<compile_context>
chip_gen: v5e
topology: v5e:2x2
jax: 0.10.0
libtpu: 0.0.40
codegen_flags: <defaults>
</compile_context>

<pallas_src>
import functools

import jax
import jax.numpy as jnp
from jax.experimental import pallas as pl
from jax.experimental.pallas import tpu as pltpu


# ----------------------------------------------------------------------------------
# Kernel 1: fused dense matmul + shift + activation  (layer 1)
# ----------------------------------------------------------------------------------
def _dense_kernel(x_ref, w_ref, shift_ref, o_ref, *, act):
    y = jnp.dot(x_ref[...].astype(jnp.bfloat16), w_ref[...],
                preferred_element_type=jnp.float32)
    y = y + shift_ref[...]
    if act == "relu":
        y = jnp.maximum(y, 0.0)
    elif act == "tanh":
        y = jnp.tanh(y)
    o_ref[...] = y.astype(o_ref.dtype)


def dense_act(x, w_bf16, shift, act, col_tile):
    """act(x @ w + shift); x:(M,K) f32, w:(K,Nc) bf16 (BN scale folded), shift:(1,Nc)."""
    M, K = x.shape
    K2, Nc = w_bf16.shape
    assert K == K2 and Nc % col_tile == 0
    grid = (Nc // col_tile,)
    return pl.pallas_call(
        functools.partial(_dense_kernel, act=act),
        out_shape=jax.ShapeDtypeStruct((M, Nc), jnp.float32),
        grid_spec=pltpu.PrefetchScalarGridSpec(
            num_scalar_prefetch=0,
            grid=grid,
            in_specs=[
                pl.BlockSpec((M, K), lambda j: (0, 0)),          # tiny (N,100) latent
                pl.BlockSpec((K, col_tile), lambda j: (0, j)),   # bf16 weight column tile
                pl.BlockSpec((1, col_tile), lambda j: (0, j)),   # folded-BN shift
            ],
            out_specs=pl.BlockSpec((M, col_tile), lambda j: (0, j)),
        ),
        compiler_params=pltpu.CompilerParams(
            dimension_semantics=("parallel",),
            vmem_limit_bytes=32 * 1024 * 1024,
        ),
    )(x, w_bf16, shift)


# ----------------------------------------------------------------------------------
# Kernel 2: one output phase of a stride-2 k=4 p=1 ConvTranspose (in-kernel im2col)
# ----------------------------------------------------------------------------------
def _deconv_phase_kernel(xw_ref, w_ref, shift_ref, o_ref, *,
                         N, H, Wp, act, transpose_out):
    """xw_ref   : (N, H+1, Wp+1, Cin) f32    phase halo window of the padded input
       w_ref    : (1, 4, Cin, Cout) bf16     2x2 sub-kernel taps (BN scale folded in)
                  or (1, 4, Cout, Cin) when transpose_out
       shift_ref: (1, Cout) f32 (or (Cout, 1) when transpose_out)
       o_ref    : (1, N*H*Wp, Cout) f32 (or (1, Cout, N*H*Wp) when transpose_out)"""
    Cin = xw_ref.shape[-1]
    M = N * H * Wp
    if transpose_out:
        Cout = w_ref.shape[2]
        acc = jnp.zeros((Cout, M), jnp.float32)
    else:
        Cout = w_ref.shape[3]
        acc = jnp.zeros((M, Cout), jnp.float32)

    for dh in range(2):
        for dw in range(2):
            t = 2 * dh + dw
            # In-kernel im2col: shifted window slice flattened to matmul rows (Wp is a
            # multiple of 8 so the collapse is layout-trivial for f32).
            win = xw_ref[:, dh:dh + H, dw:dw + Wp, :].reshape(M, Cin)
            w_t = w_ref[0, t]
            if transpose_out:
                acc = acc + jnp.dot(w_t, win.T.astype(jnp.bfloat16),
                                    preferred_element_type=jnp.float32)
            else:
                acc = acc + jnp.dot(win.astype(jnp.bfloat16), w_t,
                                    preferred_element_type=jnp.float32)

    y = acc + shift_ref[...]
    if act == "relu":
        y = jnp.maximum(y, 0.0)
    elif act == "tanh":
        y = jnp.tanh(y)
    o_ref[0] = y.astype(o_ref.dtype)


def deconv_s2_phase(x_nhwc, w_phase, shift, act, transpose_out=False):
    """ConvTranspose2d(k=4,s=2,p=1) + folded BN + activation via phase decomposition.

    Returns NHWC (N, 2H, 2W, Cout), or NCHW (N, Cout, 2H, 2W) when transpose_out."""
    N, H, W, Cin = x_nhwc.shape
    Cout = w_phase.shape[2] if transpose_out else w_phase.shape[3]
    # Row length used by the in-kernel reshape, padded to a multiple of 8 (f32 sublanes).
    Wp = W if W % 8 == 0 else ((W + 7) // 8) * 8
    Mp = N * H * Wp

    # Transposed-conv halo pad (k-1-p = 1) plus alignment padding on the right.
    xp = jnp.pad(x_nhwc, ((0, 0), (1, 1), (1, 1 + (Wp - W)), (0, 0)))
    # Per-phase halo windows, concatenated phase-major: (4*N, H+1, Wp+1, Cin).
    wins = [xp[:, pr:pr + H + 1, pc:pc + Wp + 1, :] for pr in (0, 1) for pc in (0, 1)]
    xwin = jnp.concatenate(wins, axis=0)

    if transpose_out:
        out_shape = jax.ShapeDtypeStruct((4, Cout, Mp), jnp.float32)
        out_block = (1, Cout, Mp)
        shift_arr = shift.reshape(Cout, 1).astype(jnp.float32)
    else:
        out_shape = jax.ShapeDtypeStruct((4, Mp, Cout), jnp.float32)
        out_block = (1, Mp, Cout)
        shift_arr = shift.reshape(1, Cout).astype(jnp.float32)

    out = pl.pallas_call(
        functools.partial(_deconv_phase_kernel, N=N, H=H, Wp=Wp, act=act,
                          transpose_out=transpose_out),
        out_shape=out_shape,
        grid_spec=pltpu.PrefetchScalarGridSpec(
            num_scalar_prefetch=0,
            grid=(4,),                                             # 4 independent phases
            in_specs=[
                pl.BlockSpec((N, H + 1, Wp + 1, Cin), lambda p: (p, 0, 0, 0)),
                pl.BlockSpec((1,) + w_phase.shape[1:], lambda p: (p, 0, 0, 0)),
                pl.BlockSpec(shift_arr.shape, lambda p: (0, 0)),
            ],
            out_specs=pl.BlockSpec(out_block, lambda p: (p, 0, 0)),
        ),
        compiler_params=pltpu.CompilerParams(
            dimension_semantics=("parallel",),
            vmem_limit_bytes=32 * 1024 * 1024,
        ),
    )(xwin, w_phase, shift_arr)

    # Pixel-shuffle the 4 phases back to full resolution (pure layout glue).
    if transpose_out:
        o = out.reshape(2, 2, Cout, N, H, Wp)[:, :, :, :, :, :W]
        o = jnp.transpose(o, (3, 2, 4, 0, 5, 1)).reshape(N, Cout, 2 * H, 2 * W)   # NCHW
    else:
        o = out.reshape(2, 2, N, H, Wp, Cout)[:, :, :, :, :W, :]
        o = jnp.transpose(o, (2, 3, 0, 4, 1, 5)).reshape(N, 2 * H, 2 * W, Cout)   # NHWC
    return o


# ----------------------------------------------------------------------------------
# Parameters (deterministic synthetic init, shapes from _G.__init__) + one-time prep
# ----------------------------------------------------------------------------------
def init_params(key):
    ks = jax.random.split(key, 8)

    def w_init(k, shape):
        return (0.02 * jax.random.normal(k, shape)).astype(jnp.float32)

    def bn_init(k, c):
        k1, k2, k3, k4 = jax.random.split(k, 4)
        gamma = 1.0 + 0.1 * jax.random.normal(k1, (c,))
        beta = 0.1 * jax.random.normal(k2, (c,))
        mean = 0.1 * jax.random.normal(k3, (c,))
        var = 0.9 + 0.2 * jax.random.uniform(k4, (c,))
        return (gamma.astype(jnp.float32), beta.astype(jnp.float32),
                mean.astype(jnp.float32), var.astype(jnp.float32))

    return {
        # ConvTranspose2d weights in PyTorch layout (in_ch, out_ch, kH, kW), bias=False
        "w1": w_init(ks[0], (100, 512, 4, 4)),
        "w2": w_init(ks[1], (512, 256, 4, 4)),
        "w3": w_init(ks[2], (256, 128, 4, 4)),
        "w4": w_init(ks[3], (128, 3, 4, 4)),
        "bn1": bn_init(ks[4], 512),
        "bn2": bn_init(ks[5], 256),
        "bn3": bn_init(ks[6], 128),
    }


def _fold_bn(bn, eps=1e-5):
    gamma, beta, mean, var = bn
    scale = gamma / jnp.sqrt(var + eps)
    shift = beta - mean * scale
    return scale, shift


def _phase_weights(w_pt, scale, transpose_out=False):
    """(Cin,Cout,4,4) ConvTranspose2d weight -> (4 phases, 4 taps, Cin, Cout) bf16.

    Phase (pr,pc), tap (dh,dw) uses w[:, :, 3-pr-2dh, 3-pc-2dw]; BN scale folded in."""
    w = w_pt * scale[None, :, None, None]
    phases = []
    for pr in (0, 1):
        for pc in (0, 1):
            taps = []
            for dh in (0, 1):
                for dw in (0, 1):
                    sub = w[:, :, 3 - pr - 2 * dh, 3 - pc - 2 * dw]   # (Cin, Cout)
                    taps.append(sub.T if transpose_out else sub)
            phases.append(jnp.stack(taps, axis=0))
    return jnp.stack(phases, axis=0).astype(jnp.bfloat16)


def prepare_params(params):
    """One-time parameter transform: fold BN scale into weights, cast bf16, re-layout."""
    s1, b1 = _fold_bn(params["bn1"])
    s2, b2 = _fold_bn(params["bn2"])
    s3, b3 = _fold_bn(params["bn3"])
    cin1, c1 = params["w1"].shape[0], params["w1"].shape[1]
    cout_last = params["w4"].shape[1]
    # Layer 1 dense weight: columns ordered (kh, kw, cout) so the output reshapes to NHWC.
    w1 = params["w1"] * s1[None, :, None, None]
    w1m = jnp.transpose(w1, (0, 2, 3, 1)).reshape(cin1, 16 * c1).astype(jnp.bfloat16)
    b1m = jnp.broadcast_to(b1, (16, c1)).reshape(1, 16 * c1).astype(jnp.float32)
    return {
        "w1m": w1m, "b1": b1m,
        "w2p": _phase_weights(params["w2"], s2), "b2": b2,
        "w3p": _phase_weights(params["w3"], s3), "b3": b3,
        "w4p": _phase_weights(params["w4"], jnp.ones((cout_last,), jnp.float32),
                              transpose_out=True),
        "b4": jnp.zeros((cout_last,), jnp.float32),
    }


def generator_forward(prepared, x_nchw):
    N = x_nchw.shape[0]
    c1 = prepared["w1m"].shape[1] // 16
    x = x_nchw.reshape(N, x_nchw.shape[1])                                  # (N, 100)
    # Layer 1: ConvTranspose2d(100,512,4,1,0) on a 1x1 input == dense matmul.
    y = dense_act(x, prepared["w1m"], prepared["b1"], "relu", col_tile=2048)
    y = y.reshape(N, 4, 4, c1)                                              # NHWC
    # Layers 2-4: stride-2 ConvTranspose via sub-pixel phase decomposition.
    y = deconv_s2_phase(y, prepared["w2p"], prepared["b2"], "relu")         # (N,8,8,256)
    y = deconv_s2_phase(y, prepared["w3p"], prepared["b3"], "relu")         # (N,16,16,128)
    y = deconv_s2_phase(y, prepared["w4p"], prepared["b4"], "tanh",
                        transpose_out=True)                                 # (N,3,32,32) NCHW
    return y


if __name__ == "__main__":
    key = jax.random.PRNGKey(0)
    kp, kx = jax.random.split(key)
    params = init_params(kp)
    prepared = prepare_params(params)   # one-time param transform (BN fold + bf16 cast)
    x = jax.random.normal(kx, (2, 100, 1, 1), dtype=jnp.float32)  # latent noise, NCHW

    out = jax.jit(generator_forward)(prepared, x)
    out = jax.block_until_ready(out)

    assert out.shape == (2, 3, 32, 32), out.shape
    assert bool(jnp.all(jnp.isfinite(out)))
    assert bool(jnp.all(jnp.abs(out) <= 1.0))  # tanh output range
    print("KERNEL_OK")
</pallas_src>

<mosaic_0001>
module attributes {stable_mosaic.version = 11 : i64} {
  func.func @_dense_kernel(%arg0: i32, %arg1: memref<2x100xf32, #tpu.memory_space<vmem>>, %arg2: memref<100x2048xbf16, #tpu.memory_space<vmem>>, %arg3: memref<1x2048xf32, #tpu.memory_space<vmem>>, %arg4: memref<2x2048xf32, #tpu.memory_space<vmem>>) attributes {dimension_semantics = [#tpu.dimension_semantics<parallel>], iteration_bounds = array<i64: 4>, scalar_prefetch = 0 : i64, scratch_operands = 0 : i64, tpu.core_type = #tpu.core_type<tc>, window_params = [{pipeline_mode = #tpu.pipeline_mode<synchronous>, transform_indices = @transform_0, window_bounds = array<i64: 2, 100>}, {transform_indices = @transform_1, window_bounds = array<i64: 100, 2048>}, {transform_indices = @transform_2, window_bounds = array<i64: 1, 2048>}, {transform_indices = @transform_3, window_bounds = array<i64: 2, 2048>}]} {
    %c0 = arith.constant 0 : index
    %c0_0 = arith.constant 0 : index
    %0 = vector.load %arg1[%c0, %c0_0] : memref<2x100xf32, #tpu.memory_space<vmem>>, vector<2x100xf32>
    %1 = arith.truncf %0 : vector<2x100xf32> to vector<2x100xbf16>
    %c0_1 = arith.constant 0 : index
    %c0_2 = arith.constant 0 : index
    %2 = vector.load %arg2[%c0_1, %c0_2] : memref<100x2048xbf16, #tpu.memory_space<vmem>>, vector<100x2048xbf16>
    %cst = arith.constant dense<0.000000e+00> : vector<2x2048xf32>
    %3 = tpu.matmul %1, %2, %cst {dimension_numbers = #tpu.dot_dimension_numbers<[1], [0], [0], [1], [0, 0, 1, 1], [], []>} : vector<2x100xbf16>, vector<100x2048xbf16>, vector<2x2048xf32> -> vector<2x2048xf32>
    %c0_3 = arith.constant 0 : index
    %c0_4 = arith.constant 0 : index
    %4 = vector.load %arg3[%c0_3, %c0_4] : memref<1x2048xf32, #tpu.memory_space<vmem>>, vector<1x2048xf32>
    %5 = vector.broadcast %4 : vector<1x2048xf32> to vector<2x2048xf32>
    %6 = arith.addf %3, %5 : vector<2x2048xf32>
    %cst_5 = arith.constant 0.000000e+00 : f32
    %7 = vector.broadcast %cst_5 : f32 to vector<2x2048xf32>
    %8 = arith.maximumf %6, %7 : vector<2x2048xf32>
    %c0_6 = arith.constant 0 : index
    %c0_7 = arith.constant 0 : index
    %9 = vector.load %arg4[%c0_6, %c0_7] : memref<2x2048xf32, #tpu.memory_space<vmem>>, vector<2x2048xf32>
    tpu.vector_store %arg4[%c0_6, %c0_7], %8 {strides = array<i32>} : memref<2x2048xf32, #tpu.memory_space<vmem>>, vector<2x2048xf32>,
    return
  }
  func.func @transform_0(%arg0: i32) -> (i32, i32) {
    %c0_i32 = arith.constant 0 : i32
    %c0_i32_0 = arith.constant 0 : i32
    %c0_i32_1 = arith.constant 0 : i32
    return %c0_i32, %c0_i32_0 : i32, i32
  }
  func.func @transform_1(%arg0: i32) -> (i32, i32) {
    %c0_i32 = arith.constant 0 : i32
    %c0_i32_0 = arith.constant 0 : i32
    return %c0_i32, %arg0 : i32, i32
  }
  func.func @transform_2(%arg0: i32) -> (i32, i32) {
    %c0_i32 = arith.constant 0 : i32
    %c0_i32_0 = arith.constant 0 : i32
    return %c0_i32, %arg0 : i32, i32
  }
  func.func @transform_3(%arg0: i32) -> (i32, i32) {
    %c0_i32 = arith.constant 0 : i32
    %c0_i32_0 = arith.constant 0 : i32
    return %c0_i32, %arg0 : i32, i32
  }
}

module attributes {stable_mosaic.version = 11 : i64} {
  func.func @_deconv_phase_kernel(%arg0: i32, %arg1: memref<2x5x9x512xf32, #tpu.memory_space<vmem>>, %arg2: memref<1x4x512x256xbf16, #tpu.memory_space<vmem>>, %arg3: memref<1x256xf32, #tpu.memory_space<vmem>>, %arg4: memref<1x64x256xf32, #tpu.memory_space<vmem>>) attributes {dimension_semantics = [#tpu.dimension_semantics<parallel>], iteration_bounds = array<i64: 4>, scalar_prefetch = 0 : i64, scratch_operands = 0 : i64, tpu.core_type = #tpu.core_type<tc>, window_params = [{transform_indices = @transform_0, window_bounds = array<i64: 2, 5, 9, 512>}, {transform_indices = @transform_1, window_bounds = array<i64: 1, 4, 512, 256>}, {pipeline_mode = #tpu.pipeline_mode<synchronous>, transform_indices = @transform_2, window_bounds = array<i64: 1, 256>}, {transform_indices = @transform_3, window_bounds = array<i64: 1, 64, 256>}]} {
    %cst = arith.constant 0.000000e+00 : f32
    %0 = vector.broadcast %cst : f32 to vector<64x256xf32>
    %c0 = arith.constant 0 : index
    %c0_0 = arith.constant 0 : index
    %c0_1 = arith.constant 0 : index
    %c0_2 = arith.constant 0 : index
    %1 = vector.load %arg1[%c0, %c0_0, %c0_1, %c0_2] : memref<2x5x9x512xf32, #tpu.memory_space<vmem>>, vector<2x4x8x512xf32>
    %2 = vector.shape_cast %1 : vector<2x4x8x512xf32> to vector<64x512xf32>
    %c0_3 = arith.constant 0 : index
    %c0_4 = arith.constant 0 : index
    %c0_5 = arith.constant 0 : index
    %c0_6 = arith.constant 0 : index
    %3 = vector.load %arg2[%c0_3, %c0_4, %c0_5, %c0_6] : memref<1x4x512x256xbf16, #tpu.memory_space<vmem>>, vector<1x1x512x256xbf16>
    %4 = vector.shape_cast %3 : vector<1x1x512x256xbf16> to vector<512x256xbf16>
    %5 = arith.truncf %2 : vector<64x512xf32> to vector<64x512xbf16>
    %cst_7 = arith.constant dense<0.000000e+00> : vector<64x256xf32>
    %6 = tpu.matmul %5, %4, %cst_7 {dimension_numbers = #tpu.dot_dimension_numbers<[1], [0], [0], [1], [0, 0, 1, 1], [], []>} : vector<64x512xbf16>, vector<512x256xbf16>, vector<64x256xf32> -> vector<64x256xf32>
    %7 = arith.addf %0, %6 : vector<64x256xf32>
    %c0_8 = arith.constant 0 : index
    %c0_9 = arith.constant 0 : index
    %c1 = arith.constant 1 : index
    %c0_10 = arith.constant 0 : index
    %8 = vector.load %arg1[%c0_8, %c0_9, %c1, %c0_10] : memref<2x5x9x512xf32, #tpu.memory_space<vmem>>, vector<2x4x8x512xf32>
    %9 = vector.shape_cast %8 : vector<2x4x8x512xf32> to vector<64x512xf32>
    %c0_11 = arith.constant 0 : index
    %c1_12 = arith.constant 1 : index
    %c0_13 = arith.constant 0 : index
    %c0_14 = arith.constant 0 : index
    %10 = vector.load %arg2[%c0_11, %c1_12, %c0_13, %c0_14] : memref<1x4x512x256xbf16, #tpu.memory_space<vmem>>, vector<1x1x512x256xbf16>
    %11 = vector.shape_cast %10 : vector<1x1x512x256xbf16> to vector<512x256xbf16>
    %12 = arith.truncf %9 : vector<64x512xf32> to vector<64x512xbf16>
    %cst_15 = arith.constant dense<0.000000e+00> : vector<64x256xf32>
    %13 = tpu.matmul %12, %11, %cst_15 {dimension_numbers = #tpu.dot_dimension_numbers<[1], [0], [0], [1], [0, 0, 1, 1], [], []>} : vector<64x512xbf16>, vector<512x256xbf16>, vector<64x256xf32> -> vector<64x256xf32>
    %14 = arith.addf %7, %13 : vector<64x256xf32>
    %c0_16 = arith.constant 0 : index
    %c1_17 = arith.constant 1 : index
    %c0_18 = arith.constant 0 : index
    %c0_19 = arith.constant 0 : index
    %15 = vector.load %arg1[%c0_16, %c1_17, %c0_18, %c0_19] : memref<2x5x9x512xf32, #tpu.memory_space<vmem>>, vector<2x4x8x512xf32>
    %16 = vector.shape_cast %15 : vector<2x4x8x512xf32> to vector<64x512xf32>
    %c0_20 = arith.constant 0 : index
    %c2 = arith.constant 2 : index
    %c0_21 = arith.constant 0 : index
    %c0_22 = arith.constant 0 : index
    %17 = vector.load %arg2[%c0_20, %c2, %c0_21, %c0_22] : memref<1x4x512x256xbf16, #tpu.memory_space<vmem>>, vector<1x1x512x256xbf16>
    %18 = vector.shape_cast %17 : vector<1x1x512x256xbf16> to vector<512x256xbf16>
    %19 = arith.truncf %16 : vector<64x512xf32> to vector<64x512xbf16>
    %cst_23 = arith.constant dense<0.000000e+00> : vector<64x256xf32>
    %20 = tpu.matmul %19, %18, %cst_23 {dimension_numbers = #tpu.dot_dimension_numbers<[1], [0], [0], [1], [0, 0, 1, 1], [], []>} : vector<64x512xbf16>, vector<512x256xbf16>, vector<64x256xf32> -> vector<64x256xf32>
    %21 = arith.addf %14, %20 : vector<64x256xf32>
    %c0_24 = arith.constant 0 : index
    %c1_25 = arith.constant 1 : index
    %c1_26 = arith.constant 1 : index
    %c0_27 = arith.constant 0 : index
    %22 = vector.load %arg1[%c0_24, %c1_25, %c1_26, %c0_27] : memref<2x5x9x512xf32, #tpu.memory_space<vmem>>, vector<2x4x8x512xf32>
    %23 = vector.shape_cast %22 : vector<2x4x8x512xf32> to vector<64x512xf32>
    %c0_28 = arith.constant 0 : index
    %c3 = arith.constant 3 : index
    %c0_29 = arith.constant 0 : index
    %c0_30 = arith.constant 0 : index
    %24 = vector.load %arg2[%c0_28, %c3, %c0_29, %c0_30] : memref<1x4x512x256xbf16, #tpu.memory_space<vmem>>, vector<1x1x512x256xbf16>
    %25 = vector.shape_cast %24 : vector<1x1x512x256xbf16> to vector<512x256xbf16>
    %26 = arith.truncf %23 : vector<64x512xf32> to vector<64x512xbf16>
    %cst_31 = arith.constant dense<0.000000e+00> : vector<64x256xf32>
    %27 = tpu.matmul %26, %25, %cst_31 {dimension_numbers = #tpu.dot_dimension_numbers<[1], [0], [0], [1], [0, 0, 1, 1], [], []>} : vector<64x512xbf16>, vector<512x256xbf16>, vector<64x256xf32> -> vector<64x256xf32>
    %28 = arith.addf %21, %27 : vector<64x256xf32>
    %c0_32 = arith.constant 0 : index
    %c0_33 = arith.constant 0 : index
    %29 = vector.load %arg3[%c0_32, %c0_33] : memref<1x256xf32, #tpu.memory_space<vmem>>, vector<1x256xf32>
    %30 = vector.broadcast %29 : vector<1x256xf32> to vector<64x256xf32>
    %31 = arith.addf %28, %30 : vector<64x256xf32>
    %cst_34 = arith.constant 0.000000e+00 : f32
    %32 = vector.broadcast %cst_34 : f32 to vector<64x256xf32>
    %33 = arith.maximumf %31, %32 : vector<64x256xf32>
    %c0_35 = arith.constant 0 : index
    %c0_36 = arith.constant 0 : index
    %c0_37 = arith.constant 0 : index
    %34 = vector.load %arg4[%c0_35, %c0_36, %c0_37] : memref<1x64x256xf32, #tpu.memory_space<vmem>>, vector<1x64x256xf32>
    %35 = vector.shape_cast %34 : vector<1x64x256xf32> to vector<64x256xf32>
    %36 = vector.shape_cast %33 : vector<64x256xf32> to vector<1x64x256xf32>
    tpu.vector_store %arg4[%c0_35, %c0_36, %c0_37], %36 {strides = array<i32>} : memref<1x64x256xf32, #tpu.memory_space<vmem>>, vector<1x64x256xf32>,
    return
  }
  func.func @transform_0(%arg0: i32) -> (i32, i32, i32, i32) {
    %c0_i32 = arith.constant 0 : i32
    %c0_i32_0 = arith.constant 0 : i32
    %c0_i32_1 = arith.constant 0 : i32
    %c0_i32_2 = arith.constant 0 : i32
    return %arg0, %c0_i32, %c0_i32_0, %c0_i32_1 : i32, i32, i32, i32
  }
  func.func @transform_1(%arg0: i32) -> (i32, i32, i32, i32) {
    %c0_i32 = arith.constant 0 : i32
    %c0_i32_0 = arith.constant 0 : i32
    %c0_i32_1 = arith.constant 0 : i32
    %c0_i32_2 = arith.constant 0 : i32
    return %arg0, %c0_i32, %c0_i32_0, %c0_i32_1 : i32, i32, i32, i32
  }
  func.func @transform_2(%arg0: i32) -> (i32, i32) {
    %c0_i32 = arith.constant 0 : i32
    %c0_i32_0 = arith.constant 0 : i32
    %c0_i32_1 = arith.constant 0 : i32
    return %c0_i32, %c0_i32_0 : i32, i32
  }
  func.func @transform_3(%arg0: i32) -> (i32, i32, i32) {
    %c0_i32 = arith.constant 0 : i32
    %c0_i32_0 = arith.constant 0 : i32
    %c0_i32_1 = arith.constant 0 : i32
    return %arg0, %c0_i32, %c0_i32_0 : i32, i32, i32
  }
}

module attributes {stable_mosaic.version = 11 : i64} {
  func.func @_deconv_phase_kernel(%arg0: i32, %arg1: memref<2x9x9x256xf32, #tpu.memory_space<vmem>>, %arg2: memref<1x4x256x128xbf16, #tpu.memory_space<vmem>>, %arg3: memref<1x128xf32, #tpu.memory_space<vmem>>, %arg4: memref<1x128x128xf32, #tpu.memory_space<vmem>>) attributes {dimension_semantics = [#tpu.dimension_semantics<parallel>], iteration_bounds = array<i64: 4>, scalar_prefetch = 0 : i64, scratch_operands = 0 : i64, tpu.core_type = #tpu.core_type<tc>, window_params = [{transform_indices = @transform_0, window_bounds = array<i64: 2, 9, 9, 256>}, {transform_indices = @transform_1, window_bounds = array<i64: 1, 4, 256, 128>}, {pipeline_mode = #tpu.pipeline_mode<synchronous>, transform_indices = @transform_2, window_bounds = array<i64: 1, 128>}, {transform_indices = @transform_3, window_bounds = array<i64: 1, 128, 128>}]} {
    %cst = arith.constant 0.000000e+00 : f32
    %0 = vector.broadcast %cst : f32 to vector<128x128xf32>
    %c0 = arith.constant 0 : index
    %c0_0 = arith.constant 0 : index
    %c0_1 = arith.constant 0 : index
    %c0_2 = arith.constant 0 : index
    %1 = vector.load %arg1[%c0, %c0_0, %c0_1, %c0_2] : memref<2x9x9x256xf32, #tpu.memory_space<vmem>>, vector<2x8x8x256xf32>
    %2 = vector.shape_cast %1 : vector<2x8x8x256xf32> to vector<128x256xf32>
    %c0_3 = arith.constant 0 : index
    %c0_4 = arith.constant 0 : index
    %c0_5 = arith.constant 0 : index
    %c0_6 = arith.constant 0 : index
    %3 = vector.load %arg2[%c0_3, %c0_4, %c0_5, %c0_6] : memref<1x4x256x128xbf16, #tpu.memory_space<vmem>>, vector<1x1x256x128xbf16>
    %4 = vector.shape_cast %3 : vector<1x1x256x128xbf16> to vector<256x128xbf16>
    %5 = arith.truncf %2 : vector<128x256xf32> to vector<128x256xbf16>
    %cst_7 = arith.constant dense<0.000000e+00> : vector<128x128xf32>
    %6 = tpu.matmul %5, %4, %cst_7 {dimension_numbers = #tpu.dot_dimension_numbers<[1], [0], [0], [1], [0, 0, 1, 1], [], []>} : vector<128x256xbf16>, vector<256x128xbf16>, vector<128x128xf32> -> vector<128x128xf32>
    %7 = arith.addf %0, %6 : vector<128x128xf32>
    %c0_8 = arith.constant 0 : index
    %c0_9 = arith.constant 0 : index
    %c1 = arith.constant 1 : index
    %c0_10 = arith.constant 0 : index
    %8 = vector.load %arg1[%c0_8, %c0_9, %c1, %c0_10] : memref<2x9x9x256xf32, #tpu.memory_space<vmem>>, vector<2x8x8x256xf32>
    %9 = vector.shape_cast %8 : vector<2x8x8x256xf32> to vector<128x256xf32>
    %c0_11 = arith.constant 0 : index
    %c1_12 = arith.constant 1 : index
    %c0_13 = arith.constant 0 : index
    %c0_14 = arith.constant 0 : index
    %10 = vector.load %arg2[%c0_11, %c1_12, %c0_13, %c0_14] : memref<1x4x256x128xbf16, #tpu.memory_space<vmem>>, vector<1x1x256x128xbf16>
    %11 = vector.shape_cast %10 : vector<1x1x256x128xbf16> to vector<256x128xbf16>
    %12 = arith.truncf %9 : vector<128x256xf32> to vector<128x256xbf16>
    %cst_15 = arith.constant dense<0.000000e+00> : vector<128x128xf32>
    %13 = tpu.matmul %12, %11, %cst_15 {dimension_numbers = #tpu.dot_dimension_numbers<[1], [0], [0], [1], [0, 0, 1, 1], [], []>} : vector<128x256xbf16>, vector<256x128xbf16>, vector<128x128xf32> -> vector<128x128xf32>
    %14 = arith.addf %7, %13 : vector<128x128xf32>
    %c0_16 = arith.constant 0 : index
    %c1_17 = arith.constant 1 : index
    %c0_18 = arith.constant 0 : index
    %c0_19 = arith.constant 0 : index
    %15 = vector.load %arg1[%c0_16, %c1_17, %c0_18, %c0_19] : memref<2x9x9x256xf32, #tpu.memory_space<vmem>>, vector<2x8x8x256xf32>
    %16 = vector.shape_cast %15 : vector<2x8x8x256xf32> to vector<128x256xf32>
    %c0_20 = arith.constant 0 : index
    %c2 = arith.constant 2 : index
    %c0_21 = arith.constant 0 : index
    %c0_22 = arith.constant 0 : index
    %17 = vector.load %arg2[%c0_20, %c2, %c0_21, %c0_22] : memref<1x4x256x128xbf16, #tpu.memory_space<vmem>>, vector<1x1x256x128xbf16>
    %18 = vector.shape_cast %17 : vector<1x1x256x128xbf16> to vector<256x128xbf16>
    %19 = arith.truncf %16 : vector<128x256xf32> to vector<128x256xbf16>
    %cst_23 = arith.constant dense<0.000000e+00> : vector<128x128xf32>
    %20 = tpu.matmul %19, %18, %cst_23 {dimension_numbers = #tpu.dot_dimension_numbers<[1], [0], [0], [1], [0, 0, 1, 1], [], []>} : vector<128x256xbf16>, vector<256x128xbf16>, vector<128x128xf32> -> vector<128x128xf32>
    %21 = arith.addf %14, %20 : vector<128x128xf32>
    %c0_24 = arith.constant 0 : index
    %c1_25 = arith.constant 1 : index
    %c1_26 = arith.constant 1 : index
    %c0_27 = arith.constant 0 : index
    %22 = vector.load %arg1[%c0_24, %c1_25, %c1_26, %c0_27] : memref<2x9x9x256xf32, #tpu.memory_space<vmem>>, vector<2x8x8x256xf32>
    %23 = vector.shape_cast %22 : vector<2x8x8x256xf32> to vector<128x256xf32>
    %c0_28 = arith.constant 0 : index
    %c3 = arith.constant 3 : index
    %c0_29 = arith.constant 0 : index
    %c0_30 = arith.constant 0 : index
    %24 = vector.load %arg2[%c0_28, %c3, %c0_29, %c0_30] : memref<1x4x256x128xbf16, #tpu.memory_space<vmem>>, vector<1x1x256x128xbf16>
    %25 = vector.shape_cast %24 : vector<1x1x256x128xbf16> to vector<256x128xbf16>
    %26 = arith.truncf %23 : vector<128x256xf32> to vector<128x256xbf16>
    %cst_31 = arith.constant dense<0.000000e+00> : vector<128x128xf32>
    %27 = tpu.matmul %26, %25, %cst_31 {dimension_numbers = #tpu.dot_dimension_numbers<[1], [0], [0], [1], [0, 0, 1, 1], [], []>} : vector<128x256xbf16>, vector<256x128xbf16>, vector<128x128xf32> -> vector<128x128xf32>
    %28 = arith.addf %21, %27 : vector<128x128xf32>
    %c0_32 = arith.constant 0 : index
    %c0_33 = arith.constant 0 : index
    %29 = vector.load %arg3[%c0_32, %c0_33] : memref<1x128xf32, #tpu.memory_space<vmem>>, vector<1x128xf32>
    %30 = vector.broadcast %29 : vector<1x128xf32> to vector<128x128xf32>
    %31 = arith.addf %28, %30 : vector<128x128xf32>
    %cst_34 = arith.constant 0.000000e+00 : f32
    %32 = vector.broadcast %cst_34 : f32 to vector<128x128xf32>
    %33 = arith.maximumf %31, %32 : vector<128x128xf32>
    %c0_35 = arith.constant 0 : index
    %c0_36 = arith.constant 0 : index
    %c0_37 = arith.constant 0 : index
    %34 = vector.load %arg4[%c0_35, %c0_36, %c0_37] : memref<1x128x128xf32, #tpu.memory_space<vmem>>, vector<1x128x128xf32>
    %35 = vector.shape_cast %34 : vector<1x128x128xf32> to vector<128x128xf32>
    %36 = vector.shape_cast %33 : vector<128x128xf32> to vector<1x128x128xf32>
    tpu.vector_store %arg4[%c0_35, %c0_36, %c0_37], %36 {strides = array<i32>} : memref<1x128x128xf32, #tpu.memory_space<vmem>>, vector<1x128x128xf32>,
    return
  }
  func.func @transform_0(%arg0: i32) -> (i32, i32, i32, i32) {
    %c0_i32 = arith.constant 0 : i32
    %c0_i32_0 = arith.constant 0 : i32
    %c0_i32_1 = arith.constant 0 : i32
    %c0_i32_2 = arith.constant 0 : i32
    return %arg0, %c0_i32, %c0_i32_0, %c0_i32_1 : i32, i32, i32, i32
  }
  func.func @transform_1(%arg0: i32) -> (i32, i32, i32, i32) {
    %c0_i32 = arith.constant 0 : i32
    %c0_i32_0 = arith.constant 0 : i32
    %c0_i32_1 = arith.constant 0 : i32
    %c0_i32_2 = arith.constant 0 : i32
    return %arg0, %c0_i32, %c0_i32_0, %c0_i32_1 : i32, i32, i32, i32
  }
  func.func @transform_2(%arg0: i32) -> (i32, i32) {
    %c0_i32 = arith.constant 0 : i32
    %c0_i32_0 = arith.constant 0 : i32
    %c0_i32_1 = arith.constant 0 : i32
    return %c0_i32, %c0_i32_0 : i32, i32
  }
  func.func @transform_3(%arg0: i32) -> (i32, i32, i32) {
    %c0_i32 = arith.constant 0 : i32
    %c0_i32_0 = arith.constant 0 : i32
    %c0_i32_1 = arith.constant 0 : i32
    return %arg0, %c0_i32, %c0_i32_0 : i32, i32, i32
  }
}

module attributes {stable_mosaic.version = 11 : i64} {
  func.func @_deconv_phase_kernel(%arg0: i32, %arg1: memref<2x17x17x128xf32, #tpu.memory_space<vmem>>, %arg2: memref<1x4x3x128xbf16, #tpu.memory_space<vmem>>, %arg3: memref<3x1xf32, #tpu.memory_space<vmem>>, %arg4: memref<1x3x512xf32, #tpu.memory_space<vmem>>) attributes {dimension_semantics = [#tpu.dimension_semantics<parallel>], iteration_bounds = array<i64: 4>, scalar_prefetch = 0 : i64, scratch_operands = 0 : i64, tpu.core_type = #tpu.core_type<tc>, window_params = [{transform_indices = @transform_0, window_bounds = array<i64: 2, 17, 17, 128>}, {transform_indices = @transform_1, window_bounds = array<i64: 1, 4, 3, 128>}, {pipeline_mode = #tpu.pipeline_mode<synchronous>, transform_indices = @transform_2, window_bounds = array<i64: 3, 1>}, {transform_indices = @transform_3, window_bounds = array<i64: 1, 3, 512>}]} {
    %cst = arith.constant 0.000000e+00 : f32
    %0 = vector.broadcast %cst : f32 to vector<3x512xf32>
    %c0 = arith.constant 0 : index
    %c0_0 = arith.constant 0 : index
    %c0_1 = arith.constant 0 : index
    %c0_2 = arith.constant 0 : index
    %1 = vector.load %arg1[%c0, %c0_0, %c0_1, %c0_2] : memref<2x17x17x128xf32, #tpu.memory_space<vmem>>, vector<2x16x16x128xf32>
    %2 = vector.shape_cast %1 : vector<2x16x16x128xf32> to vector<512x128xf32>
    %c0_3 = arith.constant 0 : index
    %c0_4 = arith.constant 0 : index
    %c0_5 = arith.constant 0 : index
    %c0_6 = arith.constant 0 : index
    %3 = vector.load %arg2[%c0_3, %c0_4, %c0_5, %c0_6] : memref<1x4x3x128xbf16, #tpu.memory_space<vmem>>, vector<1x1x3x128xbf16>
    %4 = vector.shape_cast %3 : vector<1x1x3x128xbf16> to vector<3x128xbf16>
    %5 = tpu.transpose %2, [1, 0] : vector<512x128xf32> -> vector<128x512xf32>
    %6 = arith.truncf %5 : vector<128x512xf32> to vector<128x512xbf16>
    %cst_7 = arith.constant dense<0.000000e+00> : vector<3x512xf32>
    %7 = tpu.matmul %4, %6, %cst_7 {dimension_numbers = #tpu.dot_dimension_numbers<[1], [0], [0], [1], [0, 0, 1, 1], [], []>} : vector<3x128xbf16>, vector<128x512xbf16>, vector<3x512xf32> -> vector<3x512xf32>
    %8 = arith.addf %0, %7 : vector<3x512xf32>
    %c0_8 = arith.constant 0 : index
    %c0_9 = arith.constant 0 : index
    %c1 = arith.constant 1 : index
    %c0_10 = arith.constant 0 : index
    %9 = vector.load %arg1[%c0_8, %c0_9, %c1, %c0_10] : memref<2x17x17x128xf32, #tpu.memory_space<vmem>>, vector<2x16x16x128xf32>
    %10 = vector.shape_cast %9 : vector<2x16x16x128xf32> to vector<512x128xf32>
    %c0_11 = arith.constant 0 : index
    %c1_12 = arith.constant 1 : index
    %c0_13 = arith.constant 0 : index
    %c0_14 = arith.constant 0 : index
    %11 = vector.load %arg2[%c0_11, %c1_12, %c0_13, %c0_14] : memref<1x4x3x128xbf16, #tpu.memory_space<vmem>>, vector<1x1x3x128xbf16>
    %12 = vector.shape_cast %11 : vector<1x1x3x128xbf16> to vector<3x128xbf16>
    %13 = tpu.transpose %10, [1, 0] : vector<512x128xf32> -> vector<128x512xf32>
    %14 = arith.truncf %13 : vector<128x512xf32> to vector<128x512xbf16>
    %cst_15 = arith.constant dense<0.000000e+00> : vector<3x512xf32>
    %15 = tpu.matmul %12, %14, %cst_15 {dimension_numbers = #tpu.dot_dimension_numbers<[1], [0], [0], [1], [0, 0, 1, 1], [], []>} : vector<3x128xbf16>, vector<128x512xbf16>, vector<3x512xf32> -> vector<3x512xf32>
    %16 = arith.addf %8, %15 : vector<3x512xf32>
    %c0_16 = arith.constant 0 : index
    %c1_17 = arith.constant 1 : index
    %c0_18 = arith.constant 0 : index
    %c0_19 = arith.constant 0 : index
    %17 = vector.load %arg1[%c0_16, %c1_17, %c0_18, %c0_19] : memref<2x17x17x128xf32, #tpu.memory_space<vmem>>, vector<2x16x16x128xf32>
    %18 = vector.shape_cast %17 : vector<2x16x16x128xf32> to vector<512x128xf32>
    %c0_20 = arith.constant 0 : index
    %c2 = arith.constant 2 : index
    %c0_21 = arith.constant 0 : index
    %c0_22 = arith.constant 0 : index
    %19 = vector.load %arg2[%c0_20, %c2, %c0_21, %c0_22] : memref<1x4x3x128xbf16, #tpu.memory_space<vmem>>, vector<1x1x3x128xbf16>
    %20 = vector.shape_cast %19 : vector<1x1x3x128xbf16> to vector<3x128xbf16>
    %21 = tpu.transpose %18, [1, 0] : vector<512x128xf32> -> vector<128x512xf32>
    %22 = arith.truncf %21 : vector<128x512xf32> to vector<128x512xbf16>
    %cst_23 = arith.constant dense<0.000000e+00> : vector<3x512xf32>
    %23 = tpu.matmul %20, %22, %cst_23 {dimension_numbers = #tpu.dot_dimension_numbers<[1], [0], [0], [1], [0, 0, 1, 1], [], []>} : vector<3x128xbf16>, vector<128x512xbf16>, vector<3x512xf32> -> vector<3x512xf32>
    %24 = arith.addf %16, %23 : vector<3x512xf32>
    %c0_24 = arith.constant 0 : index
    %c1_25 = arith.constant 1 : index
    %c1_26 = arith.constant 1 : index
    %c0_27 = arith.constant 0 : index
    %25 = vector.load %arg1[%c0_24, %c1_25, %c1_26, %c0_27] : memref<2x17x17x128xf32, #tpu.memory_space<vmem>>, vector<2x16x16x128xf32>
    %26 = vector.shape_cast %25 : vector<2x16x16x128xf32> to vector<512x128xf32>
    %c0_28 = arith.constant 0 : index
    %c3 = arith.constant 3 : index
    %c0_29 = arith.constant 0 : index
    %c0_30 = arith.constant 0 : index
    %27 = vector.load %arg2[%c0_28, %c3, %c0_29, %c0_30] : memref<1x4x3x128xbf16, #tpu.memory_space<vmem>>, vector<1x1x3x128xbf16>
    %28 = vector.shape_cast %27 : vector<1x1x3x128xbf16> to vector<3x128xbf16>
    %29 = tpu.transpose %26, [1, 0] : vector<512x128xf32> -> vector<128x512xf32>
    %30 = arith.truncf %29 : vector<128x512xf32> to vector<128x512xbf16>
    %cst_31 = arith.constant dense<0.000000e+00> : vector<3x512xf32>
    %31 = tpu.matmul %28, %30, %cst_31 {dimension_numbers = #tpu.dot_dimension_numbers<[1], [0], [0], [1], [0, 0, 1, 1], [], []>} : vector<3x128xbf16>, vector<128x512xbf16>, vector<3x512xf32> -> vector<3x512xf32>
    %32 = arith.addf %24, %31 : vector<3x512xf32>
    %c0_32 = arith.constant 0 : index
    %c0_33 = arith.constant 0 : index
    %33 = vector.load %arg3[%c0_32, %c0_33] : memref<3x1xf32, #tpu.memory_space<vmem>>, vector<3x1xf32>
    %34 = vector.broadcast %33 : vector<3x1xf32> to vector<3x512xf32>
    %35 = arith.addf %32, %34 : vector<3x512xf32>
    %36 = math.tanh %35 : vector<3x512xf32>
    %c0_34 = arith.constant 0 : index
    %c0_35 = arith.constant 0 : index
    %c0_36 = arith.constant 0 : index
    %37 = vector.load %arg4[%c0_34, %c0_35, %c0_36] : memref<1x3x512xf32, #tpu.memory_space<vmem>>, vector<1x3x512xf32>
    %38 = vector.shape_cast %37 : vector<1x3x512xf32> to vector<3x512xf32>
    %39 = vector.shape_cast %36 : vector<3x512xf32> to vector<1x3x512xf32>
    tpu.vector_store %arg4[%c0_34, %c0_35, %c0_36], %39 {strides = array<i32>} : memref<1x3x512xf32, #tpu.memory_space<vmem>>, vector<1x3x512xf32>,
    return
  }
  func.func @transform_0(%arg0: i32) -> (i32, i32, i32, i32) {
    %c0_i32 = arith.constant 0 : i32
    %c0_i32_0 = arith.constant 0 : i32
    %c0_i32_1 = arith.constant 0 : i32
    %c0_i32_2 = arith.constant 0 : i32
    return %arg0, %c0_i32, %c0_i32_0, %c0_i32_1 : i32, i32, i32, i32
  }
  func.func @transform_1(%arg0: i32) -> (i32, i32, i32, i32) {
    %c0_i32 = arith.constant 0 : i32
    %c0_i32_0 = arith.constant 0 : i32
    %c0_i32_1 = arith.constant 0 : i32
    %c0_i32_2 = arith.constant 0 : i32
    return %arg0, %c0_i32, %c0_i32_0, %c0_i32_1 : i32, i32, i32, i32
  }
  func.func @transform_2(%arg0: i32) -> (i32, i32) {
    %c0_i32 = arith.constant 0 : i32
    %c0_i32_0 = arith.constant 0 : i32
    %c0_i32_1 = arith.constant 0 : i32
    return %c0_i32, %c0_i32_0 : i32, i32
  }
  func.func @transform_3(%arg0: i32) -> (i32, i32, i32) {
    %c0_i32 = arith.constant 0 : i32
    %c0_i32_0 = arith.constant 0 : i32
    %c0_i32_1 = arith.constant 0 : i32
    return %arg0, %c0_i32, %c0_i32_0 : i32, i32, i32
  }
}

</mosaic_0001>

<llo_original>
// kernel: generator_forward.4
$region0: #{generator_forward.4}
  #allocation0 [shape = 'u32[]', space=smem, size = 0x4, offset = 0x4, fixed_abs, tag = 'smem constant byte address 0x4 - core index']
  #allocation1 [shape = 'u32[72,128]{1,0:T(1,128)}', space=vmem, size = 0x9000, scoped, tag = 'internal scratch']
  %s0 = inlined_call_operand.hbm [shape: f32[2,100], index: 0, kind: input, shape index: {}]
  %s1 = inlined_call_operand.hbm [shape: bf16[100,8192], index: 1, kind: input, shape index: {}]
  %s2 = inlined_call_operand.hbm [shape: f32[1,8192], index: 2, kind: input, shape index: {}]
  %s3 = inlined_call_operand.vmem [shape: f32[2,8192], index: 3, kind: output, shape index: {}]
  %s4 = sld [smem:[#allocation0]]
  $region57: #{generator_forward.4} parent=0
    _
  %s6 = ssub.s32 1, %s4
  %s7 = scalar_select 0, %s6, %s4
  $region1: #{generator_forward.4} parent=0
    #allocation2 [shape = 'u8[1024]{0}', space=vmem, size = 0x400, scoped, tag = 'input window, operand 0, single buffered']
    #allocation3 [shape = 's32[2]{0}', space=sflag, size = 0x8, scoped, tag = 'scoped memory for generator_forward.4']
    #allocation4 [shape = 'u8[851968]{0}', space=vmem, size = 0xd0000, scoped, tag = 'input window, operand 1']
    #allocation5 [shape = 's32[2]{0}', space=sflag, size = 0x8, scoped, tag = 'scoped memory for generator_forward.4']
    #allocation6 [shape = 'u8[16384]{0}', space=vmem, size = 0x4000, scoped, tag = 'input window, operand 2']
    %8 = vsyncpa [#allocation3], 0
    %9 = vsyncpa [#allocation5], 0
    %s10 = scalar_lea.sflag [#allocation5], 1
    %11 = vsyncpa %s10, 0
    loop: start=0, step=1, limit=6
    $region2: #{generator_forward.4} parent=1 // loop_pre_header
      _
    $region3: #{generator_forward.4} parent=1 // loop_header
      %s13 = sphi 0, %s17
      %p14 = scmp.ge.s32.totalorder %s13, 6
      %s21 = sphi 0, %s21
      %s23 = sphi 0, %s21
      %s24 = sphi 0, %s23
      %s38 = sphi 0, %s24
      %s44 = sphi 0, %s46
      %s47 = sphi 0, %s44
      %s48 = sphi 0, %s47
      %s64 = sphi 0, %s48
      %s70 = sphi 0, %s72
      %s73 = sphi 0, %s70
      %s74 = sphi 0, %s73
      %s90 = sphi 0, %s74
      %s96 = sphi 0, %s98
      %s99 = sphi 0, %s96
      %s100 = sphi 0, %s99
      %s116 = sphi 0, %s100
    $region4: #{generator_forward.4} parent=1 // loop_header_branch
      %16 = sbr.rel (%p14) target = $region8
    $region5: #{generator_forward.4} parent=1 // loop_body
      %s18 = ssub.s32 %s13, 1
      %s19 = ssub.s32 %s13, 2
      %s20 = sadd.s32 %s13, 1
      %s22 = sadd.s32 %s21, 1
      %p25 = scmp.eq.s32.totalorder %s13, 3
      %p26 = scmp.ne.s32.totalorder %s21, %s23
      %p27 = scmp.eq.s32.totalorder %s13, 0
      %p28 = por %p26, %p27
      %p29 = scmp.ne.s32.totalorder %s21, %s23
      %p30 = scmp.eq.s32.totalorder %s18, 3
      %p31 = por %p29, %p30
      %p32 = scmp.ne.s32.totalorder %s23, %s24
      %p33 = scmp.eq.s32.totalorder %s18, 0
      %p34 = por %p32, %p33
      %p35 = scmp.ne.s32.totalorder %s23, %s24
      %p36 = scmp.eq.s32.totalorder %s19, 3
      %p37 = por %p35, %p36
      %p39 = scmp.ne.s32.totalorder %s24, %s38
      %p40 = scmp.eq.s32.totalorder %s19, 0
      %p41 = por %p39, %p40
      %s42 = ssub.s32 %s13, %s20
      %p43 = scmp.eq.s32.totalorder %s42, 0
      %s45 = sadd.s32 %s44, 1
      %s46 = scalar_select %p43, %s44, %s45
      %p49 = pneg %p43
      %p50 = scmp.eq.s32.totalorder %s13, 3
      %p51 = por %p49, %p50
      %p52 = scmp.ne.s32.totalorder %s44, %s47
      %p53 = scmp.eq.s32.totalorder %s13, 0
      %p54 = por %p52, %p53
      %p55 = scmp.ne.s32.totalorder %s44, %s47
      %p56 = scmp.eq.s32.totalorder %s18, 3
      %p57 = por %p55, %p56
      %p58 = scmp.ne.s32.totalorder %s47, %s48
      %p59 = scmp.eq.s32.totalorder %s18, 0
      %p60 = por %p58, %p59
      %p61 = scmp.ne.s32.totalorder %s47, %s48
      %p62 = scmp.eq.s32.totalorder %s19, 3
      %p63 = por %p61, %p62
      %p65 = scmp.ne.s32.totalorder %s48, %s64
      %p66 = scmp.eq.s32.totalorder %s19, 0
      %p67 = por %p65, %p66
      %s68 = ssub.s32 %s13, %s20
      %p69 = scmp.eq.s32.totalorder %s68, 0
      %s71 = sadd.s32 %s70, 1
      %s72 = scalar_select %p69, %s70, %s71
      %p75 = pneg %p69
      %p76 = scmp.eq.s32.totalorder %s13, 3
      %p77 = por %p75, %p76
      %p78 = scmp.ne.s32.totalorder %s70, %s73
      %p79 = scmp.eq.s32.totalorder %s13, 0
      %p80 = por %p78, %p79
      %p81 = scmp.ne.s32.totalorder %s70, %s73
      %p82 = scmp.eq.s32.totalorder %s18, 3
      %p83 = por %p81, %p82
      %p84 = scmp.ne.s32.totalorder %s73, %s74
      %p85 = scmp.eq.s32.totalorder %s18, 0
      %p86 = por %p84, %p85
      %p87 = scmp.ne.s32.totalorder %s73, %s74
      %p88 = scmp.eq.s32.totalorder %s19, 3
      %p89 = por %p87, %p88
      %p91 = scmp.ne.s32.totalorder %s74, %s90
      %p92 = scmp.eq.s32.totalorder %s19, 0
      %p93 = por %p91, %p92
      %s94 = ssub.s32 %s13, %s20
      %p95 = scmp.eq.s32.totalorder %s94, 0
      %s97 = sadd.s32 %s96, 1
      %s98 = scalar_select %p95, %s96, %s97
      %p101 = pneg %p95
      %p102 = scmp.eq.s32.totalorder %s13, 3
      %p103 = por %p101, %p102
      %p104 = scmp.ne.s32.totalorder %s96, %s99
      %p105 = scmp.eq.s32.totalorder %s13, 0
      %p106 = por %p104, %p105
      %p107 = scmp.ne.s32.totalorder %s96, %s99
      %p108 = scmp.eq.s32.totalorder %s18, 3
      %p109 = por %p107, %p108
      %p110 = scmp.ne.s32.totalorder %s99, %s100
      %p111 = scmp.eq.s32.totalorder %s18, 0
      %p112 = por %p110, %p111
      %p113 = scmp.ne.s32.totalorder %s99, %s100
      %p114 = scmp.eq.s32.totalorder %s19, 3
      %p115 = por %p113, %p114
      %p117 = scmp.ne.s32.totalorder %s100, %s116
      %p118 = scmp.eq.s32.totalorder %s19, 0
      %p119 = por %p117, %p118
      %p120 = scmp.le.s32.totalorder 1, %s13
      %p121 = scmp.lt.s32.totalorder %s13, 5
      %p122 = pnand %p120, %p121
      %p123 = pneg %p122
      // Predicated region
      $region9: #{generator_forward.4} parent=5 // pred_check
        _
      $region10: #{generator_forward.4} parent=5 // pred_check_branch
        %125 = sbr.rel (%p122) target = $region12
      $region11: #{generator_forward.4} parent=5 // pred_region
        %s126 = ssub.s32 %s13, 1
        // Predicated region
        $region13: #{generator_forward.4} parent=11 // pred_check
          %p127 = pneg %p34
        $region14: #{generator_forward.4} parent=11 // pred_check_branch
          %129 = sbr.rel (%p127) target = $region16
        $region15: #{generator_forward.4} parent=11 // pred_region
          %131 = vsyncadd [#allocation3], 0
          %s133 = sshll.u32 %s0, 4
          %s134 = int_to_ptr.hbm [resolvable:$true] %s133
          %s135 = sshll.u32 [#allocation2], 4
          %s136 = int_to_ptr.vmem [resolvable:$true] %s135
          %138 = dma.hbm_to_vmem [thread:$0]  %s134, 32, %s136, [#allocation3]
        $region16: #{generator_forward.4} parent=11 // pred_fallthru
          _
      $region12: #{generator_forward.4} parent=5 // pred_fallthru
        _
      %p139 = scmp.lt.s32.totalorder %s13, 4
      // Predicated region
      $region17: #{generator_forward.4} parent=5 // pred_check
        %p140 = pneg %p139
      $region18: #{generator_forward.4} parent=5 // pred_check_branch
        %142 = sbr.rel (%p140) target = $region20
      $region19: #{generator_forward.4} parent=5 // pred_region
        // Predicated region
        $region21: #{generator_forward.4} parent=19 // pred_check
          %p143 = pneg %p54
        $region22: #{generator_forward.4} parent=19 // pred_check_branch
          %145 = sbr.rel (%p143) target = $region24
        $region23: #{generator_forward.4} parent=19 // pred_region
          %s146 = sand.u32 %s13, 1
          %s147 = scalar_lea.sflag [#allocation5], %s146
          %s148 = sand.u32 %s44, 1
          %s149 = smul.addr %s148, 832
          %s150 = scalar_lea.vmem [#allocation4], %s149
          %s151 = smul.u32 16, %s13
          %153 = vsyncadd %s147, 0
          %s154 = smul.addr %s151, 4
          %s155 = scalar_lea.hbm %s1, %s154
          %s156 = sshll.u32 %s155, 4
          %s157 = int_to_ptr.hbm [resolvable:$true] %s156
          %s158 = sshll.u32 %s150, 4
          %s159 = int_to_ptr.vmem [resolvable:$true] %s158
          %164 = dma.hbm_to_vmem [thread:$0]  %s157, 13312, %s159, %s147, 4096, 1024, 64
        $region24: #{generator_forward.4} parent=19 // pred_fallthru
          _
        // Predicated region
        $region25: #{generator_forward.4} parent=19 // pred_check
          %p165 = pneg %p80
        $region26: #{generator_forward.4} parent=19 // pred_check_branch
          %167 = sbr.rel (%p165) target = $region28
        $region27: #{generator_forward.4} parent=19 // pred_region
          %s168 = sand.u32 %s13, 1
          %s169 = scalar_lea.sflag [#allocation5], %s168
          %s170 = sand.u32 %s70, 1
          %s171 = smul.addr %s170, 16
          %s172 = scalar_lea.vmem [#allocation6], %s171
          %s173 = smul.u32 16, %s13
          %175 = vsyncadd %s169, 0
          %s176 = scalar_lea.hbm %s2, %s173
          %s178 = sshll.u32 %s176, 4
          %s179 = int_to_ptr.hbm [resolvable:$true] %s178
          %s180 = sshll.u32 %s172, 4
          %s181 = int_to_ptr.vmem [resolvable:$true] %s180
          %183 = dma.hbm_to_vmem [thread:$0]  %s179, 256, %s181, %s169
        $region28: #{generator_forward.4} parent=19 // pred_fallthru
          _
      $region20: #{generator_forward.4} parent=5 // pred_fallthru
        _
      %p184 = scmp.le.s32.totalorder 1, %s13
      %p185 = scmp.lt.s32.totalorder %s13, 5
      %p186 = pnand %p184, %p185
      %p187 = pneg %p186
      // Predicated region
      $region29: #{generator_forward.4} parent=5 // pred_check
        _
      $region30: #{generator_forward.4} parent=5 // pred_check_branch
        %189 = sbr.rel (%p186) target = $region32
      $region31: #{generator_forward.4} parent=5 // pred_region
        %s190 = ssub.s32 %s13, 1
        // Predicated region
        $region33: #{generator_forward.4} parent=31 // pred_check
          %p191 = pneg %p34
        $region34: #{generator_forward.4} parent=31 // pred_check_branch
          %193 = sbr.rel (%p191) target = $region36
        $region35: #{generator_forward.4} parent=31 // pred_region
          %195 = dma.done [#allocation3], 32
        $region36: #{generator_forward.4} parent=31 // pred_fallthru
          _
        %s196 = sand.u32 %s18, 1
        %s197 = scalar_lea.sflag [#allocation5], %s196
        %s198 = sand.u32 %s47, 1
        %s199 = smul.addr %s198, 832
        %s200 = scalar_lea.vmem [#allocation4], %s199
        // Predicated region
        $region37: #{generator_forward.4} parent=31 // pred_check
          %p201 = pneg %p60
        $region38: #{generator_forward.4} parent=31 // pred_check_branch
          %203 = sbr.rel (%p201) target = $region40
        $region39: #{generator_forward.4} parent=31 // pred_region
          %205 = dma.done %s197, 13312
        $region40: #{generator_forward.4} parent=31 // pred_fallthru
          _
        %s206 = sand.u32 %s18, 1
        %s207 = scalar_lea.sflag [#allocation5], %s206
        %s208 = sand.u32 %s73, 1
        %s209 = smul.addr %s208, 16
        %s210 = scalar_lea.vmem [#allocation6], %s209
        // Predicated region
        $region41: #{generator_forward.4} parent=31 // pred_check
          %p211 = pneg %p86
        $region42: #{generator_forward.4} parent=31 // pred_check_branch
          %213 = sbr.rel (%p211) target = $region44
        $region43: #{generator_forward.4} parent=31 // pred_region
          %215 = dma.done %s207, 256
        $region44: #{generator_forward.4} parent=31 // pred_fallthru
          _
        %p216 = pneg %p34
        %p217 = pneg %p31
        %s218 = sand.u32 %s18, 1
        %s219 = scalar_lea.sflag [#allocation5], %s218
        %s220 = sand.u32 %s47, 1
        %s221 = smul.addr %s220, 832
        %s222 = scalar_lea.vmem [#allocation4], %s221
        %p223 = pneg %p60
        %p224 = pneg %p57
        %s225 = sand.u32 %s18, 1
        %s226 = scalar_lea.sflag [#allocation5], %s225
        %s227 = sand.u32 %s73, 1
        %s228 = smul.addr %s227, 16
        %s229 = scalar_lea.vmem [#allocation6], %s228
        %p230 = pneg %p86
        %p231 = pneg %p83
        %p232 = pneg %p112
        %p233 = pneg %p109
        %s234 = smul.u32 16, %s18
        %p235 = scmp.lt.s32.totalorder %s234, 63
        %s236 = scalar_select %p235, %s234, 63
        %s237 = smul.addr %s236, 2
        %s238 = scalar_lea.vmem %s3, %s237
        %s239 = smul.u32 16, %s18
        %s240 = smul.u32 16, %s18
        %s241 = smul.u32 16, %s18
        %p242 = scmp.lt.s32.totalorder %s241, 63
        %s243 = scalar_select %p242, %s241, 63
        %s244 = smul.addr %s243, 2
        %s245 = scalar_lea.vmem %s3, %s244
        %s246 = smul.u32 16, %s18
        %v248 = vld [vmem:[#allocation2] sm:$0x3]
        %v249 = vpack.c.bf16 %v248, %v248
        %v250 = vld [vmem:[%s200] sm:$0xff]
        %v251 = vld [vmem:[%s200 + $0x8] sm:$0xff]
        %v252 = vld [vmem:[%s200 + $0x10] sm:$0xff]
        %v253 = vld [vmem:[%s200 + $0x18] sm:$0xff]
        %v254 = vld [vmem:[%s200 + $0x20] sm:$0xff]
        %v255 = vld [vmem:[%s200 + $0x28] sm:$0xff]
        %v256 = vld [vmem:[%s200 + $0x30] sm:$0xff]
        %v257 = vld [vmem:[%s200 + $0x38] sm:$0xff]
        %v258 = vld [vmem:[%s200 + $0x40] sm:$0xff]
        %v259 = vld [vmem:[%s200 + $0x48] sm:$0xff]
        %v260 = vld [vmem:[%s200 + $0x50] sm:$0xff]
        %v261 = vld [vmem:[%s200 + $0x58] sm:$0xff]
        %v262 = vld [vmem:[%s200 + $0x60] sm:$0xff]
        %v263 = vld [vmem:[%s200 + $0x68] sm:$0xff]
        %v264 = vld [vmem:[%s200 + $0x70] sm:$0xff]
        %v265 = vld [vmem:[%s200 + $0x78] sm:$0xff]
        %v266 = vld [vmem:[%s200 + $0x80] sm:$0xff]
        %v267 = vld [vmem:[%s200 + $0x88] sm:$0xff]
        %v268 = vld [vmem:[%s200 + $0x90] sm:$0xff]
        %v269 = vld [vmem:[%s200 + $0x98] sm:$0xff]
        %v270 = vld [vmem:[%s200 + $0xa0] sm:$0xff]
        %v271 = vld [vmem:[%s200 + $0xa8] sm:$0xff]
        %v272 = vld [vmem:[%s200 + $0xb0] sm:$0xff]
        %v273 = vld [vmem:[%s200 + $0xb8] sm:$0xff]
        %v274 = vld [vmem:[%s200 + $0xc0] sm:$0xff]
        %v275 = vld [vmem:[%s200 + $0xc8] sm:$0xff]
        %v276 = vld [vmem:[%s200 + $0xd0] sm:$0xff]
        %v277 = vld [vmem:[%s200 + $0xd8] sm:$0xff]
        %v278 = vld [vmem:[%s200 + $0xe0] sm:$0xff]
        %v279 = vld [vmem:[%s200 + $0xe8] sm:$0xff]
        %v280 = vld [vmem:[%s200 + $0xf0] sm:$0xff]
        %v281 = vld [vmem:[%s200 + $0xf8] sm:$0xff]
        %v282 = vld [vmem:[%s200 + $0x100] sm:$0xff]
        %v283 = vld [vmem:[%s200 + $0x108] sm:$0xff]
        %v284 = vld [vmem:[%s200 + $0x110] sm:$0xff]
        %v285 = vld [vmem:[%s200 + $0x118] sm:$0xff]
        %v286 = vld [vmem:[%s200 + $0x120] sm:$0xff]
        %v287 = vld [vmem:[%s200 + $0x128] sm:$0xff]
        %v288 = vld [vmem:[%s200 + $0x130] sm:$0xff]
        %v289 = vld [vmem:[%s200 + $0x138] sm:$0xff]
        %v290 = vld [vmem:[%s200 + $0x140] sm:$0xff]
        %v291 = vld [vmem:[%s200 + $0x148] sm:$0xff]
        %v292 = vld [vmem:[%s200 + $0x150] sm:$0xff]
        %v293 = vld [vmem:[%s200 + $0x158] sm:$0xff]
        %v294 = vld [vmem:[%s200 + $0x160] sm:$0xff]
        %v295 = vld [vmem:[%s200 + $0x168] sm:$0xff]
        %v296 = vld [vmem:[%s200 + $0x170] sm:$0xff]
        %v297 = vld [vmem:[%s200 + $0x178] sm:$0xff]
        %v298 = vld [vmem:[%s200 + $0x180] sm:$0xff]
        %v299 = vld [vmem:[%s200 + $0x188] sm:$0xff]
        %v300 = vld [vmem:[%s200 + $0x190] sm:$0xff]
        %v301 = vld [vmem:[%s200 + $0x198] sm:$0xff]
        %v302 = vld [vmem:[%s200 + $0x1a0] sm:$0xff]
        %v303 = vld [vmem:[%s200 + $0x1a8] sm:$0xff]
        %v304 = vld [vmem:[%s200 + $0x1b0] sm:$0xff]
        %v305 = vld [vmem:[%s200 + $0x1b8] sm:$0xff]
        %v306 = vld [vmem:[%s200 + $0x1c0] sm:$0xff]
        %v307 = vld [vmem:[%s200 + $0x1c8] sm:$0xff]
        %v308 = vld [vmem:[%s200 + $0x1d0] sm:$0xff]
        %v309 = vld [vmem:[%s200 + $0x1d8] sm:$0xff]
        %v310 = vld [vmem:[%s200 + $0x1e0] sm:$0xff]
        %v311 = vld [vmem:[%s200 + $0x1e8] sm:$0xff]
        %v312 = vld [vmem:[%s200 + $0x1f0] sm:$0xff]
        %v313 = vld [vmem:[%s200 + $0x1f8] sm:$0xff]
        %v314 = vld [vmem:[%s200 + $0x200] sm:$0xff]
        %v315 = vld [vmem:[%s200 + $0x208] sm:$0xff]
        %v316 = vld [vmem:[%s200 + $0x210] sm:$0xff]
        %v317 = vld [vmem:[%s200 + $0x218] sm:$0xff]
        %v318 = vld [vmem:[%s200 + $0x220] sm:$0xff]
        %v319 = vld [vmem:[%s200 + $0x228] sm:$0xff]
        %v320 = vld [vmem:[%s200 + $0x230] sm:$0xff]
        %v321 = vld [vmem:[%s200 + $0x238] sm:$0xff]
        %v322 = vld [vmem:[%s200 + $0x240] sm:$0xff]
        %v323 = vld [vmem:[%s200 + $0x248] sm:$0xff]
        %v324 = vld [vmem:[%s200 + $0x250] sm:$0xff]
        %v325 = vld [vmem:[%s200 + $0x258] sm:$0xff]
        %v326 = vld [vmem:[%s200 + $0x260] sm:$0xff]
        %v327 = vld [vmem:[%s200 + $0x268] sm:$0xff]
        %v328 = vld [vmem:[%s200 + $0x270] sm:$0xff]
        %v329 = vld [vmem:[%s200 + $0x278] sm:$0xff]
        %v330 = vld [vmem:[%s200 + $0x280] sm:$0xff]
        %v331 = vld [vmem:[%s200 + $0x288] sm:$0xff]
        %v332 = vld [vmem:[%s200 + $0x290] sm:$0xff]
        %v333 = vld [vmem:[%s200 + $0x298] sm:$0xff]
        %v334 = vld [vmem:[%s200 + $0x2a0] sm:$0xff]
        %v335 = vld [vmem:[%s200 + $0x2a8] sm:$0xff]
        %v336 = vld [vmem:[%s200 + $0x2b0] sm:$0xff]
        %v337 = vld [vmem:[%s200 + $0x2b8] sm:$0xff]
        %v338 = vld [vmem:[%s200 + $0x2c0] sm:$0xff]
        %v339 = vld [vmem:[%s200 + $0x2c8] sm:$0xff]
        %v340 = vld [vmem:[%s200 + $0x2d0] sm:$0xff]
        %v341 = vld [vmem:[%s200 + $0x2d8] sm:$0xff]
        %v342 = vld [vmem:[%s200 + $0x2e0] sm:$0xff]
        %v343 = vld [vmem:[%s200 + $0x2e8] sm:$0xff]
        %v344 = vld [vmem:[%s200 + $0x2f0] sm:$0xff]
        %v345 = vld [vmem:[%s200 + $0x2f8] sm:$0xff]
        %v346 = vld [vmem:[%s200 + $0x300] sm:$0x33]
        %v347 = vld [vmem:[%s200 + $0x308] sm:$0x33]
        %v348 = vld [vmem:[%s200 + $0x310] sm:$0x33]
        %v349 = vld [vmem:[%s200 + $0x318] sm:$0x33]
        %v350 = vld [vmem:[%s200 + $0x320] sm:$0x33]
        %v351 = vld [vmem:[%s200 + $0x328] sm:$0x33]
        %v352 = vld [vmem:[%s200 + $0x330] sm:$0x33]
        %v353 = vld [vmem:[%s200 + $0x338] sm:$0x33]
        %v354 = vld [vmem:[%s210] sm:$0xff]
        %v355 = vld [vmem:[%s210 + $0x8] sm:$0xff]
        %v358 = vperm.slane %v354, 0
        %v359 = vperm.slane %v354, 1
        %v360 = vperm.slane %v354, 2
        %v361 = vperm.slane %v354, 3
        %v362 = vperm.slane %v354, 4
        %v363 = vperm.slane %v354, 5
        %v364 = vperm.slane %v354, 6
        %v365 = vperm.slane %v354, 7
        %v366 = vperm.slane %v355, 0
        %v367 = vperm.slane %v355, 1
        %v368 = vperm.slane %v355, 2
        %v369 = vperm.slane %v355, 3
        %v370 = vperm.slane %v355, 4
        %v371 = vperm.slane %v355, 5
        %v372 = vperm.slane %v355, 6
        %v373 = vperm.slane %v355, 7
        %v494 = vunpack.c.l.b16 %v250
        %v495 = vunpack.c.h.b16 %v250
        %v496 = vunpack.c.l.b16 %v251
        %v497 = vunpack.c.h.b16 %v251
        %v498 = vunpack.c.l.b16 %v252
        %v499 = vunpack.c.h.b16 %v252
        %v500 = vunpack.c.l.b16 %v253
        %v501 = vunpack.c.h.b16 %v253
        %v502 = vunpack.c.l.b16 %v254
        %v503 = vunpack.c.h.b16 %v254
        %v504 = vunpack.c.l.b16 %v255
        %v505 = vunpack.c.h.b16 %v255
        %v506 = vunpack.c.l.b16 %v256
        %v507 = vunpack.c.h.b16 %v256
        %v508 = vunpack.c.l.b16 %v257
        %v509 = vunpack.c.h.b16 %v257
        %v510 = vunpack.c.l.b16 %v258
        %v511 = vunpack.c.h.b16 %v258
        %v512 = vunpack.c.l.b16 %v259
        %v513 = vunpack.c.h.b16 %v259
        %v514 = vunpack.c.l.b16 %v260
        %v515 = vunpack.c.h.b16 %v260
        %v516 = vunpack.c.l.b16 %v261
        %v517 = vunpack.c.h.b16 %v261
        %v518 = vunpack.c.l.b16 %v262
        %v519 = vunpack.c.h.b16 %v262
        %v520 = vunpack.c.l.b16 %v263
        %v521 = vunpack.c.h.b16 %v263
        %v522 = vunpack.c.l.b16 %v264
        %v523 = vunpack.c.h.b16 %v264
        %v524 = vunpack.c.l.b16 %v265
        %v525 = vunpack.c.h.b16 %v265
        %v526 = vunpack.c.l.b16 %v266
        %v527 = vunpack.c.h.b16 %v266
        %v528 = vunpack.c.l.b16 %v267
        %v529 = vunpack.c.h.b16 %v267
        %v530 = vunpack.c.l.b16 %v268
        %v531 = vunpack.c.h.b16 %v268
        %v532 = vunpack.c.l.b16 %v269
        %v533 = vunpack.c.h.b16 %v269
        %v534 = vunpack.c.l.b16 %v270
        %v535 = vunpack.c.h.b16 %v270
        %v536 = vunpack.c.l.b16 %v271
        %v537 = vunpack.c.h.b16 %v271
        %v538 = vunpack.c.l.b16 %v272
        %v539 = vunpack.c.h.b16 %v272
        %v540 = vunpack.c.l.b16 %v273
        %v541 = vunpack.c.h.b16 %v273
        %v542 = vunpack.c.l.b16 %v274
        %v543 = vunpack.c.h.b16 %v274
        %v544 = vunpack.c.l.b16 %v275
        %v545 = vunpack.c.h.b16 %v275
        %v546 = vunpack.c.l.b16 %v276
        %v547 = vunpack.c.h.b16 %v276
        %v548 = vunpack.c.l.b16 %v277
        %v549 = vunpack.c.h.b16 %v277
        %v550 = vunpack.c.l.b16 %v278
        %v551 = vunpack.c.h.b16 %v278
        %v552 = vunpack.c.l.b16 %v279
        %v553 = vunpack.c.h.b16 %v279
        %v554 = vunpack.c.l.b16 %v280
        %v555 = vunpack.c.h.b16 %v280
        %v556 = vunpack.c.l.b16 %v281
        %v557 = vunpack.c.h.b16 %v281
        %v558 = vunpack.c.l.b16 %v282
        %v559 = vunpack.c.h.b16 %v282
        %v560 = vunpack.c.l.b16 %v283
        %v561 = vunpack.c.h.b16 %v283
        %v562 = vunpack.c.l.b16 %v284
        %v563 = vunpack.c.h.b16 %v284
        %v564 = vunpack.c.l.b16 %v285
        %v565 = vunpack.c.h.b16 %v285
        %v566 = vunpack.c.l.b16 %v286
        %v567 = vunpack.c.h.b16 %v286
        %v568 = vunpack.c.l.b16 %v287
        %v569 = vunpack.c.h.b16 %v287
        %v570 = vunpack.c.l.b16 %v288
        %v571 = vunpack.c.h.b16 %v288
        %v572 = vunpack.c.l.b16 %v289
        %v573 = vunpack.c.h.b16 %v289
        %v574 = vunpack.c.l.b16 %v290
        %v575 = vunpack.c.h.b16 %v290
        %v576 = vunpack.c.l.b16 %v291
        %v577 = vunpack.c.h.b16 %v291
        %v578 = vunpack.c.l.b16 %v292
        %v579 = vunpack.c.h.b16 %v292
        %v580 = vunpack.c.l.b16 %v293
        %v581 = vunpack.c.h.b16 %v293
        %v582 = vunpack.c.l.b16 %v294
        %v583 = vunpack.c.h.b16 %v294
        %v584 = vunpack.c.l.b16 %v295
        %v585 = vunpack.c.h.b16 %v295
        %v586 = vunpack.c.l.b16 %v296
        %v587 = vunpack.c.h.b16 %v296
        %v588 = vunpack.c.l.b16 %v297
        %v589 = vunpack.c.h.b16 %v297
        %v590 = vunpack.c.l.b16 %v298
        %v591 = vunpack.c.h.b16 %v298
        %v592 = vunpack.c.l.b16 %v299
        %v593 = vunpack.c.h.b16 %v299
        %v594 = vunpack.c.l.b16 %v300
        %v595 = vunpack.c.h.b16 %v300
        %v596 = vunpack.c.l.b16 %v301
        %v597 = vunpack.c.h.b16 %v301
        %v598 = vunpack.c.l.b16 %v302
        %v599 = vunpack.c.h.b16 %v302
        %v600 = vunpack.c.l.b16 %v303
        %v601 = vunpack.c.h.b16 %v303
        %v602 = vunpack.c.l.b16 %v304
        %v603 = vunpack.c.h.b16 %v304
        %v604 = vunpack.c.l.b16 %v305
        %v605 = vunpack.c.h.b16 %v305
        %v606 = vunpack.c.l.b16 %v306
        %v607 = vunpack.c.h.b16 %v306
        %v608 = vunpack.c.l.b16 %v307
        %v609 = vunpack.c.h.b16 %v307
        %v610 = vunpack.c.l.b16 %v308
        %v611 = vunpack.c.h.b16 %v308
        %v612 = vunpack.c.l.b16 %v309
        %v613 = vunpack.c.h.b16 %v309
        %v614 = vunpack.c.l.b16 %v310
        %v615 = vunpack.c.h.b16 %v310
        %v616 = vunpack.c.l.b16 %v311
        %v617 = vunpack.c.h.b16 %v311
        %v618 = vunpack.c.l.b16 %v312
        %v619 = vunpack.c.h.b16 %v312
        %v620 = vunpack.c.l.b16 %v313
        %v621 = vunpack.c.h.b16 %v313
        %v622 = vunpack.c.l.b16 %v314
        %v623 = vunpack.c.h.b16 %v314
        %v624 = vunpack.c.l.b16 %v315
        %v625 = vunpack.c.h.b16 %v315
        %v626 = vunpack.c.l.b16 %v316
        %v627 = vunpack.c.h.b16 %v316
        %v628 = vunpack.c.l.b16 %v317
        %v629 = vunpack.c.h.b16 %v317
        %v630 = vunpack.c.l.b16 %v318
        %v631 = vunpack.c.h.b16 %v318
        %v632 = vunpack.c.l.b16 %v319
        %v633 = vunpack.c.h.b16 %v319
        %v634 = vunpack.c.l.b16 %v320
        %v635 = vunpack.c.h.b16 %v320
        %v636 = vunpack.c.l.b16 %v321
        %v637 = vunpack.c.h.b16 %v321
        %v638 = vunpack.c.l.b16 %v322
        %v639 = vunpack.c.h.b16 %v322
        %v640 = vunpack.c.l.b16 %v323
        %v641 = vunpack.c.h.b16 %v323
        %v642 = vunpack.c.l.b16 %v324
        %v643 = vunpack.c.h.b16 %v324
        %v644 = vunpack.c.l.b16 %v325
        %v645 = vunpack.c.h.b16 %v325
        %v646 = vunpack.c.l.b16 %v326
        %v647 = vunpack.c.h.b16 %v326
        %v648 = vunpack.c.l.b16 %v327
        %v649 = vunpack.c.h.b16 %v327
        %v650 = vunpack.c.l.b16 %v328
        %v651 = vunpack.c.h.b16 %v328
        %v652 = vunpack.c.l.b16 %v329
        %v653 = vunpack.c.h.b16 %v329
        %v654 = vunpack.c.l.b16 %v330
        %v655 = vunpack.c.h.b16 %v330
        %v656 = vunpack.c.l.b16 %v331
        %v657 = vunpack.c.h.b16 %v331
        %v658 = vunpack.c.l.b16 %v332
        %v659 = vunpack.c.h.b16 %v332
        %v660 = vunpack.c.l.b16 %v333
        %v661 = vunpack.c.h.b16 %v333
        %v662 = vunpack.c.l.b16 %v334
        %v663 = vunpack.c.h.b16 %v334
        %v664 = vunpack.c.l.b16 %v335
        %v665 = vunpack.c.h.b16 %v335
        %v666 = vunpack.c.l.b16 %v336
        %v667 = vunpack.c.h.b16 %v336
        %v668 = vunpack.c.l.b16 %v337
        %v669 = vunpack.c.h.b16 %v337
        %v670 = vunpack.c.l.b16 %v338
        %v671 = vunpack.c.h.b16 %v338
        %v672 = vunpack.c.l.b16 %v339
        %v673 = vunpack.c.h.b16 %v339
        %v674 = vunpack.c.l.b16 %v340
        %v675 = vunpack.c.h.b16 %v340
        %v676 = vunpack.c.l.b16 %v341
        %v677 = vunpack.c.h.b16 %v341
        %v678 = vunpack.c.l.b16 %v342
        %v679 = vunpack.c.h.b16 %v342
        %v680 = vunpack.c.l.b16 %v343
        %v681 = vunpack.c.h.b16 %v343
        %v682 = vunpack.c.l.b16 %v344
        %v683 = vunpack.c.h.b16 %v344
        %v684 = vunpack.c.l.b16 %v345
        %v685 = vunpack.c.h.b16 %v345
        %v686 = vunpack.c.l.b16 %v346
        %v687 = vunpack.c.h.b16 %v346
        %v688 = vunpack.c.l.b16 %v347
        %v689 = vunpack.c.h.b16 %v347
        %v690 = vunpack.c.l.b16 %v348
        %v691 = vunpack.c.h.b16 %v348
        %v692 = vunpack.c.l.b16 %v349
        %v693 = vunpack.c.h.b16 %v349
        %v694 = vunpack.c.l.b16 %v350
        %v695 = vunpack.c.h.b16 %v350
        %v696 = vunpack.c.l.b16 %v351
        %v697 = vunpack.c.h.b16 %v351
        %v698 = vunpack.c.l.b16 %v352
        %v699 = vunpack.c.h.b16 %v352
        %v700 = vunpack.c.l.b16 %v353
        %v701 = vunpack.c.h.b16 %v353
        %v702 = vpack.c.b16 %v510, %v494
        %v703 = vpack.c.b16 %v511, %v495
        %v704 = vpack.c.b16 %v512, %v496
        %v705 = vpack.c.b16 %v513, %v497
        %v706 = vpack.c.b16 %v514, %v498
        %v707 = vpack.c.b16 %v515, %v499
        %v708 = vpack.c.b16 %v516, %v500
        %v709 = vpack.c.b16 %v517, %v501
        %v710 = vpack.c.b16 %v518, %v502
        %v711 = vpack.c.b16 %v519, %v503
        %v712 = vpack.c.b16 %v520, %v504
        %v713 = vpack.c.b16 %v521, %v505
        %v714 = vpack.c.b16 %v522, %v506
        %v715 = vpack.c.b16 %v523, %v507
        %v716 = vpack.c.b16 %v524, %v508
        %v717 = vpack.c.b16 %v525, %v509
        %v718 = vpack.c.b16 %v542, %v526
        %v719 = vpack.c.b16 %v543, %v527
        %v720 = vpack.c.b16 %v544, %v528
        %v721 = vpack.c.b16 %v545, %v529
        %v722 = vpack.c.b16 %v546, %v530
        %v723 = vpack.c.b16 %v547, %v531
        %v724 = vpack.c.b16 %v548, %v532
        %v725 = vpack.c.b16 %v549, %v533
        %v726 = vpack.c.b16 %v550, %v534
        %v727 = vpack.c.b16 %v551, %v535
        %v728 = vpack.c.b16 %v552, %v536
        %v729 = vpack.c.b16 %v553, %v537
        %v730 = vpack.c.b16 %v554, %v538
        %v731 = vpack.c.b16 %v555, %v539
        %v732 = vpack.c.b16 %v556, %v540
        %v733 = vpack.c.b16 %v557, %v541
        %v734 = vpack.c.b16 %v574, %v558
        %v735 = vpack.c.b16 %v575, %v559
        %v736 = vpack.c.b16 %v576, %v560
        %v737 = vpack.c.b16 %v577, %v561
        %v738 = vpack.c.b16 %v578, %v562
        %v739 = vpack.c.b16 %v579, %v563
        %v740 = vpack.c.b16 %v580, %v564
        %v741 = vpack.c.b16 %v581, %v565
        %v742 = vpack.c.b16 %v582, %v566
        %v743 = vpack.c.b16 %v583, %v567
        %v744 = vpack.c.b16 %v584, %v568
        %v745 = vpack.c.b16 %v585, %v569
        %v746 = vpack.c.b16 %v586, %v570
        %v747 = vpack.c.b16 %v587, %v571
        %v748 = vpack.c.b16 %v588, %v572
        %v749 = vpack.c.b16 %v589, %v573
        %v750 = vpack.c.b16 %v606, %v590
        %v751 = vpack.c.b16 %v607, %v591
        %v752 = vpack.c.b16 %v608, %v592
        %v753 = vpack.c.b16 %v609, %v593
        %v754 = vpack.c.b16 %v610, %v594
        %v755 = vpack.c.b16 %v611, %v595
        %v756 = vpack.c.b16 %v612, %v596
        %v757 = vpack.c.b16 %v613, %v597
        %v758 = vpack.c.b16 %v614, %v598
        %v759 = vpack.c.b16 %v615, %v599
        %v760 = vpack.c.b16 %v616, %v600
        %v761 = vpack.c.b16 %v617, %v601
        %v762 = vpack.c.b16 %v618, %v602
        %v763 = vpack.c.b16 %v619, %v603
        %v764 = vpack.c.b16 %v620, %v604
        %v765 = vpack.c.b16 %v621, %v605
        %v766 = vpack.c.b16 %v638, %v622
        %v767 = vpack.c.b16 %v639, %v623
        %v768 = vpack.c.b16 %v640, %v624
        %v769 = vpack.c.b16 %v641, %v625
        %v770 = vpack.c.b16 %v642, %v626
        %v771 = vpack.c.b16 %v643, %v627
        %v772 = vpack.c.b16 %v644, %v628
        %v773 = vpack.c.b16 %v645, %v629
        %v774 = vpack.c.b16 %v646, %v630
        %v775 = vpack.c.b16 %v647, %v631
        %v776 = vpack.c.b16 %v648, %v632
        %v777 = vpack.c.b16 %v649, %v633
        %v778 = vpack.c.b16 %v650, %v634
        %v779 = vpack.c.b16 %v651, %v635
        %v780 = vpack.c.b16 %v652, %v636
        %v781 = vpack.c.b16 %v653, %v637
        %v782 = vpack.c.b16 %v670, %v654
        %v783 = vpack.c.b16 %v671, %v655
        %v784 = vpack.c.b16 %v672, %v656
        %v785 = vpack.c.b16 %v673, %v657
        %v786 = vpack.c.b16 %v674, %v658
        %v787 = vpack.c.b16 %v675, %v659
        %v788 = vpack.c.b16 %v676, %v660
        %v789 = vpack.c.b16 %v677, %v661
        %v790 = vpack.c.b16 %v678, %v662
        %v791 = vpack.c.b16 %v679, %v663
        %v792 = vpack.c.b16 %v680, %v664
        %v793 = vpack.c.b16 %v681, %v665
        %v794 = vpack.c.b16 %v682, %v666
        %v795 = vpack.c.b16 %v683, %v667
        %v796 = vpack.c.b16 %v684, %v668
        %v797 = vpack.c.b16 %v685, %v669
        %v798 = vpack.c.b16 %v686, %v686
        %v799 = vpack.c.b16 %v687, %v687
        %v800 = vpack.c.b16 %v688, %v688
        %v801 = vpack.c.b16 %v689, %v689
        %v802 = vpack.c.b16 %v690, %v690
        %v803 = vpack.c.b16 %v691, %v691
        %v804 = vpack.c.b16 %v692, %v692
        %v805 = vpack.c.b16 %v693, %v693
        %v806 = vpack.c.b16 %v694, %v694
        %v807 = vpack.c.b16 %v695, %v695
        %v808 = vpack.c.b16 %v696, %v696
        %v809 = vpack.c.b16 %v697, %v697
        %v810 = vpack.c.b16 %v698, %v698
        %v811 = vpack.c.b16 %v699, %v699
        %v812 = vpack.c.b16 %v700, %v700
        %v813 = vpack.c.b16 %v701, %v701
        %vm910 = vcmask 818176
        %v912 = vsel %vm910, %v249, 0
        %vm914 = vcmask 1041408
        %v916 = vsel %vm914, %v798, 0
        %v919 = vsel %vm914, %v799, 0
        %v922 = vsel %vm914, %v800, 0
        %v925 = vsel %vm914, %v801, 0
        %v928 = vsel %vm914, %v802, 0
        %v931 = vsel %vm914, %v803, 0
        %v934 = vsel %vm914, %v804, 0
        %v937 = vsel %vm914, %v805, 0
        %v940 = vsel %vm914, %v806, 0
        %v943 = vsel %vm914, %v807, 0
        %v946 = vsel %vm914, %v808, 0
        %v949 = vsel %vm914, %v809, 0
        %v952 = vsel %vm914, %v810, 0
        %v955 = vsel %vm914, %v811, 0
        %v958 = vsel %vm914, %v812, 0
        %v961 = vsel %vm914, %v813, 0
        %963 = vmatpush.bf16.msra.mxu0 0
        %964 = vmatpush.bf16.msra.mxu0 %v916
        %965 = vmatpush.bf16.msra.mxu0 %v782
        %966 = vmatpush.bf16.msra.mxu0 %v766
        %967 = vmatpush.bf16.msra.mxu0 %v750
        %968 = vmatpush.bf16.msra.mxu0 %v734
        %969 = vmatpush.bf16.msra.mxu0 %v718
        %970 = vmatpush.bf16.msra.mxu0 %v702
        %971 = vmatmul.bf16.gmra.mxu0 %v912
        %v972 = vpop.f32.mrf.mxu0
        %v973 = vadd.f32 %v358, %v972
        %v974 = vpop.f32.mrf.mxu0
        %975 = vdwg.mxu0
        %976 = vmatpush.bf16.msra.mxu0 0
        %977 = vmatpush.bf16.msra.mxu0 %v919
        %978 = vmatpush.bf16.msra.mxu0 %v783
        %979 = vmatpush.bf16.msra.mxu0 %v767
        %980 = vmatpush.bf16.msra.mxu0 %v751
        %981 = vmatpush.bf16.msra.mxu0 %v735
        %982 = vmatpush.bf16.msra.mxu0 %v719
        %983 = vmatpush.bf16.msra.mxu0 %v703
        %984 = vmatmul.bf16.gmra.mxu0 %v912
        %v985 = vpop.f32.mrf.mxu0
        %v986 = vadd.f32 %v359, %v985
        %v987 = vpop.f32.mrf.mxu0
        %988 = vdwg.mxu0
        %989 = vmatpush.bf16.msra.mxu0 0
        %990 = vmatpush.bf16.msra.mxu0 %v922
        %991 = vmatpush.bf16.msra.mxu0 %v784
        %992 = vmatpush.bf16.msra.mxu0 %v768
        %993 = vmatpush.bf16.msra.mxu0 %v752
        %994 = vmatpush.bf16.msra.mxu0 %v736
        %995 = vmatpush.bf16.msra.mxu0 %v720
        %996 = vmatpush.bf16.msra.mxu0 %v704
        %997 = vmatmul.bf16.gmra.mxu0 %v912
        %v998 = vpop.f32.mrf.mxu0
        %v999 = vadd.f32 %v360, %v998
        %v1000 = vpop.f32.mrf.mxu0
        %1001 = vdwg.mxu0
        %1002 = vmatpush.bf16.msra.mxu0 0
        %1003 = vmatpush.bf16.msra.mxu0 %v925
        %1004 = vmatpush.bf16.msra.mxu0 %v785
        %1005 = vmatpush.bf16.msra.mxu0 %v769
        %1006 = vmatpush.bf16.msra.mxu0 %v753
        %1007 = vmatpush.bf16.msra.mxu0 %v737
        %1008 = vmatpush.bf16.msra.mxu0 %v721
        %1009 = vmatpush.bf16.msra.mxu0 %v705
        %1010 = vmatmul.bf16.gmra.mxu0 %v912
        %v1011 = vpop.f32.mrf.mxu0
        %v1012 = vadd.f32 %v361, %v1011
        %v1013 = vpop.f32.mrf.mxu0
        %1014 = vdwg.mxu0
        %1015 = vmatpush.bf16.msra.mxu0 0
        %1016 = vmatpush.bf16.msra.mxu0 %v928
        %1017 = vmatpush.bf16.msra.mxu0 %v786
        %1018 = vmatpush.bf16.msra.mxu0 %v770
        %1019 = vmatpush.bf16.msra.mxu0 %v754
        %1020 = vmatpush.bf16.msra.mxu0 %v738
        %1021 = vmatpush.bf16.msra.mxu0 %v722
        %1022 = vmatpush.bf16.msra.mxu0 %v706
        %1023 = vmatmul.bf16.gmra.mxu0 %v912
        %v1024 = vpop.f32.mrf.mxu0
        %v1025 = vadd.f32 %v362, %v1024
        %v1026 = vpop.f32.mrf.mxu0
        %1027 = vdwg.mxu0
        %1028 = vmatpush.bf16.msra.mxu0 0
        %1029 = vmatpush.bf16.msra.mxu0 %v931
        %1030 = vmatpush.bf16.msra.mxu0 %v787
        %1031 = vmatpush.bf16.msra.mxu0 %v771
        %1032 = vmatpush.bf16.msra.mxu0 %v755
        %1033 = vmatpush.bf16.msra.mxu0 %v739
        %1034 = vmatpush.bf16.msra.mxu0 %v723
        %1035 = vmatpush.bf16.msra.mxu0 %v707
        %1036 = vmatmul.bf16.gmra.mxu0 %v912
        %v1037 = vpop.f32.mrf.mxu0
        %v1038 = vadd.f32 %v363, %v1037
        %v1039 = vpop.f32.mrf.mxu0
        %1040 = vdwg.mxu0
        %1041 = vmatpush.bf16.msra.mxu0 0
        %1042 = vmatpush.bf16.msra.mxu0 %v934
        %1043 = vmatpush.bf16.msra.mxu0 %v788
        %1044 = vmatpush.bf16.msra.mxu0 %v772
        %1045 = vmatpush.bf16.msra.mxu0 %v756
        %1046 = vmatpush.bf16.msra.mxu0 %v740
        %1047 = vmatpush.bf16.msra.mxu0 %v724
        %1048 = vmatpush.bf16.msra.mxu0 %v708
        %1049 = vmatmul.bf16.gmra.mxu0 %v912
        %v1050 = vpop.f32.mrf.mxu0
        %v1051 = vadd.f32 %v364, %v1050
        %v1052 = vpop.f32.mrf.mxu0
        %1053 = vdwg.mxu0
        %1054 = vmatpush.bf16.msra.mxu0 0
        %1055 = vmatpush.bf16.msra.mxu0 %v937
        %1056 = vmatpush.bf16.msra.mxu0 %v789
        %1057 = vmatpush.bf16.msra.mxu0 %v773
        %1058 = vmatpush.bf16.msra.mxu0 %v757
        %1059 = vmatpush.bf16.msra.mxu0 %v741
        %1060 = vmatpush.bf16.msra.mxu0 %v725
        %1061 = vmatpush.bf16.msra.mxu0 %v709
        %1062 = vmatmul.bf16.gmra.mxu0 %v912
        %v1063 = vpop.f32.mrf.mxu0
        %v1064 = vadd.f32 %v365, %v1063
        %v1065 = vpop.f32.mrf.mxu0
        %1066 = vdwg.mxu0
        %1067 = vmatpush.bf16.msra.mxu0 0
        %1068 = vmatpush.bf16.msra.mxu0 %v940
        %1069 = vmatpush.bf16.msra.mxu0 %v790
        %1070 = vmatpush.bf16.msra.mxu0 %v774
        %1071 = vmatpush.bf16.msra.mxu0 %v758
        %1072 = vmatpush.bf16.msra.mxu0 %v742
        %1073 = vmatpush.bf16.msra.mxu0 %v726
        %1074 = vmatpush.bf16.msra.mxu0 %v710
        %1075 = vmatmul.bf16.gmra.mxu0 %v912
        %v1076 = vpop.f32.mrf.mxu0
        %v1077 = vadd.f32 %v366, %v1076
        %v1078 = vpop.f32.mrf.mxu0
        %1079 = vdwg.mxu0
        %1080 = vmatpush.bf16.msra.mxu0 0
        %1081 = vmatpush.bf16.msra.mxu0 %v943
        %1082 = vmatpush.bf16.msra.mxu0 %v791
        %1083 = vmatpush.bf16.msra.mxu0 %v775
        %1084 = vmatpush.bf16.msra.mxu0 %v759
        %1085 = vmatpush.bf16.msra.mxu0 %v743
        %1086 = vmatpush.bf16.msra.mxu0 %v727
        %1087 = vmatpush.bf16.msra.mxu0 %v711
        %1088 = vmatmul.bf16.gmra.mxu0 %v912
        %v1089 = vpop.f32.mrf.mxu0
        %v1090 = vadd.f32 %v367, %v1089
        %v1091 = vpop.f32.mrf.mxu0
        %1092 = vdwg.mxu0
        %1093 = vmatpush.bf16.msra.mxu0 0
        %1094 = vmatpush.bf16.msra.mxu0 %v946
        %1095 = vmatpush.bf16.msra.mxu0 %v792
        %1096 = vmatpush.bf16.msra.mxu0 %v776
        %1097 = vmatpush.bf16.msra.mxu0 %v760
        %1098 = vmatpush.bf16.msra.mxu0 %v744
        %1099 = vmatpush.bf16.msra.mxu0 %v728
        %1100 = vmatpush.bf16.msra.mxu0 %v712
        %1101 = vmatmul.bf16.gmra.mxu0 %v912
        %v1102 = vpop.f32.mrf.mxu0
        %v1103 = vadd.f32 %v368, %v1102
        %v1104 = vpop.f32.mrf.mxu0
        %1105 = vdwg.mxu0
        %1106 = vmatpush.bf16.msra.mxu0 0
        %1107 = vmatpush.bf16.msra.mxu0 %v949
        %1108 = vmatpush.bf16.msra.mxu0 %v793
        %1109 = vmatpush.bf16.msra.mxu0 %v777
        %1110 = vmatpush.bf16.msra.mxu0 %v761
        %1111 = vmatpush.bf16.msra.mxu0 %v745
        %1112 = vmatpush.bf16.msra.mxu0 %v729
        %1113 = vmatpush.bf16.msra.mxu0 %v713
        %1114 = vmatmul.bf16.gmra.mxu0 %v912
        %v1115 = vpop.f32.mrf.mxu0
        %v1116 = vadd.f32 %v369, %v1115
        %v1117 = vpop.f32.mrf.mxu0
        %1118 = vdwg.mxu0
        %1119 = vmatpush.bf16.msra.mxu0 0
        %1120 = vmatpush.bf16.msra.mxu0 %v952
        %1121 = vmatpush.bf16.msra.mxu0 %v794
        %1122 = vmatpush.bf16.msra.mxu0 %v778
        %1123 = vmatpush.bf16.msra.mxu0 %v762
        %1124 = vmatpush.bf16.msra.mxu0 %v746
        %1125 = vmatpush.bf16.msra.mxu0 %v730
        %1126 = vmatpush.bf16.msra.mxu0 %v714
        %1127 = vmatmul.bf16.gmra.mxu0 %v912
        %v1128 = vpop.f32.mrf.mxu0
        %v1129 = vadd.f32 %v370, %v1128
        %v1130 = vpop.f32.mrf.mxu0
        %1131 = vdwg.mxu0
        %1132 = vmatpush.bf16.msra.mxu0 0
        %1133 = vmatpush.bf16.msra.mxu0 %v955
        %1134 = vmatpush.bf16.msra.mxu0 %v795
        %1135 = vmatpush.bf16.msra.mxu0 %v779
        %1136 = vmatpush.bf16.msra.mxu0 %v763
        %1137 = vmatpush.bf16.msra.mxu0 %v747
        %1138 = vmatpush.bf16.msra.mxu0 %v731
        %1139 = vmatpush.bf16.msra.mxu0 %v715
        %1140 = vmatmul.bf16.gmra.mxu0 %v912
        %v1141 = vpop.f32.mrf.mxu0
        %v1142 = vadd.f32 %v371, %v1141
        %v1143 = vpop.f32.mrf.mxu0
        %1144 = vdwg.mxu0
        %1145 = vmatpush.bf16.msra.mxu0 0
        %1146 = vmatpush.bf16.msra.mxu0 %v958
        %1147 = vmatpush.bf16.msra.mxu0 %v796
        %1148 = vmatpush.bf16.msra.mxu0 %v780
        %1149 = vmatpush.bf16.msra.mxu0 %v764
        %1150 = vmatpush.bf16.msra.mxu0 %v748
        %1151 = vmatpush.bf16.msra.mxu0 %v732
        %1152 = vmatpush.bf16.msra.mxu0 %v716
        %1153 = vmatmul.bf16.gmra.mxu0 %v912
        %v1154 = vpop.f32.mrf.mxu0
        %v1155 = vadd.f32 %v372, %v1154
        %v1156 = vpop.f32.mrf.mxu0
        %1157 = vdwg.mxu0
        %1158 = vmatpush.bf16.msra.mxu0 0
        %1159 = vmatpush.bf16.msra.mxu0 %v961
        %1160 = vmatpush.bf16.msra.mxu0 %v797
        %1161 = vmatpush.bf16.msra.mxu0 %v781
        %1162 = vmatpush.bf16.msra.mxu0 %v765
        %1163 = vmatpush.bf16.msra.mxu0 %v749
        %1164 = vmatpush.bf16.msra.mxu0 %v733
        %1165 = vmatpush.bf16.msra.mxu0 %v717
        %1166 = vmatmul.bf16.gmra.mxu0 %v912
        %v1167 = vpop.f32.mrf.mxu0
        %v1168 = vadd.f32 %v373, %v1167
        %v1169 = vpop.f32.mrf.mxu0
        %1170 = vdwg.mxu0
        %v1171 = vmax.f32 %v973, 0.0
        %v1172 = vmax.f32 %v986, 0.0
        %v1173 = vmax.f32 %v999, 0.0
        %v1174 = vmax.f32 %v1012, 0.0
        %v1175 = vmax.f32 %v1025, 0.0
        %v1176 = vmax.f32 %v1038, 0.0
        %v1177 = vmax.f32 %v1051, 0.0
        %v1178 = vmax.f32 %v1064, 0.0
        %v1179 = vmax.f32 %v1077, 0.0
        %v1180 = vmax.f32 %v1090, 0.0
        %v1181 = vmax.f32 %v1103, 0.0
        %v1182 = vmax.f32 %v1116, 0.0
        %v1183 = vmax.f32 %v1129, 0.0
        %v1184 = vmax.f32 %v1142, 0.0
        %v1185 = vmax.f32 %v1155, 0.0
        %v1186 = vmax.f32 %v1168, 0.0
        %v1203 = vrot.slane %v1172, 6
        %v1204 = vrot.slane %v1173, 4
        %v1205 = vrot.slane %v1174, 2
        %v1206 = vrot.slane %v1176, 6
        %v1207 = vrot.slane %v1177, 4
        %v1208 = vrot.slane %v1178, 2
        %v1209 = vrot.slane %v1180, 6
        %v1210 = vrot.slane %v1181, 4
        %v1211 = vrot.slane %v1182, 2
        %v1212 = vrot.slane %v1184, 6
        %v1213 = vrot.slane %v1185, 4
        %v1214 = vrot.slane %v1186, 2
        %v1215 = vsel %vm914, %v1171, %v1203
        %vm1216 = vcmask 1045508
        %v1217 = vsel %vm1216, %v1204, %v1205
        %vm1218 = vcmask 1043456
        %v1219 = vsel %vm1218, %v1215, %v1217
        %v1220 = vsel %vm914, %v1175, %v1206
        %v1221 = vsel %vm1216, %v1207, %v1208
        %v1222 = vsel %vm1218, %v1220, %v1221
        %v1223 = vsel %vm914, %v1179, %v1209
        %v1224 = vsel %vm1216, %v1210, %v1211
        %v1225 = vsel %vm1218, %v1223, %v1224
        %v1226 = vsel %vm914, %v1183, %v1212
        %v1227 = vsel %vm1216, %v1213, %v1214
        %v1228 = vsel %vm1218, %v1226, %v1227
        %1233 = vst [vmem:[%s245] sm:$0xff] %v1219
        %1234 = vst [vmem:[%s245 + $0x8] sm:$0xff] %v1222
        %1235 = vst [vmem:[%s245 + $0x10] sm:$0xff] %v1225
        %1236 = vst [vmem:[%s245 + $0x18] sm:$0xff] %v1228
        %s1237 = smul.u32 16, %s18
        %p1238 = scmp.lt.s32.totalorder %s1237, 63
        %s1239 = scalar_select %p1238, %s1237, 63
        %s1240 = smul.addr %s1239, 2
        %s1241 = scalar_lea.vmem %s3, %s1240
        // Predicated region
        $region45: #{generator_forward.4} parent=31 // pred_check
          %p1242 = pneg %p109
        $region46: #{generator_forward.4} parent=31 // pred_check_branch
          %1244 = sbr.rel (%p1242) target = $region48
        $region47: #{generator_forward.4} parent=31 // pred_region
          %s1245 = smul.u32 16, %s18
        $region48: #{generator_forward.4} parent=31 // pred_fallthru
          _
      $region32: #{generator_forward.4} parent=5 // pred_fallthru
        _
      %p1246 = scmp.le.s32.totalorder 2, %s13
      // Predicated region
      $region49: #{generator_forward.4} parent=5 // pred_check
        %p1247 = pneg %p1246
      $region50: #{generator_forward.4} parent=5 // pred_check_branch
        %1249 = sbr.rel (%p1247) target = $region52
      $region51: #{generator_forward.4} parent=5 // pred_region
        %s1250 = ssub.s32 %s13, 2
        // Predicated region
        $region53: #{generator_forward.4} parent=51 // pred_check
          %p1251 = pneg %p115
        $region54: #{generator_forward.4} parent=51 // pred_check_branch
          %1253 = sbr.rel (%p1251) target = $region56
        $region55: #{generator_forward.4} parent=51 // pred_region
          %s1254 = smul.u32 16, %s19
          %p1255 = scmp.lt.s32.totalorder %s1254, 63
          %s1256 = scalar_select %p1255, %s1254, 63
          %s1257 = smul.addr %s1256, 2
          %s1258 = scalar_lea.vmem %s3, %s1257
        $region56: #{generator_forward.4} parent=51 // pred_fallthru
          _
      $region52: #{generator_forward.4} parent=5 // pred_fallthru
        _
    $region6: #{generator_forward.4} parent=1 // loop_footer
      %s17 = sadd.s32 1, %s13
    $region7: #{generator_forward.4} parent=1 // loop_footer_branch
      %12 = sbr.rel target = $region3
    $region8: #{generator_forward.4} parent=1 // loop_exit
      _
    %1259 = vsyncpa [#allocation3], 1
    %s1260 = scalar_lea.sflag [#allocation3], 1
    %1261 = vsyncpa %s1260, 1
    %1262 = vsyncpa [#allocation5], 1
    %s1263 = scalar_lea.sflag [#allocation5], 1
    %1264 = vsyncpa %s1263, 1

// kernel: generator_forward.5
$region0: #{generator_forward.5}
  #allocation0 [shape = 'u32[]', space=smem, size = 0x4, offset = 0x4, fixed_abs, tag = 'smem constant byte address 0x4 - core index']
  #allocation1 [shape = 'u32[72,128]{1,0:T(1,128)}', space=vmem, size = 0x9000, scoped, tag = 'internal scratch']
  %s0 = inlined_call_operand.vmem [shape: f32[8,5,9,512], index: 0, kind: input, shape index: {}]
  %s1 = inlined_call_operand.hbm [shape: bf16[4,4,512,256], index: 1, kind: input, shape index: {}]
  %s2 = inlined_call_operand.vmem [shape: f32[1,256], index: 2, kind: input, shape index: {}]
  %s3 = inlined_call_operand.vmem [shape: f32[4,64,256], index: 3, kind: output, shape index: {}]
  %s4 = sld [smem:[#allocation0]]
  $region49: #{generator_forward.5} parent=0
    _
  %s6 = ssub.s32 1, %s4
  %s7 = scalar_select 0, %s6, %s4
  $region1: #{generator_forward.5} parent=0
    #allocation2 [shape = 'u8[2097152]{0}', space=vmem, size = 0x200000, scoped, tag = 'input window, operand 1']
    #allocation3 [shape = 's32[2]{0}', space=sflag, size = 0x8, scoped, tag = 'scoped memory for generator_forward.5']
    %8 = vsyncpa [#allocation3], 0
    %s9 = scalar_lea.sflag [#allocation3], 1
    %10 = vsyncpa %s9, 0
    loop: start=0, step=1, limit=6
    $region2: #{generator_forward.5} parent=1 // loop_pre_header
      _
    $region3: #{generator_forward.5} parent=1 // loop_header
      %s12 = sphi 0, %s16
      %p13 = scmp.ge.s32.totalorder %s12, 6
      %s22 = sphi 0, %s24
      %s25 = sphi 0, %s22
      %s26 = sphi 0, %s25
      %s42 = sphi 0, %s26
      %s48 = sphi 0, %s50
      %s51 = sphi 0, %s48
      %s52 = sphi 0, %s51
      %s68 = sphi 0, %s52
      %s72 = sphi 0, %s72
      %s74 = sphi 0, %s72
      %s75 = sphi 0, %s74
      %s89 = sphi 0, %s75
      %s95 = sphi 0, %s97
      %s98 = sphi 0, %s95
      %s99 = sphi 0, %s98
      %s115 = sphi 0, %s99
    $region4: #{generator_forward.5} parent=1 // loop_header_branch
      %15 = sbr.rel (%p13) target = $region8
    $region5: #{generator_forward.5} parent=1 // loop_body
      %s17 = ssub.s32 %s12, 1
      %s18 = ssub.s32 %s12, 2
      %s19 = sadd.s32 %s12, 1
      %s20 = ssub.s32 %s12, %s19
      %p21 = scmp.eq.s32.totalorder %s20, 0
      %s23 = sadd.s32 %s22, 1
      %s24 = scalar_select %p21, %s22, %s23
      %p27 = pneg %p21
      %p28 = scmp.eq.s32.totalorder %s12, 3
      %p29 = por %p27, %p28
      %p30 = scmp.ne.s32.totalorder %s22, %s25
      %p31 = scmp.eq.s32.totalorder %s12, 0
      %p32 = por %p30, %p31
      %p33 = scmp.ne.s32.totalorder %s22, %s25
      %p34 = scmp.eq.s32.totalorder %s17, 3
      %p35 = por %p33, %p34
      %p36 = scmp.ne.s32.totalorder %s25, %s26
      %p37 = scmp.eq.s32.totalorder %s17, 0
      %p38 = por %p36, %p37
      %p39 = scmp.ne.s32.totalorder %s25, %s26
      %p40 = scmp.eq.s32.totalorder %s18, 3
      %p41 = por %p39, %p40
      %p43 = scmp.ne.s32.totalorder %s26, %s42
      %p44 = scmp.eq.s32.totalorder %s18, 0
      %p45 = por %p43, %p44
      %s46 = ssub.s32 %s12, %s19
      %p47 = scmp.eq.s32.totalorder %s46, 0
      %s49 = sadd.s32 %s48, 1
      %s50 = scalar_select %p47, %s48, %s49
      %p53 = pneg %p47
      %p54 = scmp.eq.s32.totalorder %s12, 3
      %p55 = por %p53, %p54
      %p56 = scmp.ne.s32.totalorder %s48, %s51
      %p57 = scmp.eq.s32.totalorder %s12, 0
      %p58 = por %p56, %p57
      %p59 = scmp.ne.s32.totalorder %s48, %s51
      %p60 = scmp.eq.s32.totalorder %s17, 3
      %p61 = por %p59, %p60
      %p62 = scmp.ne.s32.totalorder %s51, %s52
      %p63 = scmp.eq.s32.totalorder %s17, 0
      %p64 = por %p62, %p63
      %p65 = scmp.ne.s32.totalorder %s51, %s52
      %p66 = scmp.eq.s32.totalorder %s18, 3
      %p67 = por %p65, %p66
      %p69 = scmp.ne.s32.totalorder %s52, %s68
      %p70 = scmp.eq.s32.totalorder %s18, 0
      %p71 = por %p69, %p70
      %s73 = sadd.s32 %s72, 1
      %p76 = scmp.eq.s32.totalorder %s12, 3
      %p77 = scmp.ne.s32.totalorder %s72, %s74
      %p78 = scmp.eq.s32.totalorder %s12, 0
      %p79 = por %p77, %p78
      %p80 = scmp.ne.s32.totalorder %s72, %s74
      %p81 = scmp.eq.s32.totalorder %s17, 3
      %p82 = por %p80, %p81
      %p83 = scmp.ne.s32.totalorder %s74, %s75
      %p84 = scmp.eq.s32.totalorder %s17, 0
      %p85 = por %p83, %p84
      %p86 = scmp.ne.s32.totalorder %s74, %s75
      %p87 = scmp.eq.s32.totalorder %s18, 3
      %p88 = por %p86, %p87
      %p90 = scmp.ne.s32.totalorder %s75, %s89
      %p91 = scmp.eq.s32.totalorder %s18, 0
      %p92 = por %p90, %p91
      %s93 = ssub.s32 %s12, %s19
      %p94 = scmp.eq.s32.totalorder %s93, 0
      %s96 = sadd.s32 %s95, 1
      %s97 = scalar_select %p94, %s95, %s96
      %p100 = pneg %p94
      %p101 = scmp.eq.s32.totalorder %s12, 3
      %p102 = por %p100, %p101
      %p103 = scmp.ne.s32.totalorder %s95, %s98
      %p104 = scmp.eq.s32.totalorder %s12, 0
      %p105 = por %p103, %p104
      %p106 = scmp.ne.s32.totalorder %s95, %s98
      %p107 = scmp.eq.s32.totalorder %s17, 3
      %p108 = por %p106, %p107
      %p109 = scmp.ne.s32.totalorder %s98, %s99
      %p110 = scmp.eq.s32.totalorder %s17, 0
      %p111 = por %p109, %p110
      %p112 = scmp.ne.s32.totalorder %s98, %s99
      %p113 = scmp.eq.s32.totalorder %s18, 3
      %p114 = por %p112, %p113
      %p116 = scmp.ne.s32.totalorder %s99, %s115
      %p117 = scmp.eq.s32.totalorder %s18, 0
      %p118 = por %p116, %p117
      %p119 = scmp.le.s32.totalorder 1, %s12
      %p120 = scmp.lt.s32.totalorder %s12, 5
      %p121 = pnand %p119, %p120
      %p122 = pneg %p121
      // Predicated region
      $region9: #{generator_forward.5} parent=5 // pred_check
        _
      $region10: #{generator_forward.5} parent=5 // pred_check_branch
        %124 = sbr.rel (%p121) target = $region12
      $region11: #{generator_forward.5} parent=5 // pred_region
        %s125 = ssub.s32 %s12, 1
        // Predicated region
        $region13: #{generator_forward.5} parent=11 // pred_check
          %p126 = pneg %p85
        $region14: #{generator_forward.5} parent=11 // pred_check_branch
          %128 = sbr.rel (%p126) target = $region16
        $region15: #{generator_forward.5} parent=11 // pred_region
          _
        $region16: #{generator_forward.5} parent=11 // pred_fallthru
          _
      $region12: #{generator_forward.5} parent=5 // pred_fallthru
        _
      %p129 = scmp.lt.s32.totalorder %s12, 4
      // Predicated region
      $region17: #{generator_forward.5} parent=5 // pred_check
        %p130 = pneg %p129
      $region18: #{generator_forward.5} parent=5 // pred_check_branch
        %132 = sbr.rel (%p130) target = $region20
      $region19: #{generator_forward.5} parent=5 // pred_region
        // Predicated region
        $region21: #{generator_forward.5} parent=19 // pred_check
          %p133 = pneg %p32
        $region22: #{generator_forward.5} parent=19 // pred_check_branch
          %135 = sbr.rel (%p133) target = $region24
        $region23: #{generator_forward.5} parent=19 // pred_region
          %s136 = smul.u32 2, %s12
          %p137 = scmp.lt.s32.totalorder %s136, 7
          %s138 = scalar_select %p137, %s136, 7
          %s139 = smul.addr %s138, 40
          %s140 = smul.addr %s139, 8
          %s141 = scalar_lea.vmem %s0, %s140
          %s142 = smul.u32 2, %s12
        $region24: #{generator_forward.5} parent=19 // pred_fallthru
          _
        // Predicated region
        $region25: #{generator_forward.5} parent=19 // pred_check
          %p143 = pneg %p58
        $region26: #{generator_forward.5} parent=19 // pred_check_branch
          %145 = sbr.rel (%p143) target = $region28
        $region27: #{generator_forward.5} parent=19 // pred_region
          %s146 = sand.u32 %s48, 1
          %s147 = scalar_lea.sflag [#allocation3], %s146
          %s148 = sand.u32 %s48, 1
          %s149 = smul.addr %s148, 2048
          %s150 = scalar_lea.vmem [#allocation2], %s149
          %152 = vsyncadd %s147, 0
          %s153 = smul.addr %s12, 512
          %s154 = smul.addr %s153, 4
          %s155 = scalar_lea.hbm %s1, %s154
          %s156 = sshll.u32 %s155, 4
          %s157 = int_to_ptr.hbm [resolvable:$true] %s156
          %s158 = sshll.u32 %s150, 4
          %s159 = int_to_ptr.vmem [resolvable:$true] %s158
          %164 = dma.hbm_to_vmem [thread:$0]  %s157, 32768, %s159, %s147, 128, 128, 8
        $region28: #{generator_forward.5} parent=19 // pred_fallthru
          _
      $region20: #{generator_forward.5} parent=5 // pred_fallthru
        _
      %p165 = scmp.le.s32.totalorder 1, %s12
      %p166 = scmp.lt.s32.totalorder %s12, 5
      %p167 = pnand %p165, %p166
      %p168 = pneg %p167
      // Predicated region
      $region29: #{generator_forward.5} parent=5 // pred_check
        _
      $region30: #{generator_forward.5} parent=5 // pred_check_branch
        %170 = sbr.rel (%p167) target = $region32
      $region31: #{generator_forward.5} parent=5 // pred_region
        %s171 = ssub.s32 %s12, 1
        %s172 = sand.u32 %s51, 1
        %s173 = scalar_lea.sflag [#allocation3], %s172
        %s174 = sand.u32 %s51, 1
        %s175 = smul.addr %s174, 2048
        %s176 = scalar_lea.vmem [#allocation2], %s175
        // Predicated region
        $region33: #{generator_forward.5} parent=31 // pred_check
          %p177 = pneg %p64
        $region34: #{generator_forward.5} parent=31 // pred_check_branch
          %179 = sbr.rel (%p177) target = $region36
        $region35: #{generator_forward.5} parent=31 // pred_region
          %181 = dma.done %s173, 32768
        $region36: #{generator_forward.5} parent=31 // pred_fallthru
          _
        %s182 = smul.u32 2, %s17
        %p183 = scmp.lt.s32.totalorder %s182, 7
        %s184 = scalar_select %p183, %s182, 7
        %s185 = smul.addr %s184, 40
        %s186 = smul.addr %s185, 8
        %s187 = scalar_lea.vmem %s0, %s186
        %p188 = pneg %p38
        %p189 = pneg %p35
        %s190 = sand.u32 %s51, 1
        %s191 = scalar_lea.sflag [#allocation3], %s190
        %s192 = sand.u32 %s51, 1
        %s193 = smul.addr %s192, 2048
        %s194 = scalar_lea.vmem [#allocation2], %s193
        %p195 = pneg %p64
        %p196 = pneg %p61
        %p197 = pneg %p85
        %p198 = pneg %p82
        %p199 = pneg %p111
        %p200 = pneg %p108
        %p201 = scmp.lt.s32.totalorder %s17, 3
        %s202 = scalar_select %p201, %s17, 3
        %s203 = smul.addr %s202, 16
        %s204 = smul.addr %s203, 8
        %s205 = scalar_lea.vmem %s3, %s204
        %s206 = smul.u32 2, %s17
        %p207 = scmp.lt.s32.totalorder %s206, 7
        %s208 = scalar_select %p207, %s206, 7
        %s209 = smul.addr %s208, 40
        %s210 = smul.addr %s209, 8
        %s211 = scalar_lea.vmem %s0, %s210
        %s212 = smul.u32 2, %s17
        %p213 = scmp.lt.s32.totalorder %s17, 3
        %s214 = scalar_select %p213, %s17, 3
        %s215 = smul.addr %s214, 16
        %s216 = smul.addr %s215, 8
        %s217 = scalar_lea.vmem %s3, %s216
        %v218 = vld [vmem:[%s211] sm:$0xff]
        %v219 = vld [vmem:[%s211 + $0x8] sm:$0xff]
        %v220 = vld [vmem:[%s211 + $0x10] sm:$0xff]
        %v221 = vld [vmem:[%s211 + $0x18] sm:$0xff]
        %v222 = vld [vmem:[%s211 + $0x40] sm:$0xff]
        %v223 = vld [vmem:[%s211 + $0x48] sm:$0xff]
        %v224 = vld [vmem:[%s211 + $0x50] sm:$0xff]
        %v225 = vld [vmem:[%s211 + $0x58] sm:$0xff]
        %v226 = vld [vmem:[%s211 + $0x80] sm:$0xff]
        %v227 = vld [vmem:[%s211 + $0x88] sm:$0xff]
        %v228 = vld [vmem:[%s211 + $0x90] sm:$0xff]
        %v229 = vld [vmem:[%s211 + $0x98] sm:$0xff]
        %v230 = vld [vmem:[%s211 + $0xc0] sm:$0xff]
        %v231 = vld [vmem:[%s211 + $0xc8] sm:$0xff]
        %v232 = vld [vmem:[%s211 + $0xd0] sm:$0xff]
        %v233 = vld [vmem:[%s211 + $0xd8] sm:$0xff]
        %v234 = vld [vmem:[%s211 + $0x140] sm:$0xff]
        %v235 = vld [vmem:[%s211 + $0x148] sm:$0xff]
        %v236 = vld [vmem:[%s211 + $0x150] sm:$0xff]
        %v237 = vld [vmem:[%s211 + $0x158] sm:$0xff]
        %v238 = vld [vmem:[%s211 + $0x180] sm:$0xff]
        %v239 = vld [vmem:[%s211 + $0x188] sm:$0xff]
        %v240 = vld [vmem:[%s211 + $0x190] sm:$0xff]
        %v241 = vld [vmem:[%s211 + $0x198] sm:$0xff]
        %v242 = vld [vmem:[%s211 + $0x1c0] sm:$0xff]
        %v243 = vld [vmem:[%s211 + $0x1c8] sm:$0xff]
        %v244 = vld [vmem:[%s211 + $0x1d0] sm:$0xff]
        %v245 = vld [vmem:[%s211 + $0x1d8] sm:$0xff]
        %v246 = vld [vmem:[%s211 + $0x200] sm:$0xff]
        %v247 = vld [vmem:[%s211 + $0x208] sm:$0xff]
        %v248 = vld [vmem:[%s211 + $0x210] sm:$0xff]
        %v249 = vld [vmem:[%s211 + $0x218] sm:$0xff]
        %v250 = vld [vmem:[%s176] sm:$0xff]
        %v251 = vld [vmem:[%s176 + $0x8] sm:$0xff]
        %v252 = vld [vmem:[%s176 + $0x10] sm:$0xff]
        %v253 = vld [vmem:[%s176 + $0x18] sm:$0xff]
        %v254 = vld [vmem:[%s176 + $0x20] sm:$0xff]
        %v255 = vld [vmem:[%s176 + $0x28] sm:$0xff]
        %v256 = vld [vmem:[%s176 + $0x30] sm:$0xff]
        %v257 = vld [vmem:[%s176 + $0x38] sm:$0xff]
        %v258 = vld [vmem:[%s176 + $0x40] sm:$0xff]
        %v259 = vld [vmem:[%s176 + $0x48] sm:$0xff]
        %v260 = vld [vmem:[%s176 + $0x50] sm:$0xff]
        %v261 = vld [vmem:[%s176 + $0x58] sm:$0xff]
        %v262 = vld [vmem:[%s176 + $0x60] sm:$0xff]
        %v263 = vld [vmem:[%s176 + $0x68] sm:$0xff]
        %v264 = vld [vmem:[%s176 + $0x70] sm:$0xff]
        %v265 = vld [vmem:[%s176 + $0x78] sm:$0xff]
        %v266 = vld [vmem:[%s176 + $0x80] sm:$0xff]
        %v267 = vld [vmem:[%s176 + $0x88] sm:$0xff]
        %v268 = vld [vmem:[%s176 + $0x90] sm:$0xff]
        %v269 = vld [vmem:[%s176 + $0x98] sm:$0xff]
        %v270 = vld [vmem:[%s176 + $0xa0] sm:$0xff]
        %v271 = vld [vmem:[%s176 + $0xa8] sm:$0xff]
        %v272 = vld [vmem:[%s176 + $0xb0] sm:$0xff]
        %v273 = vld [vmem:[%s176 + $0xb8] sm:$0xff]
        %v274 = vld [vmem:[%s176 + $0xc0] sm:$0xff]
        %v275 = vld [vmem:[%s176 + $0xc8] sm:$0xff]
        %v276 = vld [vmem:[%s176 + $0xd0] sm:$0xff]
        %v277 = vld [vmem:[%s176 + $0xd8] sm:$0xff]
        %v278 = vld [vmem:[%s176 + $0xe0] sm:$0xff]
        %v279 = vld [vmem:[%s176 + $0xe8] sm:$0xff]
        %v280 = vld [vmem:[%s176 + $0xf0] sm:$0xff]
        %v281 = vld [vmem:[%s176 + $0xf8] sm:$0xff]
        %v282 = vld [vmem:[%s176 + $0x100] sm:$0xff]
        %v283 = vld [vmem:[%s176 + $0x108] sm:$0xff]
        %v284 = vld [vmem:[%s176 + $0x110] sm:$0xff]
        %v285 = vld [vmem:[%s176 + $0x118] sm:$0xff]
        %v286 = vld [vmem:[%s176 + $0x120] sm:$0xff]
        %v287 = vld [vmem:[%s176 + $0x128] sm:$0xff]
        %v288 = vld [vmem:[%s176 + $0x130] sm:$0xff]
        %v289 = vld [vmem:[%s176 + $0x138] sm:$0xff]
        %v290 = vld [vmem:[%s176 + $0x140] sm:$0xff]
        %v291 = vld [vmem:[%s176 + $0x148] sm:$0xff]
        %v292 = vld [vmem:[%s176 + $0x150] sm:$0xff]
        %v293 = vld [vmem:[%s176 + $0x158] sm:$0xff]
        %v294 = vld [vmem:[%s176 + $0x160] sm:$0xff]
        %v295 = vld [vmem:[%s176 + $0x168] sm:$0xff]
        %v296 = vld [vmem:[%s176 + $0x170] sm:$0xff]
        %v297 = vld [vmem:[%s176 + $0x178] sm:$0xff]
        %v298 = vld [vmem:[%s176 + $0x180] sm:$0xff]
        %v299 = vld [vmem:[%s176 + $0x188] sm:$0xff]
        %v300 = vld [vmem:[%s176 + $0x190] sm:$0xff]
        %v301 = vld [vmem:[%s176 + $0x198] sm:$0xff]
        %v302 = vld [vmem:[%s176 + $0x1a0] sm:$0xff]
        %v303 = vld [vmem:[%s176 + $0x1a8] sm:$0xff]
        %v304 = vld [vmem:[%s176 + $0x1b0] sm:$0xff]
        %v305 = vld [vmem:[%s176 + $0x1b8] sm:$0xff]
        %v306 = vld [vmem:[%s176 + $0x1c0] sm:$0xff]
        %v307 = vld [vmem:[%s176 + $0x1c8] sm:$0xff]
        %v308 = vld [vmem:[%s176 + $0x1d0] sm:$0xff]
        %v309 = vld [vmem:[%s176 + $0x1d8] sm:$0xff]
        %v310 = vld [vmem:[%s176 + $0x1e0] sm:$0xff]
        %v311 = vld [vmem:[%s176 + $0x1e8] sm:$0xff]
        %v312 = vld [vmem:[%s176 + $0x1f0] sm:$0xff]
        %v313 = vld [vmem:[%s176 + $0x1f8] sm:$0xff]
        %v314 = vpack.c.bf16 %v222, %v218
        %v315 = vpack.c.bf16 %v223, %v219
        %v316 = vpack.c.bf16 %v224, %v220
        %v317 = vpack.c.bf16 %v225, %v221
        %v318 = vpack.c.bf16 %v230, %v226
        %v319 = vpack.c.bf16 %v231, %v227
        %v320 = vpack.c.bf16 %v232, %v228
        %v321 = vpack.c.bf16 %v233, %v229
        %v322 = vpack.c.bf16 %v238, %v234
        %v323 = vpack.c.bf16 %v239, %v235
        %v324 = vpack.c.bf16 %v240, %v236
        %v325 = vpack.c.bf16 %v241, %v237
        %v326 = vpack.c.bf16 %v246, %v242
        %v327 = vpack.c.bf16 %v247, %v243
        %v328 = vpack.c.bf16 %v248, %v244
        %v329 = vpack.c.bf16 %v249, %v245
        %v330 = vld [vmem:[%s211] sm:$0xfe]
        %v331 = vld [vmem:[%s211 + $0x8] sm:$0xfe]
        %v332 = vld [vmem:[%s211 + $0x10] sm:$0xfe]
        %v333 = vld [vmem:[%s211 + $0x18] sm:$0xfe]
        %v334 = vld [vmem:[%s211 + $0x20] sm:$0x1]
        %v335 = vld [vmem:[%s211 + $0x28] sm:$0x1]
        %v336 = vld [vmem:[%s211 + $0x30] sm:$0x1]
        %v337 = vld [vmem:[%s211 + $0x38] sm:$0x1]
        %v338 = vld [vmem:[%s211 + $0x40] sm:$0xfe]
        %v339 = vld [vmem:[%s211 + $0x48] sm:$0xfe]
        %v340 = vld [vmem:[%s211 + $0x50] sm:$0xfe]
        %v341 = vld [vmem:[%s211 + $0x58] sm:$0xfe]
        %v342 = vld [vmem:[%s211 + $0x60] sm:$0x1]
        %v343 = vld [vmem:[%s211 + $0x68] sm:$0x1]
        %v344 = vld [vmem:[%s211 + $0x70] sm:$0x1]
        %v345 = vld [vmem:[%s211 + $0x78] sm:$0x1]
        %v346 = vld [vmem:[%s211 + $0x80] sm:$0xfe]
        %v347 = vld [vmem:[%s211 + $0x88] sm:$0xfe]
        %v348 = vld [vmem:[%s211 + $0x90] sm:$0xfe]
        %v349 = vld [vmem:[%s211 + $0x98] sm:$0xfe]
        %v350 = vld [vmem:[%s211 + $0xa0] sm:$0x1]
        %v351 = vld [vmem:[%s211 + $0xa8] sm:$0x1]
        %v352 = vld [vmem:[%s211 + $0xb0] sm:$0x1]
        %v353 = vld [vmem:[%s211 + $0xb8] sm:$0x1]
        %v354 = vld [vmem:[%s211 + $0xc0] sm:$0xfe]
        %v355 = vld [vmem:[%s211 + $0xc8] sm:$0xfe]
        %v356 = vld [vmem:[%s211 + $0xd0] sm:$0xfe]
        %v357 = vld [vmem:[%s211 + $0xd8] sm:$0xfe]
        %v358 = vld [vmem:[%s211 + $0xe0] sm:$0x1]
        %v359 = vld [vmem:[%s211 + $0xe8] sm:$0x1]
        %v360 = vld [vmem:[%s211 + $0xf0] sm:$0x1]
        %v361 = vld [vmem:[%s211 + $0xf8] sm:$0x1]
        %v362 = vld [vmem:[%s211 + $0x140] sm:$0xfe]
        %v363 = vld [vmem:[%s211 + $0x148] sm:$0xfe]
        %v364 = vld [vmem:[%s211 + $0x150] sm:$0xfe]
        %v365 = vld [vmem:[%s211 + $0x158] sm:$0xfe]
        %v366 = vld [vmem:[%s211 + $0x160] sm:$0x1]
        %v367 = vld [vmem:[%s211 + $0x168] sm:$0x1]
        %v368 = vld [vmem:[%s211 + $0x170] sm:$0x1]
        %v369 = vld [vmem:[%s211 + $0x178] sm:$0x1]
        %v370 = vld [vmem:[%s211 + $0x180] sm:$0xfe]
        %v371 = vld [vmem:[%s211 + $0x188] sm:$0xfe]
        %v372 = vld [vmem:[%s211 + $0x190] sm:$0xfe]
        %v373 = vld [vmem:[%s211 + $0x198] sm:$0xfe]
        %v374 = vld [vmem:[%s211 + $0x1a0] sm:$0x1]
        %v375 = vld [vmem:[%s211 + $0x1a8] sm:$0x1]
        %v376 = vld [vmem:[%s211 + $0x1b0] sm:$0x1]
        %v377 = vld [vmem:[%s211 + $0x1b8] sm:$0x1]
        %v378 = vld [vmem:[%s211 + $0x1c0] sm:$0xfe]
        %v379 = vld [vmem:[%s211 + $0x1c8] sm:$0xfe]
        %v380 = vld [vmem:[%s211 + $0x1d0] sm:$0xfe]
        %v381 = vld [vmem:[%s211 + $0x1d8] sm:$0xfe]
        %v382 = vld [vmem:[%s211 + $0x1e0] sm:$0x1]
        %v383 = vld [vmem:[%s211 + $0x1e8] sm:$0x1]
        %v384 = vld [vmem:[%s211 + $0x1f0] sm:$0x1]
        %v385 = vld [vmem:[%s211 + $0x1f8] sm:$0x1]
        %v386 = vld [vmem:[%s211 + $0x200] sm:$0xfe]
        %v387 = vld [vmem:[%s211 + $0x208] sm:$0xfe]
        %v388 = vld [vmem:[%s211 + $0x210] sm:$0xfe]
        %v389 = vld [vmem:[%s211 + $0x218] sm:$0xfe]
        %v390 = vld [vmem:[%s211 + $0x220] sm:$0x1]
        %v391 = vld [vmem:[%s211 + $0x228] sm:$0x1]
        %v392 = vld [vmem:[%s211 + $0x230] sm:$0x1]
        %v393 = vld [vmem:[%s211 + $0x238] sm:$0x1]
        %vm458 = vcmask 1046528
        %v459 = vrot.slane %v330, 1
        %v460 = vrot.slane %v334, 1
        %v461 = vsel %vm458, %v459, %v460
        %v462 = vrot.slane %v331, 1
        %v463 = vrot.slane %v335, 1
        %v464 = vsel %vm458, %v462, %v463
        %v465 = vrot.slane %v332, 1
        %v466 = vrot.slane %v336, 1
        %v467 = vsel %vm458, %v465, %v466
        %v468 = vrot.slane %v333, 1
        %v469 = vrot.slane %v337, 1
        %v470 = vsel %vm458, %v468, %v469
        %v471 = vrot.slane %v338, 1
        %v472 = vrot.slane %v342, 1
        %v473 = vsel %vm458, %v471, %v472
        %v474 = vrot.slane %v339, 1
        %v475 = vrot.slane %v343, 1
        %v476 = vsel %vm458, %v474, %v475
        %v477 = vrot.slane %v340, 1
        %v478 = vrot.slane %v344, 1
        %v479 = vsel %vm458, %v477, %v478
        %v480 = vrot.slane %v341, 1
        %v481 = vrot.slane %v345, 1
        %v482 = vsel %vm458, %v480, %v481
        %v483 = vrot.slane %v346, 1
        %v484 = vrot.slane %v350, 1
        %v485 = vsel %vm458, %v483, %v484
        %v486 = vrot.slane %v347, 1
        %v487 = vrot.slane %v351, 1
        %v488 = vsel %vm458, %v486, %v487
        %v489 = vrot.slane %v348, 1
        %v490 = vrot.slane %v352, 1
        %v491 = vsel %vm458, %v489, %v490
        %v492 = vrot.slane %v349, 1
        %v493 = vrot.slane %v353, 1
        %v494 = vsel %vm458, %v492, %v493
        %v495 = vrot.slane %v354, 1
        %v496 = vrot.slane %v358, 1
        %v497 = vsel %vm458, %v495, %v496
        %v498 = vrot.slane %v355, 1
        %v499 = vrot.slane %v359, 1
        %v500 = vsel %vm458, %v498, %v499
        %v501 = vrot.slane %v356, 1
        %v502 = vrot.slane %v360, 1
        %v503 = vsel %vm458, %v501, %v502
        %v504 = vrot.slane %v357, 1
        %v505 = vrot.slane %v361, 1
        %v506 = vsel %vm458, %v504, %v505
        %v507 = vrot.slane %v362, 1
        %v508 = vrot.slane %v366, 1
        %v509 = vsel %vm458, %v507, %v508
        %v510 = vrot.slane %v363, 1
        %v511 = vrot.slane %v367, 1
        %v512 = vsel %vm458, %v510, %v511
        %v513 = vrot.slane %v364, 1
        %v514 = vrot.slane %v368, 1
        %v515 = vsel %vm458, %v513, %v514
        %v516 = vrot.slane %v365, 1
        %v517 = vrot.slane %v369, 1
        %v518 = vsel %vm458, %v516, %v517
        %v519 = vrot.slane %v370, 1
        %v520 = vrot.slane %v374, 1
        %v521 = vsel %vm458, %v519, %v520
        %v522 = vrot.slane %v371, 1
        %v523 = vrot.slane %v375, 1
        %v524 = vsel %vm458, %v522, %v523
        %v525 = vrot.slane %v372, 1
        %v526 = vrot.slane %v376, 1
        %v527 = vsel %vm458, %v525, %v526
        %v528 = vrot.slane %v373, 1
        %v529 = vrot.slane %v377, 1
        %v530 = vsel %vm458, %v528, %v529
        %v531 = vrot.slane %v378, 1
        %v532 = vrot.slane %v382, 1
        %v533 = vsel %vm458, %v531, %v532
        %v534 = vrot.slane %v379, 1
        %v535 = vrot.slane %v383, 1
        %v536 = vsel %vm458, %v534, %v535
        %v537 = vrot.slane %v380, 1
        %v538 = vrot.slane %v384, 1
        %v539 = vsel %vm458, %v537, %v538
        %v540 = vrot.slane %v381, 1
        %v541 = vrot.slane %v385, 1
        %v542 = vsel %vm458, %v540, %v541
        %v543 = vrot.slane %v386, 1
        %v544 = vrot.slane %v390, 1
        %v545 = vsel %vm458, %v543, %v544
        %v546 = vrot.slane %v387, 1
        %v547 = vrot.slane %v391, 1
        %v548 = vsel %vm458, %v546, %v547
        %v549 = vrot.slane %v388, 1
        %v550 = vrot.slane %v392, 1
        %v551 = vsel %vm458, %v549, %v550
        %v552 = vrot.slane %v389, 1
        %v553 = vrot.slane %v393, 1
        %v554 = vsel %vm458, %v552, %v553
        %s587 = scalar_lea.vmem %s176, 512 [#allocation2]
        %v588 = vld [vmem:[%s587] sm:$0xff]
        %v589 = vld [vmem:[%s587 + $0x8] sm:$0xff]
        %v590 = vld [vmem:[%s587 + $0x10] sm:$0xff]
        %v591 = vld [vmem:[%s587 + $0x18] sm:$0xff]
        %v592 = vld [vmem:[%s587 + $0x20] sm:$0xff]
        %v593 = vld [vmem:[%s587 + $0x28] sm:$0xff]
        %v594 = vld [vmem:[%s587 + $0x30] sm:$0xff]
        %v595 = vld [vmem:[%s587 + $0x38] sm:$0xff]
        %v596 = vld [vmem:[%s587 + $0x40] sm:$0xff]
        %v597 = vld [vmem:[%s587 + $0x48] sm:$0xff]
        %v598 = vld [vmem:[%s587 + $0x50] sm:$0xff]
        %v599 = vld [vmem:[%s587 + $0x58] sm:$0xff]
        %v600 = vld [vmem:[%s587 + $0x60] sm:$0xff]
        %v601 = vld [vmem:[%s587 + $0x68] sm:$0xff]
        %v602 = vld [vmem:[%s587 + $0x70] sm:$0xff]
        %v603 = vld [vmem:[%s587 + $0x78] sm:$0xff]
        %v604 = vld [vmem:[%s587 + $0x80] sm:$0xff]
        %v605 = vld [vmem:[%s587 + $0x88] sm:$0xff]
        %v606 = vld [vmem:[%s587 + $0x90] sm:$0xff]
        %v607 = vld [vmem:[%s587 + $0x98] sm:$0xff]
        %v608 = vld [vmem:[%s587 + $0xa0] sm:$0xff]
        %v609 = vld [vmem:[%s587 + $0xa8] sm:$0xff]
        %v610 = vld [vmem:[%s587 + $0xb0] sm:$0xff]
        %v611 = vld [vmem:[%s587 + $0xb8] sm:$0xff]
        %v612 = vld [vmem:[%s587 + $0xc0] sm:$0xff]
        %v613 = vld [vmem:[%s587 + $0xc8] sm:$0xff]
        %v614 = vld [vmem:[%s587 + $0xd0] sm:$0xff]
        %v615 = vld [vmem:[%s587 + $0xd8] sm:$0xff]
        %v616 = vld [vmem:[%s587 + $0xe0] sm:$0xff]
        %v617 = vld [vmem:[%s587 + $0xe8] sm:$0xff]
        %v618 = vld [vmem:[%s587 + $0xf0] sm:$0xff]
        %v619 = vld [vmem:[%s587 + $0xf8] sm:$0xff]
        %v620 = vld [vmem:[%s587 + $0x100] sm:$0xff]
        %v621 = vld [vmem:[%s587 + $0x108] sm:$0xff]
        %v622 = vld [vmem:[%s587 + $0x110] sm:$0xff]
        %v623 = vld [vmem:[%s587 + $0x118] sm:$0xff]
        %v624 = vld [vmem:[%s587 + $0x120] sm:$0xff]
        %v625 = vld [vmem:[%s587 + $0x128] sm:$0xff]
        %v626 = vld [vmem:[%s587 + $0x130] sm:$0xff]
        %v627 = vld [vmem:[%s587 + $0x138] sm:$0xff]
        %v628 = vld [vmem:[%s587 + $0x140] sm:$0xff]
        %v629 = vld [vmem:[%s587 + $0x148] sm:$0xff]
        %v630 = vld [vmem:[%s587 + $0x150] sm:$0xff]
        %v631 = vld [vmem:[%s587 + $0x158] sm:$0xff]
        %v632 = vld [vmem:[%s587 + $0x160] sm:$0xff]
        %v633 = vld [vmem:[%s587 + $0x168] sm:$0xff]
        %v634 = vld [vmem:[%s587 + $0x170] sm:$0xff]
        %v635 = vld [vmem:[%s587 + $0x178] sm:$0xff]
        %v636 = vld [vmem:[%s587 + $0x180] sm:$0xff]
        %v637 = vld [vmem:[%s587 + $0x188] sm:$0xff]
        %v638 = vld [vmem:[%s587 + $0x190] sm:$0xff]
        %v639 = vld [vmem:[%s587 + $0x198] sm:$0xff]
        %v640 = vld [vmem:[%s587 + $0x1a0] sm:$0xff]
        %v641 = vld [vmem:[%s587 + $0x1a8] sm:$0xff]
        %v642 = vld [vmem:[%s587 + $0x1b0] sm:$0xff]
        %v643 = vld [vmem:[%s587 + $0x1b8] sm:$0xff]
        %v644 = vld [vmem:[%s587 + $0x1c0] sm:$0xff]
        %v645 = vld [vmem:[%s587 + $0x1c8] sm:$0xff]
        %v646 = vld [vmem:[%s587 + $0x1d0] sm:$0xff]
        %v647 = vld [vmem:[%s587 + $0x1d8] sm:$0xff]
        %v648 = vld [vmem:[%s587 + $0x1e0] sm:$0xff]
        %v649 = vld [vmem:[%s587 + $0x1e8] sm:$0xff]
        %v650 = vld [vmem:[%s587 + $0x1f0] sm:$0xff]
        %v651 = vld [vmem:[%s587 + $0x1f8] sm:$0xff]
        %v652 = vpack.c.bf16 %v473, %v461
        %v653 = vpack.c.bf16 %v476, %v464
        %v654 = vpack.c.bf16 %v479, %v467
        %v655 = vpack.c.bf16 %v482, %v470
        %v656 = vpack.c.bf16 %v497, %v485
        %v657 = vpack.c.bf16 %v500, %v488
        %v658 = vpack.c.bf16 %v503, %v491
        %v659 = vpack.c.bf16 %v506, %v494
        %v660 = vpack.c.bf16 %v521, %v509
        %v661 = vpack.c.bf16 %v524, %v512
        %v662 = vpack.c.bf16 %v527, %v515
        %v663 = vpack.c.bf16 %v530, %v518
        %v664 = vpack.c.bf16 %v545, %v533
        %v665 = vpack.c.bf16 %v548, %v536
        %v666 = vpack.c.bf16 %v551, %v539
        %v667 = vpack.c.bf16 %v554, %v542
        %v732 = vunpack.c.l.b16 %v588
        %v733 = vunpack.c.h.b16 %v588
        %v734 = vunpack.c.l.b16 %v589
        %v735 = vunpack.c.h.b16 %v589
        %v736 = vunpack.c.l.b16 %v590
        %v737 = vunpack.c.h.b16 %v590
        %v738 = vunpack.c.l.b16 %v591
        %v739 = vunpack.c.h.b16 %v591
        %v740 = vunpack.c.l.b16 %v592
        %v741 = vunpack.c.h.b16 %v592
        %v742 = vunpack.c.l.b16 %v593
        %v743 = vunpack.c.h.b16 %v593
        %v744 = vunpack.c.l.b16 %v594
        %v745 = vunpack.c.h.b16 %v594
        %v746 = vunpack.c.l.b16 %v595
        %v747 = vunpack.c.h.b16 %v595
        %v748 = vunpack.c.l.b16 %v596
        %v749 = vunpack.c.h.b16 %v596
        %v750 = vunpack.c.l.b16 %v597
        %v751 = vunpack.c.h.b16 %v597
        %v752 = vunpack.c.l.b16 %v598
        %v753 = vunpack.c.h.b16 %v598
        %v754 = vunpack.c.l.b16 %v599
        %v755 = vunpack.c.h.b16 %v599
        %v756 = vunpack.c.l.b16 %v600
        %v757 = vunpack.c.h.b16 %v600
        %v758 = vunpack.c.l.b16 %v601
        %v759 = vunpack.c.h.b16 %v601
        %v760 = vunpack.c.l.b16 %v602
        %v761 = vunpack.c.h.b16 %v602
        %v762 = vunpack.c.l.b16 %v603
        %v763 = vunpack.c.h.b16 %v603
        %v764 = vunpack.c.l.b16 %v604
        %v765 = vunpack.c.h.b16 %v604
        %v766 = vunpack.c.l.b16 %v605
        %v767 = vunpack.c.h.b16 %v605
        %v768 = vunpack.c.l.b16 %v606
        %v769 = vunpack.c.h.b16 %v606
        %v770 = vunpack.c.l.b16 %v607
        %v771 = vunpack.c.h.b16 %v607
        %v772 = vunpack.c.l.b16 %v608
        %v773 = vunpack.c.h.b16 %v608
        %v774 = vunpack.c.l.b16 %v609
        %v775 = vunpack.c.h.b16 %v609
        %v776 = vunpack.c.l.b16 %v610
        %v777 = vunpack.c.h.b16 %v610
        %v778 = vunpack.c.l.b16 %v611
        %v779 = vunpack.c.h.b16 %v611
        %v780 = vunpack.c.l.b16 %v612
        %v781 = vunpack.c.h.b16 %v612
        %v782 = vunpack.c.l.b16 %v613
        %v783 = vunpack.c.h.b16 %v613
        %v784 = vunpack.c.l.b16 %v614
        %v785 = vunpack.c.h.b16 %v614
        %v786 = vunpack.c.l.b16 %v615
        %v787 = vunpack.c.h.b16 %v615
        %v788 = vunpack.c.l.b16 %v616
        %v789 = vunpack.c.h.b16 %v616
        %v790 = vunpack.c.l.b16 %v617
        %v791 = vunpack.c.h.b16 %v617
        %v792 = vunpack.c.l.b16 %v618
        %v793 = vunpack.c.h.b16 %v618
        %v794 = vunpack.c.l.b16 %v619
        %v795 = vunpack.c.h.b16 %v619
        %v796 = vunpack.c.l.b16 %v620
        %v797 = vunpack.c.h.b16 %v620
        %v798 = vunpack.c.l.b16 %v621
        %v799 = vunpack.c.h.b16 %v621
        %v800 = vunpack.c.l.b16 %v622
        %v801 = vunpack.c.h.b16 %v622
        %v802 = vunpack.c.l.b16 %v623
        %v803 = vunpack.c.h.b16 %v623
        %v804 = vunpack.c.l.b16 %v624
        %v805 = vunpack.c.h.b16 %v624
        %v806 = vunpack.c.l.b16 %v625
        %v807 = vunpack.c.h.b16 %v625
        %v808 = vunpack.c.l.b16 %v626
        %v809 = vunpack.c.h.b16 %v626
        %v810 = vunpack.c.l.b16 %v627
        %v811 = vunpack.c.h.b16 %v627
        %v812 = vunpack.c.l.b16 %v628
        %v813 = vunpack.c.h.b16 %v628
        %v814 = vunpack.c.l.b16 %v629
        %v815 = vunpack.c.h.b16 %v629
        %v816 = vunpack.c.l.b16 %v630
        %v817 = vunpack.c.h.b16 %v630
        %v818 = vunpack.c.l.b16 %v631
        %v819 = vunpack.c.h.b16 %v631
        %v820 = vunpack.c.l.b16 %v632
        %v821 = vunpack.c.h.b16 %v632
        %v822 = vunpack.c.l.b16 %v633
        %v823 = vunpack.c.h.b16 %v633
        %v824 = vunpack.c.l.b16 %v634
        %v825 = vunpack.c.h.b16 %v634
        %v826 = vunpack.c.l.b16 %v635
        %v827 = vunpack.c.h.b16 %v635
        %v828 = vunpack.c.l.b16 %v636
        %v829 = vunpack.c.h.b16 %v636
        %v830 = vunpack.c.l.b16 %v637
        %v831 = vunpack.c.h.b16 %v637
        %v832 = vunpack.c.l.b16 %v638
        %v833 = vunpack.c.h.b16 %v638
        %v834 = vunpack.c.l.b16 %v639
        %v835 = vunpack.c.h.b16 %v639
        %v836 = vunpack.c.l.b16 %v640
        %v837 = vunpack.c.h.b16 %v640
        %v838 = vunpack.c.l.b16 %v641
        %v839 = vunpack.c.h.b16 %v641
        %v840 = vunpack.c.l.b16 %v642
        %v841 = vunpack.c.h.b16 %v642
        %v842 = vunpack.c.l.b16 %v643
        %v843 = vunpack.c.h.b16 %v643
        %v844 = vunpack.c.l.b16 %v644
        %v845 = vunpack.c.h.b16 %v644
        %v846 = vunpack.c.l.b16 %v645
        %v847 = vunpack.c.h.b16 %v645
        %v848 = vunpack.c.l.b16 %v646
        %v849 = vunpack.c.h.b16 %v646
        %v850 = vunpack.c.l.b16 %v647
        %v851 = vunpack.c.h.b16 %v647
        %v852 = vunpack.c.l.b16 %v648
        %v853 = vunpack.c.h.b16 %v648
        %v854 = vunpack.c.l.b16 %v649
        %v855 = vunpack.c.h.b16 %v649
        %v856 = vunpack.c.l.b16 %v650
        %v857 = vunpack.c.h.b16 %v650
        %v858 = vunpack.c.l.b16 %v651
        %v859 = vunpack.c.h.b16 %v651
        %v860 = vpack.c.b16 %v734, %v732
        %v861 = vpack.c.b16 %v735, %v733
        %v862 = vpack.c.b16 %v738, %v736
        %v863 = vpack.c.b16 %v739, %v737
        %v864 = vpack.c.b16 %v742, %v740
        %v865 = vpack.c.b16 %v743, %v741
        %v866 = vpack.c.b16 %v746, %v744
        %v867 = vpack.c.b16 %v747, %v745
        %v868 = vpack.c.b16 %v750, %v748
        %v869 = vpack.c.b16 %v751, %v749
        %v870 = vpack.c.b16 %v754, %v752
        %v871 = vpack.c.b16 %v755, %v753
        %v872 = vpack.c.b16 %v758, %v756
        %v873 = vpack.c.b16 %v759, %v757
        %v874 = vpack.c.b16 %v762, %v760
        %v875 = vpack.c.b16 %v763, %v761
        %v876 = vpack.c.b16 %v766, %v764
        %v877 = vpack.c.b16 %v767, %v765
        %v878 = vpack.c.b16 %v770, %v768
        %v879 = vpack.c.b16 %v771, %v769
        %v880 = vpack.c.b16 %v774, %v772
        %v881 = vpack.c.b16 %v775, %v773
        %v882 = vpack.c.b16 %v778, %v776
        %v883 = vpack.c.b16 %v779, %v777
        %v884 = vpack.c.b16 %v782, %v780
        %v885 = vpack.c.b16 %v783, %v781
        %v886 = vpack.c.b16 %v786, %v784
        %v887 = vpack.c.b16 %v787, %v785
        %v888 = vpack.c.b16 %v790, %v788
        %v889 = vpack.c.b16 %v791, %v789
        %v890 = vpack.c.b16 %v794, %v792
        %v891 = vpack.c.b16 %v795, %v793
        %v892 = vpack.c.b16 %v798, %v796
        %v893 = vpack.c.b16 %v799, %v797
        %v894 = vpack.c.b16 %v802, %v800
        %v895 = vpack.c.b16 %v803, %v801
        %v896 = vpack.c.b16 %v806, %v804
        %v897 = vpack.c.b16 %v807, %v805
        %v898 = vpack.c.b16 %v810, %v808
        %v899 = vpack.c.b16 %v811, %v809
        %v900 = vpack.c.b16 %v814, %v812
        %v901 = vpack.c.b16 %v815, %v813
        %v902 = vpack.c.b16 %v818, %v816
        %v903 = vpack.c.b16 %v819, %v817
        %v904 = vpack.c.b16 %v822, %v820
        %v905 = vpack.c.b16 %v823, %v821
        %v906 = vpack.c.b16 %v826, %v824
        %v907 = vpack.c.b16 %v827, %v825
        %v908 = vpack.c.b16 %v830, %v828
        %v909 = vpack.c.b16 %v831, %v829
        %v910 = vpack.c.b16 %v834, %v832
        %v911 = vpack.c.b16 %v835, %v833
        %v912 = vpack.c.b16 %v838, %v836
        %v913 = vpack.c.b16 %v839, %v837
        %v914 = vpack.c.b16 %v842, %v840
        %v915 = vpack.c.b16 %v843, %v841
        %v916 = vpack.c.b16 %v846, %v844
        %v917 = vpack.c.b16 %v847, %v845
        %v918 = vpack.c.b16 %v850, %v848
        %v919 = vpack.c.b16 %v851, %v849
        %v920 = vpack.c.b16 %v854, %v852
        %v921 = vpack.c.b16 %v855, %v853
        %v922 = vpack.c.b16 %v858, %v856
        %v923 = vpack.c.b16 %v859, %v857
        %988 = vmatpush.bf16.msra.mxu0 %v874
        %989 = vmatpush.bf16.msra.mxu0 %v872
        %990 = vmatpush.bf16.msra.mxu0 %v870
        %991 = vmatpush.bf16.msra.mxu0 %v868
        %992 = vmatpush.bf16.msra.mxu0 %v866
        %993 = vmatpush.bf16.msra.mxu0 %v864
        %994 = vmatpush.bf16.msra.mxu0 %v862
        %995 = vmatpush.bf16.msra.mxu0 %v860
        %996 = vmatmul.bf16.gmra.mxu0 %v652
        %v997 = vpop.f32.mrf.mxu0
        %v998 = vadd.f32 0.0, %v997
        %v999 = vpop.f32.mrf.mxu0
        %v1000 = vadd.f32 0.0, %v999
        %1001 = vmatmul.bf16.gmra.mxu0 %v656
        %v1002 = vpop.f32.mrf.mxu0
        %v1003 = vadd.f32 0.0, %v1002
        %v1004 = vpop.f32.mrf.mxu0
        %v1005 = vadd.f32 0.0, %v1004
        %1006 = vmatmul.bf16.gmra.mxu0 %v660
        %v1007 = vpop.f32.mrf.mxu0
        %v1008 = vadd.f32 0.0, %v1007
        %v1009 = vpop.f32.mrf.mxu0
        %v1010 = vadd.f32 0.0, %v1009
        %1011 = vmatmul.bf16.gmra.mxu0 %v664
        %v1012 = vpop.f32.mrf.mxu0
        %v1013 = vadd.f32 0.0, %v1012
        %v1014 = vpop.f32.mrf.mxu0
        %v1015 = vadd.f32 0.0, %v1014
        %1016 = vdwg.mxu0
        %1017 = vmatpush.bf16.msra.mxu0 %v890
        %1018 = vmatpush.bf16.msra.mxu0 %v888
        %1019 = vmatpush.bf16.msra.mxu0 %v886
        %1020 = vmatpush.bf16.msra.mxu0 %v884
        %1021 = vmatpush.bf16.msra.mxu0 %v882
        %1022 = vmatpush.bf16.msra.mxu0 %v880
        %1023 = vmatpush.bf16.msra.mxu0 %v878
        %1024 = vmatpush.bf16.msra.mxu0 %v876
        %1025 = vmatmul.bf16.gmra.mxu0 %v653
        %v1026 = vpop.f32.mrf.mxu0
        %v1027 = vadd.f32 %v998, %v1026
        %v1028 = vpop.f32.mrf.mxu0
        %v1029 = vadd.f32 %v1000, %v1028
        %1030 = vmatmul.bf16.gmra.mxu0 %v657
        %v1031 = vpop.f32.mrf.mxu0
        %v1032 = vadd.f32 %v1003, %v1031
        %v1033 = vpop.f32.mrf.mxu0
        %v1034 = vadd.f32 %v1005, %v1033
        %1035 = vmatmul.bf16.gmra.mxu0 %v661
        %v1036 = vpop.f32.mrf.mxu0
        %v1037 = vadd.f32 %v1008, %v1036
        %v1038 = vpop.f32.mrf.mxu0
        %v1039 = vadd.f32 %v1010, %v1038
        %1040 = vmatmul.bf16.gmra.mxu0 %v665
        %v1041 = vpop.f32.mrf.mxu0
        %v1042 = vadd.f32 %v1013, %v1041
        %v1043 = vpop.f32.mrf.mxu0
        %v1044 = vadd.f32 %v1015, %v1043
        %1045 = vdwg.mxu0
        %1046 = vmatpush.bf16.msra.mxu0 %v906
        %1047 = vmatpush.bf16.msra.mxu0 %v904
        %1048 = vmatpush.bf16.msra.mxu0 %v902
        %1049 = vmatpush.bf16.msra.mxu0 %v900
        %1050 = vmatpush.bf16.msra.mxu0 %v898
        %1051 = vmatpush.bf16.msra.mxu0 %v896
        %1052 = vmatpush.bf16.msra.mxu0 %v894
        %1053 = vmatpush.bf16.msra.mxu0 %v892
        %1054 = vmatmul.bf16.gmra.mxu0 %v654
        %v1055 = vpop.f32.mrf.mxu0
        %v1056 = vadd.f32 %v1027, %v1055
        %v1057 = vpop.f32.mrf.mxu0
        %v1058 = vadd.f32 %v1029, %v1057
        %1059 = vmatmul.bf16.gmra.mxu0 %v658
        %v1060 = vpop.f32.mrf.mxu0
        %v1061 = vadd.f32 %v1032, %v1060
        %v1062 = vpop.f32.mrf.mxu0
        %v1063 = vadd.f32 %v1034, %v1062
        %1064 = vmatmul.bf16.gmra.mxu0 %v662
        %v1065 = vpop.f32.mrf.mxu0
        %v1066 = vadd.f32 %v1037, %v1065
        %v1067 = vpop.f32.mrf.mxu0
        %v1068 = vadd.f32 %v1039, %v1067
        %1069 = vmatmul.bf16.gmra.mxu0 %v666
        %v1070 = vpop.f32.mrf.mxu0
        %v1071 = vadd.f32 %v1042, %v1070
        %v1072 = vpop.f32.mrf.mxu0
        %v1073 = vadd.f32 %v1044, %v1072
        %1074 = vdwg.mxu0
        %1075 = vmatpush.bf16.msra.mxu0 %v922
        %1076 = vmatpush.bf16.msra.mxu0 %v920
        %1077 = vmatpush.bf16.msra.mxu0 %v918
        %1078 = vmatpush.bf16.msra.mxu0 %v916
        %1079 = vmatpush.bf16.msra.mxu0 %v914
        %1080 = vmatpush.bf16.msra.mxu0 %v912
        %1081 = vmatpush.bf16.msra.mxu0 %v910
        %1082 = vmatpush.bf16.msra.mxu0 %v908
        %1083 = vmatmul.bf16.gmra.mxu0 %v655
        %v1084 = vpop.f32.mrf.mxu0
        %v1085 = vadd.f32 %v1056, %v1084
        %v1086 = vpop.f32.mrf.mxu0
        %v1087 = vadd.f32 %v1058, %v1086
        %1088 = vmatmul.bf16.gmra.mxu0 %v659
        %v1089 = vpop.f32.mrf.mxu0
        %v1090 = vadd.f32 %v1061, %v1089
        %v1091 = vpop.f32.mrf.mxu0
        %v1092 = vadd.f32 %v1063, %v1091
        %1093 = vmatmul.bf16.gmra.mxu0 %v663
        %v1094 = vpop.f32.mrf.mxu0
        %v1095 = vadd.f32 %v1066, %v1094
        %v1096 = vpop.f32.mrf.mxu0
        %v1097 = vadd.f32 %v1068, %v1096
        %1098 = vmatmul.bf16.gmra.mxu0 %v667
        %v1099 = vpop.f32.mrf.mxu0
        %v1100 = vadd.f32 %v1071, %v1099
        %v1101 = vpop.f32.mrf.mxu0
        %v1102 = vadd.f32 %v1073, %v1101
        %1103 = vdwg.mxu0
        %1104 = vmatpush.bf16.msra.mxu0 %v875
        %1105 = vmatpush.bf16.msra.mxu0 %v873
        %1106 = vmatpush.bf16.msra.mxu0 %v871
        %1107 = vmatpush.bf16.msra.mxu0 %v869
        %1108 = vmatpush.bf16.msra.mxu0 %v867
        %1109 = vmatpush.bf16.msra.mxu0 %v865
        %1110 = vmatpush.bf16.msra.mxu0 %v863
        %1111 = vmatpush.bf16.msra.mxu0 %v861
        %1112 = vmatmul.bf16.gmra.mxu0 %v652
        %v1113 = vpop.f32.mrf.mxu0
        %v1114 = vadd.f32 0.0, %v1113
        %v1115 = vpop.f32.mrf.mxu0
        %v1116 = vadd.f32 0.0, %v1115
        %1117 = vmatmul.bf16.gmra.mxu0 %v656
        %v1118 = vpop.f32.mrf.mxu0
        %v1119 = vadd.f32 0.0, %v1118
        %v1120 = vpop.f32.mrf.mxu0
        %v1121 = vadd.f32 0.0, %v1120
        %1122 = vmatmul.bf16.gmra.mxu0 %v660
        %v1123 = vpop.f32.mrf.mxu0
        %v1124 = vadd.f32 0.0, %v1123
        %v1125 = vpop.f32.mrf.mxu0
        %v1126 = vadd.f32 0.0, %v1125
        %1127 = vmatmul.bf16.gmra.mxu0 %v664
        %v1128 = vpop.f32.mrf.mxu0
        %v1129 = vadd.f32 0.0, %v1128
        %v1130 = vpop.f32.mrf.mxu0
        %v1131 = vadd.f32 0.0, %v1130
        %1132 = vdwg.mxu0
        %1133 = vmatpush.bf16.msra.mxu0 %v891
        %1134 = vmatpush.bf16.msra.mxu0 %v889
        %1135 = vmatpush.bf16.msra.mxu0 %v887
        %1136 = vmatpush.bf16.msra.mxu0 %v885
        %1137 = vmatpush.bf16.msra.mxu0 %v883
        %1138 = vmatpush.bf16.msra.mxu0 %v881
        %1139 = vmatpush.bf16.msra.mxu0 %v879
        %1140 = vmatpush.bf16.msra.mxu0 %v877
        %1141 = vmatmul.bf16.gmra.mxu0 %v653
        %v1142 = vpop.f32.mrf.mxu0
        %v1143 = vadd.f32 %v1114, %v1142
        %v1144 = vpop.f32.mrf.mxu0
        %v1145 = vadd.f32 %v1116, %v1144
        %1146 = vmatmul.bf16.gmra.mxu0 %v657
        %v1147 = vpop.f32.mrf.mxu0
        %v1148 = vadd.f32 %v1119, %v1147
        %v1149 = vpop.f32.mrf.mxu0
        %v1150 = vadd.f32 %v1121, %v1149
        %1151 = vmatmul.bf16.gmra.mxu0 %v661
        %v1152 = vpop.f32.mrf.mxu0
        %v1153 = vadd.f32 %v1124, %v1152
        %v1154 = vpop.f32.mrf.mxu0
        %v1155 = vadd.f32 %v1126, %v1154
        %1156 = vmatmul.bf16.gmra.mxu0 %v665
        %v1157 = vpop.f32.mrf.mxu0
        %v1158 = vadd.f32 %v1129, %v1157
        %v1159 = vpop.f32.mrf.mxu0
        %v1160 = vadd.f32 %v1131, %v1159
        %1161 = vdwg.mxu0
        %1162 = vmatpush.bf16.msra.mxu0 %v907
        %1163 = vmatpush.bf16.msra.mxu0 %v905
        %1164 = vmatpush.bf16.msra.mxu0 %v903
        %1165 = vmatpush.bf16.msra.mxu0 %v901
        %1166 = vmatpush.bf16.msra.mxu0 %v899
        %1167 = vmatpush.bf16.msra.mxu0 %v897
        %1168 = vmatpush.bf16.msra.mxu0 %v895
        %1169 = vmatpush.bf16.msra.mxu0 %v893
        %1170 = vmatmul.bf16.gmra.mxu0 %v654
        %v1171 = vpop.f32.mrf.mxu0
        %v1172 = vadd.f32 %v1143, %v1171
        %v1173 = vpop.f32.mrf.mxu0
        %v1174 = vadd.f32 %v1145, %v1173
        %1175 = vmatmul.bf16.gmra.mxu0 %v658
        %v1176 = vpop.f32.mrf.mxu0
        %v1177 = vadd.f32 %v1148, %v1176
        %v1178 = vpop.f32.mrf.mxu0
        %v1179 = vadd.f32 %v1150, %v1178
        %1180 = vmatmul.bf16.gmra.mxu0 %v662
        %v1181 = vpop.f32.mrf.mxu0
        %v1182 = vadd.f32 %v1153, %v1181
        %v1183 = vpop.f32.mrf.mxu0
        %v1184 = vadd.f32 %v1155, %v1183
        %1185 = vmatmul.bf16.gmra.mxu0 %v666
        %v1186 = vpop.f32.mrf.mxu0
        %v1187 = vadd.f32 %v1158, %v1186
        %v1188 = vpop.f32.mrf.mxu0
        %v1189 = vadd.f32 %v1160, %v1188
        %1190 = vdwg.mxu0
        %1191 = vmatpush.bf16.msra.mxu0 %v923
        %1192 = vmatpush.bf16.msra.mxu0 %v921
        %1193 = vmatpush.bf16.msra.mxu0 %v919
        %1194 = vmatpush.bf16.msra.mxu0 %v917
        %1195 = vmatpush.bf16.msra.mxu0 %v915
        %1196 = vmatpush.bf16.msra.mxu0 %v913
        %1197 = vmatpush.bf16.msra.mxu0 %v911
        %1198 = vmatpush.bf16.msra.mxu0 %v909
        %1199 = vmatmul.bf16.gmra.mxu0 %v655
        %v1200 = vpop.f32.mrf.mxu0
        %v1201 = vadd.f32 %v1172, %v1200
        %v1202 = vpop.f32.mrf.mxu0
        %v1203 = vadd.f32 %v1174, %v1202
        %1204 = vmatmul.bf16.gmra.mxu0 %v659
        %v1205 = vpop.f32.mrf.mxu0
        %v1206 = vadd.f32 %v1177, %v1205
        %v1207 = vpop.f32.mrf.mxu0
        %v1208 = vadd.f32 %v1179, %v1207
        %1209 = vmatmul.bf16.gmra.mxu0 %v663
        %v1210 = vpop.f32.mrf.mxu0
        %v1211 = vadd.f32 %v1182, %v1210
        %v1212 = vpop.f32.mrf.mxu0
        %v1213 = vadd.f32 %v1184, %v1212
        %1214 = vmatmul.bf16.gmra.mxu0 %v667
        %v1215 = vpop.f32.mrf.mxu0
        %v1216 = vadd.f32 %v1187, %v1215
        %v1217 = vpop.f32.mrf.mxu0
        %v1218 = vadd.f32 %v1189, %v1217
        %1219 = vdwg.mxu0
        %v1284 = vunpack.c.l.b16 %v250
        %v1285 = vunpack.c.h.b16 %v250
        %v1286 = vunpack.c.l.b16 %v251
        %v1287 = vunpack.c.h.b16 %v251
        %v1288 = vunpack.c.l.b16 %v252
        %v1289 = vunpack.c.h.b16 %v252
        %v1290 = vunpack.c.l.b16 %v253
        %v1291 = vunpack.c.h.b16 %v253
        %v1292 = vunpack.c.l.b16 %v254
        %v1293 = vunpack.c.h.b16 %v254
        %v1294 = vunpack.c.l.b16 %v255
        %v1295 = vunpack.c.h.b16 %v255
        %v1296 = vunpack.c.l.b16 %v256
        %v1297 = vunpack.c.h.b16 %v256
        %v1298 = vunpack.c.l.b16 %v257
        %v1299 = vunpack.c.h.b16 %v257
        %v1300 = vunpack.c.l.b16 %v258
        %v1301 = vunpack.c.h.b16 %v258
        %v1302 = vunpack.c.l.b16 %v259
        %v1303 = vunpack.c.h.b16 %v259
        %v1304 = vunpack.c.l.b16 %v260
        %v1305 = vunpack.c.h.b16 %v260
        %v1306 = vunpack.c.l.b16 %v261
        %v1307 = vunpack.c.h.b16 %v261
        %v1308 = vunpack.c.l.b16 %v262
        %v1309 = vunpack.c.h.b16 %v262
        %v1310 = vunpack.c.l.b16 %v263
        %v1311 = vunpack.c.h.b16 %v263
        %v1312 = vunpack.c.l.b16 %v264
        %v1313 = vunpack.c.h.b16 %v264
        %v1314 = vunpack.c.l.b16 %v265
        %v1315 = vunpack.c.h.b16 %v265
        %v1316 = vunpack.c.l.b16 %v266
        %v1317 = vunpack.c.h.b16 %v266
        %v1318 = vunpack.c.l.b16 %v267
        %v1319 = vunpack.c.h.b16 %v267
        %v1320 = vunpack.c.l.b16 %v268
        %v1321 = vunpack.c.h.b16 %v268
        %v1322 = vunpack.c.l.b16 %v269
        %v1323 = vunpack.c.h.b16 %v269
        %v1324 = vunpack.c.l.b16 %v270
        %v1325 = vunpack.c.h.b16 %v270
        %v1326 = vunpack.c.l.b16 %v271
        %v1327 = vunpack.c.h.b16 %v271
        %v1328 = vunpack.c.l.b16 %v272
        %v1329 = vunpack.c.h.b16 %v272
        %v1330 = vunpack.c.l.b16 %v273
        %v1331 = vunpack.c.h.b16 %v273
        %v1332 = vunpack.c.l.b16 %v274
        %v1333 = vunpack.c.h.b16 %v274
        %v1334 = vunpack.c.l.b16 %v275
        %v1335 = vunpack.c.h.b16 %v275
        %v1336 = vunpack.c.l.b16 %v276
        %v1337 = vunpack.c.h.b16 %v276
        %v1338 = vunpack.c.l.b16 %v277
        %v1339 = vunpack.c.h.b16 %v277
        %v1340 = vunpack.c.l.b16 %v278
        %v1341 = vunpack.c.h.b16 %v278
        %v1342 = vunpack.c.l.b16 %v279
        %v1343 = vunpack.c.h.b16 %v279
        %v1344 = vunpack.c.l.b16 %v280
        %v1345 = vunpack.c.h.b16 %v280
        %v1346 = vunpack.c.l.b16 %v281
        %v1347 = vunpack.c.h.b16 %v281
        %v1348 = vunpack.c.l.b16 %v282
        %v1349 = vunpack.c.h.b16 %v282
        %v1350 = vunpack.c.l.b16 %v283
        %v1351 = vunpack.c.h.b16 %v283
        %v1352 = vunpack.c.l.b16 %v284
        %v1353 = vunpack.c.h.b16 %v284
        %v1354 = vunpack.c.l.b16 %v285
        %v1355 = vunpack.c.h.b16 %v285
        %v1356 = vunpack.c.l.b16 %v286
        %v1357 = vunpack.c.h.b16 %v286
        %v1358 = vunpack.c.l.b16 %v287
        %v1359 = vunpack.c.h.b16 %v287
        %v1360 = vunpack.c.l.b16 %v288
        %v1361 = vunpack.c.h.b16 %v288
        %v1362 = vunpack.c.l.b16 %v289
        %v1363 = vunpack.c.h.b16 %v289
        %v1364 = vunpack.c.l.b16 %v290
        %v1365 = vunpack.c.h.b16 %v290
        %v1366 = vunpack.c.l.b16 %v291
        %v1367 = vunpack.c.h.b16 %v291
        %v1368 = vunpack.c.l.b16 %v292
        %v1369 = vunpack.c.h.b16 %v292
        %v1370 = vunpack.c.l.b16 %v293
        %v1371 = vunpack.c.h.b16 %v293
        %v1372 = vunpack.c.l.b16 %v294
        %v1373 = vunpack.c.h.b16 %v294
        %v1374 = vunpack.c.l.b16 %v295
        %v1375 = vunpack.c.h.b16 %v295
        %v1376 = vunpack.c.l.b16 %v296
        %v1377 = vunpack.c.h.b16 %v296
        %v1378 = vunpack.c.l.b16 %v297
        %v1379 = vunpack.c.h.b16 %v297
        %v1380 = vunpack.c.l.b16 %v298
        %v1381 = vunpack.c.h.b16 %v298
        %v1382 = vunpack.c.l.b16 %v299
        %v1383 = vunpack.c.h.b16 %v299
        %v1384 = vunpack.c.l.b16 %v300
        %v1385 = vunpack.c.h.b16 %v300
        %v1386 = vunpack.c.l.b16 %v301
        %v1387 = vunpack.c.h.b16 %v301
        %v1388 = vunpack.c.l.b16 %v302
        %v1389 = vunpack.c.h.b16 %v302
        %v1390 = vunpack.c.l.b16 %v303
        %v1391 = vunpack.c.h.b16 %v303
        %v1392 = vunpack.c.l.b16 %v304
        %v1393 = vunpack.c.h.b16 %v304
        %v1394 = vunpack.c.l.b16 %v305
        %v1395 = vunpack.c.h.b16 %v305
        %v1396 = vunpack.c.l.b16 %v306
        %v1397 = vunpack.c.h.b16 %v306
        %v1398 = vunpack.c.l.b16 %v307
        %v1399 = vunpack.c.h.b16 %v307
        %v1400 = vunpack.c.l.b16 %v308
        %v1401 = vunpack.c.h.b16 %v308
        %v1402 = vunpack.c.l.b16 %v309
        %v1403 = vunpack.c.h.b16 %v309
        %v1404 = vunpack.c.l.b16 %v310
        %v1405 = vunpack.c.h.b16 %v310
        %v1406 = vunpack.c.l.b16 %v311
        %v1407 = vunpack.c.h.b16 %v311
        %v1408 = vunpack.c.l.b16 %v312
        %v1409 = vunpack.c.h.b16 %v312
        %v1410 = vunpack.c.l.b16 %v313
        %v1411 = vunpack.c.h.b16 %v313
        %v1412 = vpack.c.b16 %v1286, %v1284
        %v1413 = vpack.c.b16 %v1287, %v1285
        %v1414 = vpack.c.b16 %v1290, %v1288
        %v1415 = vpack.c.b16 %v1291, %v1289
        %v1416 = vpack.c.b16 %v1294, %v1292
        %v1417 = vpack.c.b16 %v1295, %v1293
        %v1418 = vpack.c.b16 %v1298, %v1296
        %v1419 = vpack.c.b16 %v1299, %v1297
        %v1420 = vpack.c.b16 %v1302, %v1300
        %v1421 = vpack.c.b16 %v1303, %v1301
        %v1422 = vpack.c.b16 %v1306, %v1304
        %v1423 = vpack.c.b16 %v1307, %v1305
        %v1424 = vpack.c.b16 %v1310, %v1308
        %v1425 = vpack.c.b16 %v1311, %v1309
        %v1426 = vpack.c.b16 %v1314, %v1312
        %v1427 = vpack.c.b16 %v1315, %v1313
        %v1428 = vpack.c.b16 %v1318, %v1316
        %v1429 = vpack.c.b16 %v1319, %v1317
        %v1430 = vpack.c.b16 %v1322, %v1320
        %v1431 = vpack.c.b16 %v1323, %v1321
        %v1432 = vpack.c.b16 %v1326, %v1324
        %v1433 = vpack.c.b16 %v1327, %v1325
        %v1434 = vpack.c.b16 %v1330, %v1328
        %v1435 = vpack.c.b16 %v1331, %v1329
        %v1436 = vpack.c.b16 %v1334, %v1332
        %v1437 = vpack.c.b16 %v1335, %v1333
        %v1438 = vpack.c.b16 %v1338, %v1336
        %v1439 = vpack.c.b16 %v1339, %v1337
        %v1440 = vpack.c.b16 %v1342, %v1340
        %v1441 = vpack.c.b16 %v1343, %v1341
        %v1442 = vpack.c.b16 %v1346, %v1344
        %v1443 = vpack.c.b16 %v1347, %v1345
        %v1444 = vpack.c.b16 %v1350, %v1348
        %v1445 = vpack.c.b16 %v1351, %v1349
        %v1446 = vpack.c.b16 %v1354, %v1352
        %v1447 = vpack.c.b16 %v1355, %v1353
        %v1448 = vpack.c.b16 %v1358, %v1356
        %v1449 = vpack.c.b16 %v1359, %v1357
        %v1450 = vpack.c.b16 %v1362, %v1360
        %v1451 = vpack.c.b16 %v1363, %v1361
        %v1452 = vpack.c.b16 %v1366, %v1364
        %v1453 = vpack.c.b16 %v1367, %v1365
        %v1454 = vpack.c.b16 %v1370, %v1368
        %v1455 = vpack.c.b16 %v1371, %v1369
        %v1456 = vpack.c.b16 %v1374, %v1372
        %v1457 = vpack.c.b16 %v1375, %v1373
        %v1458 = vpack.c.b16 %v1378, %v1376
        %v1459 = vpack.c.b16 %v1379, %v1377
        %v1460 = vpack.c.b16 %v1382, %v1380
        %v1461 = vpack.c.b16 %v1383, %v1381
        %v1462 = vpack.c.b16 %v1386, %v1384
        %v1463 = vpack.c.b16 %v1387, %v1385
        %v1464 = vpack.c.b16 %v1390, %v1388
        %v1465 = vpack.c.b16 %v1391, %v1389
        %v1466 = vpack.c.b16 %v1394, %v1392
        %v1467 = vpack.c.b16 %v1395, %v1393
        %v1468 = vpack.c.b16 %v1398, %v1396
        %v1469 = vpack.c.b16 %v1399, %v1397
        %v1470 = vpack.c.b16 %v1402, %v1400
        %v1471 = vpack.c.b16 %v1403, %v1401
        %v1472 = vpack.c.b16 %v1406, %v1404
        %v1473 = vpack.c.b16 %v1407, %v1405
        %v1474 = vpack.c.b16 %v1410, %v1408
        %v1475 = vpack.c.b16 %v1411, %v1409
        %1540 = vmatpush.bf16.msra.mxu0 %v1426
        %1541 = vmatpush.bf16.msra.mxu0 %v1424
        %1542 = vmatpush.bf16.msra.mxu0 %v1422
        %1543 = vmatpush.bf16.msra.mxu0 %v1420
        %1544 = vmatpush.bf16.msra.mxu0 %v1418
        %1545 = vmatpush.bf16.msra.mxu0 %v1416
        %1546 = vmatpush.bf16.msra.mxu0 %v1414
        %1547 = vmatpush.bf16.msra.mxu0 %v1412
        %1548 = vmatmul.bf16.gmra.mxu0 %v314
        %v1549 = vpop.f32.mrf.mxu0
        %v1550 = vadd.f32 %v1085, %v1549
        %v1551 = vpop.f32.mrf.mxu0
        %v1552 = vadd.f32 %v1087, %v1551
        %1553 = vmatmul.bf16.gmra.mxu0 %v318
        %v1554 = vpop.f32.mrf.mxu0
        %v1555 = vadd.f32 %v1090, %v1554
        %v1556 = vpop.f32.mrf.mxu0
        %v1557 = vadd.f32 %v1092, %v1556
        %1558 = vmatmul.bf16.gmra.mxu0 %v322
        %v1559 = vpop.f32.mrf.mxu0
        %v1560 = vadd.f32 %v1095, %v1559
        %v1561 = vpop.f32.mrf.mxu0
        %v1562 = vadd.f32 %v1097, %v1561
        %1563 = vmatmul.bf16.gmra.mxu0 %v326
        %v1564 = vpop.f32.mrf.mxu0
        %v1565 = vadd.f32 %v1100, %v1564
        %v1566 = vpop.f32.mrf.mxu0
        %v1567 = vadd.f32 %v1102, %v1566
        %1568 = vdwg.mxu0
        %1569 = vmatpush.bf16.msra.mxu0 %v1442
        %1570 = vmatpush.bf16.msra.mxu0 %v1440
        %1571 = vmatpush.bf16.msra.mxu0 %v1438
        %1572 = vmatpush.bf16.msra.mxu0 %v1436
        %1573 = vmatpush.bf16.msra.mxu0 %v1434
        %1574 = vmatpush.bf16.msra.mxu0 %v1432
        %1575 = vmatpush.bf16.msra.mxu0 %v1430
        %1576 = vmatpush.bf16.msra.mxu0 %v1428
        %1577 = vmatmul.bf16.gmra.mxu0 %v315
        %v1578 = vpop.f32.mrf.mxu0
        %v1579 = vadd.f32 %v1550, %v1578
        %v1580 = vpop.f32.mrf.mxu0
        %v1581 = vadd.f32 %v1552, %v1580
        %1582 = vmatmul.bf16.gmra.mxu0 %v319
        %v1583 = vpop.f32.mrf.mxu0
        %v1584 = vadd.f32 %v1555, %v1583
        %v1585 = vpop.f32.mrf.mxu0
        %v1586 = vadd.f32 %v1557, %v1585
        %1587 = vmatmul.bf16.gmra.mxu0 %v323
        %v1588 = vpop.f32.mrf.mxu0
        %v1589 = vadd.f32 %v1560, %v1588
        %v1590 = vpop.f32.mrf.mxu0
        %v1591 = vadd.f32 %v1562, %v1590
        %1592 = vmatmul.bf16.gmra.mxu0 %v327
        %v1593 = vpop.f32.mrf.mxu0
        %v1594 = vadd.f32 %v1565, %v1593
        %v1595 = vpop.f32.mrf.mxu0
        %v1596 = vadd.f32 %v1567, %v1595
        %1597 = vdwg.mxu0
        %1598 = vmatpush.bf16.msra.mxu0 %v1458
        %1599 = vmatpush.bf16.msra.mxu0 %v1456
        %1600 = vmatpush.bf16.msra.mxu0 %v1454
        %1601 = vmatpush.bf16.msra.mxu0 %v1452
        %1602 = vmatpush.bf16.msra.mxu0 %v1450
        %1603 = vmatpush.bf16.msra.mxu0 %v1448
        %1604 = vmatpush.bf16.msra.mxu0 %v1446
        %1605 = vmatpush.bf16.msra.mxu0 %v1444
        %1606 = vmatmul.bf16.gmra.mxu0 %v316
        %v1607 = vpop.f32.mrf.mxu0
        %v1608 = vadd.f32 %v1579, %v1607
        %v1609 = vpop.f32.mrf.mxu0
        %v1610 = vadd.f32 %v1581, %v1609
        %1611 = vmatmul.bf16.gmra.mxu0 %v320
        %v1612 = vpop.f32.mrf.mxu0
        %v1613 = vadd.f32 %v1584, %v1612
        %v1614 = vpop.f32.mrf.mxu0
        %v1615 = vadd.f32 %v1586, %v1614
        %1616 = vmatmul.bf16.gmra.mxu0 %v324
        %v1617 = vpop.f32.mrf.mxu0
        %v1618 = vadd.f32 %v1589, %v1617
        %v1619 = vpop.f32.mrf.mxu0
        %v1620 = vadd.f32 %v1591, %v1619
        %1621 = vmatmul.bf16.gmra.mxu0 %v328
        %v1622 = vpop.f32.mrf.mxu0
        %v1623 = vadd.f32 %v1594, %v1622
        %v1624 = vpop.f32.mrf.mxu0
        %v1625 = vadd.f32 %v1596, %v1624
        %1626 = vdwg.mxu0
        %1627 = vmatpush.bf16.msra.mxu0 %v1474
        %1628 = vmatpush.bf16.msra.mxu0 %v1472
        %1629 = vmatpush.bf16.msra.mxu0 %v1470
        %1630 = vmatpush.bf16.msra.mxu0 %v1468
        %1631 = vmatpush.bf16.msra.mxu0 %v1466
        %1632 = vmatpush.bf16.msra.mxu0 %v1464
        %1633 = vmatpush.bf16.msra.mxu0 %v1462
        %1634 = vmatpush.bf16.msra.mxu0 %v1460
        %1635 = vmatmul.bf16.gmra.mxu0 %v317
        %v1636 = vpop.f32.mrf.mxu0
        %v1637 = vadd.f32 %v1608, %v1636
        %v1638 = vpop.f32.mrf.mxu0
        %v1639 = vadd.f32 %v1610, %v1638
        %1640 = vmatmul.bf16.gmra.mxu0 %v321
        %v1641 = vpop.f32.mrf.mxu0
        %v1642 = vadd.f32 %v1613, %v1641
        %v1643 = vpop.f32.mrf.mxu0
        %v1644 = vadd.f32 %v1615, %v1643
        %1645 = vmatmul.bf16.gmra.mxu0 %v325
        %v1646 = vpop.f32.mrf.mxu0
        %v1647 = vadd.f32 %v1618, %v1646
        %v1648 = vpop.f32.mrf.mxu0
        %v1649 = vadd.f32 %v1620, %v1648
        %1650 = vmatmul.bf16.gmra.mxu0 %v329
        %v1651 = vpop.f32.mrf.mxu0
        %v1652 = vadd.f32 %v1623, %v1651
        %v1653 = vpop.f32.mrf.mxu0
        %v1654 = vadd.f32 %v1625, %v1653
        %1655 = vdwg.mxu0
        %1656 = vmatpush.bf16.msra.mxu0 %v1427
        %1657 = vmatpush.bf16.msra.mxu0 %v1425
        %1658 = vmatpush.bf16.msra.mxu0 %v1423
        %1659 = vmatpush.bf16.msra.mxu0 %v1421
        %1660 = vmatpush.bf16.msra.mxu0 %v1419
        %1661 = vmatpush.bf16.msra.mxu0 %v1417
        %1662 = vmatpush.bf16.msra.mxu0 %v1415
        %1663 = vmatpush.bf16.msra.mxu0 %v1413
        %1664 = vmatmul.bf16.gmra.mxu0 %v314
        %v1665 = vpop.f32.mrf.mxu0
        %v1666 = vadd.f32 %v1201, %v1665
        %v1667 = vpop.f32.mrf.mxu0
        %v1668 = vadd.f32 %v1203, %v1667
        %1669 = vmatmul.bf16.gmra.mxu0 %v318
        %v1670 = vpop.f32.mrf.mxu0
        %v1671 = vadd.f32 %v1206, %v1670
        %v1672 = vpop.f32.mrf.mxu0
        %v1673 = vadd.f32 %v1208, %v1672
        %1674 = vmatmul.bf16.gmra.mxu0 %v322
        %v1675 = vpop.f32.mrf.mxu0
        %v1676 = vadd.f32 %v1211, %v1675
        %v1677 = vpop.f32.mrf.mxu0
        %v1678 = vadd.f32 %v1213, %v1677
        %1679 = vmatmul.bf16.gmra.mxu0 %v326
        %v1680 = vpop.f32.mrf.mxu0
        %v1681 = vadd.f32 %v1216, %v1680
        %v1682 = vpop.f32.mrf.mxu0
        %v1683 = vadd.f32 %v1218, %v1682
        %1684 = vdwg.mxu0
        %1685 = vmatpush.bf16.msra.mxu0 %v1443
        %1686 = vmatpush.bf16.msra.mxu0 %v1441
        %1687 = vmatpush.bf16.msra.mxu0 %v1439
        %1688 = vmatpush.bf16.msra.mxu0 %v1437
        %1689 = vmatpush.bf16.msra.mxu0 %v1435
        %1690 = vmatpush.bf16.msra.mxu0 %v1433
        %1691 = vmatpush.bf16.msra.mxu0 %v1431
        %1692 = vmatpush.bf16.msra.mxu0 %v1429
        %1693 = vmatmul.bf16.gmra.mxu0 %v315
        %v1694 = vpop.f32.mrf.mxu0
        %v1695 = vadd.f32 %v1666, %v1694
        %v1696 = vpop.f32.mrf.mxu0
        %v1697 = vadd.f32 %v1668, %v1696
        %1698 = vmatmul.bf16.gmra.mxu0 %v319
        %v1699 = vpop.f32.mrf.mxu0
        %v1700 = vadd.f32 %v1671, %v1699
        %v1701 = vpop.f32.mrf.mxu0
        %v1702 = vadd.f32 %v1673, %v1701
        %1703 = vmatmul.bf16.gmra.mxu0 %v323
        %v1704 = vpop.f32.mrf.mxu0
        %v1705 = vadd.f32 %v1676, %v1704
        %v1706 = vpop.f32.mrf.mxu0
        %v1707 = vadd.f32 %v1678, %v1706
        %1708 = vmatmul.bf16.gmra.mxu0 %v327
        %v1709 = vpop.f32.mrf.mxu0
        %v1710 = vadd.f32 %v1681, %v1709
        %v1711 = vpop.f32.mrf.mxu0
        %v1712 = vadd.f32 %v1683, %v1711
        %1713 = vdwg.mxu0
        %1714 = vmatpush.bf16.msra.mxu0 %v1459
        %1715 = vmatpush.bf16.msra.mxu0 %v1457
        %1716 = vmatpush.bf16.msra.mxu0 %v1455
        %1717 = vmatpush.bf16.msra.mxu0 %v1453
        %1718 = vmatpush.bf16.msra.mxu0 %v1451
        %1719 = vmatpush.bf16.msra.mxu0 %v1449
        %1720 = vmatpush.bf16.msra.mxu0 %v1447
        %1721 = vmatpush.bf16.msra.mxu0 %v1445
        %1722 = vmatmul.bf16.gmra.mxu0 %v316
        %v1723 = vpop.f32.mrf.mxu0
        %v1724 = vadd.f32 %v1695, %v1723
        %v1725 = vpop.f32.mrf.mxu0
        %v1726 = vadd.f32 %v1697, %v1725
        %1727 = vmatmul.bf16.gmra.mxu0 %v320
        %v1728 = vpop.f32.mrf.mxu0
        %v1729 = vadd.f32 %v1700, %v1728
        %v1730 = vpop.f32.mrf.mxu0
        %v1731 = vadd.f32 %v1702, %v1730
        %1732 = vmatmul.bf16.gmra.mxu0 %v324
        %v1733 = vpop.f32.mrf.mxu0
        %v1734 = vadd.f32 %v1705, %v1733
        %v1735 = vpop.f32.mrf.mxu0
        %v1736 = vadd.f32 %v1707, %v1735
        %1737 = vmatmul.bf16.gmra.mxu0 %v328
        %v1738 = vpop.f32.mrf.mxu0
        %v1739 = vadd.f32 %v1710, %v1738
        %v1740 = vpop.f32.mrf.mxu0
        %v1741 = vadd.f32 %v1712, %v1740
        %1742 = vdwg.mxu0
        %1743 = vmatpush.bf16.msra.mxu0 %v1475
        %1744 = vmatpush.bf16.msra.mxu0 %v1473
        %1745 = vmatpush.bf16.msra.mxu0 %v1471
        %1746 = vmatpush.bf16.msra.mxu0 %v1469
        %1747 = vmatpush.bf16.msra.mxu0 %v1467
        %1748 = vmatpush.bf16.msra.mxu0 %v1465
        %1749 = vmatpush.bf16.msra.mxu0 %v1463
        %1750 = vmatpush.bf16.msra.mxu0 %v1461
        %1751 = vmatmul.bf16.gmra.mxu0 %v317
        %v1752 = vpop.f32.mrf.mxu0
        %v1753 = vadd.f32 %v1724, %v1752
        %v1754 = vpop.f32.mrf.mxu0
        %v1755 = vadd.f32 %v1726, %v1754
        %1756 = vmatmul.bf16.gmra.mxu0 %v321
        %v1757 = vpop.f32.mrf.mxu0
        %v1758 = vadd.f32 %v1729, %v1757
        %v1759 = vpop.f32.mrf.mxu0
        %v1760 = vadd.f32 %v1731, %v1759
        %1761 = vmatmul.bf16.gmra.mxu0 %v325
        %v1762 = vpop.f32.mrf.mxu0
        %v1763 = vadd.f32 %v1734, %v1762
        %v1764 = vpop.f32.mrf.mxu0
        %v1765 = vadd.f32 %v1736, %v1764
        %1766 = vmatmul.bf16.gmra.mxu0 %v329
        %v1767 = vpop.f32.mrf.mxu0
        %v1768 = vadd.f32 %v1739, %v1767
        %v1769 = vpop.f32.mrf.mxu0
        %v1770 = vadd.f32 %v1741, %v1769
        %1771 = vdwg.mxu0
        %s1772 = scalar_lea.vmem %s211, 64
        %v1773 = vld [vmem:[%s1772] sm:$0xff]
        %v1774 = vld [vmem:[%s1772 + $0x8] sm:$0xff]
        %v1775 = vld [vmem:[%s1772 + $0x10] sm:$0xff]
        %v1776 = vld [vmem:[%s1772 + $0x18] sm:$0xff]
        %v1777 = vld [vmem:[%s1772 + $0x40] sm:$0xff]
        %v1778 = vld [vmem:[%s1772 + $0x48] sm:$0xff]
        %v1779 = vld [vmem:[%s1772 + $0x50] sm:$0xff]
        %v1780 = vld [vmem:[%s1772 + $0x58] sm:$0xff]
        %v1781 = vld [vmem:[%s1772 + $0x80] sm:$0xff]
        %v1782 = vld [vmem:[%s1772 + $0x88] sm:$0xff]
        %v1783 = vld [vmem:[%s1772 + $0x90] sm:$0xff]
        %v1784 = vld [vmem:[%s1772 + $0x98] sm:$0xff]
        %v1785 = vld [vmem:[%s1772 + $0xc0] sm:$0xff]
        %v1786 = vld [vmem:[%s1772 + $0xc8] sm:$0xff]
        %v1787 = vld [vmem:[%s1772 + $0xd0] sm:$0xff]
        %v1788 = vld [vmem:[%s1772 + $0xd8] sm:$0xff]
        %v1789 = vld [vmem:[%s1772 + $0x140] sm:$0xff]
        %v1790 = vld [vmem:[%s1772 + $0x148] sm:$0xff]
        %v1791 = vld [vmem:[%s1772 + $0x150] sm:$0xff]
        %v1792 = vld [vmem:[%s1772 + $0x158] sm:$0xff]
        %v1793 = vld [vmem:[%s1772 + $0x180] sm:$0xff]
        %v1794 = vld [vmem:[%s1772 + $0x188] sm:$0xff]
        %v1795 = vld [vmem:[%s1772 + $0x190] sm:$0xff]
        %v1796 = vld [vmem:[%s1772 + $0x198] sm:$0xff]
        %v1797 = vld [vmem:[%s1772 + $0x1c0] sm:$0xff]
        %v1798 = vld [vmem:[%s1772 + $0x1c8] sm:$0xff]
        %v1799 = vld [vmem:[%s1772 + $0x1d0] sm:$0xff]
        %v1800 = vld [vmem:[%s1772 + $0x1d8] sm:$0xff]
        %v1801 = vld [vmem:[%s1772 + $0x200] sm:$0xff]
        %v1802 = vld [vmem:[%s1772 + $0x208] sm:$0xff]
        %v1803 = vld [vmem:[%s1772 + $0x210] sm:$0xff]
        %v1804 = vld [vmem:[%s1772 + $0x218] sm:$0xff]
        %s1805 = scalar_lea.vmem %s176, 1024 [#allocation2]
        %v1806 = vld [vmem:[%s1805] sm:$0xff]
        %v1807 = vld [vmem:[%s1805 + $0x8] sm:$0xff]
        %v1808 = vld [vmem:[%s1805 + $0x10] sm:$0xff]
        %v1809 = vld [vmem:[%s1805 + $0x18] sm:$0xff]
        %v1810 = vld [vmem:[%s1805 + $0x20] sm:$0xff]
        %v1811 = vld [vmem:[%s1805 + $0x28] sm:$0xff]
        %v1812 = vld [vmem:[%s1805 + $0x30] sm:$0xff]
        %v1813 = vld [vmem:[%s1805 + $0x38] sm:$0xff]
        %v1814 = vld [vmem:[%s1805 + $0x40] sm:$0xff]
        %v1815 = vld [vmem:[%s1805 + $0x48] sm:$0xff]
        %v1816 = vld [vmem:[%s1805 + $0x50] sm:$0xff]
        %v1817 = vld [vmem:[%s1805 + $0x58] sm:$0xff]
        %v1818 = vld [vmem:[%s1805 + $0x60] sm:$0xff]
        %v1819 = vld [vmem:[%s1805 + $0x68] sm:$0xff]
        %v1820 = vld [vmem:[%s1805 + $0x70] sm:$0xff]
        %v1821 = vld [vmem:[%s1805 + $0x78] sm:$0xff]
        %v1822 = vld [vmem:[%s1805 + $0x80] sm:$0xff]
        %v1823 = vld [vmem:[%s1805 + $0x88] sm:$0xff]
        %v1824 = vld [vmem:[%s1805 + $0x90] sm:$0xff]
        %v1825 = vld [vmem:[%s1805 + $0x98] sm:$0xff]
        %v1826 = vld [vmem:[%s1805 + $0xa0] sm:$0xff]
        %v1827 = vld [vmem:[%s1805 + $0xa8] sm:$0xff]
        %v1828 = vld [vmem:[%s1805 + $0xb0] sm:$0xff]
        %v1829 = vld [vmem:[%s1805 + $0xb8] sm:$0xff]
        %v1830 = vld [vmem:[%s1805 + $0xc0] sm:$0xff]
        %v1831 = vld [vmem:[%s1805 + $0xc8] sm:$0xff]
        %v1832 = vld [vmem:[%s1805 + $0xd0] sm:$0xff]
        %v1833 = vld [vmem:[%s1805 + $0xd8] sm:$0xff]
        %v1834 = vld [vmem:[%s1805 + $0xe0] sm:$0xff]
        %v1835 = vld [vmem:[%s1805 + $0xe8] sm:$0xff]
        %v1836 = vld [vmem:[%s1805 + $0xf0] sm:$0xff]
        %v1837 = vld [vmem:[%s1805 + $0xf8] sm:$0xff]
        %v1838 = vld [vmem:[%s1805 + $0x100] sm:$0xff]
        %v1839 = vld [vmem:[%s1805 + $0x108] sm:$0xff]
        %v1840 = vld [vmem:[%s1805 + $0x110] sm:$0xff]
        %v1841 = vld [vmem:[%s1805 + $0x118] sm:$0xff]
        %v1842 = vld [vmem:[%s1805 + $0x120] sm:$0xff]
        %v1843 = vld [vmem:[%s1805 + $0x128] sm:$0xff]
        %v1844 = vld [vmem:[%s1805 + $0x130] sm:$0xff]
        %v1845 = vld [vmem:[%s1805 + $0x138] sm:$0xff]
        %v1846 = vld [vmem:[%s1805 + $0x140] sm:$0xff]
        %v1847 = vld [vmem:[%s1805 + $0x148] sm:$0xff]
        %v1848 = vld [vmem:[%s1805 + $0x150] sm:$0xff]
        %v1849 = vld [vmem:[%s1805 + $0x158] sm:$0xff]
        %v1850 = vld [vmem:[%s1805 + $0x160] sm:$0xff]
        %v1851 = vld [vmem:[%s1805 + $0x168] sm:$0xff]
        %v1852 = vld [vmem:[%s1805 + $0x170] sm:$0xff]
        %v1853 = vld [vmem:[%s1805 + $0x178] sm:$0xff]
        %v1854 = vld [vmem:[%s1805 + $0x180] sm:$0xff]
        %v1855 = vld [vmem:[%s1805 + $0x188] sm:$0xff]
        %v1856 = vld [vmem:[%s1805 + $0x190] sm:$0xff]
        %v1857 = vld [vmem:[%s1805 + $0x198] sm:$0xff]
        %v1858 = vld [vmem:[%s1805 + $0x1a0] sm:$0xff]
        %v1859 = vld [vmem:[%s1805 + $0x1a8] sm:$0xff]
        %v1860 = vld [vmem:[%s1805 + $0x1b0] sm:$0xff]
        %v1861 = vld [vmem:[%s1805 + $0x1b8] sm:$0xff]
        %v1862 = vld [vmem:[%s1805 + $0x1c0] sm:$0xff]
        %v1863 = vld [vmem:[%s1805 + $0x1c8] sm:$0xff]
        %v1864 = vld [vmem:[%s1805 + $0x1d0] sm:$0xff]
        %v1865 = vld [vmem:[%s1805 + $0x1d8] sm:$0xff]
        %v1866 = vld [vmem:[%s1805 + $0x1e0] sm:$0xff]
        %v1867 = vld [vmem:[%s1805 + $0x1e8] sm:$0xff]
        %v1868 = vld [vmem:[%s1805 + $0x1f0] sm:$0xff]
        %v1869 = vld [vmem:[%s1805 + $0x1f8] sm:$0xff]
        %v1870 = vpack.c.bf16 %v1777, %v1773
        %v1871 = vpack.c.bf16 %v1778, %v1774
        %v1872 = vpack.c.bf16 %v1779, %v1775
        %v1873 = vpack.c.bf16 %v1780, %v1776
        %v1874 = vpack.c.bf16 %v1785, %v1781
        %v1875 = vpack.c.bf16 %v1786, %v1782
        %v1876 = vpack.c.bf16 %v1787, %v1783
        %v1877 = vpack.c.bf16 %v1788, %v1784
        %v1878 = vpack.c.bf16 %v1793, %v1789
        %v1879 = vpack.c.bf16 %v1794, %v1790
        %v1880 = vpack.c.bf16 %v1795, %v1791
        %v1881 = vpack.c.bf16 %v1796, %v1792
        %v1882 = vpack.c.bf16 %v1801, %v1797
        %v1883 = vpack.c.bf16 %v1802, %v1798
        %v1884 = vpack.c.bf16 %v1803, %v1799
        %v1885 = vpack.c.bf16 %v1804, %v1800
        %v1950 = vunpack.c.l.b16 %v1806
        %v1951 = vunpack.c.h.b16 %v1806
        %v1952 = vunpack.c.l.b16 %v1807
        %v1953 = vunpack.c.h.b16 %v1807
        %v1954 = vunpack.c.l.b16 %v1808
        %v1955 = vunpack.c.h.b16 %v1808
        %v1956 = vunpack.c.l.b16 %v1809
        %v1957 = vunpack.c.h.b16 %v1809
        %v1958 = vunpack.c.l.b16 %v1810
        %v1959 = vunpack.c.h.b16 %v1810
        %v1960 = vunpack.c.l.b16 %v1811
        %v1961 = vunpack.c.h.b16 %v1811
        %v1962 = vunpack.c.l.b16 %v1812
        %v1963 = vunpack.c.h.b16 %v1812
        %v1964 = vunpack.c.l.b16 %v1813
        %v1965 = vunpack.c.h.b16 %v1813
        %v1966 = vunpack.c.l.b16 %v1814
        %v1967 = vunpack.c.h.b16 %v1814
        %v1968 = vunpack.c.l.b16 %v1815
        %v1969 = vunpack.c.h.b16 %v1815
        %v1970 = vunpack.c.l.b16 %v1816
        %v1971 = vunpack.c.h.b16 %v1816
        %v1972 = vunpack.c.l.b16 %v1817
        %v1973 = vunpack.c.h.b16 %v1817
        %v1974 = vunpack.c.l.b16 %v1818
        %v1975 = vunpack.c.h.b16 %v1818
        %v1976 = vunpack.c.l.b16 %v1819
        %v1977 = vunpack.c.h.b16 %v1819
        %v1978 = vunpack.c.l.b16 %v1820
        %v1979 = vunpack.c.h.b16 %v1820
        %v1980 = vunpack.c.l.b16 %v1821
        %v1981 = vunpack.c.h.b16 %v1821
        %v1982 = vunpack.c.l.b16 %v1822
        %v1983 = vunpack.c.h.b16 %v1822
        %v1984 = vunpack.c.l.b16 %v1823
        %v1985 = vunpack.c.h.b16 %v1823
        %v1986 = vunpack.c.l.b16 %v1824
        %v1987 = vunpack.c.h.b16 %v1824
        %v1988 = vunpack.c.l.b16 %v1825
        %v1989 = vunpack.c.h.b16 %v1825
        %v1990 = vunpack.c.l.b16 %v1826
        %v1991 = vunpack.c.h.b16 %v1826
        %v1992 = vunpack.c.l.b16 %v1827
        %v1993 = vunpack.c.h.b16 %v1827
        %v1994 = vunpack.c.l.b16 %v1828
        %v1995 = vunpack.c.h.b16 %v1828
        %v1996 = vunpack.c.l.b16 %v1829
        %v1997 = vunpack.c.h.b16 %v1829
        %v1998 = vunpack.c.l.b16 %v1830
        %v1999 = vunpack.c.h.b16 %v1830
        %v2000 = vunpack.c.l.b16 %v1831
        %v2001 = vunpack.c.h.b16 %v1831
        %v2002 = vunpack.c.l.b16 %v1832
        %v2003 = vunpack.c.h.b16 %v1832
        %v2004 = vunpack.c.l.b16 %v1833
        %v2005 = vunpack.c.h.b16 %v1833
        %v2006 = vunpack.c.l.b16 %v1834
        %v2007 = vunpack.c.h.b16 %v1834
        %v2008 = vunpack.c.l.b16 %v1835
        %v2009 = vunpack.c.h.b16 %v1835
        %v2010 = vunpack.c.l.b16 %v1836
        %v2011 = vunpack.c.h.b16 %v1836
        %v2012 = vunpack.c.l.b16 %v1837
        %v2013 = vunpack.c.h.b16 %v1837
        %v2014 = vunpack.c.l.b16 %v1838
        %v2015 = vunpack.c.h.b16 %v1838
        %v2016 = vunpack.c.l.b16 %v1839
        %v2017 = vunpack.c.h.b16 %v1839
        %v2018 = vunpack.c.l.b16 %v1840
        %v2019 = vunpack.c.h.b16 %v1840
        %v2020 = vunpack.c.l.b16 %v1841
        %v2021 = vunpack.c.h.b16 %v1841
        %v2022 = vunpack.c.l.b16 %v1842
        %v2023 = vunpack.c.h.b16 %v1842
        %v2024 = vunpack.c.l.b16 %v1843
        %v2025 = vunpack.c.h.b16 %v1843
        %v2026 = vunpack.c.l.b16 %v1844
        %v2027 = vunpack.c.h.b16 %v1844
        %v2028 = vunpack.c.l.b16 %v1845
        %v2029 = vunpack.c.h.b16 %v1845
        %v2030 = vunpack.c.l.b16 %v1846
        %v2031 = vunpack.c.h.b16 %v1846
        %v2032 = vunpack.c.l.b16 %v1847
        %v2033 = vunpack.c.h.b16 %v1847
        %v2034 = vunpack.c.l.b16 %v1848
        %v2035 = vunpack.c.h.b16 %v1848
        %v2036 = vunpack.c.l.b16 %v1849
        %v2037 = vunpack.c.h.b16 %v1849
        %v2038 = vunpack.c.l.b16 %v1850
        %v2039 = vunpack.c.h.b16 %v1850
        %v2040 = vunpack.c.l.b16 %v1851
        %v2041 = vunpack.c.h.b16 %v1851
        %v2042 = vunpack.c.l.b16 %v1852
        %v2043 = vunpack.c.h.b16 %v1852
        %v2044 = vunpack.c.l.b16 %v1853
        %v2045 = vunpack.c.h.b16 %v1853
        %v2046 = vunpack.c.l.b16 %v1854
        %v2047 = vunpack.c.h.b16 %v1854
        %v2048 = vunpack.c.l.b16 %v1855
        %v2049 = vunpack.c.h.b16 %v1855
        %v2050 = vunpack.c.l.b16 %v1856
        %v2051 = vunpack.c.h.b16 %v1856
        %v2052 = vunpack.c.l.b16 %v1857
        %v2053 = vunpack.c.h.b16 %v1857
        %v2054 = vunpack.c.l.b16 %v1858
        %v2055 = vunpack.c.h.b16 %v1858
        %v2056 = vunpack.c.l.b16 %v1859
        %v2057 = vunpack.c.h.b16 %v1859
        %v2058 = vunpack.c.l.b16 %v1860
        %v2059 = vunpack.c.h.b16 %v1860
        %v2060 = vunpack.c.l.b16 %v1861
        %v2061 = vunpack.c.h.b16 %v1861
        %v2062 = vunpack.c.l.b16 %v1862
        %v2063 = vunpack.c.h.b16 %v1862
        %v2064 = vunpack.c.l.b16 %v1863
        %v2065 = vunpack.c.h.b16 %v1863
        %v2066 = vunpack.c.l.b16 %v1864
        %v2067 = vunpack.c.h.b16 %v1864
        %v2068 = vunpack.c.l.b16 %v1865
        %v2069 = vunpack.c.h.b16 %v1865
        %v2070 = vunpack.c.l.b16 %v1866
        %v2071 = vunpack.c.h.b16 %v1866
        %v2072 = vunpack.c.l.b16 %v1867
        %v2073 = vunpack.c.h.b16 %v1867
        %v2074 = vunpack.c.l.b16 %v1868
        %v2075 = vunpack.c.h.b16 %v1868
        %v2076 = vunpack.c.l.b16 %v1869
        %v2077 = vunpack.c.h.b16 %v1869
        %v2078 = vpack.c.b16 %v1952, %v1950
        %v2079 = vpack.c.b16 %v1953, %v1951
        %v2080 = vpack.c.b16 %v1956, %v1954
        %v2081 = vpack.c.b16 %v1957, %v1955
        %v2082 = vpack.c.b16 %v1960, %v1958
        %v2083 = vpack.c.b16 %v1961, %v1959
        %v2084 = vpack.c.b16 %v1964, %v1962
        %v2085 = vpack.c.b16 %v1965, %v1963
        %v2086 = vpack.c.b16 %v1968, %v1966
        %v2087 = vpack.c.b16 %v1969, %v1967
        %v2088 = vpack.c.b16 %v1972, %v1970
        %v2089 = vpack.c.b16 %v1973, %v1971
        %v2090 = vpack.c.b16 %v1976, %v1974
        %v2091 = vpack.c.b16 %v1977, %v1975
        %v2092 = vpack.c.b16 %v1980, %v1978
        %v2093 = vpack.c.b16 %v1981, %v1979
        %v2094 = vpack.c.b16 %v1984, %v1982
        %v2095 = vpack.c.b16 %v1985, %v1983
        %v2096 = vpack.c.b16 %v1988, %v1986
        %v2097 = vpack.c.b16 %v1989, %v1987
        %v2098 = vpack.c.b16 %v1992, %v1990
        %v2099 = vpack.c.b16 %v1993, %v1991
        %v2100 = vpack.c.b16 %v1996, %v1994
        %v2101 = vpack.c.b16 %v1997, %v1995
        %v2102 = vpack.c.b16 %v2000, %v1998
        %v2103 = vpack.c.b16 %v2001, %v1999
        %v2104 = vpack.c.b16 %v2004, %v2002
        %v2105 = vpack.c.b16 %v2005, %v2003
        %v2106 = vpack.c.b16 %v2008, %v2006
        %v2107 = vpack.c.b16 %v2009, %v2007
        %v2108 = vpack.c.b16 %v2012, %v2010
        %v2109 = vpack.c.b16 %v2013, %v2011
        %v2110 = vpack.c.b16 %v2016, %v2014
        %v2111 = vpack.c.b16 %v2017, %v2015
        %v2112 = vpack.c.b16 %v2020, %v2018
        %v2113 = vpack.c.b16 %v2021, %v2019
        %v2114 = vpack.c.b16 %v2024, %v2022
        %v2115 = vpack.c.b16 %v2025, %v2023
        %v2116 = vpack.c.b16 %v2028, %v2026
        %v2117 = vpack.c.b16 %v2029, %v2027
        %v2118 = vpack.c.b16 %v2032, %v2030
        %v2119 = vpack.c.b16 %v2033, %v2031
        %v2120 = vpack.c.b16 %v2036, %v2034
        %v2121 = vpack.c.b16 %v2037, %v2035
        %v2122 = vpack.c.b16 %v2040, %v2038
        %v2123 = vpack.c.b16 %v2041, %v2039
        %v2124 = vpack.c.b16 %v2044, %v2042
        %v2125 = vpack.c.b16 %v2045, %v2043
        %v2126 = vpack.c.b16 %v2048, %v2046
        %v2127 = vpack.c.b16 %v2049, %v2047
        %v2128 = vpack.c.b16 %v2052, %v2050
        %v2129 = vpack.c.b16 %v2053, %v2051
        %v2130 = vpack.c.b16 %v2056, %v2054
        %v2131 = vpack.c.b16 %v2057, %v2055
        %v2132 = vpack.c.b16 %v2060, %v2058
        %v2133 = vpack.c.b16 %v2061, %v2059
        %v2134 = vpack.c.b16 %v2064, %v2062
        %v2135 = vpack.c.b16 %v2065, %v2063
        %v2136 = vpack.c.b16 %v2068, %v2066
        %v2137 = vpack.c.b16 %v2069, %v2067
        %v2138 = vpack.c.b16 %v2072, %v2070
        %v2139 = vpack.c.b16 %v2073, %v2071
        %v2140 = vpack.c.b16 %v2076, %v2074
        %v2141 = vpack.c.b16 %v2077, %v2075
        %2206 = vmatpush.bf16.msra.mxu0 %v2092
        %2207 = vmatpush.bf16.msra.mxu0 %v2090
        %2208 = vmatpush.bf16.msra.mxu0 %v2088
        %2209 = vmatpush.bf16.msra.mxu0 %v2086
        %2210 = vmatpush.bf16.msra.mxu0 %v2084
        %2211 = vmatpush.bf16.msra.mxu0 %v2082
        %2212 = vmatpush.bf16.msra.mxu0 %v2080
        %2213 = vmatpush.bf16.msra.mxu0 %v2078
        %2214 = vmatmul.bf16.gmra.mxu0 %v1870
        %v2215 = vpop.f32.mrf.mxu0
        %v2216 = vadd.f32 0.0, %v2215
        %v2217 = vpop.f32.mrf.mxu0
        %v2218 = vadd.f32 0.0, %v2217
        %2219 = vmatmul.bf16.gmra.mxu0 %v1874
        %v2220 = vpop.f32.mrf.mxu0
        %v2221 = vadd.f32 0.0, %v2220
        %v2222 = vpop.f32.mrf.mxu0
        %v2223 = vadd.f32 0.0, %v2222
        %2224 = vmatmul.bf16.gmra.mxu0 %v1878
        %v2225 = vpop.f32.mrf.mxu0
        %v2226 = vadd.f32 0.0, %v2225
        %v2227 = vpop.f32.mrf.mxu0
        %v2228 = vadd.f32 0.0, %v2227
        %2229 = vmatmul.bf16.gmra.mxu0 %v1882
        %v2230 = vpop.f32.mrf.mxu0
        %v2231 = vadd.f32 0.0, %v2230
        %v2232 = vpop.f32.mrf.mxu0
        %v2233 = vadd.f32 0.0, %v2232
        %2234 = vdwg.mxu0
        %2235 = vmatpush.bf16.msra.mxu0 %v2108
        %2236 = vmatpush.bf16.msra.mxu0 %v2106
        %2237 = vmatpush.bf16.msra.mxu0 %v2104
        %2238 = vmatpush.bf16.msra.mxu0 %v2102
        %2239 = vmatpush.bf16.msra.mxu0 %v2100
        %2240 = vmatpush.bf16.msra.mxu0 %v2098
        %2241 = vmatpush.bf16.msra.mxu0 %v2096
        %2242 = vmatpush.bf16.msra.mxu0 %v2094
        %2243 = vmatmul.bf16.gmra.mxu0 %v1871
        %v2244 = vpop.f32.mrf.mxu0
        %v2245 = vadd.f32 %v2216, %v2244
        %v2246 = vpop.f32.mrf.mxu0
        %v2247 = vadd.f32 %v2218, %v2246
        %2248 = vmatmul.bf16.gmra.mxu0 %v1875
        %v2249 = vpop.f32.mrf.mxu0
        %v2250 = vadd.f32 %v2221, %v2249
        %v2251 = vpop.f32.mrf.mxu0
        %v2252 = vadd.f32 %v2223, %v2251
        %2253 = vmatmul.bf16.gmra.mxu0 %v1879
        %v2254 = vpop.f32.mrf.mxu0
        %v2255 = vadd.f32 %v2226, %v2254
        %v2256 = vpop.f32.mrf.mxu0
        %v2257 = vadd.f32 %v2228, %v2256
        %2258 = vmatmul.bf16.gmra.mxu0 %v1883
        %v2259 = vpop.f32.mrf.mxu0
        %v2260 = vadd.f32 %v2231, %v2259
        %v2261 = vpop.f32.mrf.mxu0
        %v2262 = vadd.f32 %v2233, %v2261
        %2263 = vdwg.mxu0
        %2264 = vmatpush.bf16.msra.mxu0 %v2124
        %2265 = vmatpush.bf16.msra.mxu0 %v2122
        %2266 = vmatpush.bf16.msra.mxu0 %v2120
        %2267 = vmatpush.bf16.msra.mxu0 %v2118
        %2268 = vmatpush.bf16.msra.mxu0 %v2116
        %2269 = vmatpush.bf16.msra.mxu0 %v2114
        %2270 = vmatpush.bf16.msra.mxu0 %v2112
        %2271 = vmatpush.bf16.msra.mxu0 %v2110
        %2272 = vmatmul.bf16.gmra.mxu0 %v1872
        %v2273 = vpop.f32.mrf.mxu0
        %v2274 = vadd.f32 %v2245, %v2273
        %v2275 = vpop.f32.mrf.mxu0
        %v2276 = vadd.f32 %v2247, %v2275
        %2277 = vmatmul.bf16.gmra.mxu0 %v1876
        %v2278 = vpop.f32.mrf.mxu0
        %v2279 = vadd.f32 %v2250, %v2278
        %v2280 = vpop.f32.mrf.mxu0
        %v2281 = vadd.f32 %v2252, %v2280
        %2282 = vmatmul.bf16.gmra.mxu0 %v1880
        %v2283 = vpop.f32.mrf.mxu0
        %v2284 = vadd.f32 %v2255, %v2283
        %v2285 = vpop.f32.mrf.mxu0
        %v2286 = vadd.f32 %v2257, %v2285
        %2287 = vmatmul.bf16.gmra.mxu0 %v1884
        %v2288 = vpop.f32.mrf.mxu0
        %v2289 = vadd.f32 %v2260, %v2288
        %v2290 = vpop.f32.mrf.mxu0
        %v2291 = vadd.f32 %v2262, %v2290
        %2292 = vdwg.mxu0
        %2293 = vmatpush.bf16.msra.mxu0 %v2140
        %2294 = vmatpush.bf16.msra.mxu0 %v2138
        %2295 = vmatpush.bf16.msra.mxu0 %v2136
        %2296 = vmatpush.bf16.msra.mxu0 %v2134
        %2297 = vmatpush.bf16.msra.mxu0 %v2132
        %2298 = vmatpush.bf16.msra.mxu0 %v2130
        %2299 = vmatpush.bf16.msra.mxu0 %v2128
        %2300 = vmatpush.bf16.msra.mxu0 %v2126
        %2301 = vmatmul.bf16.gmra.mxu0 %v1873
        %v2302 = vpop.f32.mrf.mxu0
        %v2303 = vadd.f32 %v2274, %v2302
        %v2304 = vpop.f32.mrf.mxu0
        %v2305 = vadd.f32 %v2276, %v2304
        %2306 = vmatmul.bf16.gmra.mxu0 %v1877
        %v2307 = vpop.f32.mrf.mxu0
        %v2308 = vadd.f32 %v2279, %v2307
        %v2309 = vpop.f32.mrf.mxu0
        %v2310 = vadd.f32 %v2281, %v2309
        %2311 = vmatmul.bf16.gmra.mxu0 %v1881
        %v2312 = vpop.f32.mrf.mxu0
        %v2313 = vadd.f32 %v2284, %v2312
        %v2314 = vpop.f32.mrf.mxu0
        %v2315 = vadd.f32 %v2286, %v2314
        %2316 = vmatmul.bf16.gmra.mxu0 %v1885
        %v2317 = vpop.f32.mrf.mxu0
        %v2318 = vadd.f32 %v2289, %v2317
        %v2319 = vpop.f32.mrf.mxu0
        %v2320 = vadd.f32 %v2291, %v2319
        %2321 = vdwg.mxu0
        %2322 = vmatpush.bf16.msra.mxu0 %v2093
        %2323 = vmatpush.bf16.msra.mxu0 %v2091
        %2324 = vmatpush.bf16.msra.mxu0 %v2089
        %2325 = vmatpush.bf16.msra.mxu0 %v2087
        %2326 = vmatpush.bf16.msra.mxu0 %v2085
        %2327 = vmatpush.bf16.msra.mxu0 %v2083
        %2328 = vmatpush.bf16.msra.mxu0 %v2081
        %2329 = vmatpush.bf16.msra.mxu0 %v2079
        %2330 = vmatmul.bf16.gmra.mxu0 %v1870
        %v2331 = vpop.f32.mrf.mxu0
        %v2332 = vadd.f32 0.0, %v2331
        %v2333 = vpop.f32.mrf.mxu0
        %v2334 = vadd.f32 0.0, %v2333
        %2335 = vmatmul.bf16.gmra.mxu0 %v1874
        %v2336 = vpop.f32.mrf.mxu0
        %v2337 = vadd.f32 0.0, %v2336
        %v2338 = vpop.f32.mrf.mxu0
        %v2339 = vadd.f32 0.0, %v2338
        %2340 = vmatmul.bf16.gmra.mxu0 %v1878
        %v2341 = vpop.f32.mrf.mxu0
        %v2342 = vadd.f32 0.0, %v2341
        %v2343 = vpop.f32.mrf.mxu0
        %v2344 = vadd.f32 0.0, %v2343
        %2345 = vmatmul.bf16.gmra.mxu0 %v1882
        %v2346 = vpop.f32.mrf.mxu0
        %v2347 = vadd.f32 0.0, %v2346
        %v2348 = vpop.f32.mrf.mxu0
        %v2349 = vadd.f32 0.0, %v2348
        %2350 = vdwg.mxu0
        %2351 = vmatpush.bf16.msra.mxu0 %v2109
        %2352 = vmatpush.bf16.msra.mxu0 %v2107
        %2353 = vmatpush.bf16.msra.mxu0 %v2105
        %2354 = vmatpush.bf16.msra.mxu0 %v2103
        %2355 = vmatpush.bf16.msra.mxu0 %v2101
        %2356 = vmatpush.bf16.msra.mxu0 %v2099
        %2357 = vmatpush.bf16.msra.mxu0 %v2097
        %2358 = vmatpush.bf16.msra.mxu0 %v2095
        %2359 = vmatmul.bf16.gmra.mxu0 %v1871
        %v2360 = vpop.f32.mrf.mxu0
        %v2361 = vadd.f32 %v2332, %v2360
        %v2362 = vpop.f32.mrf.mxu0
        %v2363 = vadd.f32 %v2334, %v2362
        %2364 = vmatmul.bf16.gmra.mxu0 %v1875
        %v2365 = vpop.f32.mrf.mxu0
        %v2366 = vadd.f32 %v2337, %v2365
        %v2367 = vpop.f32.mrf.mxu0
        %v2368 = vadd.f32 %v2339, %v2367
        %2369 = vmatmul.bf16.gmra.mxu0 %v1879
        %v2370 = vpop.f32.mrf.mxu0
        %v2371 = vadd.f32 %v2342, %v2370
        %v2372 = vpop.f32.mrf.mxu0
        %v2373 = vadd.f32 %v2344, %v2372
        %2374 = vmatmul.bf16.gmra.mxu0 %v1883
        %v2375 = vpop.f32.mrf.mxu0
        %v2376 = vadd.f32 %v2347, %v2375
        %v2377 = vpop.f32.mrf.mxu0
        %v2378 = vadd.f32 %v2349, %v2377
        %2379 = vdwg.mxu0
        %2380 = vmatpush.bf16.msra.mxu0 %v2125
        %2381 = vmatpush.bf16.msra.mxu0 %v2123
        %2382 = vmatpush.bf16.msra.mxu0 %v2121
        %2383 = vmatpush.bf16.msra.mxu0 %v2119
        %2384 = vmatpush.bf16.msra.mxu0 %v2117
        %2385 = vmatpush.bf16.msra.mxu0 %v2115
        %2386 = vmatpush.bf16.msra.mxu0 %v2113
        %2387 = vmatpush.bf16.msra.mxu0 %v2111
        %2388 = vmatmul.bf16.gmra.mxu0 %v1872
        %v2389 = vpop.f32.mrf.mxu0
        %v2390 = vadd.f32 %v2361, %v2389
        %v2391 = vpop.f32.mrf.mxu0
        %v2392 = vadd.f32 %v2363, %v2391
        %2393 = vmatmul.bf16.gmra.mxu0 %v1876
        %v2394 = vpop.f32.mrf.mxu0
        %v2395 = vadd.f32 %v2366, %v2394
        %v2396 = vpop.f32.mrf.mxu0
        %v2397 = vadd.f32 %v2368, %v2396
        %2398 = vmatmul.bf16.gmra.mxu0 %v1880
        %v2399 = vpop.f32.mrf.mxu0
        %v2400 = vadd.f32 %v2371, %v2399
        %v2401 = vpop.f32.mrf.mxu0
        %v2402 = vadd.f32 %v2373, %v2401
        %2403 = vmatmul.bf16.gmra.mxu0 %v1884
        %v2404 = vpop.f32.mrf.mxu0
        %v2405 = vadd.f32 %v2376, %v2404
        %v2406 = vpop.f32.mrf.mxu0
        %v2407 = vadd.f32 %v2378, %v2406
        %2408 = vdwg.mxu0
        %2409 = vmatpush.bf16.msra.mxu0 %v2141
        %2410 = vmatpush.bf16.msra.mxu0 %v2139
        %2411 = vmatpush.bf16.msra.mxu0 %v2137
        %2412 = vmatpush.bf16.msra.mxu0 %v2135
        %2413 = vmatpush.bf16.msra.mxu0 %v2133
        %2414 = vmatpush.bf16.msra.mxu0 %v2131
        %2415 = vmatpush.bf16.msra.mxu0 %v2129
        %2416 = vmatpush.bf16.msra.mxu0 %v2127
        %2417 = vmatmul.bf16.gmra.mxu0 %v1873
        %v2418 = vpop.f32.mrf.mxu0
        %v2419 = vadd.f32 %v2390, %v2418
        %v2420 = vpop.f32.mrf.mxu0
        %v2421 = vadd.f32 %v2392, %v2420
        %2422 = vmatmul.bf16.gmra.mxu0 %v1877
        %v2423 = vpop.f32.mrf.mxu0
        %v2424 = vadd.f32 %v2395, %v2423
        %v2425 = vpop.f32.mrf.mxu0
        %v2426 = vadd.f32 %v2397, %v2425
        %2427 = vmatmul.bf16.gmra.mxu0 %v1881
        %v2428 = vpop.f32.mrf.mxu0
        %v2429 = vadd.f32 %v2400, %v2428
        %v2430 = vpop.f32.mrf.mxu0
        %v2431 = vadd.f32 %v2402, %v2430
        %2432 = vmatmul.bf16.gmra.mxu0 %v1885
        %v2433 = vpop.f32.mrf.mxu0
        %v2434 = vadd.f32 %v2405, %v2433
        %v2435 = vpop.f32.mrf.mxu0
        %v2436 = vadd.f32 %v2407, %v2435
        %2437 = vdwg.mxu0
        %v2438 = vadd.f32 %v1637, %v2303
        %v2439 = vadd.f32 %v1753, %v2419
        %v2440 = vadd.f32 %v1639, %v2305
        %v2441 = vadd.f32 %v1755, %v2421
        %v2442 = vadd.f32 %v1642, %v2308
        %v2443 = vadd.f32 %v1758, %v2424
        %v2444 = vadd.f32 %v1644, %v2310
        %v2445 = vadd.f32 %v1760, %v2426
        %v2446 = vadd.f32 %v1647, %v2313
        %v2447 = vadd.f32 %v1763, %v2429
        %v2448 = vadd.f32 %v1649, %v2315
        %v2449 = vadd.f32 %v1765, %v2431
        %v2450 = vadd.f32 %v1652, %v2318
        %v2451 = vadd.f32 %v1768, %v2434
        %v2452 = vadd.f32 %v1654, %v2320
        %v2453 = vadd.f32 %v1770, %v2436
        %v2454 = vld [vmem:[%s1772] sm:$0xfe]
        %v2455 = vld [vmem:[%s1772 + $0x8] sm:$0xfe]
        %v2456 = vld [vmem:[%s1772 + $0x10] sm:$0xfe]
        %v2457 = vld [vmem:[%s1772 + $0x18] sm:$0xfe]
        %v2458 = vld [vmem:[%s1772 + $0x20] sm:$0x1]
        %v2459 = vld [vmem:[%s1772 + $0x28] sm:$0x1]
        %v2460 = vld [vmem:[%s1772 + $0x30] sm:$0x1]
        %v2461 = vld [vmem:[%s1772 + $0x38] sm:$0x1]
        %v2462 = vld [vmem:[%s1772 + $0x40] sm:$0xfe]
        %v2463 = vld [vmem:[%s1772 + $0x48] sm:$0xfe]
        %v2464 = vld [vmem:[%s1772 + $0x50] sm:$0xfe]
        %v2465 = vld [vmem:[%s1772 + $0x58] sm:$0xfe]
        %v2466 = vld [vmem:[%s1772 + $0x60] sm:$0x1]
        %v2467 = vld [vmem:[%s1772 + $0x68] sm:$0x1]
        %v2468 = vld [vmem:[%s1772 + $0x70] sm:$0x1]
        %v2469 = vld [vmem:[%s1772 + $0x78] sm:$0x1]
        %v2470 = vld [vmem:[%s1772 + $0x80] sm:$0xfe]
        %v2471 = vld [vmem:[%s1772 + $0x88] sm:$0xfe]
        %v2472 = vld [vmem:[%s1772 + $0x90] sm:$0xfe]
        %v2473 = vld [vmem:[%s1772 + $0x98] sm:$0xfe]
        %v2474 = vld [vmem:[%s1772 + $0xa0] sm:$0x1]
        %v2475 = vld [vmem:[%s1772 + $0xa8] sm:$0x1]
        %v2476 = vld [vmem:[%s1772 + $0xb0] sm:$0x1]
        %v2477 = vld [vmem:[%s1772 + $0xb8] sm:$0x1]
        %v2478 = vld [vmem:[%s1772 + $0xc0] sm:$0xfe]
        %v2479 = vld [vmem:[%s1772 + $0xc8] sm:$0xfe]
        %v2480 = vld [vmem:[%s1772 + $0xd0] sm:$0xfe]
        %v2481 = vld [vmem:[%s1772 + $0xd8] sm:$0xfe]
        %v2482 = vld [vmem:[%s1772 + $0xe0] sm:$0x1]
        %v2483 = vld [vmem:[%s1772 + $0xe8] sm:$0x1]
        %v2484 = vld [vmem:[%s1772 + $0xf0] sm:$0x1]
        %v2485 = vld [vmem:[%s1772 + $0xf8] sm:$0x1]
        %v2486 = vld [vmem:[%s1772 + $0x140] sm:$0xfe]
        %v2487 = vld [vmem:[%s1772 + $0x148] sm:$0xfe]
        %v2488 = vld [vmem:[%s1772 + $0x150] sm:$0xfe]
        %v2489 = vld [vmem:[%s1772 + $0x158] sm:$0xfe]
        %v2490 = vld [vmem:[%s1772 + $0x160] sm:$0x1]
        %v2491 = vld [vmem:[%s1772 + $0x168] sm:$0x1]
        %v2492 = vld [vmem:[%s1772 + $0x170] sm:$0x1]
        %v2493 = vld [vmem:[%s1772 + $0x178] sm:$0x1]
        %v2494 = vld [vmem:[%s1772 + $0x180] sm:$0xfe]
        %v2495 = vld [vmem:[%s1772 + $0x188] sm:$0xfe]
        %v2496 = vld [vmem:[%s1772 + $0x190] sm:$0xfe]
        %v2497 = vld [vmem:[%s1772 + $0x198] sm:$0xfe]
        %v2498 = vld [vmem:[%s1772 + $0x1a0] sm:$0x1]
        %v2499 = vld [vmem:[%s1772 + $0x1a8] sm:$0x1]
        %v2500 = vld [vmem:[%s1772 + $0x1b0] sm:$0x1]
        %v2501 = vld [vmem:[%s1772 + $0x1b8] sm:$0x1]
        %v2502 = vld [vmem:[%s1772 + $0x1c0] sm:$0xfe]
        %v2503 = vld [vmem:[%s1772 + $0x1c8] sm:$0xfe]
        %v2504 = vld [vmem:[%s1772 + $0x1d0] sm:$0xfe]
        %v2505 = vld [vmem:[%s1772 + $0x1d8] sm:$0xfe]
        %v2506 = vld [vmem:[%s1772 + $0x1e0] sm:$0x1]
        %v2507 = vld [vmem:[%s1772 + $0x1e8] sm:$0x1]
        %v2508 = vld [vmem:[%s1772 + $0x1f0] sm:$0x1]
        %v2509 = vld [vmem:[%s1772 + $0x1f8] sm:$0x1]
        %v2510 = vld [vmem:[%s1772 + $0x200] sm:$0xfe]
        %v2511 = vld [vmem:[%s1772 + $0x208] sm:$0xfe]
        %v2512 = vld [vmem:[%s1772 + $0x210] sm:$0xfe]
        %v2513 = vld [vmem:[%s1772 + $0x218] sm:$0xfe]
        %v2514 = vld [vmem:[%s1772 + $0x220] sm:$0x1]
        %v2515 = vld [vmem:[%s1772 + $0x228] sm:$0x1]
        %v2516 = vld [vmem:[%s1772 + $0x230] sm:$0x1]
        %v2517 = vld [vmem:[%s1772 + $0x238] sm:$0x1]
        %v2582 = vrot.slane %v2454, 1
        %v2583 = vrot.slane %v2458, 1
        %v2584 = vsel %vm458, %v2582, %v2583
        %v2585 = vrot.slane %v2455, 1
        %v2586 = vrot.slane %v2459, 1
        %v2587 = vsel %vm458, %v2585, %v2586
        %v2588 = vrot.slane %v2456, 1
        %v2589 = vrot.slane %v2460, 1
        %v2590 = vsel %vm458, %v2588, %v2589
        %v2591 = vrot.slane %v2457, 1
        %v2592 = vrot.slane %v2461, 1
        %v2593 = vsel %vm458, %v2591, %v2592
        %v2594 = vrot.slane %v2462, 1
        %v2595 = vrot.slane %v2466, 1
        %v2596 = vsel %vm458, %v2594, %v2595
        %v2597 = vrot.slane %v2463, 1
        %v2598 = vrot.slane %v2467, 1
        %v2599 = vsel %vm458, %v2597, %v2598
        %v2600 = vrot.slane %v2464, 1
        %v2601 = vrot.slane %v2468, 1
        %v2602 = vsel %vm458, %v2600, %v2601
        %v2603 = vrot.slane %v2465, 1
        %v2604 = vrot.slane %v2469, 1
        %v2605 = vsel %vm458, %v2603, %v2604
        %v2606 = vrot.slane %v2470, 1
        %v2607 = vrot.slane %v2474, 1
        %v2608 = vsel %vm458, %v2606, %v2607
        %v2609 = vrot.slane %v2471, 1
        %v2610 = vrot.slane %v2475, 1
        %v2611 = vsel %vm458, %v2609, %v2610
        %v2612 = vrot.slane %v2472, 1
        %v2613 = vrot.slane %v2476, 1
        %v2614 = vsel %vm458, %v2612, %v2613
        %v2615 = vrot.slane %v2473, 1
        %v2616 = vrot.slane %v2477, 1
        %v2617 = vsel %vm458, %v2615, %v2616
        %v2618 = vrot.slane %v2478, 1
        %v2619 = vrot.slane %v2482, 1
        %v2620 = vsel %vm458, %v2618, %v2619
        %v2621 = vrot.slane %v2479, 1
        %v2622 = vrot.slane %v2483, 1
        %v2623 = vsel %vm458, %v2621, %v2622
        %v2624 = vrot.slane %v2480, 1
        %v2625 = vrot.slane %v2484, 1
        %v2626 = vsel %vm458, %v2624, %v2625
        %v2627 = vrot.slane %v2481, 1
        %v2628 = vrot.slane %v2485, 1
        %v2629 = vsel %vm458, %v2627, %v2628
        %v2630 = vrot.slane %v2486, 1
        %v2631 = vrot.slane %v2490, 1
        %v2632 = vsel %vm458, %v2630, %v2631
        %v2633 = vrot.slane %v2487, 1
        %v2634 = vrot.slane %v2491, 1
        %v2635 = vsel %vm458, %v2633, %v2634
        %v2636 = vrot.slane %v2488, 1
        %v2637 = vrot.slane %v2492, 1
        %v2638 = vsel %vm458, %v2636, %v2637
        %v2639 = vrot.slane %v2489, 1
        %v2640 = vrot.slane %v2493, 1
        %v2641 = vsel %vm458, %v2639, %v2640
        %v2642 = vrot.slane %v2494, 1
        %v2643 = vrot.slane %v2498, 1
        %v2644 = vsel %vm458, %v2642, %v2643
        %v2645 = vrot.slane %v2495, 1
        %v2646 = vrot.slane %v2499, 1
        %v2647 = vsel %vm458, %v2645, %v2646
        %v2648 = vrot.slane %v2496, 1
        %v2649 = vrot.slane %v2500, 1
        %v2650 = vsel %vm458, %v2648, %v2649
        %v2651 = vrot.slane %v2497, 1
        %v2652 = vrot.slane %v2501, 1
        %v2653 = vsel %vm458, %v2651, %v2652
        %v2654 = vrot.slane %v2502, 1
        %v2655 = vrot.slane %v2506, 1
        %v2656 = vsel %vm458, %v2654, %v2655
        %v2657 = vrot.slane %v2503, 1
        %v2658 = vrot.slane %v2507, 1
        %v2659 = vsel %vm458, %v2657, %v2658
        %v2660 = vrot.slane %v2504, 1
        %v2661 = vrot.slane %v2508, 1
        %v2662 = vsel %vm458, %v2660, %v2661
        %v2663 = vrot.slane %v2505, 1
        %v2664 = vrot.slane %v2509, 1
        %v2665 = vsel %vm458, %v2663, %v2664
        %v2666 = vrot.slane %v2510, 1
        %v2667 = vrot.slane %v2514, 1
        %v2668 = vsel %vm458, %v2666, %v2667
        %v2669 = vrot.slane %v2511, 1
        %v2670 = vrot.slane %v2515, 1
        %v2671 = vsel %vm458, %v2669, %v2670
        %v2672 = vrot.slane %v2512, 1
        %v2673 = vrot.slane %v2516, 1
        %v2674 = vsel %vm458, %v2672, %v2673
        %v2675 = vrot.slane %v2513, 1
        %v2676 = vrot.slane %v2517, 1
        %v2677 = vsel %vm458, %v2675, %v2676
        %s2710 = scalar_lea.vmem %s176, 1536 [#allocation2]
        %v2711 = vld [vmem:[%s2710] sm:$0xff]
        %v2712 = vld [vmem:[%s2710 + $0x8] sm:$0xff]
        %v2713 = vld [vmem:[%s2710 + $0x10] sm:$0xff]
        %v2714 = vld [vmem:[%s2710 + $0x18] sm:$0xff]
        %v2715 = vld [vmem:[%s2710 + $0x20] sm:$0xff]
        %v2716 = vld [vmem:[%s2710 + $0x28] sm:$0xff]
        %v2717 = vld [vmem:[%s2710 + $0x30] sm:$0xff]
        %v2718 = vld [vmem:[%s2710 + $0x38] sm:$0xff]
        %v2719 = vld [vmem:[%s2710 + $0x40] sm:$0xff]
        %v2720 = vld [vmem:[%s2710 + $0x48] sm:$0xff]
        %v2721 = vld [vmem:[%s2710 + $0x50] sm:$0xff]
        %v2722 = vld [vmem:[%s2710 + $0x58] sm:$0xff]
        %v2723 = vld [vmem:[%s2710 + $0x60] sm:$0xff]
        %v2724 = vld [vmem:[%s2710 + $0x68] sm:$0xff]
        %v2725 = vld [vmem:[%s2710 + $0x70] sm:$0xff]
        %v2726 = vld [vmem:[%s2710 + $0x78] sm:$0xff]
        %v2727 = vld [vmem:[%s2710 + $0x80] sm:$0xff]
        %v2728 = vld [vmem:[%s2710 + $0x88] sm:$0xff]
        %v2729 = vld [vmem:[%s2710 + $0x90] sm:$0xff]
        %v2730 = vld [vmem:[%s2710 + $0x98] sm:$0xff]
        %v2731 = vld [vmem:[%s2710 + $0xa0] sm:$0xff]
        %v2732 = vld [vmem:[%s2710 + $0xa8] sm:$0xff]
        %v2733 = vld [vmem:[%s2710 + $0xb0] sm:$0xff]
        %v2734 = vld [vmem:[%s2710 + $0xb8] sm:$0xff]
        %v2735 = vld [vmem:[%s2710 + $0xc0] sm:$0xff]
        %v2736 = vld [vmem:[%s2710 + $0xc8] sm:$0xff]
        %v2737 = vld [vmem:[%s2710 + $0xd0] sm:$0xff]
        %v2738 = vld [vmem:[%s2710 + $0xd8] sm:$0xff]
        %v2739 = vld [vmem:[%s2710 + $0xe0] sm:$0xff]
        %v2740 = vld [vmem:[%s2710 + $0xe8] sm:$0xff]
        %v2741 = vld [vmem:[%s2710 + $0xf0] sm:$0xff]
        %v2742 = vld [vmem:[%s2710 + $0xf8] sm:$0xff]
        %v2743 = vld [vmem:[%s2710 + $0x100] sm:$0xff]
        %v2744 = vld [vmem:[%s2710 + $0x108] sm:$0xff]
        %v2745 = vld [vmem:[%s2710 + $0x110] sm:$0xff]
        %v2746 = vld [vmem:[%s2710 + $0x118] sm:$0xff]
        %v2747 = vld [vmem:[%s2710 + $0x120] sm:$0xff]
        %v2748 = vld [vmem:[%s2710 + $0x128] sm:$0xff]
        %v2749 = vld [vmem:[%s2710 + $0x130] sm:$0xff]
        %v2750 = vld [vmem:[%s2710 + $0x138] sm:$0xff]
        %v2751 = vld [vmem:[%s2710 + $0x140] sm:$0xff]
        %v2752 = vld [vmem:[%s2710 + $0x148] sm:$0xff]
        %v2753 = vld [vmem:[%s2710 + $0x150] sm:$0xff]
        %v2754 = vld [vmem:[%s2710 + $0x158] sm:$0xff]
        %v2755 = vld [vmem:[%s2710 + $0x160] sm:$0xff]
        %v2756 = vld [vmem:[%s2710 + $0x168] sm:$0xff]
        %v2757 = vld [vmem:[%s2710 + $0x170] sm:$0xff]
        %v2758 = vld [vmem:[%s2710 + $0x178] sm:$0xff]
        %v2759 = vld [vmem:[%s2710 + $0x180] sm:$0xff]
        %v2760 = vld [vmem:[%s2710 + $0x188] sm:$0xff]
        %v2761 = vld [vmem:[%s2710 + $0x190] sm:$0xff]
        %v2762 = vld [vmem:[%s2710 + $0x198] sm:$0xff]
        %v2763 = vld [vmem:[%s2710 + $0x1a0] sm:$0xff]
        %v2764 = vld [vmem:[%s2710 + $0x1a8] sm:$0xff]
        %v2765 = vld [vmem:[%s2710 + $0x1b0] sm:$0xff]
        %v2766 = vld [vmem:[%s2710 + $0x1b8] sm:$0xff]
        %v2767 = vld [vmem:[%s2710 + $0x1c0] sm:$0xff]
        %v2768 = vld [vmem:[%s2710 + $0x1c8] sm:$0xff]
        %v2769 = vld [vmem:[%s2710 + $0x1d0] sm:$0xff]
        %v2770 = vld [vmem:[%s2710 + $0x1d8] sm:$0xff]
        %v2771 = vld [vmem:[%s2710 + $0x1e0] sm:$0xff]
        %v2772 = vld [vmem:[%s2710 + $0x1e8] sm:$0xff]
        %v2773 = vld [vmem:[%s2710 + $0x1f0] sm:$0xff]
        %v2774 = vld [vmem:[%s2710 + $0x1f8] sm:$0xff]
        %v2775 = vpack.c.bf16 %v2596, %v2584
        %v2776 = vpack.c.bf16 %v2599, %v2587
        %v2777 = vpack.c.bf16 %v2602, %v2590
        %v2778 = vpack.c.bf16 %v2605, %v2593
        %v2779 = vpack.c.bf16 %v2620, %v2608
        %v2780 = vpack.c.bf16 %v2623, %v2611
        %v2781 = vpack.c.bf16 %v2626, %v2614
        %v2782 = vpack.c.bf16 %v2629, %v2617
        %v2783 = vpack.c.bf16 %v2644, %v2632
        %v2784 = vpack.c.bf16 %v2647, %v2635
        %v2785 = vpack.c.bf16 %v2650, %v2638
        %v2786 = vpack.c.bf16 %v2653, %v2641
        %v2787 = vpack.c.bf16 %v2668, %v2656
        %v2788 = vpack.c.bf16 %v2671, %v2659
        %v2789 = vpack.c.bf16 %v2674, %v2662
        %v2790 = vpack.c.bf16 %v2677, %v2665
        %v2855 = vunpack.c.l.b16 %v2711
        %v2856 = vunpack.c.h.b16 %v2711
        %v2857 = vunpack.c.l.b16 %v2712
        %v2858 = vunpack.c.h.b16 %v2712
        %v2859 = vunpack.c.l.b16 %v2713
        %v2860 = vunpack.c.h.b16 %v2713
        %v2861 = vunpack.c.l.b16 %v2714
        %v2862 = vunpack.c.h.b16 %v2714
        %v2863 = vunpack.c.l.b16 %v2715
        %v2864 = vunpack.c.h.b16 %v2715
        %v2865 = vunpack.c.l.b16 %v2716
        %v2866 = vunpack.c.h.b16 %v2716
        %v2867 = vunpack.c.l.b16 %v2717
        %v2868 = vunpack.c.h.b16 %v2717
        %v2869 = vunpack.c.l.b16 %v2718
        %v2870 = vunpack.c.h.b16 %v2718
        %v2871 = vunpack.c.l.b16 %v2719
        %v2872 = vunpack.c.h.b16 %v2719
        %v2873 = vunpack.c.l.b16 %v2720
        %v2874 = vunpack.c.h.b16 %v2720
        %v2875 = vunpack.c.l.b16 %v2721
        %v2876 = vunpack.c.h.b16 %v2721
        %v2877 = vunpack.c.l.b16 %v2722
        %v2878 = vunpack.c.h.b16 %v2722
        %v2879 = vunpack.c.l.b16 %v2723
        %v2880 = vunpack.c.h.b16 %v2723
        %v2881 = vunpack.c.l.b16 %v2724
        %v2882 = vunpack.c.h.b16 %v2724
        %v2883 = vunpack.c.l.b16 %v2725
        %v2884 = vunpack.c.h.b16 %v2725
        %v2885 = vunpack.c.l.b16 %v2726
        %v2886 = vunpack.c.h.b16 %v2726
        %v2887 = vunpack.c.l.b16 %v2727
        %v2888 = vunpack.c.h.b16 %v2727
        %v2889 = vunpack.c.l.b16 %v2728
        %v2890 = vunpack.c.h.b16 %v2728
        %v2891 = vunpack.c.l.b16 %v2729
        %v2892 = vunpack.c.h.b16 %v2729
        %v2893 = vunpack.c.l.b16 %v2730
        %v2894 = vunpack.c.h.b16 %v2730
        %v2895 = vunpack.c.l.b16 %v2731
        %v2896 = vunpack.c.h.b16 %v2731
        %v2897 = vunpack.c.l.b16 %v2732
        %v2898 = vunpack.c.h.b16 %v2732
        %v2899 = vunpack.c.l.b16 %v2733
        %v2900 = vunpack.c.h.b16 %v2733
        %v2901 = vunpack.c.l.b16 %v2734
        %v2902 = vunpack.c.h.b16 %v2734
        %v2903 = vunpack.c.l.b16 %v2735
        %v2904 = vunpack.c.h.b16 %v2735
        %v2905 = vunpack.c.l.b16 %v2736
        %v2906 = vunpack.c.h.b16 %v2736
        %v2907 = vunpack.c.l.b16 %v2737
        %v2908 = vunpack.c.h.b16 %v2737
        %v2909 = vunpack.c.l.b16 %v2738
        %v2910 = vunpack.c.h.b16 %v2738
        %v2911 = vunpack.c.l.b16 %v2739
        %v2912 = vunpack.c.h.b16 %v2739
        %v2913 = vunpack.c.l.b16 %v2740
        %v2914 = vunpack.c.h.b16 %v2740
        %v2915 = vunpack.c.l.b16 %v2741
        %v2916 = vunpack.c.h.b16 %v2741
        %v2917 = vunpack.c.l.b16 %v2742
        %v2918 = vunpack.c.h.b16 %v2742
        %v2919 = vunpack.c.l.b16 %v2743
        %v2920 = vunpack.c.h.b16 %v2743
        %v2921 = vunpack.c.l.b16 %v2744
        %v2922 = vunpack.c.h.b16 %v2744
        %v2923 = vunpack.c.l.b16 %v2745
        %v2924 = vunpack.c.h.b16 %v2745
        %v2925 = vunpack.c.l.b16 %v2746
        %v2926 = vunpack.c.h.b16 %v2746
        %v2927 = vunpack.c.l.b16 %v2747
        %v2928 = vunpack.c.h.b16 %v2747
        %v2929 = vunpack.c.l.b16 %v2748
        %v2930 = vunpack.c.h.b16 %v2748
        %v2931 = vunpack.c.l.b16 %v2749
        %v2932 = vunpack.c.h.b16 %v2749
        %v2933 = vunpack.c.l.b16 %v2750
        %v2934 = vunpack.c.h.b16 %v2750
        %v2935 = vunpack.c.l.b16 %v2751
        %v2936 = vunpack.c.h.b16 %v2751
        %v2937 = vunpack.c.l.b16 %v2752
        %v2938 = vunpack.c.h.b16 %v2752
        %v2939 = vunpack.c.l.b16 %v2753
        %v2940 = vunpack.c.h.b16 %v2753
        %v2941 = vunpack.c.l.b16 %v2754
        %v2942 = vunpack.c.h.b16 %v2754
        %v2943 = vunpack.c.l.b16 %v2755
        %v2944 = vunpack.c.h.b16 %v2755
        %v2945 = vunpack.c.l.b16 %v2756
        %v2946 = vunpack.c.h.b16 %v2756
        %v2947 = vunpack.c.l.b16 %v2757
        %v2948 = vunpack.c.h.b16 %v2757
        %v2949 = vunpack.c.l.b16 %v2758
        %v2950 = vunpack.c.h.b16 %v2758
        %v2951 = vunpack.c.l.b16 %v2759
        %v2952 = vunpack.c.h.b16 %v2759
        %v2953 = vunpack.c.l.b16 %v2760
        %v2954 = vunpack.c.h.b16 %v2760
        %v2955 = vunpack.c.l.b16 %v2761
        %v2956 = vunpack.c.h.b16 %v2761
        %v2957 = vunpack.c.l.b16 %v2762
        %v2958 = vunpack.c.h.b16 %v2762
        %v2959 = vunpack.c.l.b16 %v2763
        %v2960 = vunpack.c.h.b16 %v2763
        %v2961 = vunpack.c.l.b16 %v2764
        %v2962 = vunpack.c.h.b16 %v2764
        %v2963 = vunpack.c.l.b16 %v2765
        %v2964 = vunpack.c.h.b16 %v2765
        %v2965 = vunpack.c.l.b16 %v2766
        %v2966 = vunpack.c.h.b16 %v2766
        %v2967 = vunpack.c.l.b16 %v2767
        %v2968 = vunpack.c.h.b16 %v2767
        %v2969 = vunpack.c.l.b16 %v2768
        %v2970 = vunpack.c.h.b16 %v2768
        %v2971 = vunpack.c.l.b16 %v2769
        %v2972 = vunpack.c.h.b16 %v2769
        %v2973 = vunpack.c.l.b16 %v2770
        %v2974 = vunpack.c.h.b16 %v2770
        %v2975 = vunpack.c.l.b16 %v2771
        %v2976 = vunpack.c.h.b16 %v2771
        %v2977 = vunpack.c.l.b16 %v2772
        %v2978 = vunpack.c.h.b16 %v2772
        %v2979 = vunpack.c.l.b16 %v2773
        %v2980 = vunpack.c.h.b16 %v2773
        %v2981 = vunpack.c.l.b16 %v2774
        %v2982 = vunpack.c.h.b16 %v2774
        %v2983 = vpack.c.b16 %v2857, %v2855
        %v2984 = vpack.c.b16 %v2858, %v2856
        %v2985 = vpack.c.b16 %v2861, %v2859
        %v2986 = vpack.c.b16 %v2862, %v2860
        %v2987 = vpack.c.b16 %v2865, %v2863
        %v2988 = vpack.c.b16 %v2866, %v2864
        %v2989 = vpack.c.b16 %v2869, %v2867
        %v2990 = vpack.c.b16 %v2870, %v2868
        %v2991 = vpack.c.b16 %v2873, %v2871
        %v2992 = vpack.c.b16 %v2874, %v2872
        %v2993 = vpack.c.b16 %v2877, %v2875
        %v2994 = vpack.c.b16 %v2878, %v2876
        %v2995 = vpack.c.b16 %v2881, %v2879
        %v2996 = vpack.c.b16 %v2882, %v2880
        %v2997 = vpack.c.b16 %v2885, %v2883
        %v2998 = vpack.c.b16 %v2886, %v2884
        %v2999 = vpack.c.b16 %v2889, %v2887
        %v3000 = vpack.c.b16 %v2890, %v2888
        %v3001 = vpack.c.b16 %v2893, %v2891
        %v3002 = vpack.c.b16 %v2894, %v2892
        %v3003 = vpack.c.b16 %v2897, %v2895
        %v3004 = vpack.c.b16 %v2898, %v2896
        %v3005 = vpack.c.b16 %v2901, %v2899
        %v3006 = vpack.c.b16 %v2902, %v2900
        %v3007 = vpack.c.b16 %v2905, %v2903
        %v3008 = vpack.c.b16 %v2906, %v2904
        %v3009 = vpack.c.b16 %v2909, %v2907
        %v3010 = vpack.c.b16 %v2910, %v2908
        %v3011 = vpack.c.b16 %v2913, %v2911
        %v3012 = vpack.c.b16 %v2914, %v2912
        %v3013 = vpack.c.b16 %v2917, %v2915
        %v3014 = vpack.c.b16 %v2918, %v2916
        %v3015 = vpack.c.b16 %v2921, %v2919
        %v3016 = vpack.c.b16 %v2922, %v2920
        %v3017 = vpack.c.b16 %v2925, %v2923
        %v3018 = vpack.c.b16 %v2926, %v2924
        %v3019 = vpack.c.b16 %v2929, %v2927
        %v3020 = vpack.c.b16 %v2930, %v2928
        %v3021 = vpack.c.b16 %v2933, %v2931
        %v3022 = vpack.c.b16 %v2934, %v2932
        %v3023 = vpack.c.b16 %v2937, %v2935
        %v3024 = vpack.c.b16 %v2938, %v2936
        %v3025 = vpack.c.b16 %v2941, %v2939
        %v3026 = vpack.c.b16 %v2942, %v2940
        %v3027 = vpack.c.b16 %v2945, %v2943
        %v3028 = vpack.c.b16 %v2946, %v2944
        %v3029 = vpack.c.b16 %v2949, %v2947
        %v3030 = vpack.c.b16 %v2950, %v2948
        %v3031 = vpack.c.b16 %v2953, %v2951
        %v3032 = vpack.c.b16 %v2954, %v2952
        %v3033 = vpack.c.b16 %v2957, %v2955
        %v3034 = vpack.c.b16 %v2958, %v2956
        %v3035 = vpack.c.b16 %v2961, %v2959
        %v3036 = vpack.c.b16 %v2962, %v2960
        %v3037 = vpack.c.b16 %v2965, %v2963
        %v3038 = vpack.c.b16 %v2966, %v2964
        %v3039 = vpack.c.b16 %v2969, %v2967
        %v3040 = vpack.c.b16 %v2970, %v2968
        %v3041 = vpack.c.b16 %v2973, %v2971
        %v3042 = vpack.c.b16 %v2974, %v2972
        %v3043 = vpack.c.b16 %v2977, %v2975
        %v3044 = vpack.c.b16 %v2978, %v2976
        %v3045 = vpack.c.b16 %v2981, %v2979
        %v3046 = vpack.c.b16 %v2982, %v2980
        %3111 = vmatpush.bf16.msra.mxu0 %v2997
        %3112 = vmatpush.bf16.msra.mxu0 %v2995
        %3113 = vmatpush.bf16.msra.mxu0 %v2993
        %3114 = vmatpush.bf16.msra.mxu0 %v2991
        %3115 = vmatpush.bf16.msra.mxu0 %v2989
        %3116 = vmatpush.bf16.msra.mxu0 %v2987
        %3117 = vmatpush.bf16.msra.mxu0 %v2985
        %3118 = vmatpush.bf16.msra.mxu0 %v2983
        %3119 = vmatmul.bf16.gmra.mxu0 %v2775
        %v3120 = vpop.f32.mrf.mxu0
        %v3121 = vadd.f32 0.0, %v3120
        %v3122 = vpop.f32.mrf.mxu0
        %v3123 = vadd.f32 0.0, %v3122
        %3124 = vmatmul.bf16.gmra.mxu0 %v2779
        %v3125 = vpop.f32.mrf.mxu0
        %v3126 = vadd.f32 0.0, %v3125
        %v3127 = vpop.f32.mrf.mxu0
        %v3128 = vadd.f32 0.0, %v3127
        %3129 = vmatmul.bf16.gmra.mxu0 %v2783
        %v3130 = vpop.f32.mrf.mxu0
        %v3131 = vadd.f32 0.0, %v3130
        %v3132 = vpop.f32.mrf.mxu0
        %v3133 = vadd.f32 0.0, %v3132
        %3134 = vmatmul.bf16.gmra.mxu0 %v2787
        %v3135 = vpop.f32.mrf.mxu0
        %v3136 = vadd.f32 0.0, %v3135
        %v3137 = vpop.f32.mrf.mxu0
        %v3138 = vadd.f32 0.0, %v3137
        %3139 = vdwg.mxu0
        %3140 = vmatpush.bf16.msra.mxu0 %v3013
        %3141 = vmatpush.bf16.msra.mxu0 %v3011
        %3142 = vmatpush.bf16.msra.mxu0 %v3009
        %3143 = vmatpush.bf16.msra.mxu0 %v3007
        %3144 = vmatpush.bf16.msra.mxu0 %v3005
        %3145 = vmatpush.bf16.msra.mxu0 %v3003
        %3146 = vmatpush.bf16.msra.mxu0 %v3001
        %3147 = vmatpush.bf16.msra.mxu0 %v2999
        %3148 = vmatmul.bf16.gmra.mxu0 %v2776
        %v3149 = vpop.f32.mrf.mxu0
        %v3150 = vadd.f32 %v3121, %v3149
        %v3151 = vpop.f32.mrf.mxu0
        %v3152 = vadd.f32 %v3123, %v3151
        %3153 = vmatmul.bf16.gmra.mxu0 %v2780
        %v3154 = vpop.f32.mrf.mxu0
        %v3155 = vadd.f32 %v3126, %v3154
        %v3156 = vpop.f32.mrf.mxu0
        %v3157 = vadd.f32 %v3128, %v3156
        %3158 = vmatmul.bf16.gmra.mxu0 %v2784
        %v3159 = vpop.f32.mrf.mxu0
        %v3160 = vadd.f32 %v3131, %v3159
        %v3161 = vpop.f32.mrf.mxu0
        %v3162 = vadd.f32 %v3133, %v3161
        %3163 = vmatmul.bf16.gmra.mxu0 %v2788
        %v3164 = vpop.f32.mrf.mxu0
        %v3165 = vadd.f32 %v3136, %v3164
        %v3166 = vpop.f32.mrf.mxu0
        %v3167 = vadd.f32 %v3138, %v3166
        %3168 = vdwg.mxu0
        %3169 = vmatpush.bf16.msra.mxu0 %v3029
        %3170 = vmatpush.bf16.msra.mxu0 %v3027
        %3171 = vmatpush.bf16.msra.mxu0 %v3025
        %3172 = vmatpush.bf16.msra.mxu0 %v3023
        %3173 = vmatpush.bf16.msra.mxu0 %v3021
        %3174 = vmatpush.bf16.msra.mxu0 %v3019
        %3175 = vmatpush.bf16.msra.mxu0 %v3017
        %3176 = vmatpush.bf16.msra.mxu0 %v3015
        %3177 = vmatmul.bf16.gmra.mxu0 %v2777
        %v3178 = vpop.f32.mrf.mxu0
        %v3179 = vadd.f32 %v3150, %v3178
        %v3180 = vpop.f32.mrf.mxu0
        %v3181 = vadd.f32 %v3152, %v3180
        %3182 = vmatmul.bf16.gmra.mxu0 %v2781
        %v3183 = vpop.f32.mrf.mxu0
        %v3184 = vadd.f32 %v3155, %v3183
        %v3185 = vpop.f32.mrf.mxu0
        %v3186 = vadd.f32 %v3157, %v3185
        %3187 = vmatmul.bf16.gmra.mxu0 %v2785
        %v3188 = vpop.f32.mrf.mxu0
        %v3189 = vadd.f32 %v3160, %v3188
        %v3190 = vpop.f32.mrf.mxu0
        %v3191 = vadd.f32 %v3162, %v3190
        %3192 = vmatmul.bf16.gmra.mxu0 %v2789
        %v3193 = vpop.f32.mrf.mxu0
        %v3194 = vadd.f32 %v3165, %v3193
        %v3195 = vpop.f32.mrf.mxu0
        %v3196 = vadd.f32 %v3167, %v3195
        %3197 = vdwg.mxu0
        %3198 = vmatpush.bf16.msra.mxu0 %v3045
        %3199 = vmatpush.bf16.msra.mxu0 %v3043
        %3200 = vmatpush.bf16.msra.mxu0 %v3041
        %3201 = vmatpush.bf16.msra.mxu0 %v3039
        %3202 = vmatpush.bf16.msra.mxu0 %v3037
        %3203 = vmatpush.bf16.msra.mxu0 %v3035
        %3204 = vmatpush.bf16.msra.mxu0 %v3033
        %3205 = vmatpush.bf16.msra.mxu0 %v3031
        %3206 = vmatmul.bf16.gmra.mxu0 %v2778
        %v3207 = vpop.f32.mrf.mxu0
        %v3208 = vadd.f32 %v3179, %v3207
        %v3209 = vpop.f32.mrf.mxu0
        %v3210 = vadd.f32 %v3181, %v3209
        %3211 = vmatmul.bf16.gmra.mxu0 %v2782
        %v3212 = vpop.f32.mrf.mxu0
        %v3213 = vadd.f32 %v3184, %v3212
        %v3214 = vpop.f32.mrf.mxu0
        %v3215 = vadd.f32 %v3186, %v3214
        %3216 = vmatmul.bf16.gmra.mxu0 %v2786
        %v3217 = vpop.f32.mrf.mxu0
        %v3218 = vadd.f32 %v3189, %v3217
        %v3219 = vpop.f32.mrf.mxu0
        %v3220 = vadd.f32 %v3191, %v3219
        %3221 = vmatmul.bf16.gmra.mxu0 %v2790
        %v3222 = vpop.f32.mrf.mxu0
        %v3223 = vadd.f32 %v3194, %v3222
        %v3224 = vpop.f32.mrf.mxu0
        %v3225 = vadd.f32 %v3196, %v3224
        %3226 = vdwg.mxu0
        %3227 = vmatpush.bf16.msra.mxu0 %v2998
        %3228 = vmatpush.bf16.msra.mxu0 %v2996
        %3229 = vmatpush.bf16.msra.mxu0 %v2994
        %3230 = vmatpush.bf16.msra.mxu0 %v2992
        %3231 = vmatpush.bf16.msra.mxu0 %v2990
        %3232 = vmatpush.bf16.msra.mxu0 %v2988
        %3233 = vmatpush.bf16.msra.mxu0 %v2986
        %3234 = vmatpush.bf16.msra.mxu0 %v2984
        %3235 = vmatmul.bf16.gmra.mxu0 %v2775
        %v3236 = vpop.f32.mrf.mxu0
        %v3237 = vadd.f32 0.0, %v3236
        %v3238 = vpop.f32.mrf.mxu0
        %v3239 = vadd.f32 0.0, %v3238
        %3240 = vmatmul.bf16.gmra.mxu0 %v2779
        %v3241 = vpop.f32.mrf.mxu0
        %v3242 = vadd.f32 0.0, %v3241
        %v3243 = vpop.f32.mrf.mxu0
        %v3244 = vadd.f32 0.0, %v3243
        %3245 = vmatmul.bf16.gmra.mxu0 %v2783
        %v3246 = vpop.f32.mrf.mxu0
        %v3247 = vadd.f32 0.0, %v3246
        %v3248 = vpop.f32.mrf.mxu0
        %v3249 = vadd.f32 0.0, %v3248
        %3250 = vmatmul.bf16.gmra.mxu0 %v2787
        %v3251 = vpop.f32.mrf.mxu0
        %v3252 = vadd.f32 0.0, %v3251
        %v3253 = vpop.f32.mrf.mxu0
        %v3254 = vadd.f32 0.0, %v3253
        %3255 = vdwg.mxu0
        %3256 = vmatpush.bf16.msra.mxu0 %v3014
        %3257 = vmatpush.bf16.msra.mxu0 %v3012
        %3258 = vmatpush.bf16.msra.mxu0 %v3010
        %3259 = vmatpush.bf16.msra.mxu0 %v3008
        %3260 = vmatpush.bf16.msra.mxu0 %v3006
        %3261 = vmatpush.bf16.msra.mxu0 %v3004
        %3262 = vmatpush.bf16.msra.mxu0 %v3002
        %3263 = vmatpush.bf16.msra.mxu0 %v3000
        %3264 = vmatmul.bf16.gmra.mxu0 %v2776
        %v3265 = vpop.f32.mrf.mxu0
        %v3266 = vadd.f32 %v3237, %v3265
        %v3267 = vpop.f32.mrf.mxu0
        %v3268 = vadd.f32 %v3239, %v3267
        %3269 = vmatmul.bf16.gmra.mxu0 %v2780
        %v3270 = vpop.f32.mrf.mxu0
        %v3271 = vadd.f32 %v3242, %v3270
        %v3272 = vpop.f32.mrf.mxu0
        %v3273 = vadd.f32 %v3244, %v3272
        %3274 = vmatmul.bf16.gmra.mxu0 %v2784
        %v3275 = vpop.f32.mrf.mxu0
        %v3276 = vadd.f32 %v3247, %v3275
        %v3277 = vpop.f32.mrf.mxu0
        %v3278 = vadd.f32 %v3249, %v3277
        %3279 = vmatmul.bf16.gmra.mxu0 %v2788
        %v3280 = vpop.f32.mrf.mxu0
        %v3281 = vadd.f32 %v3252, %v3280
        %v3282 = vpop.f32.mrf.mxu0
        %v3283 = vadd.f32 %v3254, %v3282
        %3284 = vdwg.mxu0
        %3285 = vmatpush.bf16.msra.mxu0 %v3030
        %3286 = vmatpush.bf16.msra.mxu0 %v3028
        %3287 = vmatpush.bf16.msra.mxu0 %v3026
        %3288 = vmatpush.bf16.msra.mxu0 %v3024
        %3289 = vmatpush.bf16.msra.mxu0 %v3022
        %3290 = vmatpush.bf16.msra.mxu0 %v3020
        %3291 = vmatpush.bf16.msra.mxu0 %v3018
        %3292 = vmatpush.bf16.msra.mxu0 %v3016
        %3293 = vmatmul.bf16.gmra.mxu0 %v2777
        %v3294 = vpop.f32.mrf.mxu0
        %v3295 = vadd.f32 %v3266, %v3294
        %v3296 = vpop.f32.mrf.mxu0
        %v3297 = vadd.f32 %v3268, %v3296
        %3298 = vmatmul.bf16.gmra.mxu0 %v2781
        %v3299 = vpop.f32.mrf.mxu0
        %v3300 = vadd.f32 %v3271, %v3299
        %v3301 = vpop.f32.mrf.mxu0
        %v3302 = vadd.f32 %v3273, %v3301
        %3303 = vmatmul.bf16.gmra.mxu0 %v2785
        %v3304 = vpop.f32.mrf.mxu0
        %v3305 = vadd.f32 %v3276, %v3304
        %v3306 = vpop.f32.mrf.mxu0
        %v3307 = vadd.f32 %v3278, %v3306
        %3308 = vmatmul.bf16.gmra.mxu0 %v2789
        %v3309 = vpop.f32.mrf.mxu0
        %v3310 = vadd.f32 %v3281, %v3309
        %v3311 = vpop.f32.mrf.mxu0
        %v3312 = vadd.f32 %v3283, %v3311
        %3313 = vdwg.mxu0
        %3314 = vmatpush.bf16.msra.mxu0 %v3046
        %3315 = vmatpush.bf16.msra.mxu0 %v3044
        %3316 = vmatpush.bf16.msra.mxu0 %v3042
        %3317 = vmatpush.bf16.msra.mxu0 %v3040
        %3318 = vmatpush.bf16.msra.mxu0 %v3038
        %3319 = vmatpush.bf16.msra.mxu0 %v3036
        %3320 = vmatpush.bf16.msra.mxu0 %v3034
        %3321 = vmatpush.bf16.msra.mxu0 %v3032
        %3322 = vmatmul.bf16.gmra.mxu0 %v2778
        %v3323 = vpop.f32.mrf.mxu0
        %v3324 = vadd.f32 %v3295, %v3323
        %v3325 = vpop.f32.mrf.mxu0
        %v3326 = vadd.f32 %v3297, %v3325
        %3327 = vmatmul.bf16.gmra.mxu0 %v2782
        %v3328 = vpop.f32.mrf.mxu0
        %v3329 = vadd.f32 %v3300, %v3328
        %v3330 = vpop.f32.mrf.mxu0
        %v3331 = vadd.f32 %v3302, %v3330
        %3332 = vmatmul.bf16.gmra.mxu0 %v2786
        %v3333 = vpop.f32.mrf.mxu0
        %v3334 = vadd.f32 %v3305, %v3333
        %v3335 = vpop.f32.mrf.mxu0
        %v3336 = vadd.f32 %v3307, %v3335
        %3337 = vmatmul.bf16.gmra.mxu0 %v2790
        %v3338 = vpop.f32.mrf.mxu0
        %v3339 = vadd.f32 %v3310, %v3338
        %v3340 = vpop.f32.mrf.mxu0
        %v3341 = vadd.f32 %v3312, %v3340
        %3342 = vdwg.mxu0
        %v3343 = vadd.f32 %v2438, %v3208
        %v3344 = vadd.f32 %v2439, %v3324
        %v3345 = vadd.f32 %v2440, %v3210
        %v3346 = vadd.f32 %v2441, %v3326
        %v3347 = vadd.f32 %v2442, %v3213
        %v3348 = vadd.f32 %v2443, %v3329
        %v3349 = vadd.f32 %v2444, %v3215
        %v3350 = vadd.f32 %v2445, %v3331
        %v3351 = vadd.f32 %v2446, %v3218
        %v3352 = vadd.f32 %v2447, %v3334
        %v3353 = vadd.f32 %v2448, %v3220
        %v3354 = vadd.f32 %v2449, %v3336
        %v3355 = vadd.f32 %v2450, %v3223
        %v3356 = vadd.f32 %v2451, %v3339
        %v3357 = vadd.f32 %v2452, %v3225
        %v3358 = vadd.f32 %v2453, %v3341
        %v3359 = vld [vmem:[%s2] sm:$0x3]
        %v3361 = vperm.slane %v3359, 0
        %v3362 = vperm.slane %v3359, 1
        %v3365 = vadd.f32 %v3343, %v3361
        %v3366 = vadd.f32 %v3344, %v3362
        %v3367 = vadd.f32 %v3345, %v3361
        %v3368 = vadd.f32 %v3346, %v3362
        %v3369 = vadd.f32 %v3347, %v3361
        %v3370 = vadd.f32 %v3348, %v3362
        %v3371 = vadd.f32 %v3349, %v3361
        %v3372 = vadd.f32 %v3350, %v3362
        %v3373 = vadd.f32 %v3351, %v3361
        %v3374 = vadd.f32 %v3352, %v3362
        %v3375 = vadd.f32 %v3353, %v3361
        %v3376 = vadd.f32 %v3354, %v3362
        %v3377 = vadd.f32 %v3355, %v3361
        %v3378 = vadd.f32 %v3356, %v3362
        %v3379 = vadd.f32 %v3357, %v3361
        %v3380 = vadd.f32 %v3358, %v3362
        %v3381 = vmax.f32 %v3365, 0.0
        %v3382 = vmax.f32 %v3366, 0.0
        %v3383 = vmax.f32 %v3367, 0.0
        %v3384 = vmax.f32 %v3368, 0.0
        %v3385 = vmax.f32 %v3369, 0.0
        %v3386 = vmax.f32 %v3370, 0.0
        %v3387 = vmax.f32 %v3371, 0.0
        %v3388 = vmax.f32 %v3372, 0.0
        %v3389 = vmax.f32 %v3373, 0.0
        %v3390 = vmax.f32 %v3374, 0.0
        %v3391 = vmax.f32 %v3375, 0.0
        %v3392 = vmax.f32 %v3376, 0.0
        %v3393 = vmax.f32 %v3377, 0.0
        %v3394 = vmax.f32 %v3378, 0.0
        %v3395 = vmax.f32 %v3379, 0.0
        %v3396 = vmax.f32 %v3380, 0.0
        %3397 = vst [vmem:[%s217] sm:$0xff] %v3381
        %3398 = vst [vmem:[%s217 + $0x8] sm:$0xff] %v3382
        %3399 = vst [vmem:[%s217 + $0x10] sm:$0xff] %v3383
        %3400 = vst [vmem:[%s217 + $0x18] sm:$0xff] %v3384
        %3401 = vst [vmem:[%s217 + $0x20] sm:$0xff] %v3385
        %3402 = vst [vmem:[%s217 + $0x28] sm:$0xff] %v3386
        %3403 = vst [vmem:[%s217 + $0x30] sm:$0xff] %v3387
        %3404 = vst [vmem:[%s217 + $0x38] sm:$0xff] %v3388
        %3405 = vst [vmem:[%s217 + $0x40] sm:$0xff] %v3389
        %3406 = vst [vmem:[%s217 + $0x48] sm:$0xff] %v3390
        %3407 = vst [vmem:[%s217 + $0x50] sm:$0xff] %v3391
        %3408 = vst [vmem:[%s217 + $0x58] sm:$0xff] %v3392
        %3409 = vst [vmem:[%s217 + $0x60] sm:$0xff] %v3393
        %3410 = vst [vmem:[%s217 + $0x68] sm:$0xff] %v3394
        %3411 = vst [vmem:[%s217 + $0x70] sm:$0xff] %v3395
        %3412 = vst [vmem:[%s217 + $0x78] sm:$0xff] %v3396
        %p3413 = scmp.lt.s32.totalorder %s17, 3
        %s3414 = scalar_select %p3413, %s17, 3
        %s3415 = smul.addr %s3414, 16
        %s3416 = smul.addr %s3415, 8
        %s3417 = scalar_lea.vmem %s3, %s3416
        // Predicated region
        $region37: #{generator_forward.5} parent=31 // pred_check
          %p3418 = pneg %p108
        $region38: #{generator_forward.5} parent=31 // pred_check_branch
          %3420 = sbr.rel (%p3418) target = $region40
        $region39: #{generator_forward.5} parent=31 // pred_region
          _
        $region40: #{generator_forward.5} parent=31 // pred_fallthru
          _
      $region32: #{generator_forward.5} parent=5 // pred_fallthru
        _
      %p3421 = scmp.le.s32.totalorder 2, %s12
      // Predicated region
      $region41: #{generator_forward.5} parent=5 // pred_check
        %p3422 = pneg %p3421
      $region42: #{generator_forward.5} parent=5 // pred_check_branch
        %3424 = sbr.rel (%p3422) target = $region44
      $region43: #{generator_forward.5} parent=5 // pred_region
        %s3425 = ssub.s32 %s12, 2
        // Predicated region
        $region45: #{generator_forward.5} parent=43 // pred_check
          %p3426 = pneg %p114
        $region46: #{generator_forward.5} parent=43 // pred_check_branch
          %3428 = sbr.rel (%p3426) target = $region48
        $region47: #{generator_forward.5} parent=43 // pred_region
          %p3429 = scmp.lt.s32.totalorder %s18, 3
          %s3430 = scalar_select %p3429, %s18, 3
          %s3431 = smul.addr %s3430, 16
          %s3432 = smul.addr %s3431, 8
          %s3433 = scalar_lea.vmem %s3, %s3432
        $region48: #{generator_forward.5} parent=43 // pred_fallthru
          _
      $region44: #{generator_forward.5} parent=5 // pred_fallthru
        _
    $region6: #{generator_forward.5} parent=1 // loop_footer
      %s16 = sadd.s32 1, %s12
    $region7: #{generator_forward.5} parent=1 // loop_footer_branch
      %11 = sbr.rel target = $region3
    $region8: #{generator_forward.5} parent=1 // loop_exit
      _
    %3434 = vsyncpa [#allocation3], 1
    %s3435 = scalar_lea.sflag [#allocation3], 1
    %3436 = vsyncpa %s3435, 1

// kernel: generator_forward.6
$region0: #{generator_forward.6}
  #allocation0 [shape = 'u32[]', space=smem, size = 0x4, offset = 0x4, fixed_abs, tag = 'smem constant byte address 0x4 - core index']
  #allocation1 [shape = 'u32[72,128]{1,0:T(1,128)}', space=vmem, size = 0x9000, scoped, tag = 'internal scratch']
  %s0 = inlined_call_operand.vmem [shape: f32[8,9,9,256], index: 0, kind: input, shape index: {}]
  %s1 = inlined_call_operand.vmem [shape: bf16[4,4,256,128], index: 1, kind: input, shape index: {}]
  %s2 = inlined_call_operand.vmem [shape: f32[1,128], index: 2, kind: input, shape index: {}]
  %s3 = inlined_call_operand.vmem [shape: f32[4,128,128], index: 3, kind: output, shape index: {}]
  %s4 = sld [smem:[#allocation0]]
  $region45: #{generator_forward.6} parent=0
    _
  %s6 = ssub.s32 1, %s4
  %s7 = scalar_select 0, %s6, %s4
  loop: start=0, step=1, limit=6
  $region2: #{generator_forward.6} parent=0 // loop_pre_header
    _
  $region3: #{generator_forward.6} parent=0 // loop_header
    %s9 = sphi 0, %s13
    %p10 = scmp.ge.s32.totalorder %s9, 6
    %s19 = sphi 0, %s21
    %s22 = sphi 0, %s19
    %s23 = sphi 0, %s22
    %s39 = sphi 0, %s23
    %s45 = sphi 0, %s47
    %s48 = sphi 0, %s45
    %s49 = sphi 0, %s48
    %s65 = sphi 0, %s49
    %s69 = sphi 0, %s69
    %s71 = sphi 0, %s69
    %s72 = sphi 0, %s71
    %s86 = sphi 0, %s72
    %s92 = sphi 0, %s94
    %s95 = sphi 0, %s92
    %s96 = sphi 0, %s95
    %s112 = sphi 0, %s96
  $region4: #{generator_forward.6} parent=0 // loop_header_branch
    %12 = sbr.rel (%p10) target = $region8
  $region5: #{generator_forward.6} parent=0 // loop_body
    %s14 = ssub.s32 %s9, 1
    %s15 = ssub.s32 %s9, 2
    %s16 = sadd.s32 %s9, 1
    %s17 = ssub.s32 %s9, %s16
    %p18 = scmp.eq.s32.totalorder %s17, 0
    %s20 = sadd.s32 %s19, 1
    %s21 = scalar_select %p18, %s19, %s20
    %p24 = pneg %p18
    %p25 = scmp.eq.s32.totalorder %s9, 3
    %p26 = por %p24, %p25
    %p27 = scmp.ne.s32.totalorder %s19, %s22
    %p28 = scmp.eq.s32.totalorder %s9, 0
    %p29 = por %p27, %p28
    %p30 = scmp.ne.s32.totalorder %s19, %s22
    %p31 = scmp.eq.s32.totalorder %s14, 3
    %p32 = por %p30, %p31
    %p33 = scmp.ne.s32.totalorder %s22, %s23
    %p34 = scmp.eq.s32.totalorder %s14, 0
    %p35 = por %p33, %p34
    %p36 = scmp.ne.s32.totalorder %s22, %s23
    %p37 = scmp.eq.s32.totalorder %s15, 3
    %p38 = por %p36, %p37
    %p40 = scmp.ne.s32.totalorder %s23, %s39
    %p41 = scmp.eq.s32.totalorder %s15, 0
    %p42 = por %p40, %p41
    %s43 = ssub.s32 %s9, %s16
    %p44 = scmp.eq.s32.totalorder %s43, 0
    %s46 = sadd.s32 %s45, 1
    %s47 = scalar_select %p44, %s45, %s46
    %p50 = pneg %p44
    %p51 = scmp.eq.s32.totalorder %s9, 3
    %p52 = por %p50, %p51
    %p53 = scmp.ne.s32.totalorder %s45, %s48
    %p54 = scmp.eq.s32.totalorder %s9, 0
    %p55 = por %p53, %p54
    %p56 = scmp.ne.s32.totalorder %s45, %s48
    %p57 = scmp.eq.s32.totalorder %s14, 3
    %p58 = por %p56, %p57
    %p59 = scmp.ne.s32.totalorder %s48, %s49
    %p60 = scmp.eq.s32.totalorder %s14, 0
    %p61 = por %p59, %p60
    %p62 = scmp.ne.s32.totalorder %s48, %s49
    %p63 = scmp.eq.s32.totalorder %s15, 3
    %p64 = por %p62, %p63
    %p66 = scmp.ne.s32.totalorder %s49, %s65
    %p67 = scmp.eq.s32.totalorder %s15, 0
    %p68 = por %p66, %p67
    %s70 = sadd.s32 %s69, 1
    %p73 = scmp.eq.s32.totalorder %s9, 3
    %p74 = scmp.ne.s32.totalorder %s69, %s71
    %p75 = scmp.eq.s32.totalorder %s9, 0
    %p76 = por %p74, %p75
    %p77 = scmp.ne.s32.totalorder %s69, %s71
    %p78 = scmp.eq.s32.totalorder %s14, 3
    %p79 = por %p77, %p78
    %p80 = scmp.ne.s32.totalorder %s71, %s72
    %p81 = scmp.eq.s32.totalorder %s14, 0
    %p82 = por %p80, %p81
    %p83 = scmp.ne.s32.totalorder %s71, %s72
    %p84 = scmp.eq.s32.totalorder %s15, 3
    %p85 = por %p83, %p84
    %p87 = scmp.ne.s32.totalorder %s72, %s86
    %p88 = scmp.eq.s32.totalorder %s15, 0
    %p89 = por %p87, %p88
    %s90 = ssub.s32 %s9, %s16
    %p91 = scmp.eq.s32.totalorder %s90, 0
    %s93 = sadd.s32 %s92, 1
    %s94 = scalar_select %p91, %s92, %s93
    %p97 = pneg %p91
    %p98 = scmp.eq.s32.totalorder %s9, 3
    %p99 = por %p97, %p98
    %p100 = scmp.ne.s32.totalorder %s92, %s95
    %p101 = scmp.eq.s32.totalorder %s9, 0
    %p102 = por %p100, %p101
    %p103 = scmp.ne.s32.totalorder %s92, %s95
    %p104 = scmp.eq.s32.totalorder %s14, 3
    %p105 = por %p103, %p104
    %p106 = scmp.ne.s32.totalorder %s95, %s96
    %p107 = scmp.eq.s32.totalorder %s14, 0
    %p108 = por %p106, %p107
    %p109 = scmp.ne.s32.totalorder %s95, %s96
    %p110 = scmp.eq.s32.totalorder %s15, 3
    %p111 = por %p109, %p110
    %p113 = scmp.ne.s32.totalorder %s96, %s112
    %p114 = scmp.eq.s32.totalorder %s15, 0
    %p115 = por %p113, %p114
    %p116 = scmp.le.s32.totalorder 1, %s9
    %p117 = scmp.lt.s32.totalorder %s9, 5
    %p118 = pnand %p116, %p117
    %p119 = pneg %p118
    // Predicated region
    $region9: #{generator_forward.6} parent=5 // pred_check
      _
    $region10: #{generator_forward.6} parent=5 // pred_check_branch
      %121 = sbr.rel (%p118) target = $region12
    $region11: #{generator_forward.6} parent=5 // pred_region
      %s122 = ssub.s32 %s9, 1
      // Predicated region
      $region13: #{generator_forward.6} parent=11 // pred_check
        %p123 = pneg %p82
      $region14: #{generator_forward.6} parent=11 // pred_check_branch
        %125 = sbr.rel (%p123) target = $region16
      $region15: #{generator_forward.6} parent=11 // pred_region
        _
      $region16: #{generator_forward.6} parent=11 // pred_fallthru
        _
    $region12: #{generator_forward.6} parent=5 // pred_fallthru
      _
    %p126 = scmp.lt.s32.totalorder %s9, 4
    // Predicated region
    $region17: #{generator_forward.6} parent=5 // pred_check
      %p127 = pneg %p126
    $region18: #{generator_forward.6} parent=5 // pred_check_branch
      %129 = sbr.rel (%p127) target = $region20
    $region19: #{generator_forward.6} parent=5 // pred_region
      // Predicated region
      $region21: #{generator_forward.6} parent=19 // pred_check
        %p130 = pneg %p29
      $region22: #{generator_forward.6} parent=19 // pred_check_branch
        %132 = sbr.rel (%p130) target = $region24
      $region23: #{generator_forward.6} parent=19 // pred_region
        %s133 = smul.u32 2, %s9
        %p134 = scmp.lt.s32.totalorder %s133, 7
        %s135 = scalar_select %p134, %s133, 7
        %s136 = smul.addr %s135, 36
        %s137 = smul.addr %s136, 8
        %s138 = scalar_lea.vmem %s0, %s137
        %s139 = smul.u32 2, %s9
      $region24: #{generator_forward.6} parent=19 // pred_fallthru
        _
      // Predicated region
      $region25: #{generator_forward.6} parent=19 // pred_check
        %p140 = pneg %p55
      $region26: #{generator_forward.6} parent=19 // pred_check_branch
        %142 = sbr.rel (%p140) target = $region28
      $region27: #{generator_forward.6} parent=19 // pred_region
        %p143 = scmp.lt.s32.totalorder %s9, 3
        %s144 = scalar_select %p143, %s9, 3
        %s145 = smul.addr %s144, 128
        %s146 = smul.addr %s145, 4
        %s147 = scalar_lea.vmem %s1, %s146
      $region28: #{generator_forward.6} parent=19 // pred_fallthru
        _
    $region20: #{generator_forward.6} parent=5 // pred_fallthru
      _
    %p148 = scmp.le.s32.totalorder 1, %s9
    %p149 = scmp.lt.s32.totalorder %s9, 5
    %p150 = pnand %p148, %p149
    %p151 = pneg %p150
    // Predicated region
    $region29: #{generator_forward.6} parent=5 // pred_check
      _
    $region30: #{generator_forward.6} parent=5 // pred_check_branch
      %153 = sbr.rel (%p150) target = $region32
    $region31: #{generator_forward.6} parent=5 // pred_region
      %s154 = ssub.s32 %s9, 1
      %s155 = smul.u32 2, %s14
      %p156 = scmp.lt.s32.totalorder %s155, 7
      %s157 = scalar_select %p156, %s155, 7
      %s158 = smul.addr %s157, 36
      %s159 = smul.addr %s158, 8
      %s160 = scalar_lea.vmem %s0, %s159
      %p161 = pneg %p35
      %p162 = pneg %p32
      %p163 = scmp.lt.s32.totalorder %s14, 3
      %s164 = scalar_select %p163, %s14, 3
      %s165 = smul.addr %s164, 128
      %s166 = smul.addr %s165, 4
      %s167 = scalar_lea.vmem %s1, %s166
      %p168 = pneg %p61
      %p169 = pneg %p58
      %p170 = pneg %p82
      %p171 = pneg %p79
      %p172 = pneg %p108
      %p173 = pneg %p105
      %p174 = scmp.lt.s32.totalorder %s14, 3
      %s175 = scalar_select %p174, %s14, 3
      %s176 = smul.addr %s175, 16
      %s177 = smul.addr %s176, 8
      %s178 = scalar_lea.vmem %s3, %s177
      %s179 = smul.u32 2, %s14
      %p180 = scmp.lt.s32.totalorder %s179, 7
      %s181 = scalar_select %p180, %s179, 7
      %s182 = smul.addr %s181, 36
      %s183 = smul.addr %s182, 8
      %s184 = scalar_lea.vmem %s0, %s183
      %s185 = smul.u32 2, %s14
      %p186 = scmp.lt.s32.totalorder %s14, 3
      %s187 = scalar_select %p186, %s14, 3
      %s188 = smul.addr %s187, 128
      %s189 = smul.addr %s188, 4
      %s190 = scalar_lea.vmem %s1, %s189
      %p191 = scmp.lt.s32.totalorder %s14, 3
      %s192 = scalar_select %p191, %s14, 3
      %s193 = smul.addr %s192, 16
      %s194 = smul.addr %s193, 8
      %s195 = scalar_lea.vmem %s3, %s194
      %v196 = vld [vmem:[%s184] sm:$0xff]
      %v197 = vld [vmem:[%s184 + $0x8] sm:$0xff]
      %v198 = vld [vmem:[%s184 + $0x20] sm:$0xff]
      %v199 = vld [vmem:[%s184 + $0x28] sm:$0xff]
      %v200 = vld [vmem:[%s184 + $0x40] sm:$0xff]
      %v201 = vld [vmem:[%s184 + $0x48] sm:$0xff]
      %v202 = vld [vmem:[%s184 + $0x60] sm:$0xff]
      %v203 = vld [vmem:[%s184 + $0x68] sm:$0xff]
      %v204 = vld [vmem:[%s184 + $0x80] sm:$0xff]
      %v205 = vld [vmem:[%s184 + $0x88] sm:$0xff]
      %v206 = vld [vmem:[%s184 + $0xa0] sm:$0xff]
      %v207 = vld [vmem:[%s184 + $0xa8] sm:$0xff]
      %v208 = vld [vmem:[%s184 + $0xc0] sm:$0xff]
      %v209 = vld [vmem:[%s184 + $0xc8] sm:$0xff]
      %v210 = vld [vmem:[%s184 + $0xe0] sm:$0xff]
      %v211 = vld [vmem:[%s184 + $0xe8] sm:$0xff]
      %v212 = vld [vmem:[%s184 + $0x120] sm:$0xff]
      %v213 = vld [vmem:[%s184 + $0x128] sm:$0xff]
      %v214 = vld [vmem:[%s184 + $0x140] sm:$0xff]
      %v215 = vld [vmem:[%s184 + $0x148] sm:$0xff]
      %v216 = vld [vmem:[%s184 + $0x160] sm:$0xff]
      %v217 = vld [vmem:[%s184 + $0x168] sm:$0xff]
      %v218 = vld [vmem:[%s184 + $0x180] sm:$0xff]
      %v219 = vld [vmem:[%s184 + $0x188] sm:$0xff]
      %v220 = vld [vmem:[%s184 + $0x1a0] sm:$0xff]
      %v221 = vld [vmem:[%s184 + $0x1a8] sm:$0xff]
      %v222 = vld [vmem:[%s184 + $0x1c0] sm:$0xff]
      %v223 = vld [vmem:[%s184 + $0x1c8] sm:$0xff]
      %v224 = vld [vmem:[%s184 + $0x1e0] sm:$0xff]
      %v225 = vld [vmem:[%s184 + $0x1e8] sm:$0xff]
      %v226 = vld [vmem:[%s184 + $0x200] sm:$0xff]
      %v227 = vld [vmem:[%s184 + $0x208] sm:$0xff]
      %v228 = vld [vmem:[%s190] sm:$0xf]
      %v229 = vld [vmem:[%s190 + $0x4] sm:$0xf]
      %v230 = vld [vmem:[%s190 + $0x8] sm:$0xf]
      %v231 = vld [vmem:[%s190 + $0xc] sm:$0xf]
      %v232 = vld [vmem:[%s190 + $0x10] sm:$0xf]
      %v233 = vld [vmem:[%s190 + $0x14] sm:$0xf]
      %v234 = vld [vmem:[%s190 + $0x18] sm:$0xf]
      %v235 = vld [vmem:[%s190 + $0x1c] sm:$0xf]
      %v236 = vld [vmem:[%s190 + $0x20] sm:$0xf]
      %v237 = vld [vmem:[%s190 + $0x24] sm:$0xf]
      %v238 = vld [vmem:[%s190 + $0x28] sm:$0xf]
      %v239 = vld [vmem:[%s190 + $0x2c] sm:$0xf]
      %v240 = vld [vmem:[%s190 + $0x30] sm:$0xf]
      %v241 = vld [vmem:[%s190 + $0x34] sm:$0xf]
      %v242 = vld [vmem:[%s190 + $0x38] sm:$0xf]
      %v243 = vld [vmem:[%s190 + $0x3c] sm:$0xf]
      %v244 = vld [vmem:[%s190 + $0x40] sm:$0xf]
      %v245 = vld [vmem:[%s190 + $0x44] sm:$0xf]
      %v246 = vld [vmem:[%s190 + $0x48] sm:$0xf]
      %v247 = vld [vmem:[%s190 + $0x4c] sm:$0xf]
      %v248 = vld [vmem:[%s190 + $0x50] sm:$0xf]
      %v249 = vld [vmem:[%s190 + $0x54] sm:$0xf]
      %v250 = vld [vmem:[%s190 + $0x58] sm:$0xf]
      %v251 = vld [vmem:[%s190 + $0x5c] sm:$0xf]
      %v252 = vld [vmem:[%s190 + $0x60] sm:$0xf]
      %v253 = vld [vmem:[%s190 + $0x64] sm:$0xf]
      %v254 = vld [vmem:[%s190 + $0x68] sm:$0xf]
      %v255 = vld [vmem:[%s190 + $0x6c] sm:$0xf]
      %v256 = vld [vmem:[%s190 + $0x70] sm:$0xf]
      %v257 = vld [vmem:[%s190 + $0x74] sm:$0xf]
      %v258 = vld [vmem:[%s190 + $0x78] sm:$0xf]
      %v259 = vld [vmem:[%s190 + $0x7c] sm:$0xf]
      %v260 = vpack.c.bf16 %v198, %v196
      %v261 = vpack.c.bf16 %v199, %v197
      %v262 = vpack.c.bf16 %v202, %v200
      %v263 = vpack.c.bf16 %v203, %v201
      %v264 = vpack.c.bf16 %v206, %v204
      %v265 = vpack.c.bf16 %v207, %v205
      %v266 = vpack.c.bf16 %v210, %v208
      %v267 = vpack.c.bf16 %v211, %v209
      %v268 = vpack.c.bf16 %v214, %v212
      %v269 = vpack.c.bf16 %v215, %v213
      %v270 = vpack.c.bf16 %v218, %v216
      %v271 = vpack.c.bf16 %v219, %v217
      %v272 = vpack.c.bf16 %v222, %v220
      %v273 = vpack.c.bf16 %v223, %v221
      %v274 = vpack.c.bf16 %v226, %v224
      %v275 = vpack.c.bf16 %v227, %v225
      %v276 = vld [vmem:[%s184] sm:$0xfe]
      %v277 = vld [vmem:[%s184 + $0x8] sm:$0xfe]
      %v278 = vld [vmem:[%s184 + $0x10] sm:$0x1]
      %v279 = vld [vmem:[%s184 + $0x18] sm:$0x1]
      %v280 = vld [vmem:[%s184 + $0x20] sm:$0xfe]
      %v281 = vld [vmem:[%s184 + $0x28] sm:$0xfe]
      %v282 = vld [vmem:[%s184 + $0x30] sm:$0x1]
      %v283 = vld [vmem:[%s184 + $0x38] sm:$0x1]
      %v284 = vld [vmem:[%s184 + $0x40] sm:$0xfe]
      %v285 = vld [vmem:[%s184 + $0x48] sm:$0xfe]
      %v286 = vld [vmem:[%s184 + $0x50] sm:$0x1]
      %v287 = vld [vmem:[%s184 + $0x58] sm:$0x1]
      %v288 = vld [vmem:[%s184 + $0x60] sm:$0xfe]
      %v289 = vld [vmem:[%s184 + $0x68] sm:$0xfe]
      %v290 = vld [vmem:[%s184 + $0x70] sm:$0x1]
      %v291 = vld [vmem:[%s184 + $0x78] sm:$0x1]
      %v292 = vld [vmem:[%s184 + $0x80] sm:$0xfe]
      %v293 = vld [vmem:[%s184 + $0x88] sm:$0xfe]
      %v294 = vld [vmem:[%s184 + $0x90] sm:$0x1]
      %v295 = vld [vmem:[%s184 + $0x98] sm:$0x1]
      %v296 = vld [vmem:[%s184 + $0xa0] sm:$0xfe]
      %v297 = vld [vmem:[%s184 + $0xa8] sm:$0xfe]
      %v298 = vld [vmem:[%s184 + $0xb0] sm:$0x1]
      %v299 = vld [vmem:[%s184 + $0xb8] sm:$0x1]
      %v300 = vld [vmem:[%s184 + $0xc0] sm:$0xfe]
      %v301 = vld [vmem:[%s184 + $0xc8] sm:$0xfe]
      %v302 = vld [vmem:[%s184 + $0xd0] sm:$0x1]
      %v303 = vld [vmem:[%s184 + $0xd8] sm:$0x1]
      %v304 = vld [vmem:[%s184 + $0xe0] sm:$0xfe]
      %v305 = vld [vmem:[%s184 + $0xe8] sm:$0xfe]
      %v306 = vld [vmem:[%s184 + $0xf0] sm:$0x1]
      %v307 = vld [vmem:[%s184 + $0xf8] sm:$0x1]
      %v308 = vld [vmem:[%s184 + $0x120] sm:$0xfe]
      %v309 = vld [vmem:[%s184 + $0x128] sm:$0xfe]
      %v310 = vld [vmem:[%s184 + $0x130] sm:$0x1]
      %v311 = vld [vmem:[%s184 + $0x138] sm:$0x1]
      %v312 = vld [vmem:[%s184 + $0x140] sm:$0xfe]
      %v313 = vld [vmem:[%s184 + $0x148] sm:$0xfe]
      %v314 = vld [vmem:[%s184 + $0x150] sm:$0x1]
      %v315 = vld [vmem:[%s184 + $0x158] sm:$0x1]
      %v316 = vld [vmem:[%s184 + $0x160] sm:$0xfe]
      %v317 = vld [vmem:[%s184 + $0x168] sm:$0xfe]
      %v318 = vld [vmem:[%s184 + $0x170] sm:$0x1]
      %v319 = vld [vmem:[%s184 + $0x178] sm:$0x1]
      %v320 = vld [vmem:[%s184 + $0x180] sm:$0xfe]
      %v321 = vld [vmem:[%s184 + $0x188] sm:$0xfe]
      %v322 = vld [vmem:[%s184 + $0x190] sm:$0x1]
      %v323 = vld [vmem:[%s184 + $0x198] sm:$0x1]
      %v324 = vld [vmem:[%s184 + $0x1a0] sm:$0xfe]
      %v325 = vld [vmem:[%s184 + $0x1a8] sm:$0xfe]
      %v326 = vld [vmem:[%s184 + $0x1b0] sm:$0x1]
      %v327 = vld [vmem:[%s184 + $0x1b8] sm:$0x1]
      %v328 = vld [vmem:[%s184 + $0x1c0] sm:$0xfe]
      %v329 = vld [vmem:[%s184 + $0x1c8] sm:$0xfe]
      %v330 = vld [vmem:[%s184 + $0x1d0] sm:$0x1]
      %v331 = vld [vmem:[%s184 + $0x1d8] sm:$0x1]
      %v332 = vld [vmem:[%s184 + $0x1e0] sm:$0xfe]
      %v333 = vld [vmem:[%s184 + $0x1e8] sm:$0xfe]
      %v334 = vld [vmem:[%s184 + $0x1f0] sm:$0x1]
      %v335 = vld [vmem:[%s184 + $0x1f8] sm:$0x1]
      %v336 = vld [vmem:[%s184 + $0x200] sm:$0xfe]
      %v337 = vld [vmem:[%s184 + $0x208] sm:$0xfe]
      %v338 = vld [vmem:[%s184 + $0x210] sm:$0x1]
      %v339 = vld [vmem:[%s184 + $0x218] sm:$0x1]
      %vm404 = vcmask 1046528
      %v405 = vrot.slane %v276, 1
      %v406 = vrot.slane %v278, 1
      %v407 = vsel %vm404, %v405, %v406
      %v408 = vrot.slane %v277, 1
      %v409 = vrot.slane %v279, 1
      %v410 = vsel %vm404, %v408, %v409
      %v411 = vrot.slane %v280, 1
      %v412 = vrot.slane %v282, 1
      %v413 = vsel %vm404, %v411, %v412
      %v414 = vrot.slane %v281, 1
      %v415 = vrot.slane %v283, 1
      %v416 = vsel %vm404, %v414, %v415
      %v417 = vrot.slane %v284, 1
      %v418 = vrot.slane %v286, 1
      %v419 = vsel %vm404, %v417, %v418
      %v420 = vrot.slane %v285, 1
      %v421 = vrot.slane %v287, 1
      %v422 = vsel %vm404, %v420, %v421
      %v423 = vrot.slane %v288, 1
      %v424 = vrot.slane %v290, 1
      %v425 = vsel %vm404, %v423, %v424
      %v426 = vrot.slane %v289, 1
      %v427 = vrot.slane %v291, 1
      %v428 = vsel %vm404, %v426, %v427
      %v429 = vrot.slane %v292, 1
      %v430 = vrot.slane %v294, 1
      %v431 = vsel %vm404, %v429, %v430
      %v432 = vrot.slane %v293, 1
      %v433 = vrot.slane %v295, 1
      %v434 = vsel %vm404, %v432, %v433
      %v435 = vrot.slane %v296, 1
      %v436 = vrot.slane %v298, 1
      %v437 = vsel %vm404, %v435, %v436
      %v438 = vrot.slane %v297, 1
      %v439 = vrot.slane %v299, 1
      %v440 = vsel %vm404, %v438, %v439
      %v441 = vrot.slane %v300, 1
      %v442 = vrot.slane %v302, 1
      %v443 = vsel %vm404, %v441, %v442
      %v444 = vrot.slane %v301, 1
      %v445 = vrot.slane %v303, 1
      %v446 = vsel %vm404, %v444, %v445
      %v447 = vrot.slane %v304, 1
      %v448 = vrot.slane %v306, 1
      %v449 = vsel %vm404, %v447, %v448
      %v450 = vrot.slane %v305, 1
      %v451 = vrot.slane %v307, 1
      %v452 = vsel %vm404, %v450, %v451
      %v453 = vrot.slane %v308, 1
      %v454 = vrot.slane %v310, 1
      %v455 = vsel %vm404, %v453, %v454
      %v456 = vrot.slane %v309, 1
      %v457 = vrot.slane %v311, 1
      %v458 = vsel %vm404, %v456, %v457
      %v459 = vrot.slane %v312, 1
      %v460 = vrot.slane %v314, 1
      %v461 = vsel %vm404, %v459, %v460
      %v462 = vrot.slane %v313, 1
      %v463 = vrot.slane %v315, 1
      %v464 = vsel %vm404, %v462, %v463
      %v465 = vrot.slane %v316, 1
      %v466 = vrot.slane %v318, 1
      %v467 = vsel %vm404, %v465, %v466
      %v468 = vrot.slane %v317, 1
      %v469 = vrot.slane %v319, 1
      %v470 = vsel %vm404, %v468, %v469
      %v471 = vrot.slane %v320, 1
      %v472 = vrot.slane %v322, 1
      %v473 = vsel %vm404, %v471, %v472
      %v474 = vrot.slane %v321, 1
      %v475 = vrot.slane %v323, 1
      %v476 = vsel %vm404, %v474, %v475
      %v477 = vrot.slane %v324, 1
      %v478 = vrot.slane %v326, 1
      %v479 = vsel %vm404, %v477, %v478
      %v480 = vrot.slane %v325, 1
      %v481 = vrot.slane %v327, 1
      %v482 = vsel %vm404, %v480, %v481
      %v483 = vrot.slane %v328, 1
      %v484 = vrot.slane %v330, 1
      %v485 = vsel %vm404, %v483, %v484
      %v486 = vrot.slane %v329, 1
      %v487 = vrot.slane %v331, 1
      %v488 = vsel %vm404, %v486, %v487
      %v489 = vrot.slane %v332, 1
      %v490 = vrot.slane %v334, 1
      %v491 = vsel %vm404, %v489, %v490
      %v492 = vrot.slane %v333, 1
      %v493 = vrot.slane %v335, 1
      %v494 = vsel %vm404, %v492, %v493
      %v495 = vrot.slane %v336, 1
      %v496 = vrot.slane %v338, 1
      %v497 = vsel %vm404, %v495, %v496
      %v498 = vrot.slane %v337, 1
      %v499 = vrot.slane %v339, 1
      %v500 = vsel %vm404, %v498, %v499
      %s533 = scalar_lea.vmem %s190, 128
      %v534 = vld [vmem:[%s533] sm:$0xf]
      %v535 = vld [vmem:[%s533 + $0x4] sm:$0xf]
      %v536 = vld [vmem:[%s533 + $0x8] sm:$0xf]
      %v537 = vld [vmem:[%s533 + $0xc] sm:$0xf]
      %v538 = vld [vmem:[%s533 + $0x10] sm:$0xf]
      %v539 = vld [vmem:[%s533 + $0x14] sm:$0xf]
      %v540 = vld [vmem:[%s533 + $0x18] sm:$0xf]
      %v541 = vld [vmem:[%s533 + $0x1c] sm:$0xf]
      %v542 = vld [vmem:[%s533 + $0x20] sm:$0xf]
      %v543 = vld [vmem:[%s533 + $0x24] sm:$0xf]
      %v544 = vld [vmem:[%s533 + $0x28] sm:$0xf]
      %v545 = vld [vmem:[%s533 + $0x2c] sm:$0xf]
      %v546 = vld [vmem:[%s533 + $0x30] sm:$0xf]
      %v547 = vld [vmem:[%s533 + $0x34] sm:$0xf]
      %v548 = vld [vmem:[%s533 + $0x38] sm:$0xf]
      %v549 = vld [vmem:[%s533 + $0x3c] sm:$0xf]
      %v550 = vld [vmem:[%s533 + $0x40] sm:$0xf]
      %v551 = vld [vmem:[%s533 + $0x44] sm:$0xf]
      %v552 = vld [vmem:[%s533 + $0x48] sm:$0xf]
      %v553 = vld [vmem:[%s533 + $0x4c] sm:$0xf]
      %v554 = vld [vmem:[%s533 + $0x50] sm:$0xf]
      %v555 = vld [vmem:[%s533 + $0x54] sm:$0xf]
      %v556 = vld [vmem:[%s533 + $0x58] sm:$0xf]
      %v557 = vld [vmem:[%s533 + $0x5c] sm:$0xf]
      %v558 = vld [vmem:[%s533 + $0x60] sm:$0xf]
      %v559 = vld [vmem:[%s533 + $0x64] sm:$0xf]
      %v560 = vld [vmem:[%s533 + $0x68] sm:$0xf]
      %v561 = vld [vmem:[%s533 + $0x6c] sm:$0xf]
      %v562 = vld [vmem:[%s533 + $0x70] sm:$0xf]
      %v563 = vld [vmem:[%s533 + $0x74] sm:$0xf]
      %v564 = vld [vmem:[%s533 + $0x78] sm:$0xf]
      %v565 = vld [vmem:[%s533 + $0x7c] sm:$0xf]
      %v566 = vpack.c.bf16 %v413, %v407
      %v567 = vpack.c.bf16 %v416, %v410
      %v568 = vpack.c.bf16 %v425, %v419
      %v569 = vpack.c.bf16 %v428, %v422
      %v570 = vpack.c.bf16 %v437, %v431
      %v571 = vpack.c.bf16 %v440, %v434
      %v572 = vpack.c.bf16 %v449, %v443
      %v573 = vpack.c.bf16 %v452, %v446
      %v574 = vpack.c.bf16 %v461, %v455
      %v575 = vpack.c.bf16 %v464, %v458
      %v576 = vpack.c.bf16 %v473, %v467
      %v577 = vpack.c.bf16 %v476, %v470
      %v578 = vpack.c.bf16 %v485, %v479
      %v579 = vpack.c.bf16 %v488, %v482
      %v580 = vpack.c.bf16 %v497, %v491
      %v581 = vpack.c.bf16 %v500, %v494
      %v614 = vunpack.c.l.b16 %v534
      %v615 = vunpack.c.l.b16 %v535
      %v616 = vunpack.c.l.b16 %v536
      %v617 = vunpack.c.l.b16 %v537
      %v618 = vunpack.c.l.b16 %v538
      %v619 = vunpack.c.l.b16 %v539
      %v620 = vunpack.c.l.b16 %v540
      %v621 = vunpack.c.l.b16 %v541
      %v622 = vunpack.c.l.b16 %v542
      %v623 = vunpack.c.l.b16 %v543
      %v624 = vunpack.c.l.b16 %v544
      %v625 = vunpack.c.l.b16 %v545
      %v626 = vunpack.c.l.b16 %v546
      %v627 = vunpack.c.l.b16 %v547
      %v628 = vunpack.c.l.b16 %v548
      %v629 = vunpack.c.l.b16 %v549
      %v630 = vunpack.c.l.b16 %v550
      %v631 = vunpack.c.l.b16 %v551
      %v632 = vunpack.c.l.b16 %v552
      %v633 = vunpack.c.l.b16 %v553
      %v634 = vunpack.c.l.b16 %v554
      %v635 = vunpack.c.l.b16 %v555
      %v636 = vunpack.c.l.b16 %v556
      %v637 = vunpack.c.l.b16 %v557
      %v638 = vunpack.c.l.b16 %v558
      %v639 = vunpack.c.l.b16 %v559
      %v640 = vunpack.c.l.b16 %v560
      %v641 = vunpack.c.l.b16 %v561
      %v642 = vunpack.c.l.b16 %v562
      %v643 = vunpack.c.l.b16 %v563
      %v644 = vunpack.c.l.b16 %v564
      %v645 = vunpack.c.l.b16 %v565
      %v646 = vpack.c.b16 %v615, %v614
      %v647 = vpack.c.b16 %v617, %v616
      %v648 = vpack.c.b16 %v619, %v618
      %v649 = vpack.c.b16 %v621, %v620
      %v650 = vpack.c.b16 %v623, %v622
      %v651 = vpack.c.b16 %v625, %v624
      %v652 = vpack.c.b16 %v627, %v626
      %v653 = vpack.c.b16 %v629, %v628
      %v654 = vpack.c.b16 %v631, %v630
      %v655 = vpack.c.b16 %v633, %v632
      %v656 = vpack.c.b16 %v635, %v634
      %v657 = vpack.c.b16 %v637, %v636
      %v658 = vpack.c.b16 %v639, %v638
      %v659 = vpack.c.b16 %v641, %v640
      %v660 = vpack.c.b16 %v643, %v642
      %v661 = vpack.c.b16 %v645, %v644
      %678 = vmatpush.bf16.msra.mxu0 %v653
      %679 = vmatpush.bf16.msra.mxu0 %v652
      %680 = vmatpush.bf16.msra.mxu0 %v651
      %681 = vmatpush.bf16.msra.mxu0 %v650
      %682 = vmatpush.bf16.msra.mxu0 %v649
      %683 = vmatpush.bf16.msra.mxu0 %v648
      %684 = vmatpush.bf16.msra.mxu0 %v647
      %685 = vmatpush.bf16.msra.mxu0 %v646
      %686 = vmatmul.bf16.gmra.mxu0 %v566
      %v687 = vpop.f32.mrf.mxu0
      %v688 = vadd.f32 0.0, %v687
      %v689 = vpop.f32.mrf.mxu0
      %v690 = vadd.f32 0.0, %v689
      %691 = vmatmul.bf16.gmra.mxu0 %v568
      %v692 = vpop.f32.mrf.mxu0
      %v693 = vadd.f32 0.0, %v692
      %v694 = vpop.f32.mrf.mxu0
      %v695 = vadd.f32 0.0, %v694
      %696 = vmatmul.bf16.gmra.mxu0 %v570
      %v697 = vpop.f32.mrf.mxu0
      %v698 = vadd.f32 0.0, %v697
      %v699 = vpop.f32.mrf.mxu0
      %v700 = vadd.f32 0.0, %v699
      %701 = vmatmul.bf16.gmra.mxu0 %v572
      %v702 = vpop.f32.mrf.mxu0
      %v703 = vadd.f32 0.0, %v702
      %v704 = vpop.f32.mrf.mxu0
      %v705 = vadd.f32 0.0, %v704
      %706 = vmatmul.bf16.gmra.mxu0 %v574
      %v707 = vpop.f32.mrf.mxu0
      %v708 = vadd.f32 0.0, %v707
      %v709 = vpop.f32.mrf.mxu0
      %v710 = vadd.f32 0.0, %v709
      %711 = vmatmul.bf16.gmra.mxu0 %v576
      %v712 = vpop.f32.mrf.mxu0
      %v713 = vadd.f32 0.0, %v712
      %v714 = vpop.f32.mrf.mxu0
      %v715 = vadd.f32 0.0, %v714
      %716 = vmatmul.bf16.gmra.mxu0 %v578
      %v717 = vpop.f32.mrf.mxu0
      %v718 = vadd.f32 0.0, %v717
      %v719 = vpop.f32.mrf.mxu0
      %v720 = vadd.f32 0.0, %v719
      %721 = vmatmul.bf16.gmra.mxu0 %v580
      %v722 = vpop.f32.mrf.mxu0
      %v723 = vadd.f32 0.0, %v722
      %v724 = vpop.f32.mrf.mxu0
      %v725 = vadd.f32 0.0, %v724
      %726 = vdwg.mxu0
      %727 = vmatpush.bf16.msra.mxu0 %v661
      %728 = vmatpush.bf16.msra.mxu0 %v660
      %729 = vmatpush.bf16.msra.mxu0 %v659
      %730 = vmatpush.bf16.msra.mxu0 %v658
      %731 = vmatpush.bf16.msra.mxu0 %v657
      %732 = vmatpush.bf16.msra.mxu0 %v656
      %733 = vmatpush.bf16.msra.mxu0 %v655
      %734 = vmatpush.bf16.msra.mxu0 %v654
      %735 = vmatmul.bf16.gmra.mxu0 %v567
      %v736 = vpop.f32.mrf.mxu0
      %v737 = vadd.f32 %v688, %v736
      %v738 = vpop.f32.mrf.mxu0
      %v739 = vadd.f32 %v690, %v738
      %740 = vmatmul.bf16.gmra.mxu0 %v569
      %v741 = vpop.f32.mrf.mxu0
      %v742 = vadd.f32 %v693, %v741
      %v743 = vpop.f32.mrf.mxu0
      %v744 = vadd.f32 %v695, %v743
      %745 = vmatmul.bf16.gmra.mxu0 %v571
      %v746 = vpop.f32.mrf.mxu0
      %v747 = vadd.f32 %v698, %v746
      %v748 = vpop.f32.mrf.mxu0
      %v749 = vadd.f32 %v700, %v748
      %750 = vmatmul.bf16.gmra.mxu0 %v573
      %v751 = vpop.f32.mrf.mxu0
      %v752 = vadd.f32 %v703, %v751
      %v753 = vpop.f32.mrf.mxu0
      %v754 = vadd.f32 %v705, %v753
      %755 = vmatmul.bf16.gmra.mxu0 %v575
      %v756 = vpop.f32.mrf.mxu0
      %v757 = vadd.f32 %v708, %v756
      %v758 = vpop.f32.mrf.mxu0
      %v759 = vadd.f32 %v710, %v758
      %760 = vmatmul.bf16.gmra.mxu0 %v577
      %v761 = vpop.f32.mrf.mxu0
      %v762 = vadd.f32 %v713, %v761
      %v763 = vpop.f32.mrf.mxu0
      %v764 = vadd.f32 %v715, %v763
      %765 = vmatmul.bf16.gmra.mxu0 %v579
      %v766 = vpop.f32.mrf.mxu0
      %v767 = vadd.f32 %v718, %v766
      %v768 = vpop.f32.mrf.mxu0
      %v769 = vadd.f32 %v720, %v768
      %770 = vmatmul.bf16.gmra.mxu0 %v581
      %v771 = vpop.f32.mrf.mxu0
      %v772 = vadd.f32 %v723, %v771
      %v773 = vpop.f32.mrf.mxu0
      %v774 = vadd.f32 %v725, %v773
      %775 = vdwg.mxu0
      %v808 = vunpack.c.l.b16 %v228
      %v809 = vunpack.c.l.b16 %v229
      %v810 = vunpack.c.l.b16 %v230
      %v811 = vunpack.c.l.b16 %v231
      %v812 = vunpack.c.l.b16 %v232
      %v813 = vunpack.c.l.b16 %v233
      %v814 = vunpack.c.l.b16 %v234
      %v815 = vunpack.c.l.b16 %v235
      %v816 = vunpack.c.l.b16 %v236
      %v817 = vunpack.c.l.b16 %v237
      %v818 = vunpack.c.l.b16 %v238
      %v819 = vunpack.c.l.b16 %v239
      %v820 = vunpack.c.l.b16 %v240
      %v821 = vunpack.c.l.b16 %v241
      %v822 = vunpack.c.l.b16 %v242
      %v823 = vunpack.c.l.b16 %v243
      %v824 = vunpack.c.l.b16 %v244
      %v825 = vunpack.c.l.b16 %v245
      %v826 = vunpack.c.l.b16 %v246
      %v827 = vunpack.c.l.b16 %v247
      %v828 = vunpack.c.l.b16 %v248
      %v829 = vunpack.c.l.b16 %v249
      %v830 = vunpack.c.l.b16 %v250
      %v831 = vunpack.c.l.b16 %v251
      %v832 = vunpack.c.l.b16 %v252
      %v833 = vunpack.c.l.b16 %v253
      %v834 = vunpack.c.l.b16 %v254
      %v835 = vunpack.c.l.b16 %v255
      %v836 = vunpack.c.l.b16 %v256
      %v837 = vunpack.c.l.b16 %v257
      %v838 = vunpack.c.l.b16 %v258
      %v839 = vunpack.c.l.b16 %v259
      %v840 = vpack.c.b16 %v809, %v808
      %v841 = vpack.c.b16 %v811, %v810
      %v842 = vpack.c.b16 %v813, %v812
      %v843 = vpack.c.b16 %v815, %v814
      %v844 = vpack.c.b16 %v817, %v816
      %v845 = vpack.c.b16 %v819, %v818
      %v846 = vpack.c.b16 %v821, %v820
      %v847 = vpack.c.b16 %v823, %v822
      %v848 = vpack.c.b16 %v825, %v824
      %v849 = vpack.c.b16 %v827, %v826
      %v850 = vpack.c.b16 %v829, %v828
      %v851 = vpack.c.b16 %v831, %v830
      %v852 = vpack.c.b16 %v833, %v832
      %v853 = vpack.c.b16 %v835, %v834
      %v854 = vpack.c.b16 %v837, %v836
      %v855 = vpack.c.b16 %v839, %v838
      %872 = vmatpush.bf16.msra.mxu0 %v847
      %873 = vmatpush.bf16.msra.mxu0 %v846
      %874 = vmatpush.bf16.msra.mxu0 %v845
      %875 = vmatpush.bf16.msra.mxu0 %v844
      %876 = vmatpush.bf16.msra.mxu0 %v843
      %877 = vmatpush.bf16.msra.mxu0 %v842
      %878 = vmatpush.bf16.msra.mxu0 %v841
      %879 = vmatpush.bf16.msra.mxu0 %v840
      %880 = vmatmul.bf16.gmra.mxu0 %v260
      %v881 = vpop.f32.mrf.mxu0
      %v882 = vadd.f32 %v737, %v881
      %v883 = vpop.f32.mrf.mxu0
      %v884 = vadd.f32 %v739, %v883
      %885 = vmatmul.bf16.gmra.mxu0 %v262
      %v886 = vpop.f32.mrf.mxu0
      %v887 = vadd.f32 %v742, %v886
      %v888 = vpop.f32.mrf.mxu0
      %v889 = vadd.f32 %v744, %v888
      %890 = vmatmul.bf16.gmra.mxu0 %v264
      %v891 = vpop.f32.mrf.mxu0
      %v892 = vadd.f32 %v747, %v891
      %v893 = vpop.f32.mrf.mxu0
      %v894 = vadd.f32 %v749, %v893
      %895 = vmatmul.bf16.gmra.mxu0 %v266
      %v896 = vpop.f32.mrf.mxu0
      %v897 = vadd.f32 %v752, %v896
      %v898 = vpop.f32.mrf.mxu0
      %v899 = vadd.f32 %v754, %v898
      %900 = vmatmul.bf16.gmra.mxu0 %v268
      %v901 = vpop.f32.mrf.mxu0
      %v902 = vadd.f32 %v757, %v901
      %v903 = vpop.f32.mrf.mxu0
      %v904 = vadd.f32 %v759, %v903
      %905 = vmatmul.bf16.gmra.mxu0 %v270
      %v906 = vpop.f32.mrf.mxu0
      %v907 = vadd.f32 %v762, %v906
      %v908 = vpop.f32.mrf.mxu0
      %v909 = vadd.f32 %v764, %v908
      %910 = vmatmul.bf16.gmra.mxu0 %v272
      %v911 = vpop.f32.mrf.mxu0
      %v912 = vadd.f32 %v767, %v911
      %v913 = vpop.f32.mrf.mxu0
      %v914 = vadd.f32 %v769, %v913
      %915 = vmatmul.bf16.gmra.mxu0 %v274
      %v916 = vpop.f32.mrf.mxu0
      %v917 = vadd.f32 %v772, %v916
      %v918 = vpop.f32.mrf.mxu0
      %v919 = vadd.f32 %v774, %v918
      %920 = vdwg.mxu0
      %921 = vmatpush.bf16.msra.mxu0 %v855
      %922 = vmatpush.bf16.msra.mxu0 %v854
      %923 = vmatpush.bf16.msra.mxu0 %v853
      %924 = vmatpush.bf16.msra.mxu0 %v852
      %925 = vmatpush.bf16.msra.mxu0 %v851
      %926 = vmatpush.bf16.msra.mxu0 %v850
      %927 = vmatpush.bf16.msra.mxu0 %v849
      %928 = vmatpush.bf16.msra.mxu0 %v848
      %929 = vmatmul.bf16.gmra.mxu0 %v261
      %v930 = vpop.f32.mrf.mxu0
      %v931 = vadd.f32 %v882, %v930
      %v932 = vpop.f32.mrf.mxu0
      %v933 = vadd.f32 %v884, %v932
      %934 = vmatmul.bf16.gmra.mxu0 %v263
      %v935 = vpop.f32.mrf.mxu0
      %v936 = vadd.f32 %v887, %v935
      %v937 = vpop.f32.mrf.mxu0
      %v938 = vadd.f32 %v889, %v937
      %939 = vmatmul.bf16.gmra.mxu0 %v265
      %v940 = vpop.f32.mrf.mxu0
      %v941 = vadd.f32 %v892, %v940
      %v942 = vpop.f32.mrf.mxu0
      %v943 = vadd.f32 %v894, %v942
      %944 = vmatmul.bf16.gmra.mxu0 %v267
      %v945 = vpop.f32.mrf.mxu0
      %v946 = vadd.f32 %v897, %v945
      %v947 = vpop.f32.mrf.mxu0
      %v948 = vadd.f32 %v899, %v947
      %949 = vmatmul.bf16.gmra.mxu0 %v269
      %v950 = vpop.f32.mrf.mxu0
      %v951 = vadd.f32 %v902, %v950
      %v952 = vpop.f32.mrf.mxu0
      %v953 = vadd.f32 %v904, %v952
      %954 = vmatmul.bf16.gmra.mxu0 %v271
      %v955 = vpop.f32.mrf.mxu0
      %v956 = vadd.f32 %v907, %v955
      %v957 = vpop.f32.mrf.mxu0
      %v958 = vadd.f32 %v909, %v957
      %959 = vmatmul.bf16.gmra.mxu0 %v273
      %v960 = vpop.f32.mrf.mxu0
      %v961 = vadd.f32 %v912, %v960
      %v962 = vpop.f32.mrf.mxu0
      %v963 = vadd.f32 %v914, %v962
      %964 = vmatmul.bf16.gmra.mxu0 %v275
      %v965 = vpop.f32.mrf.mxu0
      %v966 = vadd.f32 %v917, %v965
      %v967 = vpop.f32.mrf.mxu0
      %v968 = vadd.f32 %v919, %v967
      %969 = vdwg.mxu0
      %s970 = scalar_lea.vmem %s184, 32
      %v971 = vld [vmem:[%s970] sm:$0xff]
      %v972 = vld [vmem:[%s970 + $0x8] sm:$0xff]
      %v973 = vld [vmem:[%s970 + $0x20] sm:$0xff]
      %v974 = vld [vmem:[%s970 + $0x28] sm:$0xff]
      %v975 = vld [vmem:[%s970 + $0x40] sm:$0xff]
      %v976 = vld [vmem:[%s970 + $0x48] sm:$0xff]
      %v977 = vld [vmem:[%s970 + $0x60] sm:$0xff]
      %v978 = vld [vmem:[%s970 + $0x68] sm:$0xff]
      %v979 = vld [vmem:[%s970 + $0x80] sm:$0xff]
      %v980 = vld [vmem:[%s970 + $0x88] sm:$0xff]
      %v981 = vld [vmem:[%s970 + $0xa0] sm:$0xff]
      %v982 = vld [vmem:[%s970 + $0xa8] sm:$0xff]
      %v983 = vld [vmem:[%s970 + $0xc0] sm:$0xff]
      %v984 = vld [vmem:[%s970 + $0xc8] sm:$0xff]
      %v985 = vld [vmem:[%s970 + $0xe0] sm:$0xff]
      %v986 = vld [vmem:[%s970 + $0xe8] sm:$0xff]
      %v987 = vld [vmem:[%s970 + $0x120] sm:$0xff]
      %v988 = vld [vmem:[%s970 + $0x128] sm:$0xff]
      %v989 = vld [vmem:[%s970 + $0x140] sm:$0xff]
      %v990 = vld [vmem:[%s970 + $0x148] sm:$0xff]
      %v991 = vld [vmem:[%s970 + $0x160] sm:$0xff]
      %v992 = vld [vmem:[%s970 + $0x168] sm:$0xff]
      %v993 = vld [vmem:[%s970 + $0x180] sm:$0xff]
      %v994 = vld [vmem:[%s970 + $0x188] sm:$0xff]
      %v995 = vld [vmem:[%s970 + $0x1a0] sm:$0xff]
      %v996 = vld [vmem:[%s970 + $0x1a8] sm:$0xff]
      %v997 = vld [vmem:[%s970 + $0x1c0] sm:$0xff]
      %v998 = vld [vmem:[%s970 + $0x1c8] sm:$0xff]
      %v999 = vld [vmem:[%s970 + $0x1e0] sm:$0xff]
      %v1000 = vld [vmem:[%s970 + $0x1e8] sm:$0xff]
      %v1001 = vld [vmem:[%s970 + $0x200] sm:$0xff]
      %v1002 = vld [vmem:[%s970 + $0x208] sm:$0xff]
      %s1003 = scalar_lea.vmem %s190, 256
      %v1004 = vld [vmem:[%s1003] sm:$0xf]
      %v1005 = vld [vmem:[%s1003 + $0x4] sm:$0xf]
      %v1006 = vld [vmem:[%s1003 + $0x8] sm:$0xf]
      %v1007 = vld [vmem:[%s1003 + $0xc] sm:$0xf]
      %v1008 = vld [vmem:[%s1003 + $0x10] sm:$0xf]
      %v1009 = vld [vmem:[%s1003 + $0x14] sm:$0xf]
      %v1010 = vld [vmem:[%s1003 + $0x18] sm:$0xf]
      %v1011 = vld [vmem:[%s1003 + $0x1c] sm:$0xf]
      %v1012 = vld [vmem:[%s1003 + $0x20] sm:$0xf]
      %v1013 = vld [vmem:[%s1003 + $0x24] sm:$0xf]
      %v1014 = vld [vmem:[%s1003 + $0x28] sm:$0xf]
      %v1015 = vld [vmem:[%s1003 + $0x2c] sm:$0xf]
      %v1016 = vld [vmem:[%s1003 + $0x30] sm:$0xf]
      %v1017 = vld [vmem:[%s1003 + $0x34] sm:$0xf]
      %v1018 = vld [vmem:[%s1003 + $0x38] sm:$0xf]
      %v1019 = vld [vmem:[%s1003 + $0x3c] sm:$0xf]
      %v1020 = vld [vmem:[%s1003 + $0x40] sm:$0xf]
      %v1021 = vld [vmem:[%s1003 + $0x44] sm:$0xf]
      %v1022 = vld [vmem:[%s1003 + $0x48] sm:$0xf]
      %v1023 = vld [vmem:[%s1003 + $0x4c] sm:$0xf]
      %v1024 = vld [vmem:[%s1003 + $0x50] sm:$0xf]
      %v1025 = vld [vmem:[%s1003 + $0x54] sm:$0xf]
      %v1026 = vld [vmem:[%s1003 + $0x58] sm:$0xf]
      %v1027 = vld [vmem:[%s1003 + $0x5c] sm:$0xf]
      %v1028 = vld [vmem:[%s1003 + $0x60] sm:$0xf]
      %v1029 = vld [vmem:[%s1003 + $0x64] sm:$0xf]
      %v1030 = vld [vmem:[%s1003 + $0x68] sm:$0xf]
      %v1031 = vld [vmem:[%s1003 + $0x6c] sm:$0xf]
      %v1032 = vld [vmem:[%s1003 + $0x70] sm:$0xf]
      %v1033 = vld [vmem:[%s1003 + $0x74] sm:$0xf]
      %v1034 = vld [vmem:[%s1003 + $0x78] sm:$0xf]
      %v1035 = vld [vmem:[%s1003 + $0x7c] sm:$0xf]
      %v1036 = vpack.c.bf16 %v973, %v971
      %v1037 = vpack.c.bf16 %v974, %v972
      %v1038 = vpack.c.bf16 %v977, %v975
      %v1039 = vpack.c.bf16 %v978, %v976
      %v1040 = vpack.c.bf16 %v981, %v979
      %v1041 = vpack.c.bf16 %v982, %v980
      %v1042 = vpack.c.bf16 %v985, %v983
      %v1043 = vpack.c.bf16 %v986, %v984
      %v1044 = vpack.c.bf16 %v989, %v987
      %v1045 = vpack.c.bf16 %v990, %v988
      %v1046 = vpack.c.bf16 %v993, %v991
      %v1047 = vpack.c.bf16 %v994, %v992
      %v1048 = vpack.c.bf16 %v997, %v995
      %v1049 = vpack.c.bf16 %v998, %v996
      %v1050 = vpack.c.bf16 %v1001, %v999
      %v1051 = vpack.c.bf16 %v1002, %v1000
      %v1084 = vunpack.c.l.b16 %v1004
      %v1085 = vunpack.c.l.b16 %v1005
      %v1086 = vunpack.c.l.b16 %v1006
      %v1087 = vunpack.c.l.b16 %v1007
      %v1088 = vunpack.c.l.b16 %v1008
      %v1089 = vunpack.c.l.b16 %v1009
      %v1090 = vunpack.c.l.b16 %v1010
      %v1091 = vunpack.c.l.b16 %v1011
      %v1092 = vunpack.c.l.b16 %v1012
      %v1093 = vunpack.c.l.b16 %v1013
      %v1094 = vunpack.c.l.b16 %v1014
      %v1095 = vunpack.c.l.b16 %v1015
      %v1096 = vunpack.c.l.b16 %v1016
      %v1097 = vunpack.c.l.b16 %v1017
      %v1098 = vunpack.c.l.b16 %v1018
      %v1099 = vunpack.c.l.b16 %v1019
      %v1100 = vunpack.c.l.b16 %v1020
      %v1101 = vunpack.c.l.b16 %v1021
      %v1102 = vunpack.c.l.b16 %v1022
      %v1103 = vunpack.c.l.b16 %v1023
      %v1104 = vunpack.c.l.b16 %v1024
      %v1105 = vunpack.c.l.b16 %v1025
      %v1106 = vunpack.c.l.b16 %v1026
      %v1107 = vunpack.c.l.b16 %v1027
      %v1108 = vunpack.c.l.b16 %v1028
      %v1109 = vunpack.c.l.b16 %v1029
      %v1110 = vunpack.c.l.b16 %v1030
      %v1111 = vunpack.c.l.b16 %v1031
      %v1112 = vunpack.c.l.b16 %v1032
      %v1113 = vunpack.c.l.b16 %v1033
      %v1114 = vunpack.c.l.b16 %v1034
      %v1115 = vunpack.c.l.b16 %v1035
      %v1116 = vpack.c.b16 %v1085, %v1084
      %v1117 = vpack.c.b16 %v1087, %v1086
      %v1118 = vpack.c.b16 %v1089, %v1088
      %v1119 = vpack.c.b16 %v1091, %v1090
      %v1120 = vpack.c.b16 %v1093, %v1092
      %v1121 = vpack.c.b16 %v1095, %v1094
      %v1122 = vpack.c.b16 %v1097, %v1096
      %v1123 = vpack.c.b16 %v1099, %v1098
      %v1124 = vpack.c.b16 %v1101, %v1100
      %v1125 = vpack.c.b16 %v1103, %v1102
      %v1126 = vpack.c.b16 %v1105, %v1104
      %v1127 = vpack.c.b16 %v1107, %v1106
      %v1128 = vpack.c.b16 %v1109, %v1108
      %v1129 = vpack.c.b16 %v1111, %v1110
      %v1130 = vpack.c.b16 %v1113, %v1112
      %v1131 = vpack.c.b16 %v1115, %v1114
      %1148 = vmatpush.bf16.msra.mxu0 %v1123
      %1149 = vmatpush.bf16.msra.mxu0 %v1122
      %1150 = vmatpush.bf16.msra.mxu0 %v1121
      %1151 = vmatpush.bf16.msra.mxu0 %v1120
      %1152 = vmatpush.bf16.msra.mxu0 %v1119
      %1153 = vmatpush.bf16.msra.mxu0 %v1118
      %1154 = vmatpush.bf16.msra.mxu0 %v1117
      %1155 = vmatpush.bf16.msra.mxu0 %v1116
      %1156 = vmatmul.bf16.gmra.mxu0 %v1036
      %v1157 = vpop.f32.mrf.mxu0
      %v1158 = vadd.f32 0.0, %v1157
      %v1159 = vpop.f32.mrf.mxu0
      %v1160 = vadd.f32 0.0, %v1159
      %1161 = vmatmul.bf16.gmra.mxu0 %v1038
      %v1162 = vpop.f32.mrf.mxu0
      %v1163 = vadd.f32 0.0, %v1162
      %v1164 = vpop.f32.mrf.mxu0
      %v1165 = vadd.f32 0.0, %v1164
      %1166 = vmatmul.bf16.gmra.mxu0 %v1040
      %v1167 = vpop.f32.mrf.mxu0
      %v1168 = vadd.f32 0.0, %v1167
      %v1169 = vpop.f32.mrf.mxu0
      %v1170 = vadd.f32 0.0, %v1169
      %1171 = vmatmul.bf16.gmra.mxu0 %v1042
      %v1172 = vpop.f32.mrf.mxu0
      %v1173 = vadd.f32 0.0, %v1172
      %v1174 = vpop.f32.mrf.mxu0
      %v1175 = vadd.f32 0.0, %v1174
      %1176 = vmatmul.bf16.gmra.mxu0 %v1044
      %v1177 = vpop.f32.mrf.mxu0
      %v1178 = vadd.f32 0.0, %v1177
      %v1179 = vpop.f32.mrf.mxu0
      %v1180 = vadd.f32 0.0, %v1179
      %1181 = vmatmul.bf16.gmra.mxu0 %v1046
      %v1182 = vpop.f32.mrf.mxu0
      %v1183 = vadd.f32 0.0, %v1182
      %v1184 = vpop.f32.mrf.mxu0
      %v1185 = vadd.f32 0.0, %v1184
      %1186 = vmatmul.bf16.gmra.mxu0 %v1048
      %v1187 = vpop.f32.mrf.mxu0
      %v1188 = vadd.f32 0.0, %v1187
      %v1189 = vpop.f32.mrf.mxu0
      %v1190 = vadd.f32 0.0, %v1189
      %1191 = vmatmul.bf16.gmra.mxu0 %v1050
      %v1192 = vpop.f32.mrf.mxu0
      %v1193 = vadd.f32 0.0, %v1192
      %v1194 = vpop.f32.mrf.mxu0
      %v1195 = vadd.f32 0.0, %v1194
      %1196 = vdwg.mxu0
      %1197 = vmatpush.bf16.msra.mxu0 %v1131
      %1198 = vmatpush.bf16.msra.mxu0 %v1130
      %1199 = vmatpush.bf16.msra.mxu0 %v1129
      %1200 = vmatpush.bf16.msra.mxu0 %v1128
      %1201 = vmatpush.bf16.msra.mxu0 %v1127
      %1202 = vmatpush.bf16.msra.mxu0 %v1126
      %1203 = vmatpush.bf16.msra.mxu0 %v1125
      %1204 = vmatpush.bf16.msra.mxu0 %v1124
      %1205 = vmatmul.bf16.gmra.mxu0 %v1037
      %v1206 = vpop.f32.mrf.mxu0
      %v1207 = vadd.f32 %v1158, %v1206
      %v1208 = vpop.f32.mrf.mxu0
      %v1209 = vadd.f32 %v1160, %v1208
      %1210 = vmatmul.bf16.gmra.mxu0 %v1039
      %v1211 = vpop.f32.mrf.mxu0
      %v1212 = vadd.f32 %v1163, %v1211
      %v1213 = vpop.f32.mrf.mxu0
      %v1214 = vadd.f32 %v1165, %v1213
      %1215 = vmatmul.bf16.gmra.mxu0 %v1041
      %v1216 = vpop.f32.mrf.mxu0
      %v1217 = vadd.f32 %v1168, %v1216
      %v1218 = vpop.f32.mrf.mxu0
      %v1219 = vadd.f32 %v1170, %v1218
      %1220 = vmatmul.bf16.gmra.mxu0 %v1043
      %v1221 = vpop.f32.mrf.mxu0
      %v1222 = vadd.f32 %v1173, %v1221
      %v1223 = vpop.f32.mrf.mxu0
      %v1224 = vadd.f32 %v1175, %v1223
      %1225 = vmatmul.bf16.gmra.mxu0 %v1045
      %v1226 = vpop.f32.mrf.mxu0
      %v1227 = vadd.f32 %v1178, %v1226
      %v1228 = vpop.f32.mrf.mxu0
      %v1229 = vadd.f32 %v1180, %v1228
      %1230 = vmatmul.bf16.gmra.mxu0 %v1047
      %v1231 = vpop.f32.mrf.mxu0
      %v1232 = vadd.f32 %v1183, %v1231
      %v1233 = vpop.f32.mrf.mxu0
      %v1234 = vadd.f32 %v1185, %v1233
      %1235 = vmatmul.bf16.gmra.mxu0 %v1049
      %v1236 = vpop.f32.mrf.mxu0
      %v1237 = vadd.f32 %v1188, %v1236
      %v1238 = vpop.f32.mrf.mxu0
      %v1239 = vadd.f32 %v1190, %v1238
      %1240 = vmatmul.bf16.gmra.mxu0 %v1051
      %v1241 = vpop.f32.mrf.mxu0
      %v1242 = vadd.f32 %v1193, %v1241
      %v1243 = vpop.f32.mrf.mxu0
      %v1244 = vadd.f32 %v1195, %v1243
      %1245 = vdwg.mxu0
      %v1246 = vadd.f32 %v931, %v1207
      %v1247 = vadd.f32 %v933, %v1209
      %v1248 = vadd.f32 %v936, %v1212
      %v1249 = vadd.f32 %v938, %v1214
      %v1250 = vadd.f32 %v941, %v1217
      %v1251 = vadd.f32 %v943, %v1219
      %v1252 = vadd.f32 %v946, %v1222
      %v1253 = vadd.f32 %v948, %v1224
      %v1254 = vadd.f32 %v951, %v1227
      %v1255 = vadd.f32 %v953, %v1229
      %v1256 = vadd.f32 %v956, %v1232
      %v1257 = vadd.f32 %v958, %v1234
      %v1258 = vadd.f32 %v961, %v1237
      %v1259 = vadd.f32 %v963, %v1239
      %v1260 = vadd.f32 %v966, %v1242
      %v1261 = vadd.f32 %v968, %v1244
      %v1262 = vld [vmem:[%s970] sm:$0xfe]
      %v1263 = vld [vmem:[%s970 + $0x8] sm:$0xfe]
      %v1264 = vld [vmem:[%s970 + $0x10] sm:$0x1]
      %v1265 = vld [vmem:[%s970 + $0x18] sm:$0x1]
      %v1266 = vld [vmem:[%s970 + $0x20] sm:$0xfe]
      %v1267 = vld [vmem:[%s970 + $0x28] sm:$0xfe]
      %v1268 = vld [vmem:[%s970 + $0x30] sm:$0x1]
      %v1269 = vld [vmem:[%s970 + $0x38] sm:$0x1]
      %v1270 = vld [vmem:[%s970 + $0x40] sm:$0xfe]
      %v1271 = vld [vmem:[%s970 + $0x48] sm:$0xfe]
      %v1272 = vld [vmem:[%s970 + $0x50] sm:$0x1]
      %v1273 = vld [vmem:[%s970 + $0x58] sm:$0x1]
      %v1274 = vld [vmem:[%s970 + $0x60] sm:$0xfe]
      %v1275 = vld [vmem:[%s970 + $0x68] sm:$0xfe]
      %v1276 = vld [vmem:[%s970 + $0x70] sm:$0x1]
      %v1277 = vld [vmem:[%s970 + $0x78] sm:$0x1]
      %v1278 = vld [vmem:[%s970 + $0x80] sm:$0xfe]
      %v1279 = vld [vmem:[%s970 + $0x88] sm:$0xfe]
      %v1280 = vld [vmem:[%s970 + $0x90] sm:$0x1]
      %v1281 = vld [vmem:[%s970 + $0x98] sm:$0x1]
      %v1282 = vld [vmem:[%s970 + $0xa0] sm:$0xfe]
      %v1283 = vld [vmem:[%s970 + $0xa8] sm:$0xfe]
      %v1284 = vld [vmem:[%s970 + $0xb0] sm:$0x1]
      %v1285 = vld [vmem:[%s970 + $0xb8] sm:$0x1]
      %v1286 = vld [vmem:[%s970 + $0xc0] sm:$0xfe]
      %v1287 = vld [vmem:[%s970 + $0xc8] sm:$0xfe]
      %v1288 = vld [vmem:[%s970 + $0xd0] sm:$0x1]
      %v1289 = vld [vmem:[%s970 + $0xd8] sm:$0x1]
      %v1290 = vld [vmem:[%s970 + $0xe0] sm:$0xfe]
      %v1291 = vld [vmem:[%s970 + $0xe8] sm:$0xfe]
      %v1292 = vld [vmem:[%s970 + $0xf0] sm:$0x1]
      %v1293 = vld [vmem:[%s970 + $0xf8] sm:$0x1]
      %v1294 = vld [vmem:[%s970 + $0x120] sm:$0xfe]
      %v1295 = vld [vmem:[%s970 + $0x128] sm:$0xfe]
      %v1296 = vld [vmem:[%s970 + $0x130] sm:$0x1]
      %v1297 = vld [vmem:[%s970 + $0x138] sm:$0x1]
      %v1298 = vld [vmem:[%s970 + $0x140] sm:$0xfe]
      %v1299 = vld [vmem:[%s970 + $0x148] sm:$0xfe]
      %v1300 = vld [vmem:[%s970 + $0x150] sm:$0x1]
      %v1301 = vld [vmem:[%s970 + $0x158] sm:$0x1]
      %v1302 = vld [vmem:[%s970 + $0x160] sm:$0xfe]
      %v1303 = vld [vmem:[%s970 + $0x168] sm:$0xfe]
      %v1304 = vld [vmem:[%s970 + $0x170] sm:$0x1]
      %v1305 = vld [vmem:[%s970 + $0x178] sm:$0x1]
      %v1306 = vld [vmem:[%s970 + $0x180] sm:$0xfe]
      %v1307 = vld [vmem:[%s970 + $0x188] sm:$0xfe]
      %v1308 = vld [vmem:[%s970 + $0x190] sm:$0x1]
      %v1309 = vld [vmem:[%s970 + $0x198] sm:$0x1]
      %v1310 = vld [vmem:[%s970 + $0x1a0] sm:$0xfe]
      %v1311 = vld [vmem:[%s970 + $0x1a8] sm:$0xfe]
      %v1312 = vld [vmem:[%s970 + $0x1b0] sm:$0x1]
      %v1313 = vld [vmem:[%s970 + $0x1b8] sm:$0x1]
      %v1314 = vld [vmem:[%s970 + $0x1c0] sm:$0xfe]
      %v1315 = vld [vmem:[%s970 + $0x1c8] sm:$0xfe]
      %v1316 = vld [vmem:[%s970 + $0x1d0] sm:$0x1]
      %v1317 = vld [vmem:[%s970 + $0x1d8] sm:$0x1]
      %v1318 = vld [vmem:[%s970 + $0x1e0] sm:$0xfe]
      %v1319 = vld [vmem:[%s970 + $0x1e8] sm:$0xfe]
      %v1320 = vld [vmem:[%s970 + $0x1f0] sm:$0x1]
      %v1321 = vld [vmem:[%s970 + $0x1f8] sm:$0x1]
      %v1322 = vld [vmem:[%s970 + $0x200] sm:$0xfe]
      %v1323 = vld [vmem:[%s970 + $0x208] sm:$0xfe]
      %v1324 = vld [vmem:[%s970 + $0x210] sm:$0x1]
      %v1325 = vld [vmem:[%s970 + $0x218] sm:$0x1]
      %v1390 = vrot.slane %v1262, 1
      %v1391 = vrot.slane %v1264, 1
      %v1392 = vsel %vm404, %v1390, %v1391
      %v1393 = vrot.slane %v1263, 1
      %v1394 = vrot.slane %v1265, 1
      %v1395 = vsel %vm404, %v1393, %v1394
      %v1396 = vrot.slane %v1266, 1
      %v1397 = vrot.slane %v1268, 1
      %v1398 = vsel %vm404, %v1396, %v1397
      %v1399 = vrot.slane %v1267, 1
      %v1400 = vrot.slane %v1269, 1
      %v1401 = vsel %vm404, %v1399, %v1400
      %v1402 = vrot.slane %v1270, 1
      %v1403 = vrot.slane %v1272, 1
      %v1404 = vsel %vm404, %v1402, %v1403
      %v1405 = vrot.slane %v1271, 1
      %v1406 = vrot.slane %v1273, 1
      %v1407 = vsel %vm404, %v1405, %v1406
      %v1408 = vrot.slane %v1274, 1
      %v1409 = vrot.slane %v1276, 1
      %v1410 = vsel %vm404, %v1408, %v1409
      %v1411 = vrot.slane %v1275, 1
      %v1412 = vrot.slane %v1277, 1
      %v1413 = vsel %vm404, %v1411, %v1412
      %v1414 = vrot.slane %v1278, 1
      %v1415 = vrot.slane %v1280, 1
      %v1416 = vsel %vm404, %v1414, %v1415
      %v1417 = vrot.slane %v1279, 1
      %v1418 = vrot.slane %v1281, 1
      %v1419 = vsel %vm404, %v1417, %v1418
      %v1420 = vrot.slane %v1282, 1
      %v1421 = vrot.slane %v1284, 1
      %v1422 = vsel %vm404, %v1420, %v1421
      %v1423 = vrot.slane %v1283, 1
      %v1424 = vrot.slane %v1285, 1
      %v1425 = vsel %vm404, %v1423, %v1424
      %v1426 = vrot.slane %v1286, 1
      %v1427 = vrot.slane %v1288, 1
      %v1428 = vsel %vm404, %v1426, %v1427
      %v1429 = vrot.slane %v1287, 1
      %v1430 = vrot.slane %v1289, 1
      %v1431 = vsel %vm404, %v1429, %v1430
      %v1432 = vrot.slane %v1290, 1
      %v1433 = vrot.slane %v1292, 1
      %v1434 = vsel %vm404, %v1432, %v1433
      %v1435 = vrot.slane %v1291, 1
      %v1436 = vrot.slane %v1293, 1
      %v1437 = vsel %vm404, %v1435, %v1436
      %v1438 = vrot.slane %v1294, 1
      %v1439 = vrot.slane %v1296, 1
      %v1440 = vsel %vm404, %v1438, %v1439
      %v1441 = vrot.slane %v1295, 1
      %v1442 = vrot.slane %v1297, 1
      %v1443 = vsel %vm404, %v1441, %v1442
      %v1444 = vrot.slane %v1298, 1
      %v1445 = vrot.slane %v1300, 1
      %v1446 = vsel %vm404, %v1444, %v1445
      %v1447 = vrot.slane %v1299, 1
      %v1448 = vrot.slane %v1301, 1
      %v1449 = vsel %vm404, %v1447, %v1448
      %v1450 = vrot.slane %v1302, 1
      %v1451 = vrot.slane %v1304, 1
      %v1452 = vsel %vm404, %v1450, %v1451
      %v1453 = vrot.slane %v1303, 1
      %v1454 = vrot.slane %v1305, 1
      %v1455 = vsel %vm404, %v1453, %v1454
      %v1456 = vrot.slane %v1306, 1
      %v1457 = vrot.slane %v1308, 1
      %v1458 = vsel %vm404, %v1456, %v1457
      %v1459 = vrot.slane %v1307, 1
      %v1460 = vrot.slane %v1309, 1
      %v1461 = vsel %vm404, %v1459, %v1460
      %v1462 = vrot.slane %v1310, 1
      %v1463 = vrot.slane %v1312, 1
      %v1464 = vsel %vm404, %v1462, %v1463
      %v1465 = vrot.slane %v1311, 1
      %v1466 = vrot.slane %v1313, 1
      %v1467 = vsel %vm404, %v1465, %v1466
      %v1468 = vrot.slane %v1314, 1
      %v1469 = vrot.slane %v1316, 1
      %v1470 = vsel %vm404, %v1468, %v1469
      %v1471 = vrot.slane %v1315, 1
      %v1472 = vrot.slane %v1317, 1
      %v1473 = vsel %vm404, %v1471, %v1472
      %v1474 = vrot.slane %v1318, 1
      %v1475 = vrot.slane %v1320, 1
      %v1476 = vsel %vm404, %v1474, %v1475
      %v1477 = vrot.slane %v1319, 1
      %v1478 = vrot.slane %v1321, 1
      %v1479 = vsel %vm404, %v1477, %v1478
      %v1480 = vrot.slane %v1322, 1
      %v1481 = vrot.slane %v1324, 1
      %v1482 = vsel %vm404, %v1480, %v1481
      %v1483 = vrot.slane %v1323, 1
      %v1484 = vrot.slane %v1325, 1
      %v1485 = vsel %vm404, %v1483, %v1484
      %s1518 = scalar_lea.vmem %s190, 384
      %v1519 = vld [vmem:[%s1518] sm:$0xf]
      %v1520 = vld [vmem:[%s1518 + $0x4] sm:$0xf]
      %v1521 = vld [vmem:[%s1518 + $0x8] sm:$0xf]
      %v1522 = vld [vmem:[%s1518 + $0xc] sm:$0xf]
      %v1523 = vld [vmem:[%s1518 + $0x10] sm:$0xf]
      %v1524 = vld [vmem:[%s1518 + $0x14] sm:$0xf]
      %v1525 = vld [vmem:[%s1518 + $0x18] sm:$0xf]
      %v1526 = vld [vmem:[%s1518 + $0x1c] sm:$0xf]
      %v1527 = vld [vmem:[%s1518 + $0x20] sm:$0xf]
      %v1528 = vld [vmem:[%s1518 + $0x24] sm:$0xf]
      %v1529 = vld [vmem:[%s1518 + $0x28] sm:$0xf]
      %v1530 = vld [vmem:[%s1518 + $0x2c] sm:$0xf]
      %v1531 = vld [vmem:[%s1518 + $0x30] sm:$0xf]
      %v1532 = vld [vmem:[%s1518 + $0x34] sm:$0xf]
      %v1533 = vld [vmem:[%s1518 + $0x38] sm:$0xf]
      %v1534 = vld [vmem:[%s1518 + $0x3c] sm:$0xf]
      %v1535 = vld [vmem:[%s1518 + $0x40] sm:$0xf]
      %v1536 = vld [vmem:[%s1518 + $0x44] sm:$0xf]
      %v1537 = vld [vmem:[%s1518 + $0x48] sm:$0xf]
      %v1538 = vld [vmem:[%s1518 + $0x4c] sm:$0xf]
      %v1539 = vld [vmem:[%s1518 + $0x50] sm:$0xf]
      %v1540 = vld [vmem:[%s1518 + $0x54] sm:$0xf]
      %v1541 = vld [vmem:[%s1518 + $0x58] sm:$0xf]
      %v1542 = vld [vmem:[%s1518 + $0x5c] sm:$0xf]
      %v1543 = vld [vmem:[%s1518 + $0x60] sm:$0xf]
      %v1544 = vld [vmem:[%s1518 + $0x64] sm:$0xf]
      %v1545 = vld [vmem:[%s1518 + $0x68] sm:$0xf]
      %v1546 = vld [vmem:[%s1518 + $0x6c] sm:$0xf]
      %v1547 = vld [vmem:[%s1518 + $0x70] sm:$0xf]
      %v1548 = vld [vmem:[%s1518 + $0x74] sm:$0xf]
      %v1549 = vld [vmem:[%s1518 + $0x78] sm:$0xf]
      %v1550 = vld [vmem:[%s1518 + $0x7c] sm:$0xf]
      %v1551 = vpack.c.bf16 %v1398, %v1392
      %v1552 = vpack.c.bf16 %v1401, %v1395
      %v1553 = vpack.c.bf16 %v1410, %v1404
      %v1554 = vpack.c.bf16 %v1413, %v1407
      %v1555 = vpack.c.bf16 %v1422, %v1416
      %v1556 = vpack.c.bf16 %v1425, %v1419
      %v1557 = vpack.c.bf16 %v1434, %v1428
      %v1558 = vpack.c.bf16 %v1437, %v1431
      %v1559 = vpack.c.bf16 %v1446, %v1440
      %v1560 = vpack.c.bf16 %v1449, %v1443
      %v1561 = vpack.c.bf16 %v1458, %v1452
      %v1562 = vpack.c.bf16 %v1461, %v1455
      %v1563 = vpack.c.bf16 %v1470, %v1464
      %v1564 = vpack.c.bf16 %v1473, %v1467
      %v1565 = vpack.c.bf16 %v1482, %v1476
      %v1566 = vpack.c.bf16 %v1485, %v1479
      %v1599 = vunpack.c.l.b16 %v1519
      %v1600 = vunpack.c.l.b16 %v1520
      %v1601 = vunpack.c.l.b16 %v1521
      %v1602 = vunpack.c.l.b16 %v1522
      %v1603 = vunpack.c.l.b16 %v1523
      %v1604 = vunpack.c.l.b16 %v1524
      %v1605 = vunpack.c.l.b16 %v1525
      %v1606 = vunpack.c.l.b16 %v1526
      %v1607 = vunpack.c.l.b16 %v1527
      %v1608 = vunpack.c.l.b16 %v1528
      %v1609 = vunpack.c.l.b16 %v1529
      %v1610 = vunpack.c.l.b16 %v1530
      %v1611 = vunpack.c.l.b16 %v1531
      %v1612 = vunpack.c.l.b16 %v1532
      %v1613 = vunpack.c.l.b16 %v1533
      %v1614 = vunpack.c.l.b16 %v1534
      %v1615 = vunpack.c.l.b16 %v1535
      %v1616 = vunpack.c.l.b16 %v1536
      %v1617 = vunpack.c.l.b16 %v1537
      %v1618 = vunpack.c.l.b16 %v1538
      %v1619 = vunpack.c.l.b16 %v1539
      %v1620 = vunpack.c.l.b16 %v1540
      %v1621 = vunpack.c.l.b16 %v1541
      %v1622 = vunpack.c.l.b16 %v1542
      %v1623 = vunpack.c.l.b16 %v1543
      %v1624 = vunpack.c.l.b16 %v1544
      %v1625 = vunpack.c.l.b16 %v1545
      %v1626 = vunpack.c.l.b16 %v1546
      %v1627 = vunpack.c.l.b16 %v1547
      %v1628 = vunpack.c.l.b16 %v1548
      %v1629 = vunpack.c.l.b16 %v1549
      %v1630 = vunpack.c.l.b16 %v1550
      %v1631 = vpack.c.b16 %v1600, %v1599
      %v1632 = vpack.c.b16 %v1602, %v1601
      %v1633 = vpack.c.b16 %v1604, %v1603
      %v1634 = vpack.c.b16 %v1606, %v1605
      %v1635 = vpack.c.b16 %v1608, %v1607
      %v1636 = vpack.c.b16 %v1610, %v1609
      %v1637 = vpack.c.b16 %v1612, %v1611
      %v1638 = vpack.c.b16 %v1614, %v1613
      %v1639 = vpack.c.b16 %v1616, %v1615
      %v1640 = vpack.c.b16 %v1618, %v1617
      %v1641 = vpack.c.b16 %v1620, %v1619
      %v1642 = vpack.c.b16 %v1622, %v1621
      %v1643 = vpack.c.b16 %v1624, %v1623
      %v1644 = vpack.c.b16 %v1626, %v1625
      %v1645 = vpack.c.b16 %v1628, %v1627
      %v1646 = vpack.c.b16 %v1630, %v1629
      %1663 = vmatpush.bf16.msra.mxu0 %v1638
      %1664 = vmatpush.bf16.msra.mxu0 %v1637
      %1665 = vmatpush.bf16.msra.mxu0 %v1636
      %1666 = vmatpush.bf16.msra.mxu0 %v1635
      %1667 = vmatpush.bf16.msra.mxu0 %v1634
      %1668 = vmatpush.bf16.msra.mxu0 %v1633
      %1669 = vmatpush.bf16.msra.mxu0 %v1632
      %1670 = vmatpush.bf16.msra.mxu0 %v1631
      %1671 = vmatmul.bf16.gmra.mxu0 %v1551
      %v1672 = vpop.f32.mrf.mxu0
      %v1673 = vadd.f32 0.0, %v1672
      %v1674 = vpop.f32.mrf.mxu0
      %v1675 = vadd.f32 0.0, %v1674
      %1676 = vmatmul.bf16.gmra.mxu0 %v1553
      %v1677 = vpop.f32.mrf.mxu0
      %v1678 = vadd.f32 0.0, %v1677
      %v1679 = vpop.f32.mrf.mxu0
      %v1680 = vadd.f32 0.0, %v1679
      %1681 = vmatmul.bf16.gmra.mxu0 %v1555
      %v1682 = vpop.f32.mrf.mxu0
      %v1683 = vadd.f32 0.0, %v1682
      %v1684 = vpop.f32.mrf.mxu0
      %v1685 = vadd.f32 0.0, %v1684
      %1686 = vmatmul.bf16.gmra.mxu0 %v1557
      %v1687 = vpop.f32.mrf.mxu0
      %v1688 = vadd.f32 0.0, %v1687
      %v1689 = vpop.f32.mrf.mxu0
      %v1690 = vadd.f32 0.0, %v1689
      %1691 = vmatmul.bf16.gmra.mxu0 %v1559
      %v1692 = vpop.f32.mrf.mxu0
      %v1693 = vadd.f32 0.0, %v1692
      %v1694 = vpop.f32.mrf.mxu0
      %v1695 = vadd.f32 0.0, %v1694
      %1696 = vmatmul.bf16.gmra.mxu0 %v1561
      %v1697 = vpop.f32.mrf.mxu0
      %v1698 = vadd.f32 0.0, %v1697
      %v1699 = vpop.f32.mrf.mxu0
      %v1700 = vadd.f32 0.0, %v1699
      %1701 = vmatmul.bf16.gmra.mxu0 %v1563
      %v1702 = vpop.f32.mrf.mxu0
      %v1703 = vadd.f32 0.0, %v1702
      %v1704 = vpop.f32.mrf.mxu0
      %v1705 = vadd.f32 0.0, %v1704
      %1706 = vmatmul.bf16.gmra.mxu0 %v1565
      %v1707 = vpop.f32.mrf.mxu0
      %v1708 = vadd.f32 0.0, %v1707
      %v1709 = vpop.f32.mrf.mxu0
      %v1710 = vadd.f32 0.0, %v1709
      %1711 = vdwg.mxu0
      %1712 = vmatpush.bf16.msra.mxu0 %v1646
      %1713 = vmatpush.bf16.msra.mxu0 %v1645
      %1714 = vmatpush.bf16.msra.mxu0 %v1644
      %1715 = vmatpush.bf16.msra.mxu0 %v1643
      %1716 = vmatpush.bf16.msra.mxu0 %v1642
      %1717 = vmatpush.bf16.msra.mxu0 %v1641
      %1718 = vmatpush.bf16.msra.mxu0 %v1640
      %1719 = vmatpush.bf16.msra.mxu0 %v1639
      %1720 = vmatmul.bf16.gmra.mxu0 %v1552
      %v1721 = vpop.f32.mrf.mxu0
      %v1722 = vadd.f32 %v1673, %v1721
      %v1723 = vpop.f32.mrf.mxu0
      %v1724 = vadd.f32 %v1675, %v1723
      %1725 = vmatmul.bf16.gmra.mxu0 %v1554
      %v1726 = vpop.f32.mrf.mxu0
      %v1727 = vadd.f32 %v1678, %v1726
      %v1728 = vpop.f32.mrf.mxu0
      %v1729 = vadd.f32 %v1680, %v1728
      %1730 = vmatmul.bf16.gmra.mxu0 %v1556
      %v1731 = vpop.f32.mrf.mxu0
      %v1732 = vadd.f32 %v1683, %v1731
      %v1733 = vpop.f32.mrf.mxu0
      %v1734 = vadd.f32 %v1685, %v1733
      %1735 = vmatmul.bf16.gmra.mxu0 %v1558
      %v1736 = vpop.f32.mrf.mxu0
      %v1737 = vadd.f32 %v1688, %v1736
      %v1738 = vpop.f32.mrf.mxu0
      %v1739 = vadd.f32 %v1690, %v1738
      %1740 = vmatmul.bf16.gmra.mxu0 %v1560
      %v1741 = vpop.f32.mrf.mxu0
      %v1742 = vadd.f32 %v1693, %v1741
      %v1743 = vpop.f32.mrf.mxu0
      %v1744 = vadd.f32 %v1695, %v1743
      %1745 = vmatmul.bf16.gmra.mxu0 %v1562
      %v1746 = vpop.f32.mrf.mxu0
      %v1747 = vadd.f32 %v1698, %v1746
      %v1748 = vpop.f32.mrf.mxu0
      %v1749 = vadd.f32 %v1700, %v1748
      %1750 = vmatmul.bf16.gmra.mxu0 %v1564
      %v1751 = vpop.f32.mrf.mxu0
      %v1752 = vadd.f32 %v1703, %v1751
      %v1753 = vpop.f32.mrf.mxu0
      %v1754 = vadd.f32 %v1705, %v1753
      %1755 = vmatmul.bf16.gmra.mxu0 %v1566
      %v1756 = vpop.f32.mrf.mxu0
      %v1757 = vadd.f32 %v1708, %v1756
      %v1758 = vpop.f32.mrf.mxu0
      %v1759 = vadd.f32 %v1710, %v1758
      %1760 = vdwg.mxu0
      %v1761 = vadd.f32 %v1246, %v1722
      %v1762 = vadd.f32 %v1247, %v1724
      %v1763 = vadd.f32 %v1248, %v1727
      %v1764 = vadd.f32 %v1249, %v1729
      %v1765 = vadd.f32 %v1250, %v1732
      %v1766 = vadd.f32 %v1251, %v1734
      %v1767 = vadd.f32 %v1252, %v1737
      %v1768 = vadd.f32 %v1253, %v1739
      %v1769 = vadd.f32 %v1254, %v1742
      %v1770 = vadd.f32 %v1255, %v1744
      %v1771 = vadd.f32 %v1256, %v1747
      %v1772 = vadd.f32 %v1257, %v1749
      %v1773 = vadd.f32 %v1258, %v1752
      %v1774 = vadd.f32 %v1259, %v1754
      %v1775 = vadd.f32 %v1260, %v1757
      %v1776 = vadd.f32 %v1261, %v1759
      %v1777 = vld [vmem:[%s2] sm:$0x1]
      %v1779 = vperm.slane %v1777, 0
      %v1781 = vadd.f32 %v1761, %v1779
      %v1782 = vadd.f32 %v1762, %v1779
      %v1783 = vadd.f32 %v1763, %v1779
      %v1784 = vadd.f32 %v1764, %v1779
      %v1785 = vadd.f32 %v1765, %v1779
      %v1786 = vadd.f32 %v1766, %v1779
      %v1787 = vadd.f32 %v1767, %v1779
      %v1788 = vadd.f32 %v1768, %v1779
      %v1789 = vadd.f32 %v1769, %v1779
      %v1790 = vadd.f32 %v1770, %v1779
      %v1791 = vadd.f32 %v1771, %v1779
      %v1792 = vadd.f32 %v1772, %v1779
      %v1793 = vadd.f32 %v1773, %v1779
      %v1794 = vadd.f32 %v1774, %v1779
      %v1795 = vadd.f32 %v1775, %v1779
      %v1796 = vadd.f32 %v1776, %v1779
      %v1797 = vmax.f32 %v1781, 0.0
      %v1798 = vmax.f32 %v1782, 0.0
      %v1799 = vmax.f32 %v1783, 0.0
      %v1800 = vmax.f32 %v1784, 0.0
      %v1801 = vmax.f32 %v1785, 0.0
      %v1802 = vmax.f32 %v1786, 0.0
      %v1803 = vmax.f32 %v1787, 0.0
      %v1804 = vmax.f32 %v1788, 0.0
      %v1805 = vmax.f32 %v1789, 0.0
      %v1806 = vmax.f32 %v1790, 0.0
      %v1807 = vmax.f32 %v1791, 0.0
      %v1808 = vmax.f32 %v1792, 0.0
      %v1809 = vmax.f32 %v1793, 0.0
      %v1810 = vmax.f32 %v1794, 0.0
      %v1811 = vmax.f32 %v1795, 0.0
      %v1812 = vmax.f32 %v1796, 0.0
      %1813 = vst [vmem:[%s195] sm:$0xff] %v1797
      %1814 = vst [vmem:[%s195 + $0x8] sm:$0xff] %v1798
      %1815 = vst [vmem:[%s195 + $0x10] sm:$0xff] %v1799
      %1816 = vst [vmem:[%s195 + $0x18] sm:$0xff] %v1800
      %1817 = vst [vmem:[%s195 + $0x20] sm:$0xff] %v1801
      %1818 = vst [vmem:[%s195 + $0x28] sm:$0xff] %v1802
      %1819 = vst [vmem:[%s195 + $0x30] sm:$0xff] %v1803
      %1820 = vst [vmem:[%s195 + $0x38] sm:$0xff] %v1804
      %1821 = vst [vmem:[%s195 + $0x40] sm:$0xff] %v1805
      %1822 = vst [vmem:[%s195 + $0x48] sm:$0xff] %v1806
      %1823 = vst [vmem:[%s195 + $0x50] sm:$0xff] %v1807
      %1824 = vst [vmem:[%s195 + $0x58] sm:$0xff] %v1808
      %1825 = vst [vmem:[%s195 + $0x60] sm:$0xff] %v1809
      %1826 = vst [vmem:[%s195 + $0x68] sm:$0xff] %v1810
      %1827 = vst [vmem:[%s195 + $0x70] sm:$0xff] %v1811
      %1828 = vst [vmem:[%s195 + $0x78] sm:$0xff] %v1812
      %p1829 = scmp.lt.s32.totalorder %s14, 3
      %s1830 = scalar_select %p1829, %s14, 3
      %s1831 = smul.addr %s1830, 16
      %s1832 = smul.addr %s1831, 8
      %s1833 = scalar_lea.vmem %s3, %s1832
      // Predicated region
      $region33: #{generator_forward.6} parent=31 // pred_check
        %p1834 = pneg %p105
      $region34: #{generator_forward.6} parent=31 // pred_check_branch
        %1836 = sbr.rel (%p1834) target = $region36
      $region35: #{generator_forward.6} parent=31 // pred_region
        _
      $region36: #{generator_forward.6} parent=31 // pred_fallthru
        _
    $region32: #{generator_forward.6} parent=5 // pred_fallthru
      _
    %p1837 = scmp.le.s32.totalorder 2, %s9
    // Predicated region
    $region37: #{generator_forward.6} parent=5 // pred_check
      %p1838 = pneg %p1837
    $region38: #{generator_forward.6} parent=5 // pred_check_branch
      %1840 = sbr.rel (%p1838) target = $region40
    $region39: #{generator_forward.6} parent=5 // pred_region
      %s1841 = ssub.s32 %s9, 2
      // Predicated region
      $region41: #{generator_forward.6} parent=39 // pred_check
        %p1842 = pneg %p111
      $region42: #{generator_forward.6} parent=39 // pred_check_branch
        %1844 = sbr.rel (%p1842) target = $region44
      $region43: #{generator_forward.6} parent=39 // pred_region
        %p1845 = scmp.lt.s32.totalorder %s15, 3
        %s1846 = scalar_select %p1845, %s15, 3
        %s1847 = smul.addr %s1846, 16
        %s1848 = smul.addr %s1847, 8
        %s1849 = scalar_lea.vmem %s3, %s1848
      $region44: #{generator_forward.6} parent=39 // pred_fallthru
        _
    $region40: #{generator_forward.6} parent=5 // pred_fallthru
      _
  $region6: #{generator_forward.6} parent=0 // loop_footer
    %s13 = sadd.s32 1, %s9
  $region7: #{generator_forward.6} parent=0 // loop_footer_branch
    %8 = sbr.rel target = $region3
  $region8: #{generator_forward.6} parent=0 // loop_exit
    _

// kernel: generator_forward.7
$region0: #{generator_forward.7}
  #allocation0 [shape = 'u32[]', space=smem, size = 0x4, offset = 0x4, fixed_abs, tag = 'smem constant byte address 0x4 - core index']
  #allocation1 [shape = 'u32[72,128]{1,0:T(1,128)}', space=vmem, size = 0x9000, scoped, tag = 'internal scratch']
  %s0 = inlined_call_operand.vmem [shape: f32[8,17,17,128], index: 0, kind: input, shape index: {}]
  %s1 = inlined_call_operand.vmem [shape: bf16[4,4,3,128], index: 1, kind: input, shape index: {}]
  %s2 = inlined_call_operand.vmem [shape: f32[3,1], index: 2, kind: input, shape index: {}]
  %s3 = inlined_call_operand.vmem [shape: f32[4,3,512], index: 3, kind: output, shape index: {}]
  %s4 = sld [smem:[#allocation0]]
  $region45: #{generator_forward.7} parent=0
    _
  %s6 = ssub.s32 1, %s4
  %s7 = scalar_select 0, %s6, %s4
  loop: start=0, step=1, limit=6
  $region2: #{generator_forward.7} parent=0 // loop_pre_header
    _
  $region3: #{generator_forward.7} parent=0 // loop_header
    %s9 = sphi 0, %s13
    %p10 = scmp.ge.s32.totalorder %s9, 6
    %s19 = sphi 0, %s21
    %s22 = sphi 0, %s19
    %s23 = sphi 0, %s22
    %s39 = sphi 0, %s23
    %s45 = sphi 0, %s47
    %s48 = sphi 0, %s45
    %s49 = sphi 0, %s48
    %s65 = sphi 0, %s49
    %s69 = sphi 0, %s69
    %s71 = sphi 0, %s69
    %s72 = sphi 0, %s71
    %s86 = sphi 0, %s72
    %s92 = sphi 0, %s94
    %s95 = sphi 0, %s92
    %s96 = sphi 0, %s95
    %s112 = sphi 0, %s96
  $region4: #{generator_forward.7} parent=0 // loop_header_branch
    %12 = sbr.rel (%p10) target = $region8
  $region5: #{generator_forward.7} parent=0 // loop_body
    %s14 = ssub.s32 %s9, 1
    %s15 = ssub.s32 %s9, 2
    %s16 = sadd.s32 %s9, 1
    %s17 = ssub.s32 %s9, %s16
    %p18 = scmp.eq.s32.totalorder %s17, 0
    %s20 = sadd.s32 %s19, 1
    %s21 = scalar_select %p18, %s19, %s20
    %p24 = pneg %p18
    %p25 = scmp.eq.s32.totalorder %s9, 3
    %p26 = por %p24, %p25
    %p27 = scmp.ne.s32.totalorder %s19, %s22
    %p28 = scmp.eq.s32.totalorder %s9, 0
    %p29 = por %p27, %p28
    %p30 = scmp.ne.s32.totalorder %s19, %s22
    %p31 = scmp.eq.s32.totalorder %s14, 3
    %p32 = por %p30, %p31
    %p33 = scmp.ne.s32.totalorder %s22, %s23
    %p34 = scmp.eq.s32.totalorder %s14, 0
    %p35 = por %p33, %p34
    %p36 = scmp.ne.s32.totalorder %s22, %s23
    %p37 = scmp.eq.s32.totalorder %s15, 3
    %p38 = por %p36, %p37
    %p40 = scmp.ne.s32.totalorder %s23, %s39
    %p41 = scmp.eq.s32.totalorder %s15, 0
    %p42 = por %p40, %p41
    %s43 = ssub.s32 %s9, %s16
    %p44 = scmp.eq.s32.totalorder %s43, 0
    %s46 = sadd.s32 %s45, 1
    %s47 = scalar_select %p44, %s45, %s46
    %p50 = pneg %p44
    %p51 = scmp.eq.s32.totalorder %s9, 3
    %p52 = por %p50, %p51
    %p53 = scmp.ne.s32.totalorder %s45, %s48
    %p54 = scmp.eq.s32.totalorder %s9, 0
    %p55 = por %p53, %p54
    %p56 = scmp.ne.s32.totalorder %s45, %s48
    %p57 = scmp.eq.s32.totalorder %s14, 3
    %p58 = por %p56, %p57
    %p59 = scmp.ne.s32.totalorder %s48, %s49
    %p60 = scmp.eq.s32.totalorder %s14, 0
    %p61 = por %p59, %p60
    %p62 = scmp.ne.s32.totalorder %s48, %s49
    %p63 = scmp.eq.s32.totalorder %s15, 3
    %p64 = por %p62, %p63
    %p66 = scmp.ne.s32.totalorder %s49, %s65
    %p67 = scmp.eq.s32.totalorder %s15, 0
    %p68 = por %p66, %p67
    %s70 = sadd.s32 %s69, 1
    %p73 = scmp.eq.s32.totalorder %s9, 3
    %p74 = scmp.ne.s32.totalorder %s69, %s71
    %p75 = scmp.eq.s32.totalorder %s9, 0
    %p76 = por %p74, %p75
    %p77 = scmp.ne.s32.totalorder %s69, %s71
    %p78 = scmp.eq.s32.totalorder %s14, 3
    %p79 = por %p77, %p78
    %p80 = scmp.ne.s32.totalorder %s71, %s72
    %p81 = scmp.eq.s32.totalorder %s14, 0
    %p82 = por %p80, %p81
    %p83 = scmp.ne.s32.totalorder %s71, %s72
    %p84 = scmp.eq.s32.totalorder %s15, 3
    %p85 = por %p83, %p84
    %p87 = scmp.ne.s32.totalorder %s72, %s86
    %p88 = scmp.eq.s32.totalorder %s15, 0
    %p89 = por %p87, %p88
    %s90 = ssub.s32 %s9, %s16
    %p91 = scmp.eq.s32.totalorder %s90, 0
    %s93 = sadd.s32 %s92, 1
    %s94 = scalar_select %p91, %s92, %s93
    %p97 = pneg %p91
    %p98 = scmp.eq.s32.totalorder %s9, 3
    %p99 = por %p97, %p98
    %p100 = scmp.ne.s32.totalorder %s92, %s95
    %p101 = scmp.eq.s32.totalorder %s9, 0
    %p102 = por %p100, %p101
    %p103 = scmp.ne.s32.totalorder %s92, %s95
    %p104 = scmp.eq.s32.totalorder %s14, 3
    %p105 = por %p103, %p104
    %p106 = scmp.ne.s32.totalorder %s95, %s96
    %p107 = scmp.eq.s32.totalorder %s14, 0
    %p108 = por %p106, %p107
    %p109 = scmp.ne.s32.totalorder %s95, %s96
    %p110 = scmp.eq.s32.totalorder %s15, 3
    %p111 = por %p109, %p110
    %p113 = scmp.ne.s32.totalorder %s96, %s112
    %p114 = scmp.eq.s32.totalorder %s15, 0
    %p115 = por %p113, %p114
    %p116 = scmp.le.s32.totalorder 1, %s9
    %p117 = scmp.lt.s32.totalorder %s9, 5
    %p118 = pnand %p116, %p117
    %p119 = pneg %p118
    // Predicated region
    $region9: #{generator_forward.7} parent=5 // pred_check
      _
    $region10: #{generator_forward.7} parent=5 // pred_check_branch
      %121 = sbr.rel (%p118) target = $region12
    $region11: #{generator_forward.7} parent=5 // pred_region
      %s122 = ssub.s32 %s9, 1
      // Predicated region
      $region13: #{generator_forward.7} parent=11 // pred_check
        %p123 = pneg %p82
      $region14: #{generator_forward.7} parent=11 // pred_check_branch
        %125 = sbr.rel (%p123) target = $region16
      $region15: #{generator_forward.7} parent=11 // pred_region
        _
      $region16: #{generator_forward.7} parent=11 // pred_fallthru
        _
    $region12: #{generator_forward.7} parent=5 // pred_fallthru
      _
    %p126 = scmp.lt.s32.totalorder %s9, 4
    // Predicated region
    $region17: #{generator_forward.7} parent=5 // pred_check
      %p127 = pneg %p126
    $region18: #{generator_forward.7} parent=5 // pred_check_branch
      %129 = sbr.rel (%p127) target = $region20
    $region19: #{generator_forward.7} parent=5 // pred_region
      // Predicated region
      $region21: #{generator_forward.7} parent=19 // pred_check
        %p130 = pneg %p29
      $region22: #{generator_forward.7} parent=19 // pred_check_branch
        %132 = sbr.rel (%p130) target = $region24
      $region23: #{generator_forward.7} parent=19 // pred_region
        %s133 = smul.u32 2, %s9
        %p134 = scmp.lt.s32.totalorder %s133, 7
        %s135 = scalar_select %p134, %s133, 7
        %s136 = smul.addr %s135, 51
        %s137 = smul.addr %s136, 8
        %s138 = scalar_lea.vmem %s0, %s137
        %s139 = smul.u32 2, %s9
      $region24: #{generator_forward.7} parent=19 // pred_fallthru
        _
      // Predicated region
      $region25: #{generator_forward.7} parent=19 // pred_check
        %p140 = pneg %p55
      $region26: #{generator_forward.7} parent=19 // pred_check_branch
        %142 = sbr.rel (%p140) target = $region28
      $region27: #{generator_forward.7} parent=19 // pred_region
        %p143 = scmp.lt.s32.totalorder %s9, 3
        %s144 = scalar_select %p143, %s9, 3
        %s145 = smul.addr %s144, 4
        %s146 = smul.addr %s145, 2
        %s147 = scalar_lea.vmem %s1, %s146
      $region28: #{generator_forward.7} parent=19 // pred_fallthru
        _
    $region20: #{generator_forward.7} parent=5 // pred_fallthru
      _
    %p148 = scmp.le.s32.totalorder 1, %s9
    %p149 = scmp.lt.s32.totalorder %s9, 5
    %p150 = pnand %p148, %p149
    %p151 = pneg %p150
    // Predicated region
    $region29: #{generator_forward.7} parent=5 // pred_check
      _
    $region30: #{generator_forward.7} parent=5 // pred_check_branch
      %153 = sbr.rel (%p150) target = $region32
    $region31: #{generator_forward.7} parent=5 // pred_region
      %s154 = ssub.s32 %s9, 1
      %s155 = smul.u32 2, %s14
      %p156 = scmp.lt.s32.totalorder %s155, 7
      %s157 = scalar_select %p156, %s155, 7
      %s158 = smul.addr %s157, 51
      %s159 = smul.addr %s158, 8
      %s160 = scalar_lea.vmem %s0, %s159
      %p161 = pneg %p35
      %p162 = pneg %p32
      %p163 = scmp.lt.s32.totalorder %s14, 3
      %s164 = scalar_select %p163, %s14, 3
      %s165 = smul.addr %s164, 4
      %s166 = smul.addr %s165, 2
      %s167 = scalar_lea.vmem %s1, %s166
      %p168 = pneg %p61
      %p169 = pneg %p58
      %p170 = pneg %p82
      %p171 = pneg %p79
      %p172 = pneg %p108
      %p173 = pneg %p105
      %p174 = scmp.lt.s32.totalorder %s14, 3
      %s175 = scalar_select %p174, %s14, 3
      %s176 = smul.addr %s175, 4
      %s177 = smul.addr %s176, 4
      %s178 = scalar_lea.vmem %s3, %s177
      %s179 = smul.u32 2, %s14
      %p180 = scmp.lt.s32.totalorder %s179, 7
      %s181 = scalar_select %p180, %s179, 7
      %s182 = smul.addr %s181, 51
      %s183 = smul.addr %s182, 8
      %s184 = scalar_lea.vmem %s0, %s183
      %s185 = smul.u32 2, %s14
      %p186 = scmp.lt.s32.totalorder %s14, 3
      %s187 = scalar_select %p186, %s14, 3
      %s188 = smul.addr %s187, 4
      %s189 = smul.addr %s188, 2
      %s190 = scalar_lea.vmem %s1, %s189
      %p191 = scmp.lt.s32.totalorder %s14, 3
      %s192 = scalar_select %p191, %s14, 3
      %s193 = smul.addr %s192, 4
      %s194 = smul.addr %s193, 4
      %s195 = scalar_lea.vmem %s3, %s194
      %v196 = vld [vmem:[%s184] sm:$0xff]
      %v197 = vld [vmem:[%s184 + $0x8] sm:$0xff]
      %v198 = vld [vmem:[%s184 + $0x18] sm:$0xff]
      %v199 = vld [vmem:[%s184 + $0x20] sm:$0xff]
      %v200 = vld [vmem:[%s184 + $0x30] sm:$0xff]
      %v201 = vld [vmem:[%s184 + $0x38] sm:$0xff]
      %v202 = vld [vmem:[%s184 + $0x48] sm:$0xff]
      %v203 = vld [vmem:[%s184 + $0x50] sm:$0xff]
      %v204 = vld [vmem:[%s184 + $0x60] sm:$0xff]
      %v205 = vld [vmem:[%s184 + $0x68] sm:$0xff]
      %v206 = vld [vmem:[%s184 + $0x78] sm:$0xff]
      %v207 = vld [vmem:[%s184 + $0x80] sm:$0xff]
      %v208 = vld [vmem:[%s184 + $0x90] sm:$0xff]
      %v209 = vld [vmem:[%s184 + $0x98] sm:$0xff]
      %v210 = vld [vmem:[%s184 + $0xa8] sm:$0xff]
      %v211 = vld [vmem:[%s184 + $0xb0] sm:$0xff]
      %v212 = vld [vmem:[%s184 + $0xc0] sm:$0xff]
      %v213 = vld [vmem:[%s184 + $0xc8] sm:$0xff]
      %v214 = vld [vmem:[%s184 + $0xd8] sm:$0xff]
      %v215 = vld [vmem:[%s184 + $0xe0] sm:$0xff]
      %v216 = vld [vmem:[%s184 + $0xf0] sm:$0xff]
      %v217 = vld [vmem:[%s184 + $0xf8] sm:$0xff]
      %v218 = vld [vmem:[%s184 + $0x108] sm:$0xff]
      %v219 = vld [vmem:[%s184 + $0x110] sm:$0xff]
      %v220 = vld [vmem:[%s184 + $0x120] sm:$0xff]
      %v221 = vld [vmem:[%s184 + $0x128] sm:$0xff]
      %v222 = vld [vmem:[%s184 + $0x138] sm:$0xff]
      %v223 = vld [vmem:[%s184 + $0x140] sm:$0xff]
      %v224 = vld [vmem:[%s184 + $0x150] sm:$0xff]
      %v225 = vld [vmem:[%s184 + $0x158] sm:$0xff]
      %v226 = vld [vmem:[%s184 + $0x168] sm:$0xff]
      %v227 = vld [vmem:[%s184 + $0x170] sm:$0xff]
      %v228 = vld [vmem:[%s184 + $0x198] sm:$0xff]
      %v229 = vld [vmem:[%s184 + $0x1a0] sm:$0xff]
      %v230 = vld [vmem:[%s184 + $0x1b0] sm:$0xff]
      %v231 = vld [vmem:[%s184 + $0x1b8] sm:$0xff]
      %v232 = vld [vmem:[%s184 + $0x1c8] sm:$0xff]
      %v233 = vld [vmem:[%s184 + $0x1d0] sm:$0xff]
      %v234 = vld [vmem:[%s184 + $0x1e0] sm:$0xff]
      %v235 = vld [vmem:[%s184 + $0x1e8] sm:$0xff]
      %v236 = vld [vmem:[%s184 + $0x1f8] sm:$0xff]
      %v237 = vld [vmem:[%s184 + $0x200] sm:$0xff]
      %v238 = vld [vmem:[%s184 + $0x210] sm:$0xff]
      %v239 = vld [vmem:[%s184 + $0x218] sm:$0xff]
      %v240 = vld [vmem:[%s184 + $0x228] sm:$0xff]
      %v241 = vld [vmem:[%s184 + $0x230] sm:$0xff]
      %v242 = vld [vmem:[%s184 + $0x240] sm:$0xff]
      %v243 = vld [vmem:[%s184 + $0x248] sm:$0xff]
      %v244 = vld [vmem:[%s184 + $0x258] sm:$0xff]
      %v245 = vld [vmem:[%s184 + $0x260] sm:$0xff]
      %v246 = vld [vmem:[%s184 + $0x270] sm:$0xff]
      %v247 = vld [vmem:[%s184 + $0x278] sm:$0xff]
      %v248 = vld [vmem:[%s184 + $0x288] sm:$0xff]
      %v249 = vld [vmem:[%s184 + $0x290] sm:$0xff]
      %v250 = vld [vmem:[%s184 + $0x2a0] sm:$0xff]
      %v251 = vld [vmem:[%s184 + $0x2a8] sm:$0xff]
      %v252 = vld [vmem:[%s184 + $0x2b8] sm:$0xff]
      %v253 = vld [vmem:[%s184 + $0x2c0] sm:$0xff]
      %v254 = vld [vmem:[%s184 + $0x2d0] sm:$0xff]
      %v255 = vld [vmem:[%s184 + $0x2d8] sm:$0xff]
      %v256 = vld [vmem:[%s184 + $0x2e8] sm:$0xff]
      %v257 = vld [vmem:[%s184 + $0x2f0] sm:$0xff]
      %v258 = vld [vmem:[%s184 + $0x300] sm:$0xff]
      %v259 = vld [vmem:[%s184 + $0x308] sm:$0xff]
      %v260 = vld [vmem:[%s190] sm:$0x3]
      %261 = vxpose.xlu0.b32.start [1/16] %v196, 128
      %262 = vxpose.xlu0.b32.cont [2/16] %v197, 128
      %263 = vxpose.xlu0.b32.cont [3/16] %v198, 128
      %264 = vxpose.xlu0.b32.cont [4/16] %v199, 128
      %265 = vxpose.xlu0.b32.cont [5/16] %v200, 128
      %266 = vxpose.xlu0.b32.cont [6/16] %v201, 128
      %267 = vxpose.xlu0.b32.cont [7/16] %v202, 128
      %268 = vxpose.xlu0.b32.cont [8/16] %v203, 128
      %269 = vxpose.xlu0.b32.cont [9/16] %v204, 128
      %270 = vxpose.xlu0.b32.cont [10/16] %v205, 128
      %271 = vxpose.xlu0.b32.cont [11/16] %v206, 128
      %272 = vxpose.xlu0.b32.cont [12/16] %v207, 128
      %273 = vxpose.xlu0.b32.cont [13/16] %v208, 128
      %274 = vxpose.xlu0.b32.cont [14/16] %v209, 128
      %275 = vxpose.xlu0.b32.cont [15/16] %v210, 128
      %276 = vxpose.xlu0.b32.end [16/16] %v211, 128
      %v277 = vpop.trf.xlu0
      %v278 = vpop.trf.xlu0
      %v279 = vpop.trf.xlu0
      %v280 = vpop.trf.xlu0
      %v281 = vpop.trf.xlu0
      %v282 = vpop.trf.xlu0
      %v283 = vpop.trf.xlu0
      %v284 = vpop.trf.xlu0
      %v285 = vpop.trf.xlu0
      %v286 = vpop.trf.xlu0
      %v287 = vpop.trf.xlu0
      %v288 = vpop.trf.xlu0
      %v289 = vpop.trf.xlu0
      %v290 = vpop.trf.xlu0
      %v291 = vpop.trf.xlu0
      %v292 = vpop.trf.xlu0
      %293 = vxpose.xlu0.b32.start [1/16] %v212, 128
      %294 = vxpose.xlu0.b32.cont [2/16] %v213, 128
      %295 = vxpose.xlu0.b32.cont [3/16] %v214, 128
      %296 = vxpose.xlu0.b32.cont [4/16] %v215, 128
      %297 = vxpose.xlu0.b32.cont [5/16] %v216, 128
      %298 = vxpose.xlu0.b32.cont [6/16] %v217, 128
      %299 = vxpose.xlu0.b32.cont [7/16] %v218, 128
      %300 = vxpose.xlu0.b32.cont [8/16] %v219, 128
      %301 = vxpose.xlu0.b32.cont [9/16] %v220, 128
      %302 = vxpose.xlu0.b32.cont [10/16] %v221, 128
      %303 = vxpose.xlu0.b32.cont [11/16] %v222, 128
      %304 = vxpose.xlu0.b32.cont [12/16] %v223, 128
      %305 = vxpose.xlu0.b32.cont [13/16] %v224, 128
      %306 = vxpose.xlu0.b32.cont [14/16] %v225, 128
      %307 = vxpose.xlu0.b32.cont [15/16] %v226, 128
      %308 = vxpose.xlu0.b32.end [16/16] %v227, 128
      %v309 = vpop.trf.xlu0
      %v310 = vpop.trf.xlu0
      %v311 = vpop.trf.xlu0
      %v312 = vpop.trf.xlu0
      %v313 = vpop.trf.xlu0
      %v314 = vpop.trf.xlu0
      %v315 = vpop.trf.xlu0
      %v316 = vpop.trf.xlu0
      %v317 = vpop.trf.xlu0
      %v318 = vpop.trf.xlu0
      %v319 = vpop.trf.xlu0
      %v320 = vpop.trf.xlu0
      %v321 = vpop.trf.xlu0
      %v322 = vpop.trf.xlu0
      %v323 = vpop.trf.xlu0
      %v324 = vpop.trf.xlu0
      %325 = vxpose.xlu0.b32.start [1/16] %v228, 128
      %326 = vxpose.xlu0.b32.cont [2/16] %v229, 128
      %327 = vxpose.xlu0.b32.cont [3/16] %v230, 128
      %328 = vxpose.xlu0.b32.cont [4/16] %v231, 128
      %329 = vxpose.xlu0.b32.cont [5/16] %v232, 128
      %330 = vxpose.xlu0.b32.cont [6/16] %v233, 128
      %331 = vxpose.xlu0.b32.cont [7/16] %v234, 128
      %332 = vxpose.xlu0.b32.cont [8/16] %v235, 128
      %333 = vxpose.xlu0.b32.cont [9/16] %v236, 128
      %334 = vxpose.xlu0.b32.cont [10/16] %v237, 128
      %335 = vxpose.xlu0.b32.cont [11/16] %v238, 128
      %336 = vxpose.xlu0.b32.cont [12/16] %v239, 128
      %337 = vxpose.xlu0.b32.cont [13/16] %v240, 128
      %338 = vxpose.xlu0.b32.cont [14/16] %v241, 128
      %339 = vxpose.xlu0.b32.cont [15/16] %v242, 128
      %340 = vxpose.xlu0.b32.end [16/16] %v243, 128
      %v341 = vpop.trf.xlu0
      %v342 = vpop.trf.xlu0
      %v343 = vpop.trf.xlu0
      %v344 = vpop.trf.xlu0
      %v345 = vpop.trf.xlu0
      %v346 = vpop.trf.xlu0
      %v347 = vpop.trf.xlu0
      %v348 = vpop.trf.xlu0
      %v349 = vpop.trf.xlu0
      %v350 = vpop.trf.xlu0
      %v351 = vpop.trf.xlu0
      %v352 = vpop.trf.xlu0
      %v353 = vpop.trf.xlu0
      %v354 = vpop.trf.xlu0
      %v355 = vpop.trf.xlu0
      %v356 = vpop.trf.xlu0
      %357 = vxpose.xlu0.b32.start [1/16] %v244, 128
      %358 = vxpose.xlu0.b32.cont [2/16] %v245, 128
      %359 = vxpose.xlu0.b32.cont [3/16] %v246, 128
      %360 = vxpose.xlu0.b32.cont [4/16] %v247, 128
      %361 = vxpose.xlu0.b32.cont [5/16] %v248, 128
      %362 = vxpose.xlu0.b32.cont [6/16] %v249, 128
      %363 = vxpose.xlu0.b32.cont [7/16] %v250, 128
      %364 = vxpose.xlu0.b32.cont [8/16] %v251, 128
      %365 = vxpose.xlu0.b32.cont [9/16] %v252, 128
      %366 = vxpose.xlu0.b32.cont [10/16] %v253, 128
      %367 = vxpose.xlu0.b32.cont [11/16] %v254, 128
      %368 = vxpose.xlu0.b32.cont [12/16] %v255, 128
      %369 = vxpose.xlu0.b32.cont [13/16] %v256, 128
      %370 = vxpose.xlu0.b32.cont [14/16] %v257, 128
      %371 = vxpose.xlu0.b32.cont [15/16] %v258, 128
      %372 = vxpose.xlu0.b32.end [16/16] %v259, 128
      %v373 = vpop.trf.xlu0
      %v374 = vpop.trf.xlu0
      %v375 = vpop.trf.xlu0
      %v376 = vpop.trf.xlu0
      %v377 = vpop.trf.xlu0
      %v378 = vpop.trf.xlu0
      %v379 = vpop.trf.xlu0
      %v380 = vpop.trf.xlu0
      %v381 = vpop.trf.xlu0
      %v382 = vpop.trf.xlu0
      %v383 = vpop.trf.xlu0
      %v384 = vpop.trf.xlu0
      %v385 = vpop.trf.xlu0
      %v386 = vpop.trf.xlu0
      %v387 = vpop.trf.xlu0
      %v388 = vpop.trf.xlu0
      %v389 = vpack.c.bf16 %v278, %v277
      %v390 = vpack.c.bf16 %v310, %v309
      %v391 = vpack.c.bf16 %v342, %v341
      %v392 = vpack.c.bf16 %v374, %v373
      %v393 = vpack.c.bf16 %v280, %v279
      %v394 = vpack.c.bf16 %v312, %v311
      %v395 = vpack.c.bf16 %v344, %v343
      %v396 = vpack.c.bf16 %v376, %v375
      %v397 = vpack.c.bf16 %v282, %v281
      %v398 = vpack.c.bf16 %v314, %v313
      %v399 = vpack.c.bf16 %v346, %v345
      %v400 = vpack.c.bf16 %v378, %v377
      %v401 = vpack.c.bf16 %v284, %v283
      %v402 = vpack.c.bf16 %v316, %v315
      %v403 = vpack.c.bf16 %v348, %v347
      %v404 = vpack.c.bf16 %v380, %v379
      %v405 = vpack.c.bf16 %v286, %v285
      %v406 = vpack.c.bf16 %v318, %v317
      %v407 = vpack.c.bf16 %v350, %v349
      %v408 = vpack.c.bf16 %v382, %v381
      %v409 = vpack.c.bf16 %v288, %v287
      %v410 = vpack.c.bf16 %v320, %v319
      %v411 = vpack.c.bf16 %v352, %v351
      %v412 = vpack.c.bf16 %v384, %v383
      %v413 = vpack.c.bf16 %v290, %v289
      %v414 = vpack.c.bf16 %v322, %v321
      %v415 = vpack.c.bf16 %v354, %v353
      %v416 = vpack.c.bf16 %v386, %v385
      %v417 = vpack.c.bf16 %v292, %v291
      %v418 = vpack.c.bf16 %v324, %v323
      %v419 = vpack.c.bf16 %v356, %v355
      %v420 = vpack.c.bf16 %v388, %v387
      %v421 = vld [vmem:[%s184 + $0x1] sm:$0xff]
      %v422 = vld [vmem:[%s184 + $0x9] sm:$0xff]
      %v423 = vld [vmem:[%s184 + $0x19] sm:$0xff]
      %v424 = vld [vmem:[%s184 + $0x21] sm:$0xff]
      %v425 = vld [vmem:[%s184 + $0x31] sm:$0xff]
      %v426 = vld [vmem:[%s184 + $0x39] sm:$0xff]
      %v427 = vld [vmem:[%s184 + $0x49] sm:$0xff]
      %v428 = vld [vmem:[%s184 + $0x51] sm:$0xff]
      %v429 = vld [vmem:[%s184 + $0x61] sm:$0xff]
      %v430 = vld [vmem:[%s184 + $0x69] sm:$0xff]
      %v431 = vld [vmem:[%s184 + $0x79] sm:$0xff]
      %v432 = vld [vmem:[%s184 + $0x81] sm:$0xff]
      %v433 = vld [vmem:[%s184 + $0x91] sm:$0xff]
      %v434 = vld [vmem:[%s184 + $0x99] sm:$0xff]
      %v435 = vld [vmem:[%s184 + $0xa9] sm:$0xff]
      %v436 = vld [vmem:[%s184 + $0xb1] sm:$0xff]
      %v437 = vld [vmem:[%s184 + $0xc1] sm:$0xff]
      %v438 = vld [vmem:[%s184 + $0xc9] sm:$0xff]
      %v439 = vld [vmem:[%s184 + $0xd9] sm:$0xff]
      %v440 = vld [vmem:[%s184 + $0xe1] sm:$0xff]
      %v441 = vld [vmem:[%s184 + $0xf1] sm:$0xff]
      %v442 = vld [vmem:[%s184 + $0xf9] sm:$0xff]
      %v443 = vld [vmem:[%s184 + $0x109] sm:$0xff]
      %v444 = vld [vmem:[%s184 + $0x111] sm:$0xff]
      %v445 = vld [vmem:[%s184 + $0x121] sm:$0xff]
      %v446 = vld [vmem:[%s184 + $0x129] sm:$0xff]
      %v447 = vld [vmem:[%s184 + $0x139] sm:$0xff]
      %v448 = vld [vmem:[%s184 + $0x141] sm:$0xff]
      %v449 = vld [vmem:[%s184 + $0x151] sm:$0xff]
      %v450 = vld [vmem:[%s184 + $0x159] sm:$0xff]
      %v451 = vld [vmem:[%s184 + $0x169] sm:$0xff]
      %v452 = vld [vmem:[%s184 + $0x171] sm:$0xff]
      %v453 = vld [vmem:[%s184 + $0x199] sm:$0xff]
      %v454 = vld [vmem:[%s184 + $0x1a1] sm:$0xff]
      %v455 = vld [vmem:[%s184 + $0x1b1] sm:$0xff]
      %v456 = vld [vmem:[%s184 + $0x1b9] sm:$0xff]
      %v457 = vld [vmem:[%s184 + $0x1c9] sm:$0xff]
      %v458 = vld [vmem:[%s184 + $0x1d1] sm:$0xff]
      %v459 = vld [vmem:[%s184 + $0x1e1] sm:$0xff]
      %v460 = vld [vmem:[%s184 + $0x1e9] sm:$0xff]
      %v461 = vld [vmem:[%s184 + $0x1f9] sm:$0xff]
      %v462 = vld [vmem:[%s184 + $0x201] sm:$0xff]
      %v463 = vld [vmem:[%s184 + $0x211] sm:$0xff]
      %v464 = vld [vmem:[%s184 + $0x219] sm:$0xff]
      %v465 = vld [vmem:[%s184 + $0x229] sm:$0xff]
      %v466 = vld [vmem:[%s184 + $0x231] sm:$0xff]
      %v467 = vld [vmem:[%s184 + $0x241] sm:$0xff]
      %v468 = vld [vmem:[%s184 + $0x249] sm:$0xff]
      %v469 = vld [vmem:[%s184 + $0x259] sm:$0xff]
      %v470 = vld [vmem:[%s184 + $0x261] sm:$0xff]
      %v471 = vld [vmem:[%s184 + $0x271] sm:$0xff]
      %v472 = vld [vmem:[%s184 + $0x279] sm:$0xff]
      %v473 = vld [vmem:[%s184 + $0x289] sm:$0xff]
      %v474 = vld [vmem:[%s184 + $0x291] sm:$0xff]
      %v475 = vld [vmem:[%s184 + $0x2a1] sm:$0xff]
      %v476 = vld [vmem:[%s184 + $0x2a9] sm:$0xff]
      %v477 = vld [vmem:[%s184 + $0x2b9] sm:$0xff]
      %v478 = vld [vmem:[%s184 + $0x2c1] sm:$0xff]
      %v479 = vld [vmem:[%s184 + $0x2d1] sm:$0xff]
      %v480 = vld [vmem:[%s184 + $0x2d9] sm:$0xff]
      %v481 = vld [vmem:[%s184 + $0x2e9] sm:$0xff]
      %v482 = vld [vmem:[%s184 + $0x2f1] sm:$0xff]
      %v483 = vld [vmem:[%s184 + $0x301] sm:$0xff]
      %v484 = vld [vmem:[%s184 + $0x309] sm:$0xff]
      %s485 = scalar_lea.vmem %s190, 2
      %v486 = vld [vmem:[%s485] sm:$0x3]
      %487 = vxpose.xlu0.b32.start [1/16] %v421, 128
      %488 = vxpose.xlu0.b32.cont [2/16] %v422, 128
      %489 = vxpose.xlu0.b32.cont [3/16] %v423, 128
      %490 = vxpose.xlu0.b32.cont [4/16] %v424, 128
      %491 = vxpose.xlu0.b32.cont [5/16] %v425, 128
      %492 = vxpose.xlu0.b32.cont [6/16] %v426, 128
      %493 = vxpose.xlu0.b32.cont [7/16] %v427, 128
      %494 = vxpose.xlu0.b32.cont [8/16] %v428, 128
      %495 = vxpose.xlu0.b32.cont [9/16] %v429, 128
      %496 = vxpose.xlu0.b32.cont [10/16] %v430, 128
      %497 = vxpose.xlu0.b32.cont [11/16] %v431, 128
      %498 = vxpose.xlu0.b32.cont [12/16] %v432, 128
      %499 = vxpose.xlu0.b32.cont [13/16] %v433, 128
      %500 = vxpose.xlu0.b32.cont [14/16] %v434, 128
      %501 = vxpose.xlu0.b32.cont [15/16] %v435, 128
      %502 = vxpose.xlu0.b32.end [16/16] %v436, 128
      %v503 = vpop.trf.xlu0
      %v504 = vpop.trf.xlu0
      %v505 = vpop.trf.xlu0
      %v506 = vpop.trf.xlu0
      %v507 = vpop.trf.xlu0
      %v508 = vpop.trf.xlu0
      %v509 = vpop.trf.xlu0
      %v510 = vpop.trf.xlu0
      %v511 = vpop.trf.xlu0
      %v512 = vpop.trf.xlu0
      %v513 = vpop.trf.xlu0
      %v514 = vpop.trf.xlu0
      %v515 = vpop.trf.xlu0
      %v516 = vpop.trf.xlu0
      %v517 = vpop.trf.xlu0
      %v518 = vpop.trf.xlu0
      %519 = vxpose.xlu0.b32.start [1/16] %v437, 128
      %520 = vxpose.xlu0.b32.cont [2/16] %v438, 128
      %521 = vxpose.xlu0.b32.cont [3/16] %v439, 128
      %522 = vxpose.xlu0.b32.cont [4/16] %v440, 128
      %523 = vxpose.xlu0.b32.cont [5/16] %v441, 128
      %524 = vxpose.xlu0.b32.cont [6/16] %v442, 128
      %525 = vxpose.xlu0.b32.cont [7/16] %v443, 128
      %526 = vxpose.xlu0.b32.cont [8/16] %v444, 128
      %527 = vxpose.xlu0.b32.cont [9/16] %v445, 128
      %528 = vxpose.xlu0.b32.cont [10/16] %v446, 128
      %529 = vxpose.xlu0.b32.cont [11/16] %v447, 128
      %530 = vxpose.xlu0.b32.cont [12/16] %v448, 128
      %531 = vxpose.xlu0.b32.cont [13/16] %v449, 128
      %532 = vxpose.xlu0.b32.cont [14/16] %v450, 128
      %533 = vxpose.xlu0.b32.cont [15/16] %v451, 128
      %534 = vxpose.xlu0.b32.end [16/16] %v452, 128
      %v535 = vpop.trf.xlu0
      %v536 = vpop.trf.xlu0
      %v537 = vpop.trf.xlu0
      %v538 = vpop.trf.xlu0
      %v539 = vpop.trf.xlu0
      %v540 = vpop.trf.xlu0
      %v541 = vpop.trf.xlu0
      %v542 = vpop.trf.xlu0
      %v543 = vpop.trf.xlu0
      %v544 = vpop.trf.xlu0
      %v545 = vpop.trf.xlu0
      %v546 = vpop.trf.xlu0
      %v547 = vpop.trf.xlu0
      %v548 = vpop.trf.xlu0
      %v549 = vpop.trf.xlu0
      %v550 = vpop.trf.xlu0
      %551 = vxpose.xlu0.b32.start [1/16] %v453, 128
      %552 = vxpose.xlu0.b32.cont [2/16] %v454, 128
      %553 = vxpose.xlu0.b32.cont [3/16] %v455, 128
      %554 = vxpose.xlu0.b32.cont [4/16] %v456, 128
      %555 = vxpose.xlu0.b32.cont [5/16] %v457, 128
      %556 = vxpose.xlu0.b32.cont [6/16] %v458, 128
      %557 = vxpose.xlu0.b32.cont [7/16] %v459, 128
      %558 = vxpose.xlu0.b32.cont [8/16] %v460, 128
      %559 = vxpose.xlu0.b32.cont [9/16] %v461, 128
      %560 = vxpose.xlu0.b32.cont [10/16] %v462, 128
      %561 = vxpose.xlu0.b32.cont [11/16] %v463, 128
      %562 = vxpose.xlu0.b32.cont [12/16] %v464, 128
      %563 = vxpose.xlu0.b32.cont [13/16] %v465, 128
      %564 = vxpose.xlu0.b32.cont [14/16] %v466, 128
      %565 = vxpose.xlu0.b32.cont [15/16] %v467, 128
      %566 = vxpose.xlu0.b32.end [16/16] %v468, 128
      %v567 = vpop.trf.xlu0
      %v568 = vpop.trf.xlu0
      %v569 = vpop.trf.xlu0
      %v570 = vpop.trf.xlu0
      %v571 = vpop.trf.xlu0
      %v572 = vpop.trf.xlu0
      %v573 = vpop.trf.xlu0
      %v574 = vpop.trf.xlu0
      %v575 = vpop.trf.xlu0
      %v576 = vpop.trf.xlu0
      %v577 = vpop.trf.xlu0
      %v578 = vpop.trf.xlu0
      %v579 = vpop.trf.xlu0
      %v580 = vpop.trf.xlu0
      %v581 = vpop.trf.xlu0
      %v582 = vpop.trf.xlu0
      %583 = vxpose.xlu0.b32.start [1/16] %v469, 128
      %584 = vxpose.xlu0.b32.cont [2/16] %v470, 128
      %585 = vxpose.xlu0.b32.cont [3/16] %v471, 128
      %586 = vxpose.xlu0.b32.cont [4/16] %v472, 128
      %587 = vxpose.xlu0.b32.cont [5/16] %v473, 128
      %588 = vxpose.xlu0.b32.cont [6/16] %v474, 128
      %589 = vxpose.xlu0.b32.cont [7/16] %v475, 128
      %590 = vxpose.xlu0.b32.cont [8/16] %v476, 128
      %591 = vxpose.xlu0.b32.cont [9/16] %v477, 128
      %592 = vxpose.xlu0.b32.cont [10/16] %v478, 128
      %593 = vxpose.xlu0.b32.cont [11/16] %v479, 128
      %594 = vxpose.xlu0.b32.cont [12/16] %v480, 128
      %595 = vxpose.xlu0.b32.cont [13/16] %v481, 128
      %596 = vxpose.xlu0.b32.cont [14/16] %v482, 128
      %597 = vxpose.xlu0.b32.cont [15/16] %v483, 128
      %598 = vxpose.xlu0.b32.end [16/16] %v484, 128
      %v599 = vpop.trf.xlu0
      %v600 = vpop.trf.xlu0
      %v601 = vpop.trf.xlu0
      %v602 = vpop.trf.xlu0
      %v603 = vpop.trf.xlu0
      %v604 = vpop.trf.xlu0
      %v605 = vpop.trf.xlu0
      %v606 = vpop.trf.xlu0
      %v607 = vpop.trf.xlu0
      %v608 = vpop.trf.xlu0
      %v609 = vpop.trf.xlu0
      %v610 = vpop.trf.xlu0
      %v611 = vpop.trf.xlu0
      %v612 = vpop.trf.xlu0
      %v613 = vpop.trf.xlu0
      %v614 = vpop.trf.xlu0
      %v615 = vpack.c.bf16 %v504, %v503
      %v616 = vpack.c.bf16 %v536, %v535
      %v617 = vpack.c.bf16 %v568, %v567
      %v618 = vpack.c.bf16 %v600, %v599
      %v619 = vpack.c.bf16 %v506, %v505
      %v620 = vpack.c.bf16 %v538, %v537
      %v621 = vpack.c.bf16 %v570, %v569
      %v622 = vpack.c.bf16 %v602, %v601
      %v623 = vpack.c.bf16 %v508, %v507
      %v624 = vpack.c.bf16 %v540, %v539
      %v625 = vpack.c.bf16 %v572, %v571
      %v626 = vpack.c.bf16 %v604, %v603
      %v627 = vpack.c.bf16 %v510, %v509
      %v628 = vpack.c.bf16 %v542, %v541
      %v629 = vpack.c.bf16 %v574, %v573
      %v630 = vpack.c.bf16 %v606, %v605
      %v631 = vpack.c.bf16 %v512, %v511
      %v632 = vpack.c.bf16 %v544, %v543
      %v633 = vpack.c.bf16 %v576, %v575
      %v634 = vpack.c.bf16 %v608, %v607
      %v635 = vpack.c.bf16 %v514, %v513
      %v636 = vpack.c.bf16 %v546, %v545
      %v637 = vpack.c.bf16 %v578, %v577
      %v638 = vpack.c.bf16 %v610, %v609
      %v639 = vpack.c.bf16 %v516, %v515
      %v640 = vpack.c.bf16 %v548, %v547
      %v641 = vpack.c.bf16 %v580, %v579
      %v642 = vpack.c.bf16 %v612, %v611
      %v643 = vpack.c.bf16 %v518, %v517
      %v644 = vpack.c.bf16 %v550, %v549
      %v645 = vpack.c.bf16 %v582, %v581
      %v646 = vpack.c.bf16 %v614, %v613
      %647 = vmatpush.bf16.msra.mxu0 %v643
      %648 = vmatpush.bf16.msra.mxu0 %v639
      %649 = vmatpush.bf16.msra.mxu0 %v635
      %650 = vmatpush.bf16.msra.mxu0 %v631
      %651 = vmatpush.bf16.msra.mxu0 %v627
      %652 = vmatpush.bf16.msra.mxu0 %v623
      %653 = vmatpush.bf16.msra.mxu0 %v619
      %654 = vmatpush.bf16.msra.mxu0 %v615
      %655 = vmatmul.bf16.gmra.mxu0 %v486
      %v656 = vpop.f32.mrf.mxu0
      %v657 = vadd.f32 0.0, %v656
      %v658 = vpop.f32.mrf.mxu0
      %659 = vdwg.mxu0
      %660 = vmatpush.bf16.msra.mxu0 %v644
      %661 = vmatpush.bf16.msra.mxu0 %v640
      %662 = vmatpush.bf16.msra.mxu0 %v636
      %663 = vmatpush.bf16.msra.mxu0 %v632
      %664 = vmatpush.bf16.msra.mxu0 %v628
      %665 = vmatpush.bf16.msra.mxu0 %v624
      %666 = vmatpush.bf16.msra.mxu0 %v620
      %667 = vmatpush.bf16.msra.mxu0 %v616
      %668 = vmatmul.bf16.gmra.mxu0 %v486
      %v669 = vpop.f32.mrf.mxu0
      %v670 = vadd.f32 0.0, %v669
      %v671 = vpop.f32.mrf.mxu0
      %672 = vdwg.mxu0
      %673 = vmatpush.bf16.msra.mxu0 %v645
      %674 = vmatpush.bf16.msra.mxu0 %v641
      %675 = vmatpush.bf16.msra.mxu0 %v637
      %676 = vmatpush.bf16.msra.mxu0 %v633
      %677 = vmatpush.bf16.msra.mxu0 %v629
      %678 = vmatpush.bf16.msra.mxu0 %v625
      %679 = vmatpush.bf16.msra.mxu0 %v621
      %680 = vmatpush.bf16.msra.mxu0 %v617
      %681 = vmatmul.bf16.gmra.mxu0 %v486
      %v682 = vpop.f32.mrf.mxu0
      %v683 = vadd.f32 0.0, %v682
      %v684 = vpop.f32.mrf.mxu0
      %685 = vdwg.mxu0
      %686 = vmatpush.bf16.msra.mxu0 %v646
      %687 = vmatpush.bf16.msra.mxu0 %v642
      %688 = vmatpush.bf16.msra.mxu0 %v638
      %689 = vmatpush.bf16.msra.mxu0 %v634
      %690 = vmatpush.bf16.msra.mxu0 %v630
      %691 = vmatpush.bf16.msra.mxu0 %v626
      %692 = vmatpush.bf16.msra.mxu0 %v622
      %693 = vmatpush.bf16.msra.mxu0 %v618
      %694 = vmatmul.bf16.gmra.mxu0 %v486
      %v695 = vpop.f32.mrf.mxu0
      %v696 = vadd.f32 0.0, %v695
      %v697 = vpop.f32.mrf.mxu0
      %698 = vdwg.mxu0
      %699 = vmatpush.bf16.msra.mxu0 %v417
      %700 = vmatpush.bf16.msra.mxu0 %v413
      %701 = vmatpush.bf16.msra.mxu0 %v409
      %702 = vmatpush.bf16.msra.mxu0 %v405
      %703 = vmatpush.bf16.msra.mxu0 %v401
      %704 = vmatpush.bf16.msra.mxu0 %v397
      %705 = vmatpush.bf16.msra.mxu0 %v393
      %706 = vmatpush.bf16.msra.mxu0 %v389
      %707 = vmatmul.bf16.gmra.mxu0 %v260
      %v708 = vpop.f32.mrf.mxu0
      %v709 = vadd.f32 %v657, %v708
      %v710 = vpop.f32.mrf.mxu0
      %711 = vdwg.mxu0
      %712 = vmatpush.bf16.msra.mxu0 %v418
      %713 = vmatpush.bf16.msra.mxu0 %v414
      %714 = vmatpush.bf16.msra.mxu0 %v410
      %715 = vmatpush.bf16.msra.mxu0 %v406
      %716 = vmatpush.bf16.msra.mxu0 %v402
      %717 = vmatpush.bf16.msra.mxu0 %v398
      %718 = vmatpush.bf16.msra.mxu0 %v394
      %719 = vmatpush.bf16.msra.mxu0 %v390
      %720 = vmatmul.bf16.gmra.mxu0 %v260
      %v721 = vpop.f32.mrf.mxu0
      %v722 = vadd.f32 %v670, %v721
      %v723 = vpop.f32.mrf.mxu0
      %724 = vdwg.mxu0
      %725 = vmatpush.bf16.msra.mxu0 %v419
      %726 = vmatpush.bf16.msra.mxu0 %v415
      %727 = vmatpush.bf16.msra.mxu0 %v411
      %728 = vmatpush.bf16.msra.mxu0 %v407
      %729 = vmatpush.bf16.msra.mxu0 %v403
      %730 = vmatpush.bf16.msra.mxu0 %v399
      %731 = vmatpush.bf16.msra.mxu0 %v395
      %732 = vmatpush.bf16.msra.mxu0 %v391
      %733 = vmatmul.bf16.gmra.mxu0 %v260
      %v734 = vpop.f32.mrf.mxu0
      %v735 = vadd.f32 %v683, %v734
      %v736 = vpop.f32.mrf.mxu0
      %737 = vdwg.mxu0
      %738 = vmatpush.bf16.msra.mxu0 %v420
      %739 = vmatpush.bf16.msra.mxu0 %v416
      %740 = vmatpush.bf16.msra.mxu0 %v412
      %741 = vmatpush.bf16.msra.mxu0 %v408
      %742 = vmatpush.bf16.msra.mxu0 %v404
      %743 = vmatpush.bf16.msra.mxu0 %v400
      %744 = vmatpush.bf16.msra.mxu0 %v396
      %745 = vmatpush.bf16.msra.mxu0 %v392
      %746 = vmatmul.bf16.gmra.mxu0 %v260
      %v747 = vpop.f32.mrf.mxu0
      %v748 = vadd.f32 %v696, %v747
      %v749 = vpop.f32.mrf.mxu0
      %750 = vdwg.mxu0
      %s751 = scalar_lea.vmem %s184, 24
      %v752 = vld [vmem:[%s751] sm:$0xff]
      %v753 = vld [vmem:[%s751 + $0x8] sm:$0xff]
      %v754 = vld [vmem:[%s751 + $0x18] sm:$0xff]
      %v755 = vld [vmem:[%s751 + $0x20] sm:$0xff]
      %v756 = vld [vmem:[%s751 + $0x30] sm:$0xff]
      %v757 = vld [vmem:[%s751 + $0x38] sm:$0xff]
      %v758 = vld [vmem:[%s751 + $0x48] sm:$0xff]
      %v759 = vld [vmem:[%s751 + $0x50] sm:$0xff]
      %v760 = vld [vmem:[%s751 + $0x60] sm:$0xff]
      %v761 = vld [vmem:[%s751 + $0x68] sm:$0xff]
      %v762 = vld [vmem:[%s751 + $0x78] sm:$0xff]
      %v763 = vld [vmem:[%s751 + $0x80] sm:$0xff]
      %v764 = vld [vmem:[%s751 + $0x90] sm:$0xff]
      %v765 = vld [vmem:[%s751 + $0x98] sm:$0xff]
      %v766 = vld [vmem:[%s751 + $0xa8] sm:$0xff]
      %v767 = vld [vmem:[%s751 + $0xb0] sm:$0xff]
      %v768 = vld [vmem:[%s751 + $0xc0] sm:$0xff]
      %v769 = vld [vmem:[%s751 + $0xc8] sm:$0xff]
      %v770 = vld [vmem:[%s751 + $0xd8] sm:$0xff]
      %v771 = vld [vmem:[%s751 + $0xe0] sm:$0xff]
      %v772 = vld [vmem:[%s751 + $0xf0] sm:$0xff]
      %v773 = vld [vmem:[%s751 + $0xf8] sm:$0xff]
      %v774 = vld [vmem:[%s751 + $0x108] sm:$0xff]
      %v775 = vld [vmem:[%s751 + $0x110] sm:$0xff]
      %v776 = vld [vmem:[%s751 + $0x120] sm:$0xff]
      %v777 = vld [vmem:[%s751 + $0x128] sm:$0xff]
      %v778 = vld [vmem:[%s751 + $0x138] sm:$0xff]
      %v779 = vld [vmem:[%s751 + $0x140] sm:$0xff]
      %v780 = vld [vmem:[%s751 + $0x150] sm:$0xff]
      %v781 = vld [vmem:[%s751 + $0x158] sm:$0xff]
      %v782 = vld [vmem:[%s751 + $0x168] sm:$0xff]
      %v783 = vld [vmem:[%s751 + $0x170] sm:$0xff]
      %v784 = vld [vmem:[%s751 + $0x198] sm:$0xff]
      %v785 = vld [vmem:[%s751 + $0x1a0] sm:$0xff]
      %v786 = vld [vmem:[%s751 + $0x1b0] sm:$0xff]
      %v787 = vld [vmem:[%s751 + $0x1b8] sm:$0xff]
      %v788 = vld [vmem:[%s751 + $0x1c8] sm:$0xff]
      %v789 = vld [vmem:[%s751 + $0x1d0] sm:$0xff]
      %v790 = vld [vmem:[%s751 + $0x1e0] sm:$0xff]
      %v791 = vld [vmem:[%s751 + $0x1e8] sm:$0xff]
      %v792 = vld [vmem:[%s751 + $0x1f8] sm:$0xff]
      %v793 = vld [vmem:[%s751 + $0x200] sm:$0xff]
      %v794 = vld [vmem:[%s751 + $0x210] sm:$0xff]
      %v795 = vld [vmem:[%s751 + $0x218] sm:$0xff]
      %v796 = vld [vmem:[%s751 + $0x228] sm:$0xff]
      %v797 = vld [vmem:[%s751 + $0x230] sm:$0xff]
      %v798 = vld [vmem:[%s751 + $0x240] sm:$0xff]
      %v799 = vld [vmem:[%s751 + $0x248] sm:$0xff]
      %v800 = vld [vmem:[%s751 + $0x258] sm:$0xff]
      %v801 = vld [vmem:[%s751 + $0x260] sm:$0xff]
      %v802 = vld [vmem:[%s751 + $0x270] sm:$0xff]
      %v803 = vld [vmem:[%s751 + $0x278] sm:$0xff]
      %v804 = vld [vmem:[%s751 + $0x288] sm:$0xff]
      %v805 = vld [vmem:[%s751 + $0x290] sm:$0xff]
      %v806 = vld [vmem:[%s751 + $0x2a0] sm:$0xff]
      %v807 = vld [vmem:[%s751 + $0x2a8] sm:$0xff]
      %v808 = vld [vmem:[%s751 + $0x2b8] sm:$0xff]
      %v809 = vld [vmem:[%s751 + $0x2c0] sm:$0xff]
      %v810 = vld [vmem:[%s751 + $0x2d0] sm:$0xff]
      %v811 = vld [vmem:[%s751 + $0x2d8] sm:$0xff]
      %v812 = vld [vmem:[%s751 + $0x2e8] sm:$0xff]
      %v813 = vld [vmem:[%s751 + $0x2f0] sm:$0xff]
      %v814 = vld [vmem:[%s751 + $0x300] sm:$0xff]
      %v815 = vld [vmem:[%s751 + $0x308] sm:$0xff]
      %s816 = scalar_lea.vmem %s190, 4
      %v817 = vld [vmem:[%s816] sm:$0x3]
      %818 = vxpose.xlu0.b32.start [1/16] %v752, 128
      %819 = vxpose.xlu0.b32.cont [2/16] %v753, 128
      %820 = vxpose.xlu0.b32.cont [3/16] %v754, 128
      %821 = vxpose.xlu0.b32.cont [4/16] %v755, 128
      %822 = vxpose.xlu0.b32.cont [5/16] %v756, 128
      %823 = vxpose.xlu0.b32.cont [6/16] %v757, 128
      %824 = vxpose.xlu0.b32.cont [7/16] %v758, 128
      %825 = vxpose.xlu0.b32.cont [8/16] %v759, 128
      %826 = vxpose.xlu0.b32.cont [9/16] %v760, 128
      %827 = vxpose.xlu0.b32.cont [10/16] %v761, 128
      %828 = vxpose.xlu0.b32.cont [11/16] %v762, 128
      %829 = vxpose.xlu0.b32.cont [12/16] %v763, 128
      %830 = vxpose.xlu0.b32.cont [13/16] %v764, 128
      %831 = vxpose.xlu0.b32.cont [14/16] %v765, 128
      %832 = vxpose.xlu0.b32.cont [15/16] %v766, 128
      %833 = vxpose.xlu0.b32.end [16/16] %v767, 128
      %v834 = vpop.trf.xlu0
      %v835 = vpop.trf.xlu0
      %v836 = vpop.trf.xlu0
      %v837 = vpop.trf.xlu0
      %v838 = vpop.trf.xlu0
      %v839 = vpop.trf.xlu0
      %v840 = vpop.trf.xlu0
      %v841 = vpop.trf.xlu0
      %v842 = vpop.trf.xlu0
      %v843 = vpop.trf.xlu0
      %v844 = vpop.trf.xlu0
      %v845 = vpop.trf.xlu0
      %v846 = vpop.trf.xlu0
      %v847 = vpop.trf.xlu0
      %v848 = vpop.trf.xlu0
      %v849 = vpop.trf.xlu0
      %850 = vxpose.xlu0.b32.start [1/16] %v768, 128
      %851 = vxpose.xlu0.b32.cont [2/16] %v769, 128
      %852 = vxpose.xlu0.b32.cont [3/16] %v770, 128
      %853 = vxpose.xlu0.b32.cont [4/16] %v771, 128
      %854 = vxpose.xlu0.b32.cont [5/16] %v772, 128
      %855 = vxpose.xlu0.b32.cont [6/16] %v773, 128
      %856 = vxpose.xlu0.b32.cont [7/16] %v774, 128
      %857 = vxpose.xlu0.b32.cont [8/16] %v775, 128
      %858 = vxpose.xlu0.b32.cont [9/16] %v776, 128
      %859 = vxpose.xlu0.b32.cont [10/16] %v777, 128
      %860 = vxpose.xlu0.b32.cont [11/16] %v778, 128
      %861 = vxpose.xlu0.b32.cont [12/16] %v779, 128
      %862 = vxpose.xlu0.b32.cont [13/16] %v780, 128
      %863 = vxpose.xlu0.b32.cont [14/16] %v781, 128
      %864 = vxpose.xlu0.b32.cont [15/16] %v782, 128
      %865 = vxpose.xlu0.b32.end [16/16] %v783, 128
      %v866 = vpop.trf.xlu0
      %v867 = vpop.trf.xlu0
      %v868 = vpop.trf.xlu0
      %v869 = vpop.trf.xlu0
      %v870 = vpop.trf.xlu0
      %v871 = vpop.trf.xlu0
      %v872 = vpop.trf.xlu0
      %v873 = vpop.trf.xlu0
      %v874 = vpop.trf.xlu0
      %v875 = vpop.trf.xlu0
      %v876 = vpop.trf.xlu0
      %v877 = vpop.trf.xlu0
      %v878 = vpop.trf.xlu0
      %v879 = vpop.trf.xlu0
      %v880 = vpop.trf.xlu0
      %v881 = vpop.trf.xlu0
      %882 = vxpose.xlu0.b32.start [1/16] %v784, 128
      %883 = vxpose.xlu0.b32.cont [2/16] %v785, 128
      %884 = vxpose.xlu0.b32.cont [3/16] %v786, 128
      %885 = vxpose.xlu0.b32.cont [4/16] %v787, 128
      %886 = vxpose.xlu0.b32.cont [5/16] %v788, 128
      %887 = vxpose.xlu0.b32.cont [6/16] %v789, 128
      %888 = vxpose.xlu0.b32.cont [7/16] %v790, 128
      %889 = vxpose.xlu0.b32.cont [8/16] %v791, 128
      %890 = vxpose.xlu0.b32.cont [9/16] %v792, 128
      %891 = vxpose.xlu0.b32.cont [10/16] %v793, 128
      %892 = vxpose.xlu0.b32.cont [11/16] %v794, 128
      %893 = vxpose.xlu0.b32.cont [12/16] %v795, 128
      %894 = vxpose.xlu0.b32.cont [13/16] %v796, 128
      %895 = vxpose.xlu0.b32.cont [14/16] %v797, 128
      %896 = vxpose.xlu0.b32.cont [15/16] %v798, 128
      %897 = vxpose.xlu0.b32.end [16/16] %v799, 128
      %v898 = vpop.trf.xlu0
      %v899 = vpop.trf.xlu0
      %v900 = vpop.trf.xlu0
      %v901 = vpop.trf.xlu0
      %v902 = vpop.trf.xlu0
      %v903 = vpop.trf.xlu0
      %v904 = vpop.trf.xlu0
      %v905 = vpop.trf.xlu0
      %v906 = vpop.trf.xlu0
      %v907 = vpop.trf.xlu0
      %v908 = vpop.trf.xlu0
      %v909 = vpop.trf.xlu0
      %v910 = vpop.trf.xlu0
      %v911 = vpop.trf.xlu0
      %v912 = vpop.trf.xlu0
      %v913 = vpop.trf.xlu0
      %914 = vxpose.xlu0.b32.start [1/16] %v800, 128
      %915 = vxpose.xlu0.b32.cont [2/16] %v801, 128
      %916 = vxpose.xlu0.b32.cont [3/16] %v802, 128
      %917 = vxpose.xlu0.b32.cont [4/16] %v803, 128
      %918 = vxpose.xlu0.b32.cont [5/16] %v804, 128
      %919 = vxpose.xlu0.b32.cont [6/16] %v805, 128
      %920 = vxpose.xlu0.b32.cont [7/16] %v806, 128
      %921 = vxpose.xlu0.b32.cont [8/16] %v807, 128
      %922 = vxpose.xlu0.b32.cont [9/16] %v808, 128
      %923 = vxpose.xlu0.b32.cont [10/16] %v809, 128
      %924 = vxpose.xlu0.b32.cont [11/16] %v810, 128
      %925 = vxpose.xlu0.b32.cont [12/16] %v811, 128
      %926 = vxpose.xlu0.b32.cont [13/16] %v812, 128
      %927 = vxpose.xlu0.b32.cont [14/16] %v813, 128
      %928 = vxpose.xlu0.b32.cont [15/16] %v814, 128
      %929 = vxpose.xlu0.b32.end [16/16] %v815, 128
      %v930 = vpop.trf.xlu0
      %v931 = vpop.trf.xlu0
      %v932 = vpop.trf.xlu0
      %v933 = vpop.trf.xlu0
      %v934 = vpop.trf.xlu0
      %v935 = vpop.trf.xlu0
      %v936 = vpop.trf.xlu0
      %v937 = vpop.trf.xlu0
      %v938 = vpop.trf.xlu0
      %v939 = vpop.trf.xlu0
      %v940 = vpop.trf.xlu0
      %v941 = vpop.trf.xlu0
      %v942 = vpop.trf.xlu0
      %v943 = vpop.trf.xlu0
      %v944 = vpop.trf.xlu0
      %v945 = vpop.trf.xlu0
      %v946 = vpack.c.bf16 %v835, %v834
      %v947 = vpack.c.bf16 %v867, %v866
      %v948 = vpack.c.bf16 %v899, %v898
      %v949 = vpack.c.bf16 %v931, %v930
      %v950 = vpack.c.bf16 %v837, %v836
      %v951 = vpack.c.bf16 %v869, %v868
      %v952 = vpack.c.bf16 %v901, %v900
      %v953 = vpack.c.bf16 %v933, %v932
      %v954 = vpack.c.bf16 %v839, %v838
      %v955 = vpack.c.bf16 %v871, %v870
      %v956 = vpack.c.bf16 %v903, %v902
      %v957 = vpack.c.bf16 %v935, %v934
      %v958 = vpack.c.bf16 %v841, %v840
      %v959 = vpack.c.bf16 %v873, %v872
      %v960 = vpack.c.bf16 %v905, %v904
      %v961 = vpack.c.bf16 %v937, %v936
      %v962 = vpack.c.bf16 %v843, %v842
      %v963 = vpack.c.bf16 %v875, %v874
      %v964 = vpack.c.bf16 %v907, %v906
      %v965 = vpack.c.bf16 %v939, %v938
      %v966 = vpack.c.bf16 %v845, %v844
      %v967 = vpack.c.bf16 %v877, %v876
      %v968 = vpack.c.bf16 %v909, %v908
      %v969 = vpack.c.bf16 %v941, %v940
      %v970 = vpack.c.bf16 %v847, %v846
      %v971 = vpack.c.bf16 %v879, %v878
      %v972 = vpack.c.bf16 %v911, %v910
      %v973 = vpack.c.bf16 %v943, %v942
      %v974 = vpack.c.bf16 %v849, %v848
      %v975 = vpack.c.bf16 %v881, %v880
      %v976 = vpack.c.bf16 %v913, %v912
      %v977 = vpack.c.bf16 %v945, %v944
      %978 = vmatpush.bf16.msra.mxu0 %v974
      %979 = vmatpush.bf16.msra.mxu0 %v970
      %980 = vmatpush.bf16.msra.mxu0 %v966
      %981 = vmatpush.bf16.msra.mxu0 %v962
      %982 = vmatpush.bf16.msra.mxu0 %v958
      %983 = vmatpush.bf16.msra.mxu0 %v954
      %984 = vmatpush.bf16.msra.mxu0 %v950
      %985 = vmatpush.bf16.msra.mxu0 %v946
      %986 = vmatmul.bf16.gmra.mxu0 %v817
      %v987 = vpop.f32.mrf.mxu0
      %v988 = vadd.f32 0.0, %v987
      %v989 = vpop.f32.mrf.mxu0
      %990 = vdwg.mxu0
      %991 = vmatpush.bf16.msra.mxu0 %v975
      %992 = vmatpush.bf16.msra.mxu0 %v971
      %993 = vmatpush.bf16.msra.mxu0 %v967
      %994 = vmatpush.bf16.msra.mxu0 %v963
      %995 = vmatpush.bf16.msra.mxu0 %v959
      %996 = vmatpush.bf16.msra.mxu0 %v955
      %997 = vmatpush.bf16.msra.mxu0 %v951
      %998 = vmatpush.bf16.msra.mxu0 %v947
      %999 = vmatmul.bf16.gmra.mxu0 %v817
      %v1000 = vpop.f32.mrf.mxu0
      %v1001 = vadd.f32 0.0, %v1000
      %v1002 = vpop.f32.mrf.mxu0
      %1003 = vdwg.mxu0
      %1004 = vmatpush.bf16.msra.mxu0 %v976
      %1005 = vmatpush.bf16.msra.mxu0 %v972
      %1006 = vmatpush.bf16.msra.mxu0 %v968
      %1007 = vmatpush.bf16.msra.mxu0 %v964
      %1008 = vmatpush.bf16.msra.mxu0 %v960
      %1009 = vmatpush.bf16.msra.mxu0 %v956
      %1010 = vmatpush.bf16.msra.mxu0 %v952
      %1011 = vmatpush.bf16.msra.mxu0 %v948
      %1012 = vmatmul.bf16.gmra.mxu0 %v817
      %v1013 = vpop.f32.mrf.mxu0
      %v1014 = vadd.f32 0.0, %v1013
      %v1015 = vpop.f32.mrf.mxu0
      %1016 = vdwg.mxu0
      %1017 = vmatpush.bf16.msra.mxu0 %v977
      %1018 = vmatpush.bf16.msra.mxu0 %v973
      %1019 = vmatpush.bf16.msra.mxu0 %v969
      %1020 = vmatpush.bf16.msra.mxu0 %v965
      %1021 = vmatpush.bf16.msra.mxu0 %v961
      %1022 = vmatpush.bf16.msra.mxu0 %v957
      %1023 = vmatpush.bf16.msra.mxu0 %v953
      %1024 = vmatpush.bf16.msra.mxu0 %v949
      %1025 = vmatmul.bf16.gmra.mxu0 %v817
      %v1026 = vpop.f32.mrf.mxu0
      %v1027 = vadd.f32 0.0, %v1026
      %v1028 = vpop.f32.mrf.mxu0
      %1029 = vdwg.mxu0
      %v1030 = vadd.f32 %v709, %v988
      %v1031 = vadd.f32 %v722, %v1001
      %v1032 = vadd.f32 %v735, %v1014
      %v1033 = vadd.f32 %v748, %v1027
      %v1034 = vld [vmem:[%s751 + $0x1] sm:$0xff]
      %v1035 = vld [vmem:[%s751 + $0x9] sm:$0xff]
      %v1036 = vld [vmem:[%s751 + $0x19] sm:$0xff]
      %v1037 = vld [vmem:[%s751 + $0x21] sm:$0xff]
      %v1038 = vld [vmem:[%s751 + $0x31] sm:$0xff]
      %v1039 = vld [vmem:[%s751 + $0x39] sm:$0xff]
      %v1040 = vld [vmem:[%s751 + $0x49] sm:$0xff]
      %v1041 = vld [vmem:[%s751 + $0x51] sm:$0xff]
      %v1042 = vld [vmem:[%s751 + $0x61] sm:$0xff]
      %v1043 = vld [vmem:[%s751 + $0x69] sm:$0xff]
      %v1044 = vld [vmem:[%s751 + $0x79] sm:$0xff]
      %v1045 = vld [vmem:[%s751 + $0x81] sm:$0xff]
      %v1046 = vld [vmem:[%s751 + $0x91] sm:$0xff]
      %v1047 = vld [vmem:[%s751 + $0x99] sm:$0xff]
      %v1048 = vld [vmem:[%s751 + $0xa9] sm:$0xff]
      %v1049 = vld [vmem:[%s751 + $0xb1] sm:$0xff]
      %v1050 = vld [vmem:[%s751 + $0xc1] sm:$0xff]
      %v1051 = vld [vmem:[%s751 + $0xc9] sm:$0xff]
      %v1052 = vld [vmem:[%s751 + $0xd9] sm:$0xff]
      %v1053 = vld [vmem:[%s751 + $0xe1] sm:$0xff]
      %v1054 = vld [vmem:[%s751 + $0xf1] sm:$0xff]
      %v1055 = vld [vmem:[%s751 + $0xf9] sm:$0xff]
      %v1056 = vld [vmem:[%s751 + $0x109] sm:$0xff]
      %v1057 = vld [vmem:[%s751 + $0x111] sm:$0xff]
      %v1058 = vld [vmem:[%s751 + $0x121] sm:$0xff]
      %v1059 = vld [vmem:[%s751 + $0x129] sm:$0xff]
      %v1060 = vld [vmem:[%s751 + $0x139] sm:$0xff]
      %v1061 = vld [vmem:[%s751 + $0x141] sm:$0xff]
      %v1062 = vld [vmem:[%s751 + $0x151] sm:$0xff]
      %v1063 = vld [vmem:[%s751 + $0x159] sm:$0xff]
      %v1064 = vld [vmem:[%s751 + $0x169] sm:$0xff]
      %v1065 = vld [vmem:[%s751 + $0x171] sm:$0xff]
      %v1066 = vld [vmem:[%s751 + $0x199] sm:$0xff]
      %v1067 = vld [vmem:[%s751 + $0x1a1] sm:$0xff]
      %v1068 = vld [vmem:[%s751 + $0x1b1] sm:$0xff]
      %v1069 = vld [vmem:[%s751 + $0x1b9] sm:$0xff]
      %v1070 = vld [vmem:[%s751 + $0x1c9] sm:$0xff]
      %v1071 = vld [vmem:[%s751 + $0x1d1] sm:$0xff]
      %v1072 = vld [vmem:[%s751 + $0x1e1] sm:$0xff]
      %v1073 = vld [vmem:[%s751 + $0x1e9] sm:$0xff]
      %v1074 = vld [vmem:[%s751 + $0x1f9] sm:$0xff]
      %v1075 = vld [vmem:[%s751 + $0x201] sm:$0xff]
      %v1076 = vld [vmem:[%s751 + $0x211] sm:$0xff]
      %v1077 = vld [vmem:[%s751 + $0x219] sm:$0xff]
      %v1078 = vld [vmem:[%s751 + $0x229] sm:$0xff]
      %v1079 = vld [vmem:[%s751 + $0x231] sm:$0xff]
      %v1080 = vld [vmem:[%s751 + $0x241] sm:$0xff]
      %v1081 = vld [vmem:[%s751 + $0x249] sm:$0xff]
      %v1082 = vld [vmem:[%s751 + $0x259] sm:$0xff]
      %v1083 = vld [vmem:[%s751 + $0x261] sm:$0xff]
      %v1084 = vld [vmem:[%s751 + $0x271] sm:$0xff]
      %v1085 = vld [vmem:[%s751 + $0x279] sm:$0xff]
      %v1086 = vld [vmem:[%s751 + $0x289] sm:$0xff]
      %v1087 = vld [vmem:[%s751 + $0x291] sm:$0xff]
      %v1088 = vld [vmem:[%s751 + $0x2a1] sm:$0xff]
      %v1089 = vld [vmem:[%s751 + $0x2a9] sm:$0xff]
      %v1090 = vld [vmem:[%s751 + $0x2b9] sm:$0xff]
      %v1091 = vld [vmem:[%s751 + $0x2c1] sm:$0xff]
      %v1092 = vld [vmem:[%s751 + $0x2d1] sm:$0xff]
      %v1093 = vld [vmem:[%s751 + $0x2d9] sm:$0xff]
      %v1094 = vld [vmem:[%s751 + $0x2e9] sm:$0xff]
      %v1095 = vld [vmem:[%s751 + $0x2f1] sm:$0xff]
      %v1096 = vld [vmem:[%s751 + $0x301] sm:$0xff]
      %v1097 = vld [vmem:[%s751 + $0x309] sm:$0xff]
      %s1098 = scalar_lea.vmem %s190, 6
      %v1099 = vld [vmem:[%s1098] sm:$0x3]
      %1100 = vxpose.xlu0.b32.start [1/16] %v1034, 128
      %1101 = vxpose.xlu0.b32.cont [2/16] %v1035, 128
      %1102 = vxpose.xlu0.b32.cont [3/16] %v1036, 128
      %1103 = vxpose.xlu0.b32.cont [4/16] %v1037, 128
      %1104 = vxpose.xlu0.b32.cont [5/16] %v1038, 128
      %1105 = vxpose.xlu0.b32.cont [6/16] %v1039, 128
      %1106 = vxpose.xlu0.b32.cont [7/16] %v1040, 128
      %1107 = vxpose.xlu0.b32.cont [8/16] %v1041, 128
      %1108 = vxpose.xlu0.b32.cont [9/16] %v1042, 128
      %1109 = vxpose.xlu0.b32.cont [10/16] %v1043, 128
      %1110 = vxpose.xlu0.b32.cont [11/16] %v1044, 128
      %1111 = vxpose.xlu0.b32.cont [12/16] %v1045, 128
      %1112 = vxpose.xlu0.b32.cont [13/16] %v1046, 128
      %1113 = vxpose.xlu0.b32.cont [14/16] %v1047, 128
      %1114 = vxpose.xlu0.b32.cont [15/16] %v1048, 128
      %1115 = vxpose.xlu0.b32.end [16/16] %v1049, 128
      %v1116 = vpop.trf.xlu0
      %v1117 = vpop.trf.xlu0
      %v1118 = vpop.trf.xlu0
      %v1119 = vpop.trf.xlu0
      %v1120 = vpop.trf.xlu0
      %v1121 = vpop.trf.xlu0
      %v1122 = vpop.trf.xlu0
      %v1123 = vpop.trf.xlu0
      %v1124 = vpop.trf.xlu0
      %v1125 = vpop.trf.xlu0
      %v1126 = vpop.trf.xlu0
      %v1127 = vpop.trf.xlu0
      %v1128 = vpop.trf.xlu0
      %v1129 = vpop.trf.xlu0
      %v1130 = vpop.trf.xlu0
      %v1131 = vpop.trf.xlu0
      %1132 = vxpose.xlu0.b32.start [1/16] %v1050, 128
      %1133 = vxpose.xlu0.b32.cont [2/16] %v1051, 128
      %1134 = vxpose.xlu0.b32.cont [3/16] %v1052, 128
      %1135 = vxpose.xlu0.b32.cont [4/16] %v1053, 128
      %1136 = vxpose.xlu0.b32.cont [5/16] %v1054, 128
      %1137 = vxpose.xlu0.b32.cont [6/16] %v1055, 128
      %1138 = vxpose.xlu0.b32.cont [7/16] %v1056, 128
      %1139 = vxpose.xlu0.b32.cont [8/16] %v1057, 128
      %1140 = vxpose.xlu0.b32.cont [9/16] %v1058, 128
      %1141 = vxpose.xlu0.b32.cont [10/16] %v1059, 128
      %1142 = vxpose.xlu0.b32.cont [11/16] %v1060, 128
      %1143 = vxpose.xlu0.b32.cont [12/16] %v1061, 128
      %1144 = vxpose.xlu0.b32.cont [13/16] %v1062, 128
      %1145 = vxpose.xlu0.b32.cont [14/16] %v1063, 128
      %1146 = vxpose.xlu0.b32.cont [15/16] %v1064, 128
      %1147 = vxpose.xlu0.b32.end [16/16] %v1065, 128
      %v1148 = vpop.trf.xlu0
      %v1149 = vpop.trf.xlu0
      %v1150 = vpop.trf.xlu0
      %v1151 = vpop.trf.xlu0
      %v1152 = vpop.trf.xlu0
      %v1153 = vpop.trf.xlu0
      %v1154 = vpop.trf.xlu0
      %v1155 = vpop.trf.xlu0
      %v1156 = vpop.trf.xlu0
      %v1157 = vpop.trf.xlu0
      %v1158 = vpop.trf.xlu0
      %v1159 = vpop.trf.xlu0
      %v1160 = vpop.trf.xlu0
      %v1161 = vpop.trf.xlu0
      %v1162 = vpop.trf.xlu0
      %v1163 = vpop.trf.xlu0
      %1164 = vxpose.xlu0.b32.start [1/16] %v1066, 128
      %1165 = vxpose.xlu0.b32.cont [2/16] %v1067, 128
      %1166 = vxpose.xlu0.b32.cont [3/16] %v1068, 128
      %1167 = vxpose.xlu0.b32.cont [4/16] %v1069, 128
      %1168 = vxpose.xlu0.b32.cont [5/16] %v1070, 128
      %1169 = vxpose.xlu0.b32.cont [6/16] %v1071, 128
      %1170 = vxpose.xlu0.b32.cont [7/16] %v1072, 128
      %1171 = vxpose.xlu0.b32.cont [8/16] %v1073, 128
      %1172 = vxpose.xlu0.b32.cont [9/16] %v1074, 128
      %1173 = vxpose.xlu0.b32.cont [10/16] %v1075, 128
      %1174 = vxpose.xlu0.b32.cont [11/16] %v1076, 128
      %1175 = vxpose.xlu0.b32.cont [12/16] %v1077, 128
      %1176 = vxpose.xlu0.b32.cont [13/16] %v1078, 128
      %1177 = vxpose.xlu0.b32.cont [14/16] %v1079, 128
      %1178 = vxpose.xlu0.b32.cont [15/16] %v1080, 128
      %1179 = vxpose.xlu0.b32.end [16/16] %v1081, 128
      %v1180 = vpop.trf.xlu0
      %v1181 = vpop.trf.xlu0
      %v1182 = vpop.trf.xlu0
      %v1183 = vpop.trf.xlu0
      %v1184 = vpop.trf.xlu0
      %v1185 = vpop.trf.xlu0
      %v1186 = vpop.trf.xlu0
      %v1187 = vpop.trf.xlu0
      %v1188 = vpop.trf.xlu0
      %v1189 = vpop.trf.xlu0
      %v1190 = vpop.trf.xlu0
      %v1191 = vpop.trf.xlu0
      %v1192 = vpop.trf.xlu0
      %v1193 = vpop.trf.xlu0
      %v1194 = vpop.trf.xlu0
      %v1195 = vpop.trf.xlu0
      %1196 = vxpose.xlu0.b32.start [1/16] %v1082, 128
      %1197 = vxpose.xlu0.b32.cont [2/16] %v1083, 128
      %1198 = vxpose.xlu0.b32.cont [3/16] %v1084, 128
      %1199 = vxpose.xlu0.b32.cont [4/16] %v1085, 128
      %1200 = vxpose.xlu0.b32.cont [5/16] %v1086, 128
      %1201 = vxpose.xlu0.b32.cont [6/16] %v1087, 128
      %1202 = vxpose.xlu0.b32.cont [7/16] %v1088, 128
      %1203 = vxpose.xlu0.b32.cont [8/16] %v1089, 128
      %1204 = vxpose.xlu0.b32.cont [9/16] %v1090, 128
      %1205 = vxpose.xlu0.b32.cont [10/16] %v1091, 128
      %1206 = vxpose.xlu0.b32.cont [11/16] %v1092, 128
      %1207 = vxpose.xlu0.b32.cont [12/16] %v1093, 128
      %1208 = vxpose.xlu0.b32.cont [13/16] %v1094, 128
      %1209 = vxpose.xlu0.b32.cont [14/16] %v1095, 128
      %1210 = vxpose.xlu0.b32.cont [15/16] %v1096, 128
      %1211 = vxpose.xlu0.b32.end [16/16] %v1097, 128
      %v1212 = vpop.trf.xlu0
      %v1213 = vpop.trf.xlu0
      %v1214 = vpop.trf.xlu0
      %v1215 = vpop.trf.xlu0
      %v1216 = vpop.trf.xlu0
      %v1217 = vpop.trf.xlu0
      %v1218 = vpop.trf.xlu0
      %v1219 = vpop.trf.xlu0
      %v1220 = vpop.trf.xlu0
      %v1221 = vpop.trf.xlu0
      %v1222 = vpop.trf.xlu0
      %v1223 = vpop.trf.xlu0
      %v1224 = vpop.trf.xlu0
      %v1225 = vpop.trf.xlu0
      %v1226 = vpop.trf.xlu0
      %v1227 = vpop.trf.xlu0
      %v1228 = vpack.c.bf16 %v1117, %v1116
      %v1229 = vpack.c.bf16 %v1149, %v1148
      %v1230 = vpack.c.bf16 %v1181, %v1180
      %v1231 = vpack.c.bf16 %v1213, %v1212
      %v1232 = vpack.c.bf16 %v1119, %v1118
      %v1233 = vpack.c.bf16 %v1151, %v1150
      %v1234 = vpack.c.bf16 %v1183, %v1182
      %v1235 = vpack.c.bf16 %v1215, %v1214
      %v1236 = vpack.c.bf16 %v1121, %v1120
      %v1237 = vpack.c.bf16 %v1153, %v1152
      %v1238 = vpack.c.bf16 %v1185, %v1184
      %v1239 = vpack.c.bf16 %v1217, %v1216
      %v1240 = vpack.c.bf16 %v1123, %v1122
      %v1241 = vpack.c.bf16 %v1155, %v1154
      %v1242 = vpack.c.bf16 %v1187, %v1186
      %v1243 = vpack.c.bf16 %v1219, %v1218
      %v1244 = vpack.c.bf16 %v1125, %v1124
      %v1245 = vpack.c.bf16 %v1157, %v1156
      %v1246 = vpack.c.bf16 %v1189, %v1188
      %v1247 = vpack.c.bf16 %v1221, %v1220
      %v1248 = vpack.c.bf16 %v1127, %v1126
      %v1249 = vpack.c.bf16 %v1159, %v1158
      %v1250 = vpack.c.bf16 %v1191, %v1190
      %v1251 = vpack.c.bf16 %v1223, %v1222
      %v1252 = vpack.c.bf16 %v1129, %v1128
      %v1253 = vpack.c.bf16 %v1161, %v1160
      %v1254 = vpack.c.bf16 %v1193, %v1192
      %v1255 = vpack.c.bf16 %v1225, %v1224
      %v1256 = vpack.c.bf16 %v1131, %v1130
      %v1257 = vpack.c.bf16 %v1163, %v1162
      %v1258 = vpack.c.bf16 %v1195, %v1194
      %v1259 = vpack.c.bf16 %v1227, %v1226
      %1260 = vmatpush.bf16.msra.mxu0 %v1256
      %1261 = vmatpush.bf16.msra.mxu0 %v1252
      %1262 = vmatpush.bf16.msra.mxu0 %v1248
      %1263 = vmatpush.bf16.msra.mxu0 %v1244
      %1264 = vmatpush.bf16.msra.mxu0 %v1240
      %1265 = vmatpush.bf16.msra.mxu0 %v1236
      %1266 = vmatpush.bf16.msra.mxu0 %v1232
      %1267 = vmatpush.bf16.msra.mxu0 %v1228
      %1268 = vmatmul.bf16.gmra.mxu0 %v1099
      %v1269 = vpop.f32.mrf.mxu0
      %v1270 = vadd.f32 0.0, %v1269
      %v1271 = vpop.f32.mrf.mxu0
      %1272 = vdwg.mxu0
      %1273 = vmatpush.bf16.msra.mxu0 %v1257
      %1274 = vmatpush.bf16.msra.mxu0 %v1253
      %1275 = vmatpush.bf16.msra.mxu0 %v1249
      %1276 = vmatpush.bf16.msra.mxu0 %v1245
      %1277 = vmatpush.bf16.msra.mxu0 %v1241
      %1278 = vmatpush.bf16.msra.mxu0 %v1237
      %1279 = vmatpush.bf16.msra.mxu0 %v1233
      %1280 = vmatpush.bf16.msra.mxu0 %v1229
      %1281 = vmatmul.bf16.gmra.mxu0 %v1099
      %v1282 = vpop.f32.mrf.mxu0
      %v1283 = vadd.f32 0.0, %v1282
      %v1284 = vpop.f32.mrf.mxu0
      %1285 = vdwg.mxu0
      %1286 = vmatpush.bf16.msra.mxu0 %v1258
      %1287 = vmatpush.bf16.msra.mxu0 %v1254
      %1288 = vmatpush.bf16.msra.mxu0 %v1250
      %1289 = vmatpush.bf16.msra.mxu0 %v1246
      %1290 = vmatpush.bf16.msra.mxu0 %v1242
      %1291 = vmatpush.bf16.msra.mxu0 %v1238
      %1292 = vmatpush.bf16.msra.mxu0 %v1234
      %1293 = vmatpush.bf16.msra.mxu0 %v1230
      %1294 = vmatmul.bf16.gmra.mxu0 %v1099
      %v1295 = vpop.f32.mrf.mxu0
      %v1296 = vadd.f32 0.0, %v1295
      %v1297 = vpop.f32.mrf.mxu0
      %1298 = vdwg.mxu0
      %1299 = vmatpush.bf16.msra.mxu0 %v1259
      %1300 = vmatpush.bf16.msra.mxu0 %v1255
      %1301 = vmatpush.bf16.msra.mxu0 %v1251
      %1302 = vmatpush.bf16.msra.mxu0 %v1247
      %1303 = vmatpush.bf16.msra.mxu0 %v1243
      %1304 = vmatpush.bf16.msra.mxu0 %v1239
      %1305 = vmatpush.bf16.msra.mxu0 %v1235
      %1306 = vmatpush.bf16.msra.mxu0 %v1231
      %1307 = vmatmul.bf16.gmra.mxu0 %v1099
      %v1308 = vpop.f32.mrf.mxu0
      %v1309 = vadd.f32 0.0, %v1308
      %v1310 = vpop.f32.mrf.mxu0
      %1311 = vdwg.mxu0
      %v1312 = vadd.f32 %v1030, %v1270
      %v1313 = vadd.f32 %v1031, %v1283
      %v1314 = vadd.f32 %v1032, %v1296
      %v1315 = vadd.f32 %v1033, %v1309
      %v1316 = vld [vmem:[%s2] sm:$0x7]
      %1318 = vset.pattern.permute.xlu0 0
      %1319 = vperm.xlu0 %1318, %v1316
      %v1320 = vpop.permute.xlu0 %1319
      %v1322 = vadd.f32 %v1312, %v1320
      %v1323 = vadd.f32 %v1313, %v1320
      %v1324 = vadd.f32 %v1314, %v1320
      %v1325 = vadd.f32 %v1315, %v1320
      %v1326 = vtanh.pop %v1322
      %v1327 = vtanh.pop %v1323
      %v1328 = vtanh.pop %v1324
      %v1329 = vtanh.pop %v1325
      %v1334 = vrot.slane %v1327, 4
      %v1335 = vrot.slane %v1329, 4
      %vm1336 = vcmask 1043456
      %v1337 = vsel %vm1336, %v1326, %v1334
      %v1338 = vsel %vm1336, %v1328, %v1335
      %1341 = vst [vmem:[%s195] sm:$0x77] %v1337
      %1342 = vst [vmem:[%s195 + $0x8] sm:$0x77] %v1338
      %p1343 = scmp.lt.s32.totalorder %s14, 3
      %s1344 = scalar_select %p1343, %s14, 3
      %s1345 = smul.addr %s1344, 4
      %s1346 = smul.addr %s1345, 4
      %s1347 = scalar_lea.vmem %s3, %s1346
      // Predicated region
      $region33: #{generator_forward.7} parent=31 // pred_check
        %p1348 = pneg %p105
      $region34: #{generator_forward.7} parent=31 // pred_check_branch
        %1350 = sbr.rel (%p1348) target = $region36
      $region35: #{generator_forward.7} parent=31 // pred_region
        _
      $region36: #{generator_forward.7} parent=31 // pred_fallthru
        _
    $region32: #{generator_forward.7} parent=5 // pred_fallthru
      _
    %p1351 = scmp.le.s32.totalorder 2, %s9
    // Predicated region
    $region37: #{generator_forward.7} parent=5 // pred_check
      %p1352 = pneg %p1351
    $region38: #{generator_forward.7} parent=5 // pred_check_branch
      %1354 = sbr.rel (%p1352) target = $region40
    $region39: #{generator_forward.7} parent=5 // pred_region
      %s1355 = ssub.s32 %s9, 2
      // Predicated region
      $region41: #{generator_forward.7} parent=39 // pred_check
        %p1356 = pneg %p111
      $region42: #{generator_forward.7} parent=39 // pred_check_branch
        %1358 = sbr.rel (%p1356) target = $region44
      $region43: #{generator_forward.7} parent=39 // pred_region
        %p1359 = scmp.lt.s32.totalorder %s15, 3
        %s1360 = scalar_select %p1359, %s15, 3
        %s1361 = smul.addr %s1360, 4
        %s1362 = smul.addr %s1361, 4
        %s1363 = scalar_lea.vmem %s3, %s1362
      $region44: #{generator_forward.7} parent=39 // pred_fallthru
        _
    $region40: #{generator_forward.7} parent=5 // pred_fallthru
      _
  $region6: #{generator_forward.7} parent=0 // loop_footer
    %s13 = sadd.s32 1, %s9
  $region7: #{generator_forward.7} parent=0 // loop_footer_branch
    %8 = sbr.rel target = $region3
  $region8: #{generator_forward.7} parent=0 // loop_exit
    _

</llo_original>
